<compile_context>
chip_gen: v7x
topology: tpu7x:2x2x1
jax: 0.10.0
libtpu: 0.0.40
codegen_flags: <defaults>
</compile_context>

<pallas_src>
import jax
import jax.numpy as jnp
import numpy as np
from jax.experimental import pallas as pl
from jax.experimental.pallas import tpu as pltpu

CATEGORY_CLASSES = 7
IMG = 27            # scaled-down spatial size (module's dummy probe uses 135)
BATCH = 2
CIN, C1, C2 = 3, 32, 64
NFC1 = 32
KSZ = 3


def _conv_sizes(img):
    """Mirror NeuralNet._forward_conv_layers shape arithmetic."""
    h1 = img - 2                 # Conv2d(3, 32, 3), valid
    p1 = (h1 - 3) // 2 + 1       # MaxPool2d(3, 2)
    h2 = p1 - 2                  # Conv2d(32, 64, 3), valid
    p2 = (h2 - 3) // 2 + 1       # MaxPool2d(3, 2)
    return h1, p1, h2, p2


H1, P1, H2, P2 = _conv_sizes(IMG)        # 25, 12, 10, 4
W0 = IMG
N = BATCH
NPOS = P2 * P2                           # 16 pooled spatial positions
FLAT = C2 * NPOS                         # 1024 (PyTorch flatten size)


def _rup(x, m=8):
    return ((x + m - 1) // m) * m


# ---- row geometry: activation row index = (h*W + w)*N + n, channels in lanes
OFF1 = [(kh * W0 + kw) * N for kh in range(KSZ) for kw in range(KSZ)]  # conv1 taps
OFF2 = [(kh * P1 + kw) * N for kh in range(KSZ) for kw in range(KSZ)]  # conv2 taps

SEL_M = P1 * N                                   # 24 pooled rows per output block
SEL_K = 2 * P1 * N                               # 48 source rows per output block
R_M1  = _rup(2 * (P1 - 1) * W0 * N + SEL_K)      # 1240: pool1 stride-1 3x3 max rows
R_MW1 = _rup(R_M1 + 2 * W0 * N)                  # 1352: pool1 kw-max rows
R_H1  = _rup(R_MW1 + 2 * (KSZ - 1))              # 1360: conv1 output rows (full width)
R_X   = _rup(R_H1 + OFF1[-1])                    # 1472: zero-padded input rows
K_IM  = _rup(KSZ * KSZ * CIN, 8)                 # 32: im2col contraction (27 padded)
R_P1  = P1 * P1 * N                              # 288: compact pooled1 rows

R_M2  = _rup((2 * (P2 - 1) * P1 + 2 * (P2 - 1)) * N + N)   # 160
R_MW2 = _rup(R_M2 + 2 * P1 * N)                  # 208
R_H2  = _rup(R_MW2 + 2 * (KSZ - 1))              # 216

assert R_X >= IMG * IMG * N
assert R_H2 + OFF2[-1] <= R_P1       # conv2 tap slices stay inside pooled1


def _pool1_select_np():
    """Constant (24, 48) 0/1 tile: for one pooled output-row block `a`,
    pooled rows [24a, 24a+24) = S @ m1 rows [108a, 108a+48) (stride-2 w-subsample
    of the full-width stride-1 max, dropping the wrap-around garbage columns)."""
    s = np.zeros((SEL_M, SEL_K), np.float32)
    for b in range(P1):
        for n in range(N):
            s[b * N + n, 2 * b * N + n] = 1.0
    return s


_POOL1_SELECT = _pool1_select_np()


# -----------------------------------------------------------------------------
# Pallas kernel: full forward pass, single program, everything in VMEM.
# -----------------------------------------------------------------------------
def _net_kernel(xc_ref, w1_ref, b1_ref, w2_ref, b2_ref, s1_ref,
                fw1_ref, fb1_ref, fw2_ref, fb2_ref, out_ref,
                h1_s, mw1_s, m1_s, p1_s, h2_s, mw2_s, m2_s):
    f32 = jnp.float32
    bf16 = jnp.bfloat16

    # ---- conv1 + bias + ReLU: ONE im2col matmul, K = 9*Cin (padded to 32),
    #      bf16 operands / f32 accumulation -----------------------------------
    h1_s[...] = jnp.maximum(
        jnp.dot(xc_ref[...], w1_ref[...], preferred_element_type=f32)
        + b1_ref[...], 0.0)                                    # (R_H1, 32)

    # ---- MaxPool2d(3,2) #1: separable stride-1 3x3 max (kw then kh) ----------
    mw1_s[...] = jnp.maximum(
        jnp.maximum(h1_s[pl.ds(0, R_MW1), :], h1_s[pl.ds(2, R_MW1), :]),
        h1_s[pl.ds(4, R_MW1), :])                              # max over kw
    m1_s[...] = jnp.maximum(
        jnp.maximum(mw1_s[pl.ds(0, R_M1), :], mw1_s[pl.ds(W0 * N, R_M1), :]),
        mw1_s[pl.ds(2 * W0 * N, R_M1), :])                     # max over kh

    # stride-2 subsample (and drop of wrap-around garbage columns): 12 tiny
    # (24,48)@(48,32) 0/1-select matmuls in f32 — exact gather, aligned stores.
    for a in range(P1):
        p1_s[pl.ds(SEL_M * a, SEL_M), :] = jnp.dot(
            s1_ref[...], m1_s[pl.ds(2 * a * W0 * N, SEL_K), :],
            preferred_element_type=f32)                        # (288, 32) total

    # ---- conv2 + bias + ReLU: 9 taps, MXU dot over C1=32 per tap (bf16/f32);
    #      the (216, 64) f32 accumulator stays register-resident --------------
    acc2 = jnp.dot(p1_s[pl.ds(OFF2[0], R_H2), :].astype(bf16), w2_ref[0],
                   preferred_element_type=f32) + b2_ref[...]
    for t in range(1, 9):
        acc2 = acc2 + jnp.dot(p1_s[pl.ds(OFF2[t], R_H2), :].astype(bf16),
                              w2_ref[t], preferred_element_type=f32)
    h2_s[...] = jnp.maximum(acc2, 0.0)                         # (R_H2, 64)

    # ---- MaxPool2d(3,2) #2: separable stride-1 3x3 max -----------------------
    mw2_s[...] = jnp.maximum(
        jnp.maximum(h2_s[pl.ds(0, R_MW2), :], h2_s[pl.ds(2, R_MW2), :]),
        h2_s[pl.ds(4, R_MW2), :])                              # max over kw
    m2_s[...] = jnp.maximum(
        jnp.maximum(mw2_s[pl.ds(0, R_M2), :], mw2_s[pl.ds(P1 * N, R_M2), :]),
        mw2_s[pl.ds(2 * P1 * N, R_M2), :])                     # max over kh

    # ---- pool2 stride-2 subsample + PyTorch (c,h,w) flatten fused into fc1:
    #      hid = sum_s pooled2_rows(s) @ fw1[s]  (16 tiny M=2 MXU dots) --------
    hid = fb1_ref[...]                                         # (1, 32) -> bcast
    for a in range(P2):
        for b in range(P2):
            s = a * P2 + b
            rows = (2 * a * P1 + 2 * b) * N
            hid = hid + jnp.dot(m2_s[pl.ds(rows, N), :].astype(bf16),
                                fw1_ref[s], preferred_element_type=f32)
    hid = jnp.maximum(hid, 0.0)                                # (N, 32)

    # ---- fc2 ------------------------------------------------------------------
    out_ref[...] = (jnp.dot(hid.astype(bf16), fw2_ref[...],
                            preferred_element_type=f32)
                    + fb2_ref[...]).astype(out_ref.dtype)


# -----------------------------------------------------------------------------
# Wrapper (layout plumbing: im2col, weight reshapes) + pallas_call
# -----------------------------------------------------------------------------
@jax.jit
def neural_net_forward(x_nchw, params):
    n = x_nchw.shape[0]
    assert n == N, "row geometry / pool-select constant are built for BATCH"
    bf16 = jnp.bfloat16

    # NCHW (PyTorch) -> rows ordered (h, w, n), channels last; zero-pad rows so
    # every shifted window slice stays in bounds.
    x = jnp.transpose(x_nchw, (2, 3, 0, 1)).astype(jnp.float32)   # (H, W, N, C)
    x2 = x.reshape(IMG * IMG * n, CIN)
    x2 = jnp.pad(x2, ((0, R_X - x2.shape[0]), (0, 0)))
    # conv1 im2col in the wrapper: fold the 9 taps into K (9*Cin=27, pad to 32).
    xc = jnp.concatenate([x2[off:off + R_H1] for off in OFF1], axis=1)
    xc = jnp.pad(xc, ((0, 0), (0, K_IM - KSZ * KSZ * CIN))).astype(bf16)

    # conv1 weight as (K_IM, 32): row index = kh*9 + kw*3 + cin (matches im2col).
    w1 = jnp.transpose(params["conv1_w"], (2, 3, 1, 0)).reshape(KSZ * KSZ * CIN, C1)
    w1 = jnp.pad(w1, ((0, K_IM - KSZ * KSZ * CIN), (0, 0))).astype(bf16)
    b1 = params["conv1_b"].reshape(1, C1)
    # conv2 weight as (tap, Cin, Cout)
    w2 = jnp.transpose(params["conv2_w"], (2, 3, 1, 0)).reshape(9, C1, C2).astype(bf16)
    b2 = params["conv2_b"].reshape(1, C2)
    # fc1: PyTorch flattens (c, h, w) -> input index = c*16 + s, s = a*P2 + b.
    # Reshape into one (C2, NFC1) block per pooled spatial position s.
    fw1 = jnp.transpose(params["fc1_w"].reshape(NFC1, C2, NPOS),
                        (2, 1, 0)).astype(bf16)                   # (16, 64, 32)
    fb1 = params["fc1_b"].reshape(1, NFC1)
    fw2 = jnp.transpose(params["fc2_w"], (1, 0)).astype(bf16)     # (32, 7)
    fb2 = params["fc2_b"].reshape(1, CATEGORY_CLASSES)
    s1 = jnp.asarray(_POOL1_SELECT)                               # (24, 48) f32

    args = (xc, w1, b1, w2, b2, s1, fw1, fb1, fw2, fb2)
    vmem = pl.BlockSpec(memory_space=pltpu.MemorySpace.VMEM)
    return pl.pallas_call(
        _net_kernel,
        out_shape=jax.ShapeDtypeStruct((n, CATEGORY_CLASSES), jnp.float32),
        in_specs=[vmem] * len(args),
        out_specs=vmem,
        scratch_shapes=[
            pltpu.VMEM((R_H1, C1), jnp.float32),    # conv1 output (full width)
            pltpu.VMEM((R_MW1, C1), jnp.float32),   # pool1 kw-max
            pltpu.VMEM((R_M1, C1), jnp.float32),    # pool1 stride-1 3x3 max
            pltpu.VMEM((R_P1, C1), jnp.float32),    # pooled1 (compact)
            pltpu.VMEM((R_H2, C2), jnp.float32),    # conv2 output (full width)
            pltpu.VMEM((R_MW2, C2), jnp.float32),   # pool2 kw-max
            pltpu.VMEM((R_M2, C2), jnp.float32),    # pool2 stride-1 3x3 max
        ],
        # No vmem_limit override: total footprint ~3 MiB (fits v7x's 64 MiB).
    )(*args)


# -----------------------------------------------------------------------------
# Deterministic synthetic parameters in native PyTorch layouts
# -----------------------------------------------------------------------------
def init_params(key):
    k = jax.random.split(key, 8)
    return dict(
        conv1_w=0.10 * jax.random.normal(k[0], (C1, CIN, 3, 3), jnp.float32),
        conv1_b=0.10 * jax.random.normal(k[1], (C1,), jnp.float32),
        conv2_w=0.05 * jax.random.normal(k[2], (C2, C1, 3, 3), jnp.float32),
        conv2_b=0.05 * jax.random.normal(k[3], (C2,), jnp.float32),
        fc1_w=0.02 * jax.random.normal(k[4], (NFC1, FLAT), jnp.float32),
        fc1_b=0.02 * jax.random.normal(k[5], (NFC1,), jnp.float32),
        fc2_w=0.10 * jax.random.normal(k[6], (CATEGORY_CLASSES, NFC1), jnp.float32),
        fc2_b=0.10 * jax.random.normal(k[7], (CATEGORY_CLASSES,), jnp.float32),
    )


# -----------------------------------------------------------------------------
# Pure-JAX f32 reference (mirrors PyTorch semantics) for validation
# -----------------------------------------------------------------------------
@jax.jit
def reference_forward(x_nchw, params):
    x = jnp.transpose(x_nchw, (0, 2, 3, 1)).astype(jnp.float32)   # NHWC
    dn = ("NHWC", "HWIO", "NHWC")
    w1 = jnp.transpose(params["conv1_w"], (2, 3, 1, 0))
    w2 = jnp.transpose(params["conv2_w"], (2, 3, 1, 0))
    y = jax.lax.conv_general_dilated(x, w1, (1, 1), "VALID",
                                     dimension_numbers=dn) + params["conv1_b"]
    y = jnp.maximum(y, 0.0)
    y = jax.lax.reduce_window(y, -jnp.inf, jax.lax.max,
                              (1, 3, 3, 1), (1, 2, 2, 1), "VALID")
    y = jax.lax.conv_general_dilated(y, w2, (1, 1), "VALID",
                                     dimension_numbers=dn) + params["conv2_b"]
    y = jnp.maximum(y, 0.0)
    y = jax.lax.reduce_window(y, -jnp.inf, jax.lax.max,
                              (1, 3, 3, 1), (1, 2, 2, 1), "VALID")
    n = y.shape[0]
    feat = jnp.transpose(y, (0, 3, 1, 2)).reshape(n, -1)   # (c, h, w) like PyTorch
    h = jnp.maximum(feat @ params["fc1_w"].T + params["fc1_b"], 0.0)
    return h @ params["fc2_w"].T + params["fc2_b"]


if __name__ == "__main__":
    key = jax.random.PRNGKey(0)
    k_x, k_p = jax.random.split(key)
    x = jax.random.normal(k_x, (BATCH, CIN, IMG, IMG), jnp.float32)  # NCHW like PyTorch
    params = init_params(k_p)

    out = jax.block_until_ready(neural_net_forward(x, params))
    ref = jax.block_until_ready(reference_forward(x, params))

    assert out.shape == (BATCH, CATEGORY_CLASSES)
    # bf16 MXU operands (f32 accumulation) vs f32 reference -> loose tolerance;
    # structural errors would be O(1), far above this.
    np.testing.assert_allclose(np.asarray(out), np.asarray(ref),
                               rtol=5e-2, atol=5e-2)
    print("KERNEL_OK")
</pallas_src>

<mosaic_0001>
module attributes {stable_mosaic.version = 11 : i64} {
  func.func @_net_kernel(%arg0: memref<1360x32xbf16, #tpu.memory_space<vmem>>, %arg1: memref<32x32xbf16, #tpu.memory_space<vmem>>, %arg2: memref<1x32xf32, #tpu.memory_space<vmem>>, %arg3: memref<9x32x64xbf16, #tpu.memory_space<vmem>>, %arg4: memref<1x64xf32, #tpu.memory_space<vmem>>, %arg5: memref<24x48xf32, #tpu.memory_space<vmem>>, %arg6: memref<16x64x32xbf16, #tpu.memory_space<vmem>>, %arg7: memref<1x32xf32, #tpu.memory_space<vmem>>, %arg8: memref<32x7xbf16, #tpu.memory_space<vmem>>, %arg9: memref<1x7xf32, #tpu.memory_space<vmem>>, %arg10: memref<2x7xf32, #tpu.memory_space<vmem>>, %arg11: memref<1360x32xf32, #tpu.memory_space<vmem>>, %arg12: memref<1352x32xf32, #tpu.memory_space<vmem>>, %arg13: memref<1240x32xf32, #tpu.memory_space<vmem>>, %arg14: memref<288x32xf32, #tpu.memory_space<vmem>>, %arg15: memref<216x64xf32, #tpu.memory_space<vmem>>, %arg16: memref<208x64xf32, #tpu.memory_space<vmem>>, %arg17: memref<160x64xf32, #tpu.memory_space<vmem>>) attributes {dimension_semantics = [], scalar_prefetch = 0 : i64, scratch_operands = 7 : i64, tpu.core_type = #tpu.core_type<tc>} {
    %c0 = arith.constant 0 : index
    %c0_0 = arith.constant 0 : index
    %0 = vector.load %arg0[%c0, %c0_0] : memref<1360x32xbf16, #tpu.memory_space<vmem>>, vector<1360x32xbf16>
    %c0_1 = arith.constant 0 : index
    %c0_2 = arith.constant 0 : index
    %1 = vector.load %arg1[%c0_1, %c0_2] : memref<32x32xbf16, #tpu.memory_space<vmem>>, vector<32x32xbf16>
    %cst = arith.constant dense<0.000000e+00> : vector<1360x32xf32>
    %2 = tpu.matmul %0, %1, %cst {dimension_numbers = #tpu.dot_dimension_numbers<[1], [0], [0], [1], [0, 0, 1, 1], [], []>} : vector<1360x32xbf16>, vector<32x32xbf16>, vector<1360x32xf32> -> vector<1360x32xf32>
    %c0_3 = arith.constant 0 : index
    %c0_4 = arith.constant 0 : index
    %3 = vector.load %arg2[%c0_3, %c0_4] : memref<1x32xf32, #tpu.memory_space<vmem>>, vector<1x32xf32>
    %4 = vector.broadcast %3 : vector<1x32xf32> to vector<1360x32xf32>
    %5 = arith.addf %2, %4 : vector<1360x32xf32>
    %cst_5 = arith.constant 0.000000e+00 : f32
    %6 = vector.broadcast %cst_5 : f32 to vector<1360x32xf32>
    %7 = arith.maximumf %5, %6 : vector<1360x32xf32>
    %c0_6 = arith.constant 0 : index
    %c0_7 = arith.constant 0 : index
    %8 = vector.load %arg11[%c0_6, %c0_7] : memref<1360x32xf32, #tpu.memory_space<vmem>>, vector<1360x32xf32>
    tpu.vector_store %arg11[%c0_6, %c0_7], %7 {strides = array<i32>} : memref<1360x32xf32, #tpu.memory_space<vmem>>, vector<1360x32xf32>,
    %c0_8 = arith.constant 0 : index
    %c0_9 = arith.constant 0 : index
    %9 = vector.load %arg11[%c0_8, %c0_9] : memref<1360x32xf32, #tpu.memory_space<vmem>>, vector<1352x32xf32>
    %c2 = arith.constant 2 : index
    %c0_10 = arith.constant 0 : index
    %10 = vector.load %arg11[%c2, %c0_10] : memref<1360x32xf32, #tpu.memory_space<vmem>>, vector<1352x32xf32>
    %11 = arith.maximumf %9, %10 : vector<1352x32xf32>
    %c4 = arith.constant 4 : index
    %c0_11 = arith.constant 0 : index
    %12 = vector.load %arg11[%c4, %c0_11] : memref<1360x32xf32, #tpu.memory_space<vmem>>, vector<1352x32xf32>
    %13 = arith.maximumf %11, %12 : vector<1352x32xf32>
    %c0_12 = arith.constant 0 : index
    %c0_13 = arith.constant 0 : index
    %14 = vector.load %arg12[%c0_12, %c0_13] : memref<1352x32xf32, #tpu.memory_space<vmem>>, vector<1352x32xf32>
    tpu.vector_store %arg12[%c0_12, %c0_13], %13 {strides = array<i32>} : memref<1352x32xf32, #tpu.memory_space<vmem>>, vector<1352x32xf32>,
    %c0_14 = arith.constant 0 : index
    %c0_15 = arith.constant 0 : index
    %15 = vector.load %arg12[%c0_14, %c0_15] : memref<1352x32xf32, #tpu.memory_space<vmem>>, vector<1240x32xf32>
    %c54 = arith.constant 54 : index
    %c0_16 = arith.constant 0 : index
    %16 = vector.load %arg12[%c54, %c0_16] : memref<1352x32xf32, #tpu.memory_space<vmem>>, vector<1240x32xf32>
    %17 = arith.maximumf %15, %16 : vector<1240x32xf32>
    %c108 = arith.constant 108 : index
    %c0_17 = arith.constant 0 : index
    %18 = vector.load %arg12[%c108, %c0_17] : memref<1352x32xf32, #tpu.memory_space<vmem>>, vector<1240x32xf32>
    %19 = arith.maximumf %17, %18 : vector<1240x32xf32>
    %c0_18 = arith.constant 0 : index
    %c0_19 = arith.constant 0 : index
    %20 = vector.load %arg13[%c0_18, %c0_19] : memref<1240x32xf32, #tpu.memory_space<vmem>>, vector<1240x32xf32>
    tpu.vector_store %arg13[%c0_18, %c0_19], %19 {strides = array<i32>} : memref<1240x32xf32, #tpu.memory_space<vmem>>, vector<1240x32xf32>,
    %c0_20 = arith.constant 0 : index
    %c0_21 = arith.constant 0 : index
    %21 = vector.load %arg5[%c0_20, %c0_21] : memref<24x48xf32, #tpu.memory_space<vmem>>, vector<24x48xf32>
    %c0_22 = arith.constant 0 : index
    %c0_23 = arith.constant 0 : index
    %22 = vector.load %arg13[%c0_22, %c0_23] : memref<1240x32xf32, #tpu.memory_space<vmem>>, vector<48x32xf32>
    %cst_24 = arith.constant dense<0.000000e+00> : vector<24x32xf32>
    %23 = tpu.matmul %21, %22, %cst_24 {dimension_numbers = #tpu.dot_dimension_numbers<[1], [0], [0], [1], [0, 0, 1, 1], [], []>} : vector<24x48xf32>, vector<48x32xf32>, vector<24x32xf32> -> vector<24x32xf32>
    %c0_25 = arith.constant 0 : index
    %c0_26 = arith.constant 0 : index
    %24 = vector.load %arg14[%c0_25, %c0_26] : memref<288x32xf32, #tpu.memory_space<vmem>>, vector<24x32xf32>
    tpu.vector_store %arg14[%c0_25, %c0_26], %23 {strides = array<i32>} : memref<288x32xf32, #tpu.memory_space<vmem>>, vector<24x32xf32>,
    %c0_27 = arith.constant 0 : index
    %c0_28 = arith.constant 0 : index
    %25 = vector.load %arg5[%c0_27, %c0_28] : memref<24x48xf32, #tpu.memory_space<vmem>>, vector<24x48xf32>
    %c108_29 = arith.constant 108 : index
    %c0_30 = arith.constant 0 : index
    %26 = vector.load %arg13[%c108_29, %c0_30] : memref<1240x32xf32, #tpu.memory_space<vmem>>, vector<48x32xf32>
    %cst_31 = arith.constant dense<0.000000e+00> : vector<24x32xf32>
    %27 = tpu.matmul %25, %26, %cst_31 {dimension_numbers = #tpu.dot_dimension_numbers<[1], [0], [0], [1], [0, 0, 1, 1], [], []>} : vector<24x48xf32>, vector<48x32xf32>, vector<24x32xf32> -> vector<24x32xf32>
    %c24 = arith.constant 24 : index
    %c0_32 = arith.constant 0 : index
    %28 = vector.load %arg14[%c24, %c0_32] : memref<288x32xf32, #tpu.memory_space<vmem>>, vector<24x32xf32>
    tpu.vector_store %arg14[%c24, %c0_32], %27 {strides = array<i32>} : memref<288x32xf32, #tpu.memory_space<vmem>>, vector<24x32xf32>,
    %c0_33 = arith.constant 0 : index
    %c0_34 = arith.constant 0 : index
    %29 = vector.load %arg5[%c0_33, %c0_34] : memref<24x48xf32, #tpu.memory_space<vmem>>, vector<24x48xf32>
    %c216 = arith.constant 216 : index
    %c0_35 = arith.constant 0 : index
    %30 = vector.load %arg13[%c216, %c0_35] : memref<1240x32xf32, #tpu.memory_space<vmem>>, vector<48x32xf32>
    %cst_36 = arith.constant dense<0.000000e+00> : vector<24x32xf32>
    %31 = tpu.matmul %29, %30, %cst_36 {dimension_numbers = #tpu.dot_dimension_numbers<[1], [0], [0], [1], [0, 0, 1, 1], [], []>} : vector<24x48xf32>, vector<48x32xf32>, vector<24x32xf32> -> vector<24x32xf32>
    %c48 = arith.constant 48 : index
    %c0_37 = arith.constant 0 : index
    %32 = vector.load %arg14[%c48, %c0_37] : memref<288x32xf32, #tpu.memory_space<vmem>>, vector<24x32xf32>
    tpu.vector_store %arg14[%c48, %c0_37], %31 {strides = array<i32>} : memref<288x32xf32, #tpu.memory_space<vmem>>, vector<24x32xf32>,
    %c0_38 = arith.constant 0 : index
    %c0_39 = arith.constant 0 : index
    %33 = vector.load %arg5[%c0_38, %c0_39] : memref<24x48xf32, #tpu.memory_space<vmem>>, vector<24x48xf32>
    %c324 = arith.constant 324 : index
    %c0_40 = arith.constant 0 : index
    %34 = vector.load %arg13[%c324, %c0_40] : memref<1240x32xf32, #tpu.memory_space<vmem>>, vector<48x32xf32>
    %cst_41 = arith.constant dense<0.000000e+00> : vector<24x32xf32>
    %35 = tpu.matmul %33, %34, %cst_41 {dimension_numbers = #tpu.dot_dimension_numbers<[1], [0], [0], [1], [0, 0, 1, 1], [], []>} : vector<24x48xf32>, vector<48x32xf32>, vector<24x32xf32> -> vector<24x32xf32>
    %c72 = arith.constant 72 : index
    %c0_42 = arith.constant 0 : index
    %36 = vector.load %arg14[%c72, %c0_42] : memref<288x32xf32, #tpu.memory_space<vmem>>, vector<24x32xf32>
    tpu.vector_store %arg14[%c72, %c0_42], %35 {strides = array<i32>} : memref<288x32xf32, #tpu.memory_space<vmem>>, vector<24x32xf32>,
    %c0_43 = arith.constant 0 : index
    %c0_44 = arith.constant 0 : index
    %37 = vector.load %arg5[%c0_43, %c0_44] : memref<24x48xf32, #tpu.memory_space<vmem>>, vector<24x48xf32>
    %c432 = arith.constant 432 : index
    %c0_45 = arith.constant 0 : index
    %38 = vector.load %arg13[%c432, %c0_45] : memref<1240x32xf32, #tpu.memory_space<vmem>>, vector<48x32xf32>
    %cst_46 = arith.constant dense<0.000000e+00> : vector<24x32xf32>
    %39 = tpu.matmul %37, %38, %cst_46 {dimension_numbers = #tpu.dot_dimension_numbers<[1], [0], [0], [1], [0, 0, 1, 1], [], []>} : vector<24x48xf32>, vector<48x32xf32>, vector<24x32xf32> -> vector<24x32xf32>
    %c96 = arith.constant 96 : index
    %c0_47 = arith.constant 0 : index
    %40 = vector.load %arg14[%c96, %c0_47] : memref<288x32xf32, #tpu.memory_space<vmem>>, vector<24x32xf32>
    tpu.vector_store %arg14[%c96, %c0_47], %39 {strides = array<i32>} : memref<288x32xf32, #tpu.memory_space<vmem>>, vector<24x32xf32>,
    %c0_48 = arith.constant 0 : index
    %c0_49 = arith.constant 0 : index
    %41 = vector.load %arg5[%c0_48, %c0_49] : memref<24x48xf32, #tpu.memory_space<vmem>>, vector<24x48xf32>
    %c540 = arith.constant 540 : index
    %c0_50 = arith.constant 0 : index
    %42 = vector.load %arg13[%c540, %c0_50] : memref<1240x32xf32, #tpu.memory_space<vmem>>, vector<48x32xf32>
    %cst_51 = arith.constant dense<0.000000e+00> : vector<24x32xf32>
    %43 = tpu.matmul %41, %42, %cst_51 {dimension_numbers = #tpu.dot_dimension_numbers<[1], [0], [0], [1], [0, 0, 1, 1], [], []>} : vector<24x48xf32>, vector<48x32xf32>, vector<24x32xf32> -> vector<24x32xf32>
    %c120 = arith.constant 120 : index
    %c0_52 = arith.constant 0 : index
    %44 = vector.load %arg14[%c120, %c0_52] : memref<288x32xf32, #tpu.memory_space<vmem>>, vector<24x32xf32>
    tpu.vector_store %arg14[%c120, %c0_52], %43 {strides = array<i32>} : memref<288x32xf32, #tpu.memory_space<vmem>>, vector<24x32xf32>,
    %c0_53 = arith.constant 0 : index
    %c0_54 = arith.constant 0 : index
    %45 = vector.load %arg5[%c0_53, %c0_54] : memref<24x48xf32, #tpu.memory_space<vmem>>, vector<24x48xf32>
    %c648 = arith.constant 648 : index
    %c0_55 = arith.constant 0 : index
    %46 = vector.load %arg13[%c648, %c0_55] : memref<1240x32xf32, #tpu.memory_space<vmem>>, vector<48x32xf32>
    %cst_56 = arith.constant dense<0.000000e+00> : vector<24x32xf32>
    %47 = tpu.matmul %45, %46, %cst_56 {dimension_numbers = #tpu.dot_dimension_numbers<[1], [0], [0], [1], [0, 0, 1, 1], [], []>} : vector<24x48xf32>, vector<48x32xf32>, vector<24x32xf32> -> vector<24x32xf32>
    %c144 = arith.constant 144 : index
    %c0_57 = arith.constant 0 : index
    %48 = vector.load %arg14[%c144, %c0_57] : memref<288x32xf32, #tpu.memory_space<vmem>>, vector<24x32xf32>
    tpu.vector_store %arg14[%c144, %c0_57], %47 {strides = array<i32>} : memref<288x32xf32, #tpu.memory_space<vmem>>, vector<24x32xf32>,
    %c0_58 = arith.constant 0 : index
    %c0_59 = arith.constant 0 : index
    %49 = vector.load %arg5[%c0_58, %c0_59] : memref<24x48xf32, #tpu.memory_space<vmem>>, vector<24x48xf32>
    %c756 = arith.constant 756 : index
    %c0_60 = arith.constant 0 : index
    %50 = vector.load %arg13[%c756, %c0_60] : memref<1240x32xf32, #tpu.memory_space<vmem>>, vector<48x32xf32>
    %cst_61 = arith.constant dense<0.000000e+00> : vector<24x32xf32>
    %51 = tpu.matmul %49, %50, %cst_61 {dimension_numbers = #tpu.dot_dimension_numbers<[1], [0], [0], [1], [0, 0, 1, 1], [], []>} : vector<24x48xf32>, vector<48x32xf32>, vector<24x32xf32> -> vector<24x32xf32>
    %c168 = arith.constant 168 : index
    %c0_62 = arith.constant 0 : index
    %52 = vector.load %arg14[%c168, %c0_62] : memref<288x32xf32, #tpu.memory_space<vmem>>, vector<24x32xf32>
    tpu.vector_store %arg14[%c168, %c0_62], %51 {strides = array<i32>} : memref<288x32xf32, #tpu.memory_space<vmem>>, vector<24x32xf32>,
    %c0_63 = arith.constant 0 : index
    %c0_64 = arith.constant 0 : index
    %53 = vector.load %arg5[%c0_63, %c0_64] : memref<24x48xf32, #tpu.memory_space<vmem>>, vector<24x48xf32>
    %c864 = arith.constant 864 : index
    %c0_65 = arith.constant 0 : index
    %54 = vector.load %arg13[%c864, %c0_65] : memref<1240x32xf32, #tpu.memory_space<vmem>>, vector<48x32xf32>
    %cst_66 = arith.constant dense<0.000000e+00> : vector<24x32xf32>
    %55 = tpu.matmul %53, %54, %cst_66 {dimension_numbers = #tpu.dot_dimension_numbers<[1], [0], [0], [1], [0, 0, 1, 1], [], []>} : vector<24x48xf32>, vector<48x32xf32>, vector<24x32xf32> -> vector<24x32xf32>
    %c192 = arith.constant 192 : index
    %c0_67 = arith.constant 0 : index
    %56 = vector.load %arg14[%c192, %c0_67] : memref<288x32xf32, #tpu.memory_space<vmem>>, vector<24x32xf32>
    tpu.vector_store %arg14[%c192, %c0_67], %55 {strides = array<i32>} : memref<288x32xf32, #tpu.memory_space<vmem>>, vector<24x32xf32>,
    %c0_68 = arith.constant 0 : index
    %c0_69 = arith.constant 0 : index
    %57 = vector.load %arg5[%c0_68, %c0_69] : memref<24x48xf32, #tpu.memory_space<vmem>>, vector<24x48xf32>
    %c972 = arith.constant 972 : index
    %c0_70 = arith.constant 0 : index
    %58 = vector.load %arg13[%c972, %c0_70] : memref<1240x32xf32, #tpu.memory_space<vmem>>, vector<48x32xf32>
    %cst_71 = arith.constant dense<0.000000e+00> : vector<24x32xf32>
    %59 = tpu.matmul %57, %58, %cst_71 {dimension_numbers = #tpu.dot_dimension_numbers<[1], [0], [0], [1], [0, 0, 1, 1], [], []>} : vector<24x48xf32>, vector<48x32xf32>, vector<24x32xf32> -> vector<24x32xf32>
    %c216_72 = arith.constant 216 : index
    %c0_73 = arith.constant 0 : index
    %60 = vector.load %arg14[%c216_72, %c0_73] : memref<288x32xf32, #tpu.memory_space<vmem>>, vector<24x32xf32>
    tpu.vector_store %arg14[%c216_72, %c0_73], %59 {strides = array<i32>} : memref<288x32xf32, #tpu.memory_space<vmem>>, vector<24x32xf32>,
    %c0_74 = arith.constant 0 : index
    %c0_75 = arith.constant 0 : index
    %61 = vector.load %arg5[%c0_74, %c0_75] : memref<24x48xf32, #tpu.memory_space<vmem>>, vector<24x48xf32>
    %c1080 = arith.constant 1080 : index
    %c0_76 = arith.constant 0 : index
    %62 = vector.load %arg13[%c1080, %c0_76] : memref<1240x32xf32, #tpu.memory_space<vmem>>, vector<48x32xf32>
    %cst_77 = arith.constant dense<0.000000e+00> : vector<24x32xf32>
    %63 = tpu.matmul %61, %62, %cst_77 {dimension_numbers = #tpu.dot_dimension_numbers<[1], [0], [0], [1], [0, 0, 1, 1], [], []>} : vector<24x48xf32>, vector<48x32xf32>, vector<24x32xf32> -> vector<24x32xf32>
    %c240 = arith.constant 240 : index
    %c0_78 = arith.constant 0 : index
    %64 = vector.load %arg14[%c240, %c0_78] : memref<288x32xf32, #tpu.memory_space<vmem>>, vector<24x32xf32>
    tpu.vector_store %arg14[%c240, %c0_78], %63 {strides = array<i32>} : memref<288x32xf32, #tpu.memory_space<vmem>>, vector<24x32xf32>,
    %c0_79 = arith.constant 0 : index
    %c0_80 = arith.constant 0 : index
    %65 = vector.load %arg5[%c0_79, %c0_80] : memref<24x48xf32, #tpu.memory_space<vmem>>, vector<24x48xf32>
    %c1188 = arith.constant 1188 : index
    %c0_81 = arith.constant 0 : index
    %66 = vector.load %arg13[%c1188, %c0_81] : memref<1240x32xf32, #tpu.memory_space<vmem>>, vector<48x32xf32>
    %cst_82 = arith.constant dense<0.000000e+00> : vector<24x32xf32>
    %67 = tpu.matmul %65, %66, %cst_82 {dimension_numbers = #tpu.dot_dimension_numbers<[1], [0], [0], [1], [0, 0, 1, 1], [], []>} : vector<24x48xf32>, vector<48x32xf32>, vector<24x32xf32> -> vector<24x32xf32>
    %c264 = arith.constant 264 : index
    %c0_83 = arith.constant 0 : index
    %68 = vector.load %arg14[%c264, %c0_83] : memref<288x32xf32, #tpu.memory_space<vmem>>, vector<24x32xf32>
    tpu.vector_store %arg14[%c264, %c0_83], %67 {strides = array<i32>} : memref<288x32xf32, #tpu.memory_space<vmem>>, vector<24x32xf32>,
    %c0_84 = arith.constant 0 : index
    %c0_85 = arith.constant 0 : index
    %69 = vector.load %arg14[%c0_84, %c0_85] : memref<288x32xf32, #tpu.memory_space<vmem>>, vector<216x32xf32>
    %70 = arith.truncf %69 : vector<216x32xf32> to vector<216x32xbf16>
    %c0_86 = arith.constant 0 : index
    %c0_87 = arith.constant 0 : index
    %c0_88 = arith.constant 0 : index
    %71 = vector.load %arg3[%c0_86, %c0_87, %c0_88] : memref<9x32x64xbf16, #tpu.memory_space<vmem>>, vector<1x32x64xbf16>
    %72 = vector.shape_cast %71 : vector<1x32x64xbf16> to vector<32x64xbf16>
    %cst_89 = arith.constant dense<0.000000e+00> : vector<216x64xf32>
    %73 = tpu.matmul %70, %72, %cst_89 {dimension_numbers = #tpu.dot_dimension_numbers<[1], [0], [0], [1], [0, 0, 1, 1], [], []>} : vector<216x32xbf16>, vector<32x64xbf16>, vector<216x64xf32> -> vector<216x64xf32>
    %c0_90 = arith.constant 0 : index
    %c0_91 = arith.constant 0 : index
    %74 = vector.load %arg4[%c0_90, %c0_91] : memref<1x64xf32, #tpu.memory_space<vmem>>, vector<1x64xf32>
    %75 = vector.broadcast %74 : vector<1x64xf32> to vector<216x64xf32>
    %76 = arith.addf %73, %75 : vector<216x64xf32>
    %c2_92 = arith.constant 2 : index
    %c0_93 = arith.constant 0 : index
    %77 = vector.load %arg14[%c2_92, %c0_93] : memref<288x32xf32, #tpu.memory_space<vmem>>, vector<216x32xf32>
    %78 = arith.truncf %77 : vector<216x32xf32> to vector<216x32xbf16>
    %c1 = arith.constant 1 : index
    %c0_94 = arith.constant 0 : index
    %c0_95 = arith.constant 0 : index
    %79 = vector.load %arg3[%c1, %c0_94, %c0_95] : memref<9x32x64xbf16, #tpu.memory_space<vmem>>, vector<1x32x64xbf16>
    %80 = vector.shape_cast %79 : vector<1x32x64xbf16> to vector<32x64xbf16>
    %cst_96 = arith.constant dense<0.000000e+00> : vector<216x64xf32>
    %81 = tpu.matmul %78, %80, %cst_96 {dimension_numbers = #tpu.dot_dimension_numbers<[1], [0], [0], [1], [0, 0, 1, 1], [], []>} : vector<216x32xbf16>, vector<32x64xbf16>, vector<216x64xf32> -> vector<216x64xf32>
    %82 = arith.addf %76, %81 : vector<216x64xf32>
    %c4_97 = arith.constant 4 : index
    %c0_98 = arith.constant 0 : index
    %83 = vector.load %arg14[%c4_97, %c0_98] : memref<288x32xf32, #tpu.memory_space<vmem>>, vector<216x32xf32>
    %84 = arith.truncf %83 : vector<216x32xf32> to vector<216x32xbf16>
    %c2_99 = arith.constant 2 : index
    %c0_100 = arith.constant 0 : index
    %c0_101 = arith.constant 0 : index
    %85 = vector.load %arg3[%c2_99, %c0_100, %c0_101] : memref<9x32x64xbf16, #tpu.memory_space<vmem>>, vector<1x32x64xbf16>
    %86 = vector.shape_cast %85 : vector<1x32x64xbf16> to vector<32x64xbf16>
    %cst_102 = arith.constant dense<0.000000e+00> : vector<216x64xf32>
    %87 = tpu.matmul %84, %86, %cst_102 {dimension_numbers = #tpu.dot_dimension_numbers<[1], [0], [0], [1], [0, 0, 1, 1], [], []>} : vector<216x32xbf16>, vector<32x64xbf16>, vector<216x64xf32> -> vector<216x64xf32>
    %88 = arith.addf %82, %87 : vector<216x64xf32>
    %c24_103 = arith.constant 24 : index
    %c0_104 = arith.constant 0 : index
    %89 = vector.load %arg14[%c24_103, %c0_104] : memref<288x32xf32, #tpu.memory_space<vmem>>, vector<216x32xf32>
    %90 = arith.truncf %89 : vector<216x32xf32> to vector<216x32xbf16>
    %c3 = arith.constant 3 : index
    %c0_105 = arith.constant 0 : index
    %c0_106 = arith.constant 0 : index
    %91 = vector.load %arg3[%c3, %c0_105, %c0_106] : memref<9x32x64xbf16, #tpu.memory_space<vmem>>, vector<1x32x64xbf16>
    %92 = vector.shape_cast %91 : vector<1x32x64xbf16> to vector<32x64xbf16>
    %cst_107 = arith.constant dense<0.000000e+00> : vector<216x64xf32>
    %93 = tpu.matmul %90, %92, %cst_107 {dimension_numbers = #tpu.dot_dimension_numbers<[1], [0], [0], [1], [0, 0, 1, 1], [], []>} : vector<216x32xbf16>, vector<32x64xbf16>, vector<216x64xf32> -> vector<216x64xf32>
    %94 = arith.addf %88, %93 : vector<216x64xf32>
    %c26 = arith.constant 26 : index
    %c0_108 = arith.constant 0 : index
    %95 = vector.load %arg14[%c26, %c0_108] : memref<288x32xf32, #tpu.memory_space<vmem>>, vector<216x32xf32>
    %96 = arith.truncf %95 : vector<216x32xf32> to vector<216x32xbf16>
    %c4_109 = arith.constant 4 : index
    %c0_110 = arith.constant 0 : index
    %c0_111 = arith.constant 0 : index
    %97 = vector.load %arg3[%c4_109, %c0_110, %c0_111] : memref<9x32x64xbf16, #tpu.memory_space<vmem>>, vector<1x32x64xbf16>
    %98 = vector.shape_cast %97 : vector<1x32x64xbf16> to vector<32x64xbf16>
    %cst_112 = arith.constant dense<0.000000e+00> : vector<216x64xf32>
    %99 = tpu.matmul %96, %98, %cst_112 {dimension_numbers = #tpu.dot_dimension_numbers<[1], [0], [0], [1], [0, 0, 1, 1], [], []>} : vector<216x32xbf16>, vector<32x64xbf16>, vector<216x64xf32> -> vector<216x64xf32>
    %100 = arith.addf %94, %99 : vector<216x64xf32>
    %c28 = arith.constant 28 : index
    %c0_113 = arith.constant 0 : index
    %101 = vector.load %arg14[%c28, %c0_113] : memref<288x32xf32, #tpu.memory_space<vmem>>, vector<216x32xf32>
    %102 = arith.truncf %101 : vector<216x32xf32> to vector<216x32xbf16>
    %c5 = arith.constant 5 : index
    %c0_114 = arith.constant 0 : index
    %c0_115 = arith.constant 0 : index
    %103 = vector.load %arg3[%c5, %c0_114, %c0_115] : memref<9x32x64xbf16, #tpu.memory_space<vmem>>, vector<1x32x64xbf16>
    %104 = vector.shape_cast %103 : vector<1x32x64xbf16> to vector<32x64xbf16>
    %cst_116 = arith.constant dense<0.000000e+00> : vector<216x64xf32>
    %105 = tpu.matmul %102, %104, %cst_116 {dimension_numbers = #tpu.dot_dimension_numbers<[1], [0], [0], [1], [0, 0, 1, 1], [], []>} : vector<216x32xbf16>, vector<32x64xbf16>, vector<216x64xf32> -> vector<216x64xf32>
    %106 = arith.addf %100, %105 : vector<216x64xf32>
    %c48_117 = arith.constant 48 : index
    %c0_118 = arith.constant 0 : index
    %107 = vector.load %arg14[%c48_117, %c0_118] : memref<288x32xf32, #tpu.memory_space<vmem>>, vector<216x32xf32>
    %108 = arith.truncf %107 : vector<216x32xf32> to vector<216x32xbf16>
    %c6 = arith.constant 6 : index
    %c0_119 = arith.constant 0 : index
    %c0_120 = arith.constant 0 : index
    %109 = vector.load %arg3[%c6, %c0_119, %c0_120] : memref<9x32x64xbf16, #tpu.memory_space<vmem>>, vector<1x32x64xbf16>
    %110 = vector.shape_cast %109 : vector<1x32x64xbf16> to vector<32x64xbf16>
    %cst_121 = arith.constant dense<0.000000e+00> : vector<216x64xf32>
    %111 = tpu.matmul %108, %110, %cst_121 {dimension_numbers = #tpu.dot_dimension_numbers<[1], [0], [0], [1], [0, 0, 1, 1], [], []>} : vector<216x32xbf16>, vector<32x64xbf16>, vector<216x64xf32> -> vector<216x64xf32>
    %112 = arith.addf %106, %111 : vector<216x64xf32>
    %c50 = arith.constant 50 : index
    %c0_122 = arith.constant 0 : index
    %113 = vector.load %arg14[%c50, %c0_122] : memref<288x32xf32, #tpu.memory_space<vmem>>, vector<216x32xf32>
    %114 = arith.truncf %113 : vector<216x32xf32> to vector<216x32xbf16>
    %c7 = arith.constant 7 : index
    %c0_123 = arith.constant 0 : index
    %c0_124 = arith.constant 0 : index
    %115 = vector.load %arg3[%c7, %c0_123, %c0_124] : memref<9x32x64xbf16, #tpu.memory_space<vmem>>, vector<1x32x64xbf16>
    %116 = vector.shape_cast %115 : vector<1x32x64xbf16> to vector<32x64xbf16>
    %cst_125 = arith.constant dense<0.000000e+00> : vector<216x64xf32>
    %117 = tpu.matmul %114, %116, %cst_125 {dimension_numbers = #tpu.dot_dimension_numbers<[1], [0], [0], [1], [0, 0, 1, 1], [], []>} : vector<216x32xbf16>, vector<32x64xbf16>, vector<216x64xf32> -> vector<216x64xf32>
    %118 = arith.addf %112, %117 : vector<216x64xf32>
    %c52 = arith.constant 52 : index
    %c0_126 = arith.constant 0 : index
    %119 = vector.load %arg14[%c52, %c0_126] : memref<288x32xf32, #tpu.memory_space<vmem>>, vector<216x32xf32>
    %120 = arith.truncf %119 : vector<216x32xf32> to vector<216x32xbf16>
    %c8 = arith.constant 8 : index
    %c0_127 = arith.constant 0 : index
    %c0_128 = arith.constant 0 : index
    %121 = vector.load %arg3[%c8, %c0_127, %c0_128] : memref<9x32x64xbf16, #tpu.memory_space<vmem>>, vector<1x32x64xbf16>
    %122 = vector.shape_cast %121 : vector<1x32x64xbf16> to vector<32x64xbf16>
    %cst_129 = arith.constant dense<0.000000e+00> : vector<216x64xf32>
    %123 = tpu.matmul %120, %122, %cst_129 {dimension_numbers = #tpu.dot_dimension_numbers<[1], [0], [0], [1], [0, 0, 1, 1], [], []>} : vector<216x32xbf16>, vector<32x64xbf16>, vector<216x64xf32> -> vector<216x64xf32>
    %124 = arith.addf %118, %123 : vector<216x64xf32>
    %cst_130 = arith.constant 0.000000e+00 : f32
    %125 = vector.broadcast %cst_130 : f32 to vector<216x64xf32>
    %126 = arith.maximumf %124, %125 : vector<216x64xf32>
    %c0_131 = arith.constant 0 : index
    %c0_132 = arith.constant 0 : index
    %127 = vector.load %arg15[%c0_131, %c0_132] : memref<216x64xf32, #tpu.memory_space<vmem>>, vector<216x64xf32>
    tpu.vector_store %arg15[%c0_131, %c0_132], %126 {strides = array<i32>} : memref<216x64xf32, #tpu.memory_space<vmem>>, vector<216x64xf32>,
    %c0_133 = arith.constant 0 : index
    %c0_134 = arith.constant 0 : index
    %128 = vector.load %arg15[%c0_133, %c0_134] : memref<216x64xf32, #tpu.memory_space<vmem>>, vector<208x64xf32>
    %c2_135 = arith.constant 2 : index
    %c0_136 = arith.constant 0 : index
    %129 = vector.load %arg15[%c2_135, %c0_136] : memref<216x64xf32, #tpu.memory_space<vmem>>, vector<208x64xf32>
    %130 = arith.maximumf %128, %129 : vector<208x64xf32>
    %c4_137 = arith.constant 4 : index
    %c0_138 = arith.constant 0 : index
    %131 = vector.load %arg15[%c4_137, %c0_138] : memref<216x64xf32, #tpu.memory_space<vmem>>, vector<208x64xf32>
    %132 = arith.maximumf %130, %131 : vector<208x64xf32>
    %c0_139 = arith.constant 0 : index
    %c0_140 = arith.constant 0 : index
    %133 = vector.load %arg16[%c0_139, %c0_140] : memref<208x64xf32, #tpu.memory_space<vmem>>, vector<208x64xf32>
    tpu.vector_store %arg16[%c0_139, %c0_140], %132 {strides = array<i32>} : memref<208x64xf32, #tpu.memory_space<vmem>>, vector<208x64xf32>,
    %c0_141 = arith.constant 0 : index
    %c0_142 = arith.constant 0 : index
    %134 = vector.load %arg16[%c0_141, %c0_142] : memref<208x64xf32, #tpu.memory_space<vmem>>, vector<160x64xf32>
    %c24_143 = arith.constant 24 : index
    %c0_144 = arith.constant 0 : index
    %135 = vector.load %arg16[%c24_143, %c0_144] : memref<208x64xf32, #tpu.memory_space<vmem>>, vector<160x64xf32>
    %136 = arith.maximumf %134, %135 : vector<160x64xf32>
    %c48_145 = arith.constant 48 : index
    %c0_146 = arith.constant 0 : index
    %137 = vector.load %arg16[%c48_145, %c0_146] : memref<208x64xf32, #tpu.memory_space<vmem>>, vector<160x64xf32>
    %138 = arith.maximumf %136, %137 : vector<160x64xf32>
    %c0_147 = arith.constant 0 : index
    %c0_148 = arith.constant 0 : index
    %139 = vector.load %arg17[%c0_147, %c0_148] : memref<160x64xf32, #tpu.memory_space<vmem>>, vector<160x64xf32>
    tpu.vector_store %arg17[%c0_147, %c0_148], %138 {strides = array<i32>} : memref<160x64xf32, #tpu.memory_space<vmem>>, vector<160x64xf32>,
    %c0_149 = arith.constant 0 : index
    %c0_150 = arith.constant 0 : index
    %140 = vector.load %arg7[%c0_149, %c0_150] : memref<1x32xf32, #tpu.memory_space<vmem>>, vector<1x32xf32>
    %c0_151 = arith.constant 0 : index
    %c0_152 = arith.constant 0 : index
    %141 = vector.load %arg17[%c0_151, %c0_152] : memref<160x64xf32, #tpu.memory_space<vmem>>, vector<2x64xf32>
    %142 = arith.truncf %141 : vector<2x64xf32> to vector<2x64xbf16>
    %c0_153 = arith.constant 0 : index
    %c0_154 = arith.constant 0 : index
    %c0_155 = arith.constant 0 : index
    %143 = vector.load %arg6[%c0_153, %c0_154, %c0_155] : memref<16x64x32xbf16, #tpu.memory_space<vmem>>, vector<1x64x32xbf16>
    %144 = vector.shape_cast %143 : vector<1x64x32xbf16> to vector<64x32xbf16>
    %cst_156 = arith.constant dense<0.000000e+00> : vector<2x32xf32>
    %145 = tpu.matmul %142, %144, %cst_156 {dimension_numbers = #tpu.dot_dimension_numbers<[1], [0], [0], [1], [0, 0, 1, 1], [], []>} : vector<2x64xbf16>, vector<64x32xbf16>, vector<2x32xf32> -> vector<2x32xf32>
    %146 = vector.broadcast %140 : vector<1x32xf32> to vector<2x32xf32>
    %147 = arith.addf %146, %145 : vector<2x32xf32>
    %c4_157 = arith.constant 4 : index
    %c0_158 = arith.constant 0 : index
    %148 = vector.load %arg17[%c4_157, %c0_158] : memref<160x64xf32, #tpu.memory_space<vmem>>, vector<2x64xf32>
    %149 = arith.truncf %148 : vector<2x64xf32> to vector<2x64xbf16>
    %c1_159 = arith.constant 1 : index
    %c0_160 = arith.constant 0 : index
    %c0_161 = arith.constant 0 : index
    %150 = vector.load %arg6[%c1_159, %c0_160, %c0_161] : memref<16x64x32xbf16, #tpu.memory_space<vmem>>, vector<1x64x32xbf16>
    %151 = vector.shape_cast %150 : vector<1x64x32xbf16> to vector<64x32xbf16>
    %cst_162 = arith.constant dense<0.000000e+00> : vector<2x32xf32>
    %152 = tpu.matmul %149, %151, %cst_162 {dimension_numbers = #tpu.dot_dimension_numbers<[1], [0], [0], [1], [0, 0, 1, 1], [], []>} : vector<2x64xbf16>, vector<64x32xbf16>, vector<2x32xf32> -> vector<2x32xf32>
    %153 = arith.addf %147, %152 : vector<2x32xf32>
    %c8_163 = arith.constant 8 : index
    %c0_164 = arith.constant 0 : index
    %154 = vector.load %arg17[%c8_163, %c0_164] : memref<160x64xf32, #tpu.memory_space<vmem>>, vector<2x64xf32>
    %155 = arith.truncf %154 : vector<2x64xf32> to vector<2x64xbf16>
    %c2_165 = arith.constant 2 : index
    %c0_166 = arith.constant 0 : index
    %c0_167 = arith.constant 0 : index
    %156 = vector.load %arg6[%c2_165, %c0_166, %c0_167] : memref<16x64x32xbf16, #tpu.memory_space<vmem>>, vector<1x64x32xbf16>
    %157 = vector.shape_cast %156 : vector<1x64x32xbf16> to vector<64x32xbf16>
    %cst_168 = arith.constant dense<0.000000e+00> : vector<2x32xf32>
    %158 = tpu.matmul %155, %157, %cst_168 {dimension_numbers = #tpu.dot_dimension_numbers<[1], [0], [0], [1], [0, 0, 1, 1], [], []>} : vector<2x64xbf16>, vector<64x32xbf16>, vector<2x32xf32> -> vector<2x32xf32>
    %159 = arith.addf %153, %158 : vector<2x32xf32>
    %c12 = arith.constant 12 : index
    %c0_169 = arith.constant 0 : index
    %160 = vector.load %arg17[%c12, %c0_169] : memref<160x64xf32, #tpu.memory_space<vmem>>, vector<2x64xf32>
    %161 = arith.truncf %160 : vector<2x64xf32> to vector<2x64xbf16>
    %c3_170 = arith.constant 3 : index
    %c0_171 = arith.constant 0 : index
    %c0_172 = arith.constant 0 : index
    %162 = vector.load %arg6[%c3_170, %c0_171, %c0_172] : memref<16x64x32xbf16, #tpu.memory_space<vmem>>, vector<1x64x32xbf16>
    %163 = vector.shape_cast %162 : vector<1x64x32xbf16> to vector<64x32xbf16>
    %cst_173 = arith.constant dense<0.000000e+00> : vector<2x32xf32>
    %164 = tpu.matmul %161, %163, %cst_173 {dimension_numbers = #tpu.dot_dimension_numbers<[1], [0], [0], [1], [0, 0, 1, 1], [], []>} : vector<2x64xbf16>, vector<64x32xbf16>, vector<2x32xf32> -> vector<2x32xf32>
    %165 = arith.addf %159, %164 : vector<2x32xf32>
    %c48_174 = arith.constant 48 : index
    %c0_175 = arith.constant 0 : index
    %166 = vector.load %arg17[%c48_174, %c0_175] : memref<160x64xf32, #tpu.memory_space<vmem>>, vector<2x64xf32>
    %167 = arith.truncf %166 : vector<2x64xf32> to vector<2x64xbf16>
    %c4_176 = arith.constant 4 : index
    %c0_177 = arith.constant 0 : index
    %c0_178 = arith.constant 0 : index
    %168 = vector.load %arg6[%c4_176, %c0_177, %c0_178] : memref<16x64x32xbf16, #tpu.memory_space<vmem>>, vector<1x64x32xbf16>
    %169 = vector.shape_cast %168 : vector<1x64x32xbf16> to vector<64x32xbf16>
    %cst_179 = arith.constant dense<0.000000e+00> : vector<2x32xf32>
    %170 = tpu.matmul %167, %169, %cst_179 {dimension_numbers = #tpu.dot_dimension_numbers<[1], [0], [0], [1], [0, 0, 1, 1], [], []>} : vector<2x64xbf16>, vector<64x32xbf16>, vector<2x32xf32> -> vector<2x32xf32>
    %171 = arith.addf %165, %170 : vector<2x32xf32>
    %c52_180 = arith.constant 52 : index
    %c0_181 = arith.constant 0 : index
    %172 = vector.load %arg17[%c52_180, %c0_181] : memref<160x64xf32, #tpu.memory_space<vmem>>, vector<2x64xf32>
    %173 = arith.truncf %172 : vector<2x64xf32> to vector<2x64xbf16>
    %c5_182 = arith.constant 5 : index
    %c0_183 = arith.constant 0 : index
    %c0_184 = arith.constant 0 : index
    %174 = vector.load %arg6[%c5_182, %c0_183, %c0_184] : memref<16x64x32xbf16, #tpu.memory_space<vmem>>, vector<1x64x32xbf16>
    %175 = vector.shape_cast %174 : vector<1x64x32xbf16> to vector<64x32xbf16>
    %cst_185 = arith.constant dense<0.000000e+00> : vector<2x32xf32>
    %176 = tpu.matmul %173, %175, %cst_185 {dimension_numbers = #tpu.dot_dimension_numbers<[1], [0], [0], [1], [0, 0, 1, 1], [], []>} : vector<2x64xbf16>, vector<64x32xbf16>, vector<2x32xf32> -> vector<2x32xf32>
    %177 = arith.addf %171, %176 : vector<2x32xf32>
    %c56 = arith.constant 56 : index
    %c0_186 = arith.constant 0 : index
    %178 = vector.load %arg17[%c56, %c0_186] : memref<160x64xf32, #tpu.memory_space<vmem>>, vector<2x64xf32>
    %179 = arith.truncf %178 : vector<2x64xf32> to vector<2x64xbf16>
    %c6_187 = arith.constant 6 : index
    %c0_188 = arith.constant 0 : index
    %c0_189 = arith.constant 0 : index
    %180 = vector.load %arg6[%c6_187, %c0_188, %c0_189] : memref<16x64x32xbf16, #tpu.memory_space<vmem>>, vector<1x64x32xbf16>
    %181 = vector.shape_cast %180 : vector<1x64x32xbf16> to vector<64x32xbf16>
    %cst_190 = arith.constant dense<0.000000e+00> : vector<2x32xf32>
    %182 = tpu.matmul %179, %181, %cst_190 {dimension_numbers = #tpu.dot_dimension_numbers<[1], [0], [0], [1], [0, 0, 1, 1], [], []>} : vector<2x64xbf16>, vector<64x32xbf16>, vector<2x32xf32> -> vector<2x32xf32>
    %183 = arith.addf %177, %182 : vector<2x32xf32>
    %c60 = arith.constant 60 : index
    %c0_191 = arith.constant 0 : index
    %184 = vector.load %arg17[%c60, %c0_191] : memref<160x64xf32, #tpu.memory_space<vmem>>, vector<2x64xf32>
    %185 = arith.truncf %184 : vector<2x64xf32> to vector<2x64xbf16>
    %c7_192 = arith.constant 7 : index
    %c0_193 = arith.constant 0 : index
    %c0_194 = arith.constant 0 : index
    %186 = vector.load %arg6[%c7_192, %c0_193, %c0_194] : memref<16x64x32xbf16, #tpu.memory_space<vmem>>, vector<1x64x32xbf16>
    %187 = vector.shape_cast %186 : vector<1x64x32xbf16> to vector<64x32xbf16>
    %cst_195 = arith.constant dense<0.000000e+00> : vector<2x32xf32>
    %188 = tpu.matmul %185, %187, %cst_195 {dimension_numbers = #tpu.dot_dimension_numbers<[1], [0], [0], [1], [0, 0, 1, 1], [], []>} : vector<2x64xbf16>, vector<64x32xbf16>, vector<2x32xf32> -> vector<2x32xf32>
    %189 = arith.addf %183, %188 : vector<2x32xf32>
    %c96_196 = arith.constant 96 : index
    %c0_197 = arith.constant 0 : index
    %190 = vector.load %arg17[%c96_196, %c0_197] : memref<160x64xf32, #tpu.memory_space<vmem>>, vector<2x64xf32>
    %191 = arith.truncf %190 : vector<2x64xf32> to vector<2x64xbf16>
    %c8_198 = arith.constant 8 : index
    %c0_199 = arith.constant 0 : index
    %c0_200 = arith.constant 0 : index
    %192 = vector.load %arg6[%c8_198, %c0_199, %c0_200] : memref<16x64x32xbf16, #tpu.memory_space<vmem>>, vector<1x64x32xbf16>
    %193 = vector.shape_cast %192 : vector<1x64x32xbf16> to vector<64x32xbf16>
    %cst_201 = arith.constant dense<0.000000e+00> : vector<2x32xf32>
    %194 = tpu.matmul %191, %193, %cst_201 {dimension_numbers = #tpu.dot_dimension_numbers<[1], [0], [0], [1], [0, 0, 1, 1], [], []>} : vector<2x64xbf16>, vector<64x32xbf16>, vector<2x32xf32> -> vector<2x32xf32>
    %195 = arith.addf %189, %194 : vector<2x32xf32>
    %c100 = arith.constant 100 : index
    %c0_202 = arith.constant 0 : index
    %196 = vector.load %arg17[%c100, %c0_202] : memref<160x64xf32, #tpu.memory_space<vmem>>, vector<2x64xf32>
    %197 = arith.truncf %196 : vector<2x64xf32> to vector<2x64xbf16>
    %c9 = arith.constant 9 : index
    %c0_203 = arith.constant 0 : index
    %c0_204 = arith.constant 0 : index
    %198 = vector.load %arg6[%c9, %c0_203, %c0_204] : memref<16x64x32xbf16, #tpu.memory_space<vmem>>, vector<1x64x32xbf16>
    %199 = vector.shape_cast %198 : vector<1x64x32xbf16> to vector<64x32xbf16>
    %cst_205 = arith.constant dense<0.000000e+00> : vector<2x32xf32>
    %200 = tpu.matmul %197, %199, %cst_205 {dimension_numbers = #tpu.dot_dimension_numbers<[1], [0], [0], [1], [0, 0, 1, 1], [], []>} : vector<2x64xbf16>, vector<64x32xbf16>, vector<2x32xf32> -> vector<2x32xf32>
    %201 = arith.addf %195, %200 : vector<2x32xf32>
    %c104 = arith.constant 104 : index
    %c0_206 = arith.constant 0 : index
    %202 = vector.load %arg17[%c104, %c0_206] : memref<160x64xf32, #tpu.memory_space<vmem>>, vector<2x64xf32>
    %203 = arith.truncf %202 : vector<2x64xf32> to vector<2x64xbf16>
    %c10 = arith.constant 10 : index
    %c0_207 = arith.constant 0 : index
    %c0_208 = arith.constant 0 : index
    %204 = vector.load %arg6[%c10, %c0_207, %c0_208] : memref<16x64x32xbf16, #tpu.memory_space<vmem>>, vector<1x64x32xbf16>
    %205 = vector.shape_cast %204 : vector<1x64x32xbf16> to vector<64x32xbf16>
    %cst_209 = arith.constant dense<0.000000e+00> : vector<2x32xf32>
    %206 = tpu.matmul %203, %205, %cst_209 {dimension_numbers = #tpu.dot_dimension_numbers<[1], [0], [0], [1], [0, 0, 1, 1], [], []>} : vector<2x64xbf16>, vector<64x32xbf16>, vector<2x32xf32> -> vector<2x32xf32>
    %207 = arith.addf %201, %206 : vector<2x32xf32>
    %c108_210 = arith.constant 108 : index
    %c0_211 = arith.constant 0 : index
    %208 = vector.load %arg17[%c108_210, %c0_211] : memref<160x64xf32, #tpu.memory_space<vmem>>, vector<2x64xf32>
    %209 = arith.truncf %208 : vector<2x64xf32> to vector<2x64xbf16>
    %c11 = arith.constant 11 : index
    %c0_212 = arith.constant 0 : index
    %c0_213 = arith.constant 0 : index
    %210 = vector.load %arg6[%c11, %c0_212, %c0_213] : memref<16x64x32xbf16, #tpu.memory_space<vmem>>, vector<1x64x32xbf16>
    %211 = vector.shape_cast %210 : vector<1x64x32xbf16> to vector<64x32xbf16>
    %cst_214 = arith.constant dense<0.000000e+00> : vector<2x32xf32>
    %212 = tpu.matmul %209, %211, %cst_214 {dimension_numbers = #tpu.dot_dimension_numbers<[1], [0], [0], [1], [0, 0, 1, 1], [], []>} : vector<2x64xbf16>, vector<64x32xbf16>, vector<2x32xf32> -> vector<2x32xf32>
    %213 = arith.addf %207, %212 : vector<2x32xf32>
    %c144_215 = arith.constant 144 : index
    %c0_216 = arith.constant 0 : index
    %214 = vector.load %arg17[%c144_215, %c0_216] : memref<160x64xf32, #tpu.memory_space<vmem>>, vector<2x64xf32>
    %215 = arith.truncf %214 : vector<2x64xf32> to vector<2x64xbf16>
    %c12_217 = arith.constant 12 : index
    %c0_218 = arith.constant 0 : index
    %c0_219 = arith.constant 0 : index
    %216 = vector.load %arg6[%c12_217, %c0_218, %c0_219] : memref<16x64x32xbf16, #tpu.memory_space<vmem>>, vector<1x64x32xbf16>
    %217 = vector.shape_cast %216 : vector<1x64x32xbf16> to vector<64x32xbf16>
    %cst_220 = arith.constant dense<0.000000e+00> : vector<2x32xf32>
    %218 = tpu.matmul %215, %217, %cst_220 {dimension_numbers = #tpu.dot_dimension_numbers<[1], [0], [0], [1], [0, 0, 1, 1], [], []>} : vector<2x64xbf16>, vector<64x32xbf16>, vector<2x32xf32> -> vector<2x32xf32>
    %219 = arith.addf %213, %218 : vector<2x32xf32>
    %c148 = arith.constant 148 : index
    %c0_221 = arith.constant 0 : index
    %220 = vector.load %arg17[%c148, %c0_221] : memref<160x64xf32, #tpu.memory_space<vmem>>, vector<2x64xf32>
    %221 = arith.truncf %220 : vector<2x64xf32> to vector<2x64xbf16>
    %c13 = arith.constant 13 : index
    %c0_222 = arith.constant 0 : index
    %c0_223 = arith.constant 0 : index
    %222 = vector.load %arg6[%c13, %c0_222, %c0_223] : memref<16x64x32xbf16, #tpu.memory_space<vmem>>, vector<1x64x32xbf16>
    %223 = vector.shape_cast %222 : vector<1x64x32xbf16> to vector<64x32xbf16>
    %cst_224 = arith.constant dense<0.000000e+00> : vector<2x32xf32>
    %224 = tpu.matmul %221, %223, %cst_224 {dimension_numbers = #tpu.dot_dimension_numbers<[1], [0], [0], [1], [0, 0, 1, 1], [], []>} : vector<2x64xbf16>, vector<64x32xbf16>, vector<2x32xf32> -> vector<2x32xf32>
    %225 = arith.addf %219, %224 : vector<2x32xf32>
    %c152 = arith.constant 152 : index
    %c0_225 = arith.constant 0 : index
    %226 = vector.load %arg17[%c152, %c0_225] : memref<160x64xf32, #tpu.memory_space<vmem>>, vector<2x64xf32>
    %227 = arith.truncf %226 : vector<2x64xf32> to vector<2x64xbf16>
    %c14 = arith.constant 14 : index
    %c0_226 = arith.constant 0 : index
    %c0_227 = arith.constant 0 : index
    %228 = vector.load %arg6[%c14, %c0_226, %c0_227] : memref<16x64x32xbf16, #tpu.memory_space<vmem>>, vector<1x64x32xbf16>
    %229 = vector.shape_cast %228 : vector<1x64x32xbf16> to vector<64x32xbf16>
    %cst_228 = arith.constant dense<0.000000e+00> : vector<2x32xf32>
    %230 = tpu.matmul %227, %229, %cst_228 {dimension_numbers = #tpu.dot_dimension_numbers<[1], [0], [0], [1], [0, 0, 1, 1], [], []>} : vector<2x64xbf16>, vector<64x32xbf16>, vector<2x32xf32> -> vector<2x32xf32>
    %231 = arith.addf %225, %230 : vector<2x32xf32>
    %c156 = arith.constant 156 : index
    %c0_229 = arith.constant 0 : index
    %232 = vector.load %arg17[%c156, %c0_229] : memref<160x64xf32, #tpu.memory_space<vmem>>, vector<2x64xf32>
    %233 = arith.truncf %232 : vector<2x64xf32> to vector<2x64xbf16>
    %c15 = arith.constant 15 : index
    %c0_230 = arith.constant 0 : index
    %c0_231 = arith.constant 0 : index
    %234 = vector.load %arg6[%c15, %c0_230, %c0_231] : memref<16x64x32xbf16, #tpu.memory_space<vmem>>, vector<1x64x32xbf16>
    %235 = vector.shape_cast %234 : vector<1x64x32xbf16> to vector<64x32xbf16>
    %cst_232 = arith.constant dense<0.000000e+00> : vector<2x32xf32>
    %236 = tpu.matmul %233, %235, %cst_232 {dimension_numbers = #tpu.dot_dimension_numbers<[1], [0], [0], [1], [0, 0, 1, 1], [], []>} : vector<2x64xbf16>, vector<64x32xbf16>, vector<2x32xf32> -> vector<2x32xf32>
    %237 = arith.addf %231, %236 : vector<2x32xf32>
    %cst_233 = arith.constant 0.000000e+00 : f32
    %238 = vector.broadcast %cst_233 : f32 to vector<2x32xf32>
    %239 = arith.maximumf %237, %238 : vector<2x32xf32>
    %240 = arith.truncf %239 : vector<2x32xf32> to vector<2x32xbf16>
    %c0_234 = arith.constant 0 : index
    %c0_235 = arith.constant 0 : index
    %241 = vector.load %arg8[%c0_234, %c0_235] : memref<32x7xbf16, #tpu.memory_space<vmem>>, vector<32x7xbf16>
    %cst_236 = arith.constant dense<0.000000e+00> : vector<2x7xf32>
    %242 = tpu.matmul %240, %241, %cst_236 {dimension_numbers = #tpu.dot_dimension_numbers<[1], [0], [0], [1], [0, 0, 1, 1], [], []>} : vector<2x32xbf16>, vector<32x7xbf16>, vector<2x7xf32> -> vector<2x7xf32>
    %c0_237 = arith.constant 0 : index
    %c0_238 = arith.constant 0 : index
    %243 = vector.load %arg9[%c0_237, %c0_238] : memref<1x7xf32, #tpu.memory_space<vmem>>, vector<1x7xf32>
    %244 = vector.broadcast %243 : vector<1x7xf32> to vector<2x7xf32>
    %245 = arith.addf %242, %244 : vector<2x7xf32>
    %c0_239 = arith.constant 0 : index
    %c0_240 = arith.constant 0 : index
    %246 = vector.load %arg10[%c0_239, %c0_240] : memref<2x7xf32, #tpu.memory_space<vmem>>, vector<2x7xf32>
    tpu.vector_store %arg10[%c0_239, %c0_240], %245 {strides = array<i32>} : memref<2x7xf32, #tpu.memory_space<vmem>>, vector<2x7xf32>,
    return
  }
}

</mosaic_0001>

<llo_original>
// kernel: neural_net_forward.1
$region0: #{neural_net_forward.1}
  #allocation0 [shape = 'u32[]', space=smem, size = 0x4, offset = 0x4, fixed_abs, tag = 'smem constant byte address 0x4 - core index']
  #allocation1 [shape = 'u32[144,128]{1,0:T(1,128)}', space=vmem, size = 0x12000, scoped, tag = 'internal scratch']
  #allocation2 [shape = 'f32[1360,32]{1,0:T(8,128)}', space=vmem, size = 0xaa000, scoped, tag = 'scratch operand']
  #allocation3 [shape = 'f32[1352,32]{1,0:T(8,128)}', space=vmem, size = 0xa9000, scoped, tag = 'scratch operand']
  #allocation4 [shape = 'f32[1240,32]{1,0:T(8,128)}', space=vmem, size = 0x9b000, scoped, tag = 'scratch operand']
  #allocation5 [shape = 'f32[288,32]{1,0:T(8,128)}', space=vmem, size = 0x24000, scoped, tag = 'scratch operand']
  #allocation6 [shape = 'f32[216,64]{1,0:T(8,128)}', space=vmem, size = 0x1b000, scoped, tag = 'scratch operand']
  #allocation7 [shape = 'f32[208,64]{1,0:T(8,128)}', space=vmem, size = 0x1a000, scoped, tag = 'scratch operand']
  #allocation8 [shape = 'f32[160,64]{1,0:T(8,128)}', space=vmem, size = 0x14000, scoped, tag = 'scratch operand']
  %s0 = inlined_call_operand.vmem [shape: bf16[1360,32], index: 0, kind: input, shape index: {}]
  %s1 = inlined_call_operand.vmem [shape: bf16[32,32], index: 1, kind: input, shape index: {}]
  %s2 = inlined_call_operand.vmem [shape: f32[1,32], index: 2, kind: input, shape index: {}]
  %s3 = inlined_call_operand.vmem [shape: bf16[9,32,64], index: 3, kind: input, shape index: {}]
  %s4 = inlined_call_operand.vmem [shape: f32[1,64], index: 4, kind: input, shape index: {}]
  %s5 = inlined_call_operand.vmem [shape: f32[24,48], index: 5, kind: input, shape index: {}]
  %s6 = inlined_call_operand.vmem [shape: bf16[16,64,32], index: 6, kind: input, shape index: {}]
  %s7 = inlined_call_operand.vmem [shape: f32[1,32], index: 7, kind: input, shape index: {}]
  %s8 = inlined_call_operand.vmem [shape: bf16[32,7], index: 8, kind: input, shape index: {}]
  %s9 = inlined_call_operand.vmem [shape: f32[1,7], index: 9, kind: input, shape index: {}]
  %s10 = inlined_call_operand.hbm [shape: f32[2,7], index: 10, kind: output, shape index: {}]
  %s11 = sld [smem:[#allocation0]]
  $region50: #{neural_net_forward.1} parent=0
    _
  %s13 = ssub.s32 1, %s11
  %s14 = scalar_select 0, %s13, %s11
  $region1: #{neural_net_forward.1} parent=0
    #allocation9 [shape = 'u8[1024]{0}', space=vmem, size = 0x400, scoped, tag = 'output window, operand 0, single buffered']
    #allocation10 [shape = 's32[1]{0}', space=sflag, size = 0x4, scoped, tag = 'scoped memory for neural_net_forward.1']
    %15 = vsyncpa [#allocation10], 0
    // Predicated region
    $region2: #{neural_net_forward.1} parent=1 // pred_check
      _
    $region3: #{neural_net_forward.1} parent=1 // pred_check_branch
      %17 = sbr.rel (0) target = $region5
    $region4: #{neural_net_forward.1} parent=1 // pred_region
      _
    $region5: #{neural_net_forward.1} parent=1 // pred_fallthru
      _
    // Predicated region
    $region6: #{neural_net_forward.1} parent=1 // pred_check
      _
    $region7: #{neural_net_forward.1} parent=1 // pred_check_branch
      %19 = sbr.rel (0) target = $region9
    $region8: #{neural_net_forward.1} parent=1 // pred_region
      _
    $region9: #{neural_net_forward.1} parent=1 // pred_fallthru
      _
    // Predicated region
    $region10: #{neural_net_forward.1} parent=1 // pred_check
      _
    $region11: #{neural_net_forward.1} parent=1 // pred_check_branch
      %21 = sbr.rel (0) target = $region13
    $region12: #{neural_net_forward.1} parent=1 // pred_region
      _
    $region13: #{neural_net_forward.1} parent=1 // pred_fallthru
      _
    // Predicated region
    $region14: #{neural_net_forward.1} parent=1 // pred_check
      _
    $region15: #{neural_net_forward.1} parent=1 // pred_check_branch
      %23 = sbr.rel (0) target = $region17
    $region16: #{neural_net_forward.1} parent=1 // pred_region
      _
    $region17: #{neural_net_forward.1} parent=1 // pred_fallthru
      _
    // Predicated region
    $region18: #{neural_net_forward.1} parent=1 // pred_check
      _
    $region19: #{neural_net_forward.1} parent=1 // pred_check_branch
      %25 = sbr.rel (0) target = $region21
    $region20: #{neural_net_forward.1} parent=1 // pred_region
      _
    $region21: #{neural_net_forward.1} parent=1 // pred_fallthru
      _
    // Predicated region
    $region22: #{neural_net_forward.1} parent=1 // pred_check
      _
    $region23: #{neural_net_forward.1} parent=1 // pred_check_branch
      %27 = sbr.rel (0) target = $region25
    $region24: #{neural_net_forward.1} parent=1 // pred_region
      _
    $region25: #{neural_net_forward.1} parent=1 // pred_fallthru
      _
    // Predicated region
    $region26: #{neural_net_forward.1} parent=1 // pred_check
      _
    $region27: #{neural_net_forward.1} parent=1 // pred_check_branch
      %29 = sbr.rel (0) target = $region29
    $region28: #{neural_net_forward.1} parent=1 // pred_region
      _
    $region29: #{neural_net_forward.1} parent=1 // pred_fallthru
      _
    // Predicated region
    $region30: #{neural_net_forward.1} parent=1 // pred_check
      _
    $region31: #{neural_net_forward.1} parent=1 // pred_check_branch
      %31 = sbr.rel (0) target = $region33
    $region32: #{neural_net_forward.1} parent=1 // pred_region
      _
    $region33: #{neural_net_forward.1} parent=1 // pred_fallthru
      _
    // Predicated region
    $region34: #{neural_net_forward.1} parent=1 // pred_check
      _
    $region35: #{neural_net_forward.1} parent=1 // pred_check_branch
      %33 = sbr.rel (0) target = $region37
    $region36: #{neural_net_forward.1} parent=1 // pred_region
      _
    $region37: #{neural_net_forward.1} parent=1 // pred_fallthru
      _
    // Predicated region
    $region38: #{neural_net_forward.1} parent=1 // pred_check
      _
    $region39: #{neural_net_forward.1} parent=1 // pred_check_branch
      %35 = sbr.rel (0) target = $region41
    $region40: #{neural_net_forward.1} parent=1 // pred_region
      _
    $region41: #{neural_net_forward.1} parent=1 // pred_fallthru
      _
    %v37 = vld [vmem:[%s0] sm:$0xf]
    %v38 = vld [vmem:[%s0 + $0x4] sm:$0xf]
    %v39 = vld [vmem:[%s0 + $0x8] sm:$0xf]
    %v40 = vld [vmem:[%s0 + $0xc] sm:$0xf]
    %v41 = vld [vmem:[%s0 + $0x10] sm:$0xf]
    %v42 = vld [vmem:[%s0 + $0x14] sm:$0xf]
    %v43 = vld [vmem:[%s0 + $0x18] sm:$0xf]
    %v44 = vld [vmem:[%s0 + $0x1c] sm:$0xf]
    %v45 = vld [vmem:[%s0 + $0x20] sm:$0xf]
    %v46 = vld [vmem:[%s0 + $0x24] sm:$0xf]
    %v47 = vld [vmem:[%s0 + $0x28] sm:$0xf]
    %v48 = vld [vmem:[%s0 + $0x2c] sm:$0xf]
    %v49 = vld [vmem:[%s0 + $0x30] sm:$0xf]
    %v50 = vld [vmem:[%s0 + $0x34] sm:$0xf]
    %v51 = vld [vmem:[%s0 + $0x38] sm:$0xf]
    %v52 = vld [vmem:[%s0 + $0x3c] sm:$0xf]
    %v53 = vld [vmem:[%s0 + $0x40] sm:$0xf]
    %v54 = vld [vmem:[%s0 + $0x44] sm:$0xf]
    %v55 = vld [vmem:[%s0 + $0x48] sm:$0xf]
    %v56 = vld [vmem:[%s0 + $0x4c] sm:$0xf]
    %v57 = vld [vmem:[%s0 + $0x50] sm:$0xf]
    %v58 = vld [vmem:[%s0 + $0x54] sm:$0xf]
    %v59 = vld [vmem:[%s0 + $0x58] sm:$0xf]
    %v60 = vld [vmem:[%s0 + $0x5c] sm:$0xf]
    %v61 = vld [vmem:[%s0 + $0x60] sm:$0xf]
    %v62 = vld [vmem:[%s0 + $0x64] sm:$0xf]
    %v63 = vld [vmem:[%s0 + $0x68] sm:$0xf]
    %v64 = vld [vmem:[%s0 + $0x6c] sm:$0xf]
    %v65 = vld [vmem:[%s0 + $0x70] sm:$0xf]
    %v66 = vld [vmem:[%s0 + $0x74] sm:$0xf]
    %v67 = vld [vmem:[%s0 + $0x78] sm:$0xf]
    %v68 = vld [vmem:[%s0 + $0x7c] sm:$0xf]
    %v69 = vld [vmem:[%s0 + $0x80] sm:$0xf]
    %v70 = vld [vmem:[%s0 + $0x84] sm:$0xf]
    %v71 = vld [vmem:[%s0 + $0x88] sm:$0xf]
    %v72 = vld [vmem:[%s0 + $0x8c] sm:$0xf]
    %v73 = vld [vmem:[%s0 + $0x90] sm:$0xf]
    %v74 = vld [vmem:[%s0 + $0x94] sm:$0xf]
    %v75 = vld [vmem:[%s0 + $0x98] sm:$0xf]
    %v76 = vld [vmem:[%s0 + $0x9c] sm:$0xf]
    %v77 = vld [vmem:[%s0 + $0xa0] sm:$0xf]
    %v78 = vld [vmem:[%s0 + $0xa4] sm:$0xf]
    %v79 = vld [vmem:[%s0 + $0xa8] sm:$0xf]
    %v80 = vld [vmem:[%s0 + $0xac] sm:$0xf]
    %v81 = vld [vmem:[%s0 + $0xb0] sm:$0xf]
    %v82 = vld [vmem:[%s0 + $0xb4] sm:$0xf]
    %v83 = vld [vmem:[%s0 + $0xb8] sm:$0xf]
    %v84 = vld [vmem:[%s0 + $0xbc] sm:$0xf]
    %v85 = vld [vmem:[%s0 + $0xc0] sm:$0xf]
    %v86 = vld [vmem:[%s0 + $0xc4] sm:$0xf]
    %v87 = vld [vmem:[%s0 + $0xc8] sm:$0xf]
    %v88 = vld [vmem:[%s0 + $0xcc] sm:$0xf]
    %v89 = vld [vmem:[%s0 + $0xd0] sm:$0xf]
    %v90 = vld [vmem:[%s0 + $0xd4] sm:$0xf]
    %v91 = vld [vmem:[%s0 + $0xd8] sm:$0xf]
    %v92 = vld [vmem:[%s0 + $0xdc] sm:$0xf]
    %v93 = vld [vmem:[%s0 + $0xe0] sm:$0xf]
    %v94 = vld [vmem:[%s0 + $0xe4] sm:$0xf]
    %v95 = vld [vmem:[%s0 + $0xe8] sm:$0xf]
    %v96 = vld [vmem:[%s0 + $0xec] sm:$0xf]
    %v97 = vld [vmem:[%s0 + $0xf0] sm:$0xf]
    %v98 = vld [vmem:[%s0 + $0xf4] sm:$0xf]
    %v99 = vld [vmem:[%s0 + $0xf8] sm:$0xf]
    %v100 = vld [vmem:[%s0 + $0xfc] sm:$0xf]
    %v101 = vld [vmem:[%s0 + $0x100] sm:$0xf]
    %v102 = vld [vmem:[%s0 + $0x104] sm:$0xf]
    %v103 = vld [vmem:[%s0 + $0x108] sm:$0xf]
    %v104 = vld [vmem:[%s0 + $0x10c] sm:$0xf]
    %v105 = vld [vmem:[%s0 + $0x110] sm:$0xf]
    %v106 = vld [vmem:[%s0 + $0x114] sm:$0xf]
    %v107 = vld [vmem:[%s0 + $0x118] sm:$0xf]
    %v108 = vld [vmem:[%s0 + $0x11c] sm:$0xf]
    %v109 = vld [vmem:[%s0 + $0x120] sm:$0xf]
    %v110 = vld [vmem:[%s0 + $0x124] sm:$0xf]
    %v111 = vld [vmem:[%s0 + $0x128] sm:$0xf]
    %v112 = vld [vmem:[%s0 + $0x12c] sm:$0xf]
    %v113 = vld [vmem:[%s0 + $0x130] sm:$0xf]
    %v114 = vld [vmem:[%s0 + $0x134] sm:$0xf]
    %v115 = vld [vmem:[%s0 + $0x138] sm:$0xf]
    %v116 = vld [vmem:[%s0 + $0x13c] sm:$0xf]
    %v117 = vld [vmem:[%s0 + $0x140] sm:$0xf]
    %v118 = vld [vmem:[%s0 + $0x144] sm:$0xf]
    %v119 = vld [vmem:[%s0 + $0x148] sm:$0xf]
    %v120 = vld [vmem:[%s0 + $0x14c] sm:$0xf]
    %v121 = vld [vmem:[%s0 + $0x150] sm:$0xf]
    %v122 = vld [vmem:[%s0 + $0x154] sm:$0xf]
    %v123 = vld [vmem:[%s0 + $0x158] sm:$0xf]
    %v124 = vld [vmem:[%s0 + $0x15c] sm:$0xf]
    %v125 = vld [vmem:[%s0 + $0x160] sm:$0xf]
    %v126 = vld [vmem:[%s0 + $0x164] sm:$0xf]
    %v127 = vld [vmem:[%s0 + $0x168] sm:$0xf]
    %v128 = vld [vmem:[%s0 + $0x16c] sm:$0xf]
    %v129 = vld [vmem:[%s0 + $0x170] sm:$0xf]
    %v130 = vld [vmem:[%s0 + $0x174] sm:$0xf]
    %v131 = vld [vmem:[%s0 + $0x178] sm:$0xf]
    %v132 = vld [vmem:[%s0 + $0x17c] sm:$0xf]
    %v133 = vld [vmem:[%s0 + $0x180] sm:$0xf]
    %v134 = vld [vmem:[%s0 + $0x184] sm:$0xf]
    %v135 = vld [vmem:[%s0 + $0x188] sm:$0xf]
    %v136 = vld [vmem:[%s0 + $0x18c] sm:$0xf]
    %v137 = vld [vmem:[%s0 + $0x190] sm:$0xf]
    %v138 = vld [vmem:[%s0 + $0x194] sm:$0xf]
    %v139 = vld [vmem:[%s0 + $0x198] sm:$0xf]
    %v140 = vld [vmem:[%s0 + $0x19c] sm:$0xf]
    %v141 = vld [vmem:[%s0 + $0x1a0] sm:$0xf]
    %v142 = vld [vmem:[%s0 + $0x1a4] sm:$0xf]
    %v143 = vld [vmem:[%s0 + $0x1a8] sm:$0xf]
    %v144 = vld [vmem:[%s0 + $0x1ac] sm:$0xf]
    %v145 = vld [vmem:[%s0 + $0x1b0] sm:$0xf]
    %v146 = vld [vmem:[%s0 + $0x1b4] sm:$0xf]
    %v147 = vld [vmem:[%s0 + $0x1b8] sm:$0xf]
    %v148 = vld [vmem:[%s0 + $0x1bc] sm:$0xf]
    %v149 = vld [vmem:[%s0 + $0x1c0] sm:$0xf]
    %v150 = vld [vmem:[%s0 + $0x1c4] sm:$0xf]
    %v151 = vld [vmem:[%s0 + $0x1c8] sm:$0xf]
    %v152 = vld [vmem:[%s0 + $0x1cc] sm:$0xf]
    %v153 = vld [vmem:[%s0 + $0x1d0] sm:$0xf]
    %v154 = vld [vmem:[%s0 + $0x1d4] sm:$0xf]
    %v155 = vld [vmem:[%s0 + $0x1d8] sm:$0xf]
    %v156 = vld [vmem:[%s0 + $0x1dc] sm:$0xf]
    %v157 = vld [vmem:[%s0 + $0x1e0] sm:$0xf]
    %v158 = vld [vmem:[%s0 + $0x1e4] sm:$0xf]
    %v159 = vld [vmem:[%s0 + $0x1e8] sm:$0xf]
    %v160 = vld [vmem:[%s0 + $0x1ec] sm:$0xf]
    %v161 = vld [vmem:[%s0 + $0x1f0] sm:$0xf]
    %v162 = vld [vmem:[%s0 + $0x1f4] sm:$0xf]
    %v163 = vld [vmem:[%s0 + $0x1f8] sm:$0xf]
    %v164 = vld [vmem:[%s0 + $0x1fc] sm:$0xf]
    %v165 = vld [vmem:[%s0 + $0x200] sm:$0xf]
    %v166 = vld [vmem:[%s0 + $0x204] sm:$0xf]
    %v167 = vld [vmem:[%s0 + $0x208] sm:$0xf]
    %v168 = vld [vmem:[%s0 + $0x20c] sm:$0xf]
    %v169 = vld [vmem:[%s0 + $0x210] sm:$0xf]
    %v170 = vld [vmem:[%s0 + $0x214] sm:$0xf]
    %v171 = vld [vmem:[%s0 + $0x218] sm:$0xf]
    %v172 = vld [vmem:[%s0 + $0x21c] sm:$0xf]
    %v173 = vld [vmem:[%s0 + $0x220] sm:$0xf]
    %v174 = vld [vmem:[%s0 + $0x224] sm:$0xf]
    %v175 = vld [vmem:[%s0 + $0x228] sm:$0xf]
    %v176 = vld [vmem:[%s0 + $0x22c] sm:$0xf]
    %v177 = vld [vmem:[%s0 + $0x230] sm:$0xf]
    %v178 = vld [vmem:[%s0 + $0x234] sm:$0xf]
    %v179 = vld [vmem:[%s0 + $0x238] sm:$0xf]
    %v180 = vld [vmem:[%s0 + $0x23c] sm:$0xf]
    %v181 = vld [vmem:[%s0 + $0x240] sm:$0xf]
    %v182 = vld [vmem:[%s0 + $0x244] sm:$0xf]
    %v183 = vld [vmem:[%s0 + $0x248] sm:$0xf]
    %v184 = vld [vmem:[%s0 + $0x24c] sm:$0xf]
    %v185 = vld [vmem:[%s0 + $0x250] sm:$0xf]
    %v186 = vld [vmem:[%s0 + $0x254] sm:$0xf]
    %v187 = vld [vmem:[%s0 + $0x258] sm:$0xf]
    %v188 = vld [vmem:[%s0 + $0x25c] sm:$0xf]
    %v189 = vld [vmem:[%s0 + $0x260] sm:$0xf]
    %v190 = vld [vmem:[%s0 + $0x264] sm:$0xf]
    %v191 = vld [vmem:[%s0 + $0x268] sm:$0xf]
    %v192 = vld [vmem:[%s0 + $0x26c] sm:$0xf]
    %v193 = vld [vmem:[%s0 + $0x270] sm:$0xf]
    %v194 = vld [vmem:[%s0 + $0x274] sm:$0xf]
    %v195 = vld [vmem:[%s0 + $0x278] sm:$0xf]
    %v196 = vld [vmem:[%s0 + $0x27c] sm:$0xf]
    %v197 = vld [vmem:[%s0 + $0x280] sm:$0xf]
    %v198 = vld [vmem:[%s0 + $0x284] sm:$0xf]
    %v199 = vld [vmem:[%s0 + $0x288] sm:$0xf]
    %v200 = vld [vmem:[%s0 + $0x28c] sm:$0xf]
    %v201 = vld [vmem:[%s0 + $0x290] sm:$0xf]
    %v202 = vld [vmem:[%s0 + $0x294] sm:$0xf]
    %v203 = vld [vmem:[%s0 + $0x298] sm:$0xf]
    %v204 = vld [vmem:[%s0 + $0x29c] sm:$0xf]
    %v205 = vld [vmem:[%s0 + $0x2a0] sm:$0xf]
    %v206 = vld [vmem:[%s0 + $0x2a4] sm:$0xf]
    %v207 = vld [vmem:[%s1] sm:$0xf]
    %v208 = vld [vmem:[%s1 + $0x4] sm:$0xf]
    %v209 = vld [vmem:[%s1 + $0x8] sm:$0xf]
    %v210 = vld [vmem:[%s1 + $0xc] sm:$0xf]
    %v211 = vld [vmem:[%s2] sm:$0x1]
    %v213 = vlaneseq
    %v214 = vshrl.u32 %v213, 7
    %v215 = vsub.s32 0, %v214
    %v216 = vrot.slane %v211, %v215
    %v388 = vunpack.c.l.b16 %v37
    %v389 = vunpack.c.l.b16 %v38
    %v390 = vunpack.c.l.b16 %v39
    %v391 = vunpack.c.l.b16 %v40
    %v392 = vunpack.c.l.b16 %v41
    %v393 = vunpack.c.l.b16 %v42
    %v394 = vunpack.c.l.b16 %v43
    %v395 = vunpack.c.l.b16 %v44
    %v396 = vunpack.c.l.b16 %v45
    %v397 = vunpack.c.l.b16 %v46
    %v398 = vunpack.c.l.b16 %v47
    %v399 = vunpack.c.l.b16 %v48
    %v400 = vunpack.c.l.b16 %v49
    %v401 = vunpack.c.l.b16 %v50
    %v402 = vunpack.c.l.b16 %v51
    %v403 = vunpack.c.l.b16 %v52
    %v404 = vunpack.c.l.b16 %v53
    %v405 = vunpack.c.l.b16 %v54
    %v406 = vunpack.c.l.b16 %v55
    %v407 = vunpack.c.l.b16 %v56
    %v408 = vunpack.c.l.b16 %v57
    %v409 = vunpack.c.l.b16 %v58
    %v410 = vunpack.c.l.b16 %v59
    %v411 = vunpack.c.l.b16 %v60
    %v412 = vunpack.c.l.b16 %v61
    %v413 = vunpack.c.l.b16 %v62
    %v414 = vunpack.c.l.b16 %v63
    %v415 = vunpack.c.l.b16 %v64
    %v416 = vunpack.c.l.b16 %v65
    %v417 = vunpack.c.l.b16 %v66
    %v418 = vunpack.c.l.b16 %v67
    %v419 = vunpack.c.l.b16 %v68
    %v420 = vunpack.c.l.b16 %v69
    %v421 = vunpack.c.l.b16 %v70
    %v422 = vunpack.c.l.b16 %v71
    %v423 = vunpack.c.l.b16 %v72
    %v424 = vunpack.c.l.b16 %v73
    %v425 = vunpack.c.l.b16 %v74
    %v426 = vunpack.c.l.b16 %v75
    %v427 = vunpack.c.l.b16 %v76
    %v428 = vunpack.c.l.b16 %v77
    %v429 = vunpack.c.l.b16 %v78
    %v430 = vunpack.c.l.b16 %v79
    %v431 = vunpack.c.l.b16 %v80
    %v432 = vunpack.c.l.b16 %v81
    %v433 = vunpack.c.l.b16 %v82
    %v434 = vunpack.c.l.b16 %v83
    %v435 = vunpack.c.l.b16 %v84
    %v436 = vunpack.c.l.b16 %v85
    %v437 = vunpack.c.l.b16 %v86
    %v438 = vunpack.c.l.b16 %v87
    %v439 = vunpack.c.l.b16 %v88
    %v440 = vunpack.c.l.b16 %v89
    %v441 = vunpack.c.l.b16 %v90
    %v442 = vunpack.c.l.b16 %v91
    %v443 = vunpack.c.l.b16 %v92
    %v444 = vunpack.c.l.b16 %v93
    %v445 = vunpack.c.l.b16 %v94
    %v446 = vunpack.c.l.b16 %v95
    %v447 = vunpack.c.l.b16 %v96
    %v448 = vunpack.c.l.b16 %v97
    %v449 = vunpack.c.l.b16 %v98
    %v450 = vunpack.c.l.b16 %v99
    %v451 = vunpack.c.l.b16 %v100
    %v452 = vunpack.c.l.b16 %v101
    %v453 = vunpack.c.l.b16 %v102
    %v454 = vunpack.c.l.b16 %v103
    %v455 = vunpack.c.l.b16 %v104
    %v456 = vunpack.c.l.b16 %v105
    %v457 = vunpack.c.l.b16 %v106
    %v458 = vunpack.c.l.b16 %v107
    %v459 = vunpack.c.l.b16 %v108
    %v460 = vunpack.c.l.b16 %v109
    %v461 = vunpack.c.l.b16 %v110
    %v462 = vunpack.c.l.b16 %v111
    %v463 = vunpack.c.l.b16 %v112
    %v464 = vunpack.c.l.b16 %v113
    %v465 = vunpack.c.l.b16 %v114
    %v466 = vunpack.c.l.b16 %v115
    %v467 = vunpack.c.l.b16 %v116
    %v468 = vunpack.c.l.b16 %v117
    %v469 = vunpack.c.l.b16 %v118
    %v470 = vunpack.c.l.b16 %v119
    %v471 = vunpack.c.l.b16 %v120
    %v472 = vunpack.c.l.b16 %v121
    %v473 = vunpack.c.l.b16 %v122
    %v474 = vunpack.c.l.b16 %v123
    %v475 = vunpack.c.l.b16 %v124
    %v476 = vunpack.c.l.b16 %v125
    %v477 = vunpack.c.l.b16 %v126
    %v478 = vunpack.c.l.b16 %v127
    %v479 = vunpack.c.l.b16 %v128
    %v480 = vunpack.c.l.b16 %v129
    %v481 = vunpack.c.l.b16 %v130
    %v482 = vunpack.c.l.b16 %v131
    %v483 = vunpack.c.l.b16 %v132
    %v484 = vunpack.c.l.b16 %v133
    %v485 = vunpack.c.l.b16 %v134
    %v486 = vunpack.c.l.b16 %v135
    %v487 = vunpack.c.l.b16 %v136
    %v488 = vunpack.c.l.b16 %v137
    %v489 = vunpack.c.l.b16 %v138
    %v490 = vunpack.c.l.b16 %v139
    %v491 = vunpack.c.l.b16 %v140
    %v492 = vunpack.c.l.b16 %v141
    %v493 = vunpack.c.l.b16 %v142
    %v494 = vunpack.c.l.b16 %v143
    %v495 = vunpack.c.l.b16 %v144
    %v496 = vunpack.c.l.b16 %v145
    %v497 = vunpack.c.l.b16 %v146
    %v498 = vunpack.c.l.b16 %v147
    %v499 = vunpack.c.l.b16 %v148
    %v500 = vunpack.c.l.b16 %v149
    %v501 = vunpack.c.l.b16 %v150
    %v502 = vunpack.c.l.b16 %v151
    %v503 = vunpack.c.l.b16 %v152
    %v504 = vunpack.c.l.b16 %v153
    %v505 = vunpack.c.l.b16 %v154
    %v506 = vunpack.c.l.b16 %v155
    %v507 = vunpack.c.l.b16 %v156
    %v508 = vunpack.c.l.b16 %v157
    %v509 = vunpack.c.l.b16 %v158
    %v510 = vunpack.c.l.b16 %v159
    %v511 = vunpack.c.l.b16 %v160
    %v512 = vunpack.c.l.b16 %v161
    %v513 = vunpack.c.l.b16 %v162
    %v514 = vunpack.c.l.b16 %v163
    %v515 = vunpack.c.l.b16 %v164
    %v516 = vunpack.c.l.b16 %v165
    %v517 = vunpack.c.l.b16 %v166
    %v518 = vunpack.c.l.b16 %v167
    %v519 = vunpack.c.l.b16 %v168
    %v520 = vunpack.c.l.b16 %v169
    %v521 = vunpack.c.l.b16 %v170
    %v522 = vunpack.c.l.b16 %v171
    %v523 = vunpack.c.l.b16 %v172
    %v524 = vunpack.c.l.b16 %v173
    %v525 = vunpack.c.l.b16 %v174
    %v526 = vunpack.c.l.b16 %v175
    %v527 = vunpack.c.l.b16 %v176
    %v528 = vunpack.c.l.b16 %v177
    %v529 = vunpack.c.l.b16 %v178
    %v530 = vunpack.c.l.b16 %v179
    %v531 = vunpack.c.l.b16 %v180
    %v532 = vunpack.c.l.b16 %v181
    %v533 = vunpack.c.l.b16 %v182
    %v534 = vunpack.c.l.b16 %v183
    %v535 = vunpack.c.l.b16 %v184
    %v536 = vunpack.c.l.b16 %v185
    %v537 = vunpack.c.l.b16 %v186
    %v538 = vunpack.c.l.b16 %v187
    %v539 = vunpack.c.l.b16 %v188
    %v540 = vunpack.c.l.b16 %v189
    %v541 = vunpack.c.l.b16 %v190
    %v542 = vunpack.c.l.b16 %v191
    %v543 = vunpack.c.l.b16 %v192
    %v544 = vunpack.c.l.b16 %v193
    %v545 = vunpack.c.l.b16 %v194
    %v546 = vunpack.c.l.b16 %v195
    %v547 = vunpack.c.l.b16 %v196
    %v548 = vunpack.c.l.b16 %v197
    %v549 = vunpack.c.l.b16 %v198
    %v550 = vunpack.c.l.b16 %v199
    %v551 = vunpack.c.l.b16 %v200
    %v552 = vunpack.c.l.b16 %v201
    %v553 = vunpack.c.l.b16 %v202
    %v554 = vunpack.c.l.b16 %v203
    %v555 = vunpack.c.l.b16 %v204
    %v556 = vunpack.c.l.b16 %v205
    %v557 = vunpack.c.l.b16 %v206
    %v558 = vpack.c.b16 %v389, %v388
    %v559 = vpack.c.b16 %v391, %v390
    %v560 = vpack.c.b16 %v393, %v392
    %v561 = vpack.c.b16 %v395, %v394
    %v562 = vpack.c.b16 %v397, %v396
    %v563 = vpack.c.b16 %v399, %v398
    %v564 = vpack.c.b16 %v401, %v400
    %v565 = vpack.c.b16 %v403, %v402
    %v566 = vpack.c.b16 %v405, %v404
    %v567 = vpack.c.b16 %v407, %v406
    %v568 = vpack.c.b16 %v409, %v408
    %v569 = vpack.c.b16 %v411, %v410
    %v570 = vpack.c.b16 %v413, %v412
    %v571 = vpack.c.b16 %v415, %v414
    %v572 = vpack.c.b16 %v417, %v416
    %v573 = vpack.c.b16 %v419, %v418
    %v574 = vpack.c.b16 %v421, %v420
    %v575 = vpack.c.b16 %v423, %v422
    %v576 = vpack.c.b16 %v425, %v424
    %v577 = vpack.c.b16 %v427, %v426
    %v578 = vpack.c.b16 %v429, %v428
    %v579 = vpack.c.b16 %v431, %v430
    %v580 = vpack.c.b16 %v433, %v432
    %v581 = vpack.c.b16 %v435, %v434
    %v582 = vpack.c.b16 %v437, %v436
    %v583 = vpack.c.b16 %v439, %v438
    %v584 = vpack.c.b16 %v441, %v440
    %v585 = vpack.c.b16 %v443, %v442
    %v586 = vpack.c.b16 %v445, %v444
    %v587 = vpack.c.b16 %v447, %v446
    %v588 = vpack.c.b16 %v449, %v448
    %v589 = vpack.c.b16 %v451, %v450
    %v590 = vpack.c.b16 %v453, %v452
    %v591 = vpack.c.b16 %v455, %v454
    %v592 = vpack.c.b16 %v457, %v456
    %v593 = vpack.c.b16 %v459, %v458
    %v594 = vpack.c.b16 %v461, %v460
    %v595 = vpack.c.b16 %v463, %v462
    %v596 = vpack.c.b16 %v465, %v464
    %v597 = vpack.c.b16 %v467, %v466
    %v598 = vpack.c.b16 %v469, %v468
    %v599 = vpack.c.b16 %v471, %v470
    %v600 = vpack.c.b16 %v473, %v472
    %v601 = vpack.c.b16 %v475, %v474
    %v602 = vpack.c.b16 %v477, %v476
    %v603 = vpack.c.b16 %v479, %v478
    %v604 = vpack.c.b16 %v481, %v480
    %v605 = vpack.c.b16 %v483, %v482
    %v606 = vpack.c.b16 %v485, %v484
    %v607 = vpack.c.b16 %v487, %v486
    %v608 = vpack.c.b16 %v489, %v488
    %v609 = vpack.c.b16 %v491, %v490
    %v610 = vpack.c.b16 %v493, %v492
    %v611 = vpack.c.b16 %v495, %v494
    %v612 = vpack.c.b16 %v497, %v496
    %v613 = vpack.c.b16 %v499, %v498
    %v614 = vpack.c.b16 %v501, %v500
    %v615 = vpack.c.b16 %v503, %v502
    %v616 = vpack.c.b16 %v505, %v504
    %v617 = vpack.c.b16 %v507, %v506
    %v618 = vpack.c.b16 %v509, %v508
    %v619 = vpack.c.b16 %v511, %v510
    %v620 = vpack.c.b16 %v513, %v512
    %v621 = vpack.c.b16 %v515, %v514
    %v622 = vpack.c.b16 %v517, %v516
    %v623 = vpack.c.b16 %v519, %v518
    %v624 = vpack.c.b16 %v521, %v520
    %v625 = vpack.c.b16 %v523, %v522
    %v626 = vpack.c.b16 %v525, %v524
    %v627 = vpack.c.b16 %v527, %v526
    %v628 = vpack.c.b16 %v529, %v528
    %v629 = vpack.c.b16 %v531, %v530
    %v630 = vpack.c.b16 %v533, %v532
    %v631 = vpack.c.b16 %v535, %v534
    %v632 = vpack.c.b16 %v537, %v536
    %v633 = vpack.c.b16 %v539, %v538
    %v634 = vpack.c.b16 %v541, %v540
    %v635 = vpack.c.b16 %v543, %v542
    %v636 = vpack.c.b16 %v545, %v544
    %v637 = vpack.c.b16 %v547, %v546
    %v638 = vpack.c.b16 %v549, %v548
    %v639 = vpack.c.b16 %v551, %v550
    %v640 = vpack.c.b16 %v553, %v552
    %v641 = vpack.c.b16 %v555, %v554
    %v642 = vpack.c.b16 %v557, %v556
    %v647 = vunpack.c.l.b16 %v207
    %v648 = vunpack.c.l.b16 %v208
    %v649 = vunpack.c.l.b16 %v209
    %v650 = vunpack.c.l.b16 %v210
    %v651 = vpack.c.b16 %v648, %v647
    %v652 = vpack.c.b16 %v650, %v649
    %vm655 = vcmask 261120
    %v657 = vsel %vm655, %v558, 0
    %v660 = vsel %vm655, %v559, 0
    %v663 = vsel %vm655, %v560, 0
    %v666 = vsel %vm655, %v561, 0
    %v669 = vsel %vm655, %v562, 0
    %v672 = vsel %vm655, %v563, 0
    %v675 = vsel %vm655, %v564, 0
    %v678 = vsel %vm655, %v565, 0
    %v681 = vsel %vm655, %v566, 0
    %v684 = vsel %vm655, %v567, 0
    %v687 = vsel %vm655, %v568, 0
    %v690 = vsel %vm655, %v569, 0
    %v693 = vsel %vm655, %v570, 0
    %v696 = vsel %vm655, %v571, 0
    %v699 = vsel %vm655, %v572, 0
    %v702 = vsel %vm655, %v573, 0
    %v705 = vsel %vm655, %v574, 0
    %v708 = vsel %vm655, %v575, 0
    %v711 = vsel %vm655, %v576, 0
    %v714 = vsel %vm655, %v577, 0
    %v717 = vsel %vm655, %v578, 0
    %v720 = vsel %vm655, %v579, 0
    %v723 = vsel %vm655, %v580, 0
    %v726 = vsel %vm655, %v581, 0
    %v729 = vsel %vm655, %v582, 0
    %v732 = vsel %vm655, %v583, 0
    %v735 = vsel %vm655, %v584, 0
    %v738 = vsel %vm655, %v585, 0
    %v741 = vsel %vm655, %v586, 0
    %v744 = vsel %vm655, %v587, 0
    %v747 = vsel %vm655, %v588, 0
    %v750 = vsel %vm655, %v589, 0
    %v753 = vsel %vm655, %v590, 0
    %v756 = vsel %vm655, %v591, 0
    %v759 = vsel %vm655, %v592, 0
    %v762 = vsel %vm655, %v593, 0
    %v765 = vsel %vm655, %v594, 0
    %v768 = vsel %vm655, %v595, 0
    %v771 = vsel %vm655, %v596, 0
    %v774 = vsel %vm655, %v597, 0
    %v777 = vsel %vm655, %v598, 0
    %v780 = vsel %vm655, %v599, 0
    %v783 = vsel %vm655, %v600, 0
    %v786 = vsel %vm655, %v601, 0
    %v789 = vsel %vm655, %v602, 0
    %v792 = vsel %vm655, %v603, 0
    %v795 = vsel %vm655, %v604, 0
    %v798 = vsel %vm655, %v605, 0
    %v801 = vsel %vm655, %v606, 0
    %v804 = vsel %vm655, %v607, 0
    %v807 = vsel %vm655, %v608, 0
    %v810 = vsel %vm655, %v609, 0
    %v813 = vsel %vm655, %v610, 0
    %v816 = vsel %vm655, %v611, 0
    %v819 = vsel %vm655, %v612, 0
    %v822 = vsel %vm655, %v613, 0
    %v825 = vsel %vm655, %v614, 0
    %v828 = vsel %vm655, %v615, 0
    %v831 = vsel %vm655, %v616, 0
    %v834 = vsel %vm655, %v617, 0
    %v837 = vsel %vm655, %v618, 0
    %v840 = vsel %vm655, %v619, 0
    %v843 = vsel %vm655, %v620, 0
    %v846 = vsel %vm655, %v621, 0
    %v849 = vsel %vm655, %v622, 0
    %v852 = vsel %vm655, %v623, 0
    %v855 = vsel %vm655, %v624, 0
    %v858 = vsel %vm655, %v625, 0
    %v861 = vsel %vm655, %v626, 0
    %v864 = vsel %vm655, %v627, 0
    %v867 = vsel %vm655, %v628, 0
    %v870 = vsel %vm655, %v629, 0
    %v873 = vsel %vm655, %v630, 0
    %v876 = vsel %vm655, %v631, 0
    %v879 = vsel %vm655, %v632, 0
    %v882 = vsel %vm655, %v633, 0
    %v885 = vsel %vm655, %v634, 0
    %v888 = vsel %vm655, %v635, 0
    %v891 = vsel %vm655, %v636, 0
    %v894 = vsel %vm655, %v637, 0
    %v897 = vsel %vm655, %v638, 0
    %v900 = vsel %vm655, %v639, 0
    %v903 = vsel %vm655, %v640, 0
    %v906 = vsel %vm655, %v641, 0
    %v909 = vsel %vm655, %v642, 0
    %911 = vmatprep.subr.bf16.mxu0 0
    %912 = vmatpush1.bf16.msra.mxu0 %v651
    %913 = vmatprep.subr.bf16.mxu0 0
    %914 = vmatpush1.bf16.msra.mxu0 %v652
    %915 = vmatprep.subr.bf16.mxu0 0
    %916 = vmatpush1.bf16.msra.mxu0 0
    %917 = vmatprep.subr.bf16.mxu0 0
    %918 = vmatpush1.bf16.msra.mxu0 0
    %919 = vmatprep.subr.bf16.mxu0 0
    %920 = vmatpush1.bf16.msra.mxu0 0
    %921 = vmatprep.subr.bf16.mxu0 0
    %922 = vmatpush1.bf16.msra.mxu0 0
    %923 = vmatprep.subr.bf16.mxu0 0
    %924 = vmatpush1.bf16.msra.mxu0 0
    %925 = vmatprep.subr.bf16.mxu0 0
    %926 = vmatpush1.bf16.msra.mxu0 0
    %927 = vmatprep.subr.bf16.mxu0 0
    %928 = vmatpush1.bf16.msra.mxu0 0
    %929 = vmatprep.subr.bf16.mxu0 0
    %930 = vmatpush1.bf16.msra.mxu0 0
    %931 = vmatprep.subr.bf16.mxu0 0
    %932 = vmatpush1.bf16.msra.mxu0 0
    %933 = vmatprep.subr.bf16.mxu0 0
    %934 = vmatpush1.bf16.msra.mxu0 0
    %935 = vmatprep.subr.bf16.mxu0 0
    %936 = vmatpush1.bf16.msra.mxu0 0
    %937 = vmatprep.subr.bf16.mxu0 0
    %938 = vmatpush1.bf16.msra.mxu0 0
    %939 = vmatprep.subr.bf16.mxu0 0
    %940 = vmatpush1.bf16.msra.mxu0 0
    %941 = vmatprep.subr.bf16.mxu0 0
    %942 = vmatpush1.bf16.msra.mxu0 0
    %943 = vmatprep.mubr.bf16.mxu0 0
    %944 = vmatmul.mubr.bf16.gmra.mrb[0].mxu0 %v657
    %v945 = vpop.f32.mrb[0].mxu0
    %v946 = vadd.f32 %v216, %v945
    %v947 = vpop.f32.mrb[0].mxu0
    %v948 = vpop.f32.mrb[0].mxu0
    %v949 = vadd.f32 %v216, %v948
    %v950 = vpop.f32.mrb[0].mxu0
    %951 = vmatprep.mubr.bf16.mxu0 0
    %952 = vmatmul.mubr.bf16.gmra.mrb[0].mxu0 %v660
    %v953 = vpop.f32.mrb[0].mxu0
    %v954 = vadd.f32 %v216, %v953
    %v955 = vpop.f32.mrb[0].mxu0
    %v956 = vpop.f32.mrb[0].mxu0
    %v957 = vadd.f32 %v216, %v956
    %v958 = vpop.f32.mrb[0].mxu0
    %959 = vmatprep.mubr.bf16.mxu0 0
    %960 = vmatmul.mubr.bf16.gmra.mrb[0].mxu0 %v663
    %v961 = vpop.f32.mrb[0].mxu0
    %v962 = vadd.f32 %v216, %v961
    %v963 = vpop.f32.mrb[0].mxu0
    %v964 = vpop.f32.mrb[0].mxu0
    %v965 = vadd.f32 %v216, %v964
    %v966 = vpop.f32.mrb[0].mxu0
    %967 = vmatprep.mubr.bf16.mxu0 0
    %968 = vmatmul.mubr.bf16.gmra.mrb[0].mxu0 %v666
    %v969 = vpop.f32.mrb[0].mxu0
    %v970 = vadd.f32 %v216, %v969
    %v971 = vpop.f32.mrb[0].mxu0
    %v972 = vpop.f32.mrb[0].mxu0
    %v973 = vadd.f32 %v216, %v972
    %v974 = vpop.f32.mrb[0].mxu0
    %975 = vmatprep.mubr.bf16.mxu0 0
    %976 = vmatmul.mubr.bf16.gmra.mrb[0].mxu0 %v669
    %v977 = vpop.f32.mrb[0].mxu0
    %v978 = vadd.f32 %v216, %v977
    %v979 = vpop.f32.mrb[0].mxu0
    %v980 = vpop.f32.mrb[0].mxu0
    %v981 = vadd.f32 %v216, %v980
    %v982 = vpop.f32.mrb[0].mxu0
    %983 = vmatprep.mubr.bf16.mxu0 0
    %984 = vmatmul.mubr.bf16.gmra.mrb[0].mxu0 %v672
    %v985 = vpop.f32.mrb[0].mxu0
    %v986 = vadd.f32 %v216, %v985
    %v987 = vpop.f32.mrb[0].mxu0
    %v988 = vpop.f32.mrb[0].mxu0
    %v989 = vadd.f32 %v216, %v988
    %v990 = vpop.f32.mrb[0].mxu0
    %991 = vmatprep.mubr.bf16.mxu0 0
    %992 = vmatmul.mubr.bf16.gmra.mrb[0].mxu0 %v675
    %v993 = vpop.f32.mrb[0].mxu0
    %v994 = vadd.f32 %v216, %v993
    %v995 = vpop.f32.mrb[0].mxu0
    %v996 = vpop.f32.mrb[0].mxu0
    %v997 = vadd.f32 %v216, %v996
    %v998 = vpop.f32.mrb[0].mxu0
    %999 = vmatprep.mubr.bf16.mxu0 0
    %1000 = vmatmul.mubr.bf16.gmra.mrb[0].mxu0 %v678
    %v1001 = vpop.f32.mrb[0].mxu0
    %v1002 = vadd.f32 %v216, %v1001
    %v1003 = vpop.f32.mrb[0].mxu0
    %v1004 = vpop.f32.mrb[0].mxu0
    %v1005 = vadd.f32 %v216, %v1004
    %v1006 = vpop.f32.mrb[0].mxu0
    %1007 = vmatprep.mubr.bf16.mxu0 0
    %1008 = vmatmul.mubr.bf16.gmra.mrb[0].mxu0 %v681
    %v1009 = vpop.f32.mrb[0].mxu0
    %v1010 = vadd.f32 %v216, %v1009
    %v1011 = vpop.f32.mrb[0].mxu0
    %v1012 = vpop.f32.mrb[0].mxu0
    %v1013 = vadd.f32 %v216, %v1012
    %v1014 = vpop.f32.mrb[0].mxu0
    %1015 = vmatprep.mubr.bf16.mxu0 0
    %1016 = vmatmul.mubr.bf16.gmra.mrb[0].mxu0 %v684
    %v1017 = vpop.f32.mrb[0].mxu0
    %v1018 = vadd.f32 %v216, %v1017
    %v1019 = vpop.f32.mrb[0].mxu0
    %v1020 = vpop.f32.mrb[0].mxu0
    %v1021 = vadd.f32 %v216, %v1020
    %v1022 = vpop.f32.mrb[0].mxu0
    %1023 = vmatprep.mubr.bf16.mxu0 0
    %1024 = vmatmul.mubr.bf16.gmra.mrb[0].mxu0 %v687
    %v1025 = vpop.f32.mrb[0].mxu0
    %v1026 = vadd.f32 %v216, %v1025
    %v1027 = vpop.f32.mrb[0].mxu0
    %v1028 = vpop.f32.mrb[0].mxu0
    %v1029 = vadd.f32 %v216, %v1028
    %v1030 = vpop.f32.mrb[0].mxu0
    %1031 = vmatprep.mubr.bf16.mxu0 0
    %1032 = vmatmul.mubr.bf16.gmra.mrb[0].mxu0 %v690
    %v1033 = vpop.f32.mrb[0].mxu0
    %v1034 = vadd.f32 %v216, %v1033
    %v1035 = vpop.f32.mrb[0].mxu0
    %v1036 = vpop.f32.mrb[0].mxu0
    %v1037 = vadd.f32 %v216, %v1036
    %v1038 = vpop.f32.mrb[0].mxu0
    %1039 = vmatprep.mubr.bf16.mxu0 0
    %1040 = vmatmul.mubr.bf16.gmra.mrb[0].mxu0 %v693
    %v1041 = vpop.f32.mrb[0].mxu0
    %v1042 = vadd.f32 %v216, %v1041
    %v1043 = vpop.f32.mrb[0].mxu0
    %v1044 = vpop.f32.mrb[0].mxu0
    %v1045 = vadd.f32 %v216, %v1044
    %v1046 = vpop.f32.mrb[0].mxu0
    %1047 = vmatprep.mubr.bf16.mxu0 0
    %1048 = vmatmul.mubr.bf16.gmra.mrb[0].mxu0 %v696
    %v1049 = vpop.f32.mrb[0].mxu0
    %v1050 = vadd.f32 %v216, %v1049
    %v1051 = vpop.f32.mrb[0].mxu0
    %v1052 = vpop.f32.mrb[0].mxu0
    %v1053 = vadd.f32 %v216, %v1052
    %v1054 = vpop.f32.mrb[0].mxu0
    %1055 = vmatprep.mubr.bf16.mxu0 0
    %1056 = vmatmul.mubr.bf16.gmra.mrb[0].mxu0 %v699
    %v1057 = vpop.f32.mrb[0].mxu0
    %v1058 = vadd.f32 %v216, %v1057
    %v1059 = vpop.f32.mrb[0].mxu0
    %v1060 = vpop.f32.mrb[0].mxu0
    %v1061 = vadd.f32 %v216, %v1060
    %v1062 = vpop.f32.mrb[0].mxu0
    %1063 = vmatprep.mubr.bf16.mxu0 0
    %1064 = vmatmul.mubr.bf16.gmra.mrb[0].mxu0 %v702
    %v1065 = vpop.f32.mrb[0].mxu0
    %v1066 = vadd.f32 %v216, %v1065
    %v1067 = vpop.f32.mrb[0].mxu0
    %v1068 = vpop.f32.mrb[0].mxu0
    %v1069 = vadd.f32 %v216, %v1068
    %v1070 = vpop.f32.mrb[0].mxu0
    %1071 = vmatprep.mubr.bf16.mxu0 0
    %1072 = vmatmul.mubr.bf16.gmra.mrb[0].mxu0 %v705
    %v1073 = vpop.f32.mrb[0].mxu0
    %v1074 = vadd.f32 %v216, %v1073
    %v1075 = vpop.f32.mrb[0].mxu0
    %v1076 = vpop.f32.mrb[0].mxu0
    %v1077 = vadd.f32 %v216, %v1076
    %v1078 = vpop.f32.mrb[0].mxu0
    %1079 = vmatprep.mubr.bf16.mxu0 0
    %1080 = vmatmul.mubr.bf16.gmra.mrb[0].mxu0 %v708
    %v1081 = vpop.f32.mrb[0].mxu0
    %v1082 = vadd.f32 %v216, %v1081
    %v1083 = vpop.f32.mrb[0].mxu0
    %v1084 = vpop.f32.mrb[0].mxu0
    %v1085 = vadd.f32 %v216, %v1084
    %v1086 = vpop.f32.mrb[0].mxu0
    %1087 = vmatprep.mubr.bf16.mxu0 0
    %1088 = vmatmul.mubr.bf16.gmra.mrb[0].mxu0 %v711
    %v1089 = vpop.f32.mrb[0].mxu0
    %v1090 = vadd.f32 %v216, %v1089
    %v1091 = vpop.f32.mrb[0].mxu0
    %v1092 = vpop.f32.mrb[0].mxu0
    %v1093 = vadd.f32 %v216, %v1092
    %v1094 = vpop.f32.mrb[0].mxu0
    %1095 = vmatprep.mubr.bf16.mxu0 0
    %1096 = vmatmul.mubr.bf16.gmra.mrb[0].mxu0 %v714
    %v1097 = vpop.f32.mrb[0].mxu0
    %v1098 = vadd.f32 %v216, %v1097
    %v1099 = vpop.f32.mrb[0].mxu0
    %v1100 = vpop.f32.mrb[0].mxu0
    %v1101 = vadd.f32 %v216, %v1100
    %v1102 = vpop.f32.mrb[0].mxu0
    %1103 = vmatprep.mubr.bf16.mxu0 0
    %1104 = vmatmul.mubr.bf16.gmra.mrb[0].mxu0 %v717
    %v1105 = vpop.f32.mrb[0].mxu0
    %v1106 = vadd.f32 %v216, %v1105
    %v1107 = vpop.f32.mrb[0].mxu0
    %v1108 = vpop.f32.mrb[0].mxu0
    %v1109 = vadd.f32 %v216, %v1108
    %v1110 = vpop.f32.mrb[0].mxu0
    %1111 = vmatprep.mubr.bf16.mxu0 0
    %1112 = vmatmul.mubr.bf16.gmra.mrb[0].mxu0 %v720
    %v1113 = vpop.f32.mrb[0].mxu0
    %v1114 = vadd.f32 %v216, %v1113
    %v1115 = vpop.f32.mrb[0].mxu0
    %v1116 = vpop.f32.mrb[0].mxu0
    %v1117 = vadd.f32 %v216, %v1116
    %v1118 = vpop.f32.mrb[0].mxu0
    %1119 = vmatprep.mubr.bf16.mxu0 0
    %1120 = vmatmul.mubr.bf16.gmra.mrb[0].mxu0 %v723
    %v1121 = vpop.f32.mrb[0].mxu0
    %v1122 = vadd.f32 %v216, %v1121
    %v1123 = vpop.f32.mrb[0].mxu0
    %v1124 = vpop.f32.mrb[0].mxu0
    %v1125 = vadd.f32 %v216, %v1124
    %v1126 = vpop.f32.mrb[0].mxu0
    %1127 = vmatprep.mubr.bf16.mxu0 0
    %1128 = vmatmul.mubr.bf16.gmra.mrb[0].mxu0 %v726
    %v1129 = vpop.f32.mrb[0].mxu0
    %v1130 = vadd.f32 %v216, %v1129
    %v1131 = vpop.f32.mrb[0].mxu0
    %v1132 = vpop.f32.mrb[0].mxu0
    %v1133 = vadd.f32 %v216, %v1132
    %v1134 = vpop.f32.mrb[0].mxu0
    %1135 = vmatprep.mubr.bf16.mxu0 0
    %1136 = vmatmul.mubr.bf16.gmra.mrb[0].mxu0 %v729
    %v1137 = vpop.f32.mrb[0].mxu0
    %v1138 = vadd.f32 %v216, %v1137
    %v1139 = vpop.f32.mrb[0].mxu0
    %v1140 = vpop.f32.mrb[0].mxu0
    %v1141 = vadd.f32 %v216, %v1140
    %v1142 = vpop.f32.mrb[0].mxu0
    %1143 = vmatprep.mubr.bf16.mxu0 0
    %1144 = vmatmul.mubr.bf16.gmra.mrb[0].mxu0 %v732
    %v1145 = vpop.f32.mrb[0].mxu0
    %v1146 = vadd.f32 %v216, %v1145
    %v1147 = vpop.f32.mrb[0].mxu0
    %v1148 = vpop.f32.mrb[0].mxu0
    %v1149 = vadd.f32 %v216, %v1148
    %v1150 = vpop.f32.mrb[0].mxu0
    %1151 = vmatprep.mubr.bf16.mxu0 0
    %1152 = vmatmul.mubr.bf16.gmra.mrb[0].mxu0 %v735
    %v1153 = vpop.f32.mrb[0].mxu0
    %v1154 = vadd.f32 %v216, %v1153
    %v1155 = vpop.f32.mrb[0].mxu0
    %v1156 = vpop.f32.mrb[0].mxu0
    %v1157 = vadd.f32 %v216, %v1156
    %v1158 = vpop.f32.mrb[0].mxu0
    %1159 = vmatprep.mubr.bf16.mxu0 0
    %1160 = vmatmul.mubr.bf16.gmra.mrb[0].mxu0 %v738
    %v1161 = vpop.f32.mrb[0].mxu0
    %v1162 = vadd.f32 %v216, %v1161
    %v1163 = vpop.f32.mrb[0].mxu0
    %v1164 = vpop.f32.mrb[0].mxu0
    %v1165 = vadd.f32 %v216, %v1164
    %v1166 = vpop.f32.mrb[0].mxu0
    %1167 = vmatprep.mubr.bf16.mxu0 0
    %1168 = vmatmul.mubr.bf16.gmra.mrb[0].mxu0 %v741
    %v1169 = vpop.f32.mrb[0].mxu0
    %v1170 = vadd.f32 %v216, %v1169
    %v1171 = vpop.f32.mrb[0].mxu0
    %v1172 = vpop.f32.mrb[0].mxu0
    %v1173 = vadd.f32 %v216, %v1172
    %v1174 = vpop.f32.mrb[0].mxu0
    %1175 = vmatprep.mubr.bf16.mxu0 0
    %1176 = vmatmul.mubr.bf16.gmra.mrb[0].mxu0 %v744
    %v1177 = vpop.f32.mrb[0].mxu0
    %v1178 = vadd.f32 %v216, %v1177
    %v1179 = vpop.f32.mrb[0].mxu0
    %v1180 = vpop.f32.mrb[0].mxu0
    %v1181 = vadd.f32 %v216, %v1180
    %v1182 = vpop.f32.mrb[0].mxu0
    %1183 = vmatprep.mubr.bf16.mxu0 0
    %1184 = vmatmul.mubr.bf16.gmra.mrb[0].mxu0 %v747
    %v1185 = vpop.f32.mrb[0].mxu0
    %v1186 = vadd.f32 %v216, %v1185
    %v1187 = vpop.f32.mrb[0].mxu0
    %v1188 = vpop.f32.mrb[0].mxu0
    %v1189 = vadd.f32 %v216, %v1188
    %v1190 = vpop.f32.mrb[0].mxu0
    %1191 = vmatprep.mubr.bf16.mxu0 0
    %1192 = vmatmul.mubr.bf16.gmra.mrb[0].mxu0 %v750
    %v1193 = vpop.f32.mrb[0].mxu0
    %v1194 = vadd.f32 %v216, %v1193
    %v1195 = vpop.f32.mrb[0].mxu0
    %v1196 = vpop.f32.mrb[0].mxu0
    %v1197 = vadd.f32 %v216, %v1196
    %v1198 = vpop.f32.mrb[0].mxu0
    %1199 = vmatprep.mubr.bf16.mxu0 0
    %1200 = vmatmul.mubr.bf16.gmra.mrb[0].mxu0 %v753
    %v1201 = vpop.f32.mrb[0].mxu0
    %v1202 = vadd.f32 %v216, %v1201
    %v1203 = vpop.f32.mrb[0].mxu0
    %v1204 = vpop.f32.mrb[0].mxu0
    %v1205 = vadd.f32 %v216, %v1204
    %v1206 = vpop.f32.mrb[0].mxu0
    %1207 = vmatprep.mubr.bf16.mxu0 0
    %1208 = vmatmul.mubr.bf16.gmra.mrb[0].mxu0 %v756
    %v1209 = vpop.f32.mrb[0].mxu0
    %v1210 = vadd.f32 %v216, %v1209
    %v1211 = vpop.f32.mrb[0].mxu0
    %v1212 = vpop.f32.mrb[0].mxu0
    %v1213 = vadd.f32 %v216, %v1212
    %v1214 = vpop.f32.mrb[0].mxu0
    %1215 = vmatprep.mubr.bf16.mxu0 0
    %1216 = vmatmul.mubr.bf16.gmra.mrb[0].mxu0 %v759
    %v1217 = vpop.f32.mrb[0].mxu0
    %v1218 = vadd.f32 %v216, %v1217
    %v1219 = vpop.f32.mrb[0].mxu0
    %v1220 = vpop.f32.mrb[0].mxu0
    %v1221 = vadd.f32 %v216, %v1220
    %v1222 = vpop.f32.mrb[0].mxu0
    %1223 = vmatprep.mubr.bf16.mxu0 0
    %1224 = vmatmul.mubr.bf16.gmra.mrb[0].mxu0 %v762
    %v1225 = vpop.f32.mrb[0].mxu0
    %v1226 = vadd.f32 %v216, %v1225
    %v1227 = vpop.f32.mrb[0].mxu0
    %v1228 = vpop.f32.mrb[0].mxu0
    %v1229 = vadd.f32 %v216, %v1228
    %v1230 = vpop.f32.mrb[0].mxu0
    %1231 = vmatprep.mubr.bf16.mxu0 0
    %1232 = vmatmul.mubr.bf16.gmra.mrb[0].mxu0 %v765
    %v1233 = vpop.f32.mrb[0].mxu0
    %v1234 = vadd.f32 %v216, %v1233
    %v1235 = vpop.f32.mrb[0].mxu0
    %v1236 = vpop.f32.mrb[0].mxu0
    %v1237 = vadd.f32 %v216, %v1236
    %v1238 = vpop.f32.mrb[0].mxu0
    %1239 = vmatprep.mubr.bf16.mxu0 0
    %1240 = vmatmul.mubr.bf16.gmra.mrb[0].mxu0 %v768
    %v1241 = vpop.f32.mrb[0].mxu0
    %v1242 = vadd.f32 %v216, %v1241
    %v1243 = vpop.f32.mrb[0].mxu0
    %v1244 = vpop.f32.mrb[0].mxu0
    %v1245 = vadd.f32 %v216, %v1244
    %v1246 = vpop.f32.mrb[0].mxu0
    %1247 = vmatprep.mubr.bf16.mxu0 0
    %1248 = vmatmul.mubr.bf16.gmra.mrb[0].mxu0 %v771
    %v1249 = vpop.f32.mrb[0].mxu0
    %v1250 = vadd.f32 %v216, %v1249
    %v1251 = vpop.f32.mrb[0].mxu0
    %v1252 = vpop.f32.mrb[0].mxu0
    %v1253 = vadd.f32 %v216, %v1252
    %v1254 = vpop.f32.mrb[0].mxu0
    %1255 = vmatprep.mubr.bf16.mxu0 0
    %1256 = vmatmul.mubr.bf16.gmra.mrb[0].mxu0 %v774
    %v1257 = vpop.f32.mrb[0].mxu0
    %v1258 = vadd.f32 %v216, %v1257
    %v1259 = vpop.f32.mrb[0].mxu0
    %v1260 = vpop.f32.mrb[0].mxu0
    %v1261 = vadd.f32 %v216, %v1260
    %v1262 = vpop.f32.mrb[0].mxu0
    %1263 = vmatprep.mubr.bf16.mxu0 0
    %1264 = vmatmul.mubr.bf16.gmra.mrb[0].mxu0 %v777
    %v1265 = vpop.f32.mrb[0].mxu0
    %v1266 = vadd.f32 %v216, %v1265
    %v1267 = vpop.f32.mrb[0].mxu0
    %v1268 = vpop.f32.mrb[0].mxu0
    %v1269 = vadd.f32 %v216, %v1268
    %v1270 = vpop.f32.mrb[0].mxu0
    %1271 = vmatprep.mubr.bf16.mxu0 0
    %1272 = vmatmul.mubr.bf16.gmra.mrb[0].mxu0 %v780
    %v1273 = vpop.f32.mrb[0].mxu0
    %v1274 = vadd.f32 %v216, %v1273
    %v1275 = vpop.f32.mrb[0].mxu0
    %v1276 = vpop.f32.mrb[0].mxu0
    %v1277 = vadd.f32 %v216, %v1276
    %v1278 = vpop.f32.mrb[0].mxu0
    %1279 = vmatprep.mubr.bf16.mxu0 0
    %1280 = vmatmul.mubr.bf16.gmra.mrb[0].mxu0 %v783
    %v1281 = vpop.f32.mrb[0].mxu0
    %v1282 = vadd.f32 %v216, %v1281
    %v1283 = vpop.f32.mrb[0].mxu0
    %v1284 = vpop.f32.mrb[0].mxu0
    %v1285 = vadd.f32 %v216, %v1284
    %v1286 = vpop.f32.mrb[0].mxu0
    %1287 = vmatprep.mubr.bf16.mxu0 0
    %1288 = vmatmul.mubr.bf16.gmra.mrb[0].mxu0 %v786
    %v1289 = vpop.f32.mrb[0].mxu0
    %v1290 = vadd.f32 %v216, %v1289
    %v1291 = vpop.f32.mrb[0].mxu0
    %v1292 = vpop.f32.mrb[0].mxu0
    %v1293 = vadd.f32 %v216, %v1292
    %v1294 = vpop.f32.mrb[0].mxu0
    %1295 = vmatprep.mubr.bf16.mxu0 0
    %1296 = vmatmul.mubr.bf16.gmra.mrb[0].mxu0 %v789
    %v1297 = vpop.f32.mrb[0].mxu0
    %v1298 = vadd.f32 %v216, %v1297
    %v1299 = vpop.f32.mrb[0].mxu0
    %v1300 = vpop.f32.mrb[0].mxu0
    %v1301 = vadd.f32 %v216, %v1300
    %v1302 = vpop.f32.mrb[0].mxu0
    %1303 = vmatprep.mubr.bf16.mxu0 0
    %1304 = vmatmul.mubr.bf16.gmra.mrb[0].mxu0 %v792
    %v1305 = vpop.f32.mrb[0].mxu0
    %v1306 = vadd.f32 %v216, %v1305
    %v1307 = vpop.f32.mrb[0].mxu0
    %v1308 = vpop.f32.mrb[0].mxu0
    %v1309 = vadd.f32 %v216, %v1308
    %v1310 = vpop.f32.mrb[0].mxu0
    %1311 = vmatprep.mubr.bf16.mxu0 0
    %1312 = vmatmul.mubr.bf16.gmra.mrb[0].mxu0 %v795
    %v1313 = vpop.f32.mrb[0].mxu0
    %v1314 = vadd.f32 %v216, %v1313
    %v1315 = vpop.f32.mrb[0].mxu0
    %v1316 = vpop.f32.mrb[0].mxu0
    %v1317 = vadd.f32 %v216, %v1316
    %v1318 = vpop.f32.mrb[0].mxu0
    %1319 = vmatprep.mubr.bf16.mxu0 0
    %1320 = vmatmul.mubr.bf16.gmra.mrb[0].mxu0 %v798
    %v1321 = vpop.f32.mrb[0].mxu0
    %v1322 = vadd.f32 %v216, %v1321
    %v1323 = vpop.f32.mrb[0].mxu0
    %v1324 = vpop.f32.mrb[0].mxu0
    %v1325 = vadd.f32 %v216, %v1324
    %v1326 = vpop.f32.mrb[0].mxu0
    %1327 = vmatprep.mubr.bf16.mxu0 0
    %1328 = vmatmul.mubr.bf16.gmra.mrb[0].mxu0 %v801
    %v1329 = vpop.f32.mrb[0].mxu0
    %v1330 = vadd.f32 %v216, %v1329
    %v1331 = vpop.f32.mrb[0].mxu0
    %v1332 = vpop.f32.mrb[0].mxu0
    %v1333 = vadd.f32 %v216, %v1332
    %v1334 = vpop.f32.mrb[0].mxu0
    %1335 = vmatprep.mubr.bf16.mxu0 0
    %1336 = vmatmul.mubr.bf16.gmra.mrb[0].mxu0 %v804
    %v1337 = vpop.f32.mrb[0].mxu0
    %v1338 = vadd.f32 %v216, %v1337
    %v1339 = vpop.f32.mrb[0].mxu0
    %v1340 = vpop.f32.mrb[0].mxu0
    %v1341 = vadd.f32 %v216, %v1340
    %v1342 = vpop.f32.mrb[0].mxu0
    %1343 = vmatprep.mubr.bf16.mxu0 0
    %1344 = vmatmul.mubr.bf16.gmra.mrb[0].mxu0 %v807
    %v1345 = vpop.f32.mrb[0].mxu0
    %v1346 = vadd.f32 %v216, %v1345
    %v1347 = vpop.f32.mrb[0].mxu0
    %v1348 = vpop.f32.mrb[0].mxu0
    %v1349 = vadd.f32 %v216, %v1348
    %v1350 = vpop.f32.mrb[0].mxu0
    %1351 = vmatprep.mubr.bf16.mxu0 0
    %1352 = vmatmul.mubr.bf16.gmra.mrb[0].mxu0 %v810
    %v1353 = vpop.f32.mrb[0].mxu0
    %v1354 = vadd.f32 %v216, %v1353
    %v1355 = vpop.f32.mrb[0].mxu0
    %v1356 = vpop.f32.mrb[0].mxu0
    %v1357 = vadd.f32 %v216, %v1356
    %v1358 = vpop.f32.mrb[0].mxu0
    %1359 = vmatprep.mubr.bf16.mxu0 0
    %1360 = vmatmul.mubr.bf16.gmra.mrb[0].mxu0 %v813
    %v1361 = vpop.f32.mrb[0].mxu0
    %v1362 = vadd.f32 %v216, %v1361
    %v1363 = vpop.f32.mrb[0].mxu0
    %v1364 = vpop.f32.mrb[0].mxu0
    %v1365 = vadd.f32 %v216, %v1364
    %v1366 = vpop.f32.mrb[0].mxu0
    %1367 = vmatprep.mubr.bf16.mxu0 0
    %1368 = vmatmul.mubr.bf16.gmra.mrb[0].mxu0 %v816
    %v1369 = vpop.f32.mrb[0].mxu0
    %v1370 = vadd.f32 %v216, %v1369
    %v1371 = vpop.f32.mrb[0].mxu0
    %v1372 = vpop.f32.mrb[0].mxu0
    %v1373 = vadd.f32 %v216, %v1372
    %v1374 = vpop.f32.mrb[0].mxu0
    %1375 = vmatprep.mubr.bf16.mxu0 0
    %1376 = vmatmul.mubr.bf16.gmra.mrb[0].mxu0 %v819
    %v1377 = vpop.f32.mrb[0].mxu0
    %v1378 = vadd.f32 %v216, %v1377
    %v1379 = vpop.f32.mrb[0].mxu0
    %v1380 = vpop.f32.mrb[0].mxu0
    %v1381 = vadd.f32 %v216, %v1380
    %v1382 = vpop.f32.mrb[0].mxu0
    %1383 = vmatprep.mubr.bf16.mxu0 0
    %1384 = vmatmul.mubr.bf16.gmra.mrb[0].mxu0 %v822
    %v1385 = vpop.f32.mrb[0].mxu0
    %v1386 = vadd.f32 %v216, %v1385
    %v1387 = vpop.f32.mrb[0].mxu0
    %v1388 = vpop.f32.mrb[0].mxu0
    %v1389 = vadd.f32 %v216, %v1388
    %v1390 = vpop.f32.mrb[0].mxu0
    %1391 = vmatprep.mubr.bf16.mxu0 0
    %1392 = vmatmul.mubr.bf16.gmra.mrb[0].mxu0 %v825
    %v1393 = vpop.f32.mrb[0].mxu0
    %v1394 = vadd.f32 %v216, %v1393
    %v1395 = vpop.f32.mrb[0].mxu0
    %v1396 = vpop.f32.mrb[0].mxu0
    %v1397 = vadd.f32 %v216, %v1396
    %v1398 = vpop.f32.mrb[0].mxu0
    %1399 = vmatprep.mubr.bf16.mxu0 0
    %1400 = vmatmul.mubr.bf16.gmra.mrb[0].mxu0 %v828
    %v1401 = vpop.f32.mrb[0].mxu0
    %v1402 = vadd.f32 %v216, %v1401
    %v1403 = vpop.f32.mrb[0].mxu0
    %v1404 = vpop.f32.mrb[0].mxu0
    %v1405 = vadd.f32 %v216, %v1404
    %v1406 = vpop.f32.mrb[0].mxu0
    %1407 = vmatprep.mubr.bf16.mxu0 0
    %1408 = vmatmul.mubr.bf16.gmra.mrb[0].mxu0 %v831
    %v1409 = vpop.f32.mrb[0].mxu0
    %v1410 = vadd.f32 %v216, %v1409
    %v1411 = vpop.f32.mrb[0].mxu0
    %v1412 = vpop.f32.mrb[0].mxu0
    %v1413 = vadd.f32 %v216, %v1412
    %v1414 = vpop.f32.mrb[0].mxu0
    %1415 = vmatprep.mubr.bf16.mxu0 0
    %1416 = vmatmul.mubr.bf16.gmra.mrb[0].mxu0 %v834
    %v1417 = vpop.f32.mrb[0].mxu0
    %v1418 = vadd.f32 %v216, %v1417
    %v1419 = vpop.f32.mrb[0].mxu0
    %v1420 = vpop.f32.mrb[0].mxu0
    %v1421 = vadd.f32 %v216, %v1420
    %v1422 = vpop.f32.mrb[0].mxu0
    %1423 = vmatprep.mubr.bf16.mxu0 0
    %1424 = vmatmul.mubr.bf16.gmra.mrb[0].mxu0 %v837
    %v1425 = vpop.f32.mrb[0].mxu0
    %v1426 = vadd.f32 %v216, %v1425
    %v1427 = vpop.f32.mrb[0].mxu0
    %v1428 = vpop.f32.mrb[0].mxu0
    %v1429 = vadd.f32 %v216, %v1428
    %v1430 = vpop.f32.mrb[0].mxu0
    %1431 = vmatprep.mubr.bf16.mxu0 0
    %1432 = vmatmul.mubr.bf16.gmra.mrb[0].mxu0 %v840
    %v1433 = vpop.f32.mrb[0].mxu0
    %v1434 = vadd.f32 %v216, %v1433
    %v1435 = vpop.f32.mrb[0].mxu0
    %v1436 = vpop.f32.mrb[0].mxu0
    %v1437 = vadd.f32 %v216, %v1436
    %v1438 = vpop.f32.mrb[0].mxu0
    %1439 = vmatprep.mubr.bf16.mxu0 0
    %1440 = vmatmul.mubr.bf16.gmra.mrb[0].mxu0 %v843
    %v1441 = vpop.f32.mrb[0].mxu0
    %v1442 = vadd.f32 %v216, %v1441
    %v1443 = vpop.f32.mrb[0].mxu0
    %v1444 = vpop.f32.mrb[0].mxu0
    %v1445 = vadd.f32 %v216, %v1444
    %v1446 = vpop.f32.mrb[0].mxu0
    %1447 = vmatprep.mubr.bf16.mxu0 0
    %1448 = vmatmul.mubr.bf16.gmra.mrb[0].mxu0 %v846
    %v1449 = vpop.f32.mrb[0].mxu0
    %v1450 = vadd.f32 %v216, %v1449
    %v1451 = vpop.f32.mrb[0].mxu0
    %v1452 = vpop.f32.mrb[0].mxu0
    %v1453 = vadd.f32 %v216, %v1452
    %v1454 = vpop.f32.mrb[0].mxu0
    %1455 = vmatprep.mubr.bf16.mxu0 0
    %1456 = vmatmul.mubr.bf16.gmra.mrb[0].mxu0 %v849
    %v1457 = vpop.f32.mrb[0].mxu0
    %v1458 = vadd.f32 %v216, %v1457
    %v1459 = vpop.f32.mrb[0].mxu0
    %v1460 = vpop.f32.mrb[0].mxu0
    %v1461 = vadd.f32 %v216, %v1460
    %v1462 = vpop.f32.mrb[0].mxu0
    %1463 = vmatprep.mubr.bf16.mxu0 0
    %1464 = vmatmul.mubr.bf16.gmra.mrb[0].mxu0 %v852
    %v1465 = vpop.f32.mrb[0].mxu0
    %v1466 = vadd.f32 %v216, %v1465
    %v1467 = vpop.f32.mrb[0].mxu0
    %v1468 = vpop.f32.mrb[0].mxu0
    %v1469 = vadd.f32 %v216, %v1468
    %v1470 = vpop.f32.mrb[0].mxu0
    %1471 = vmatprep.mubr.bf16.mxu0 0
    %1472 = vmatmul.mubr.bf16.gmra.mrb[0].mxu0 %v855
    %v1473 = vpop.f32.mrb[0].mxu0
    %v1474 = vadd.f32 %v216, %v1473
    %v1475 = vpop.f32.mrb[0].mxu0
    %v1476 = vpop.f32.mrb[0].mxu0
    %v1477 = vadd.f32 %v216, %v1476
    %v1478 = vpop.f32.mrb[0].mxu0
    %1479 = vmatprep.mubr.bf16.mxu0 0
    %1480 = vmatmul.mubr.bf16.gmra.mrb[0].mxu0 %v858
    %v1481 = vpop.f32.mrb[0].mxu0
    %v1482 = vadd.f32 %v216, %v1481
    %v1483 = vpop.f32.mrb[0].mxu0
    %v1484 = vpop.f32.mrb[0].mxu0
    %v1485 = vadd.f32 %v216, %v1484
    %v1486 = vpop.f32.mrb[0].mxu0
    %1487 = vmatprep.mubr.bf16.mxu0 0
    %1488 = vmatmul.mubr.bf16.gmra.mrb[0].mxu0 %v861
    %v1489 = vpop.f32.mrb[0].mxu0
    %v1490 = vadd.f32 %v216, %v1489
    %v1491 = vpop.f32.mrb[0].mxu0
    %v1492 = vpop.f32.mrb[0].mxu0
    %v1493 = vadd.f32 %v216, %v1492
    %v1494 = vpop.f32.mrb[0].mxu0
    %1495 = vmatprep.mubr.bf16.mxu0 0
    %1496 = vmatmul.mubr.bf16.gmra.mrb[0].mxu0 %v864
    %v1497 = vpop.f32.mrb[0].mxu0
    %v1498 = vadd.f32 %v216, %v1497
    %v1499 = vpop.f32.mrb[0].mxu0
    %v1500 = vpop.f32.mrb[0].mxu0
    %v1501 = vadd.f32 %v216, %v1500
    %v1502 = vpop.f32.mrb[0].mxu0
    %1503 = vmatprep.mubr.bf16.mxu0 0
    %1504 = vmatmul.mubr.bf16.gmra.mrb[0].mxu0 %v867
    %v1505 = vpop.f32.mrb[0].mxu0
    %v1506 = vadd.f32 %v216, %v1505
    %v1507 = vpop.f32.mrb[0].mxu0
    %v1508 = vpop.f32.mrb[0].mxu0
    %v1509 = vadd.f32 %v216, %v1508
    %v1510 = vpop.f32.mrb[0].mxu0
    %1511 = vmatprep.mubr.bf16.mxu0 0
    %1512 = vmatmul.mubr.bf16.gmra.mrb[0].mxu0 %v870
    %v1513 = vpop.f32.mrb[0].mxu0
    %v1514 = vadd.f32 %v216, %v1513
    %v1515 = vpop.f32.mrb[0].mxu0
    %v1516 = vpop.f32.mrb[0].mxu0
    %v1517 = vadd.f32 %v216, %v1516
    %v1518 = vpop.f32.mrb[0].mxu0
    %1519 = vmatprep.mubr.bf16.mxu0 0
    %1520 = vmatmul.mubr.bf16.gmra.mrb[0].mxu0 %v873
    %v1521 = vpop.f32.mrb[0].mxu0
    %v1522 = vadd.f32 %v216, %v1521
    %v1523 = vpop.f32.mrb[0].mxu0
    %v1524 = vpop.f32.mrb[0].mxu0
    %v1525 = vadd.f32 %v216, %v1524
    %v1526 = vpop.f32.mrb[0].mxu0
    %1527 = vmatprep.mubr.bf16.mxu0 0
    %1528 = vmatmul.mubr.bf16.gmra.mrb[0].mxu0 %v876
    %v1529 = vpop.f32.mrb[0].mxu0
    %v1530 = vadd.f32 %v216, %v1529
    %v1531 = vpop.f32.mrb[0].mxu0
    %v1532 = vpop.f32.mrb[0].mxu0
    %v1533 = vadd.f32 %v216, %v1532
    %v1534 = vpop.f32.mrb[0].mxu0
    %1535 = vmatprep.mubr.bf16.mxu0 0
    %1536 = vmatmul.mubr.bf16.gmra.mrb[0].mxu0 %v879
    %v1537 = vpop.f32.mrb[0].mxu0
    %v1538 = vadd.f32 %v216, %v1537
    %v1539 = vpop.f32.mrb[0].mxu0
    %v1540 = vpop.f32.mrb[0].mxu0
    %v1541 = vadd.f32 %v216, %v1540
    %v1542 = vpop.f32.mrb[0].mxu0
    %1543 = vmatprep.mubr.bf16.mxu0 0
    %1544 = vmatmul.mubr.bf16.gmra.mrb[0].mxu0 %v882
    %v1545 = vpop.f32.mrb[0].mxu0
    %v1546 = vadd.f32 %v216, %v1545
    %v1547 = vpop.f32.mrb[0].mxu0
    %v1548 = vpop.f32.mrb[0].mxu0
    %v1549 = vadd.f32 %v216, %v1548
    %v1550 = vpop.f32.mrb[0].mxu0
    %1551 = vmatprep.mubr.bf16.mxu0 0
    %1552 = vmatmul.mubr.bf16.gmra.mrb[0].mxu0 %v885
    %v1553 = vpop.f32.mrb[0].mxu0
    %v1554 = vadd.f32 %v216, %v1553
    %v1555 = vpop.f32.mrb[0].mxu0
    %v1556 = vpop.f32.mrb[0].mxu0
    %v1557 = vadd.f32 %v216, %v1556
    %v1558 = vpop.f32.mrb[0].mxu0
    %1559 = vmatprep.mubr.bf16.mxu0 0
    %1560 = vmatmul.mubr.bf16.gmra.mrb[0].mxu0 %v888
    %v1561 = vpop.f32.mrb[0].mxu0
    %v1562 = vadd.f32 %v216, %v1561
    %v1563 = vpop.f32.mrb[0].mxu0
    %v1564 = vpop.f32.mrb[0].mxu0
    %v1565 = vadd.f32 %v216, %v1564
    %v1566 = vpop.f32.mrb[0].mxu0
    %1567 = vmatprep.mubr.bf16.mxu0 0
    %1568 = vmatmul.mubr.bf16.gmra.mrb[0].mxu0 %v891
    %v1569 = vpop.f32.mrb[0].mxu0
    %v1570 = vadd.f32 %v216, %v1569
    %v1571 = vpop.f32.mrb[0].mxu0
    %v1572 = vpop.f32.mrb[0].mxu0
    %v1573 = vadd.f32 %v216, %v1572
    %v1574 = vpop.f32.mrb[0].mxu0
    %1575 = vmatprep.mubr.bf16.mxu0 0
    %1576 = vmatmul.mubr.bf16.gmra.mrb[0].mxu0 %v894
    %v1577 = vpop.f32.mrb[0].mxu0
    %v1578 = vadd.f32 %v216, %v1577
    %v1579 = vpop.f32.mrb[0].mxu0
    %v1580 = vpop.f32.mrb[0].mxu0
    %v1581 = vadd.f32 %v216, %v1580
    %v1582 = vpop.f32.mrb[0].mxu0
    %1583 = vmatprep.mubr.bf16.mxu0 0
    %1584 = vmatmul.mubr.bf16.gmra.mrb[0].mxu0 %v897
    %v1585 = vpop.f32.mrb[0].mxu0
    %v1586 = vadd.f32 %v216, %v1585
    %v1587 = vpop.f32.mrb[0].mxu0
    %v1588 = vpop.f32.mrb[0].mxu0
    %v1589 = vadd.f32 %v216, %v1588
    %v1590 = vpop.f32.mrb[0].mxu0
    %1591 = vmatprep.mubr.bf16.mxu0 0
    %1592 = vmatmul.mubr.bf16.gmra.mrb[0].mxu0 %v900
    %v1593 = vpop.f32.mrb[0].mxu0
    %v1594 = vadd.f32 %v216, %v1593
    %v1595 = vpop.f32.mrb[0].mxu0
    %v1596 = vpop.f32.mrb[0].mxu0
    %v1597 = vadd.f32 %v216, %v1596
    %v1598 = vpop.f32.mrb[0].mxu0
    %1599 = vmatprep.mubr.bf16.mxu0 0
    %1600 = vmatmul.mubr.bf16.gmra.mrb[0].mxu0 %v903
    %v1601 = vpop.f32.mrb[0].mxu0
    %v1602 = vadd.f32 %v216, %v1601
    %v1603 = vpop.f32.mrb[0].mxu0
    %v1604 = vpop.f32.mrb[0].mxu0
    %v1605 = vadd.f32 %v216, %v1604
    %v1606 = vpop.f32.mrb[0].mxu0
    %1607 = vmatprep.mubr.bf16.mxu0 0
    %1608 = vmatmul.mubr.bf16.gmra.mrb[0].mxu0 %v906
    %v1609 = vpop.f32.mrb[0].mxu0
    %v1610 = vadd.f32 %v216, %v1609
    %v1611 = vpop.f32.mrb[0].mxu0
    %v1612 = vpop.f32.mrb[0].mxu0
    %v1613 = vadd.f32 %v216, %v1612
    %v1614 = vpop.f32.mrb[0].mxu0
    %1615 = vmatprep.mubr.bf16.mxu0 0
    %1616 = vmatmul.mubr.bf16.gmra.mrb[0].mxu0 %v909
    %v1617 = vpop.f32.mrb[0].mxu0
    %v1618 = vadd.f32 %v216, %v1617
    %v1619 = vpop.f32.mrb[0].mxu0
    %v1620 = vpop.f32.mrb[0].mxu0
    %v1621 = vadd.f32 %v216, %v1620
    %v1622 = vpop.f32.mrb[0].mxu0
    %1623 = vdwg.mxu0
    %v1624 = vmax.f32 %v946, 0.0
    %v1625 = vmax.f32 %v949, 0.0
    %v1626 = vmax.f32 %v954, 0.0
    %v1627 = vmax.f32 %v957, 0.0
    %v1628 = vmax.f32 %v962, 0.0
    %v1629 = vmax.f32 %v965, 0.0
    %v1630 = vmax.f32 %v970, 0.0
    %v1631 = vmax.f32 %v973, 0.0
    %v1632 = vmax.f32 %v978, 0.0
    %v1633 = vmax.f32 %v981, 0.0
    %v1634 = vmax.f32 %v986, 0.0
    %v1635 = vmax.f32 %v989, 0.0
    %v1636 = vmax.f32 %v994, 0.0
    %v1637 = vmax.f32 %v997, 0.0
    %v1638 = vmax.f32 %v1002, 0.0
    %v1639 = vmax.f32 %v1005, 0.0
    %v1640 = vmax.f32 %v1010, 0.0
    %v1641 = vmax.f32 %v1013, 0.0
    %v1642 = vmax.f32 %v1018, 0.0
    %v1643 = vmax.f32 %v1021, 0.0
    %v1644 = vmax.f32 %v1026, 0.0
    %v1645 = vmax.f32 %v1029, 0.0
    %v1646 = vmax.f32 %v1034, 0.0
    %v1647 = vmax.f32 %v1037, 0.0
    %v1648 = vmax.f32 %v1042, 0.0
    %v1649 = vmax.f32 %v1045, 0.0
    %v1650 = vmax.f32 %v1050, 0.0
    %v1651 = vmax.f32 %v1053, 0.0
    %v1652 = vmax.f32 %v1058, 0.0
    %v1653 = vmax.f32 %v1061, 0.0
    %v1654 = vmax.f32 %v1066, 0.0
    %v1655 = vmax.f32 %v1069, 0.0
    %v1656 = vmax.f32 %v1074, 0.0
    %v1657 = vmax.f32 %v1077, 0.0
    %v1658 = vmax.f32 %v1082, 0.0
    %v1659 = vmax.f32 %v1085, 0.0
    %v1660 = vmax.f32 %v1090, 0.0
    %v1661 = vmax.f32 %v1093, 0.0
    %v1662 = vmax.f32 %v1098, 0.0
    %v1663 = vmax.f32 %v1101, 0.0
    %v1664 = vmax.f32 %v1106, 0.0
    %v1665 = vmax.f32 %v1109, 0.0
    %v1666 = vmax.f32 %v1114, 0.0
    %v1667 = vmax.f32 %v1117, 0.0
    %v1668 = vmax.f32 %v1122, 0.0
    %v1669 = vmax.f32 %v1125, 0.0
    %v1670 = vmax.f32 %v1130, 0.0
    %v1671 = vmax.f32 %v1133, 0.0
    %v1672 = vmax.f32 %v1138, 0.0
    %v1673 = vmax.f32 %v1141, 0.0
    %v1674 = vmax.f32 %v1146, 0.0
    %v1675 = vmax.f32 %v1149, 0.0
    %v1676 = vmax.f32 %v1154, 0.0
    %v1677 = vmax.f32 %v1157, 0.0
    %v1678 = vmax.f32 %v1162, 0.0
    %v1679 = vmax.f32 %v1165, 0.0
    %v1680 = vmax.f32 %v1170, 0.0
    %v1681 = vmax.f32 %v1173, 0.0
    %v1682 = vmax.f32 %v1178, 0.0
    %v1683 = vmax.f32 %v1181, 0.0
    %v1684 = vmax.f32 %v1186, 0.0
    %v1685 = vmax.f32 %v1189, 0.0
    %v1686 = vmax.f32 %v1194, 0.0
    %v1687 = vmax.f32 %v1197, 0.0
    %v1688 = vmax.f32 %v1202, 0.0
    %v1689 = vmax.f32 %v1205, 0.0
    %v1690 = vmax.f32 %v1210, 0.0
    %v1691 = vmax.f32 %v1213, 0.0
    %v1692 = vmax.f32 %v1218, 0.0
    %v1693 = vmax.f32 %v1221, 0.0
    %v1694 = vmax.f32 %v1226, 0.0
    %v1695 = vmax.f32 %v1229, 0.0
    %v1696 = vmax.f32 %v1234, 0.0
    %v1697 = vmax.f32 %v1237, 0.0
    %v1698 = vmax.f32 %v1242, 0.0
    %v1699 = vmax.f32 %v1245, 0.0
    %v1700 = vmax.f32 %v1250, 0.0
    %v1701 = vmax.f32 %v1253, 0.0
    %v1702 = vmax.f32 %v1258, 0.0
    %v1703 = vmax.f32 %v1261, 0.0
    %v1704 = vmax.f32 %v1266, 0.0
    %v1705 = vmax.f32 %v1269, 0.0
    %v1706 = vmax.f32 %v1274, 0.0
    %v1707 = vmax.f32 %v1277, 0.0
    %v1708 = vmax.f32 %v1282, 0.0
    %v1709 = vmax.f32 %v1285, 0.0
    %v1710 = vmax.f32 %v1290, 0.0
    %v1711 = vmax.f32 %v1293, 0.0
    %v1712 = vmax.f32 %v1298, 0.0
    %v1713 = vmax.f32 %v1301, 0.0
    %v1714 = vmax.f32 %v1306, 0.0
    %v1715 = vmax.f32 %v1309, 0.0
    %v1716 = vmax.f32 %v1314, 0.0
    %v1717 = vmax.f32 %v1317, 0.0
    %v1718 = vmax.f32 %v1322, 0.0
    %v1719 = vmax.f32 %v1325, 0.0
    %v1720 = vmax.f32 %v1330, 0.0
    %v1721 = vmax.f32 %v1333, 0.0
    %v1722 = vmax.f32 %v1338, 0.0
    %v1723 = vmax.f32 %v1341, 0.0
    %v1724 = vmax.f32 %v1346, 0.0
    %v1725 = vmax.f32 %v1349, 0.0
    %v1726 = vmax.f32 %v1354, 0.0
    %v1727 = vmax.f32 %v1357, 0.0
    %v1728 = vmax.f32 %v1362, 0.0
    %v1729 = vmax.f32 %v1365, 0.0
    %v1730 = vmax.f32 %v1370, 0.0
    %v1731 = vmax.f32 %v1373, 0.0
    %v1732 = vmax.f32 %v1378, 0.0
    %v1733 = vmax.f32 %v1381, 0.0
    %v1734 = vmax.f32 %v1386, 0.0
    %v1735 = vmax.f32 %v1389, 0.0
    %v1736 = vmax.f32 %v1394, 0.0
    %v1737 = vmax.f32 %v1397, 0.0
    %v1738 = vmax.f32 %v1402, 0.0
    %v1739 = vmax.f32 %v1405, 0.0
    %v1740 = vmax.f32 %v1410, 0.0
    %v1741 = vmax.f32 %v1413, 0.0
    %v1742 = vmax.f32 %v1418, 0.0
    %v1743 = vmax.f32 %v1421, 0.0
    %v1744 = vmax.f32 %v1426, 0.0
    %v1745 = vmax.f32 %v1429, 0.0
    %v1746 = vmax.f32 %v1434, 0.0
    %v1747 = vmax.f32 %v1437, 0.0
    %v1748 = vmax.f32 %v1442, 0.0
    %v1749 = vmax.f32 %v1445, 0.0
    %v1750 = vmax.f32 %v1450, 0.0
    %v1751 = vmax.f32 %v1453, 0.0
    %v1752 = vmax.f32 %v1458, 0.0
    %v1753 = vmax.f32 %v1461, 0.0
    %v1754 = vmax.f32 %v1466, 0.0
    %v1755 = vmax.f32 %v1469, 0.0
    %v1756 = vmax.f32 %v1474, 0.0
    %v1757 = vmax.f32 %v1477, 0.0
    %v1758 = vmax.f32 %v1482, 0.0
    %v1759 = vmax.f32 %v1485, 0.0
    %v1760 = vmax.f32 %v1490, 0.0
    %v1761 = vmax.f32 %v1493, 0.0
    %v1762 = vmax.f32 %v1498, 0.0
    %v1763 = vmax.f32 %v1501, 0.0
    %v1764 = vmax.f32 %v1506, 0.0
    %v1765 = vmax.f32 %v1509, 0.0
    %v1766 = vmax.f32 %v1514, 0.0
    %v1767 = vmax.f32 %v1517, 0.0
    %v1768 = vmax.f32 %v1522, 0.0
    %v1769 = vmax.f32 %v1525, 0.0
    %v1770 = vmax.f32 %v1530, 0.0
    %v1771 = vmax.f32 %v1533, 0.0
    %v1772 = vmax.f32 %v1538, 0.0
    %v1773 = vmax.f32 %v1541, 0.0
    %v1774 = vmax.f32 %v1546, 0.0
    %v1775 = vmax.f32 %v1549, 0.0
    %v1776 = vmax.f32 %v1554, 0.0
    %v1777 = vmax.f32 %v1557, 0.0
    %v1778 = vmax.f32 %v1562, 0.0
    %v1779 = vmax.f32 %v1565, 0.0
    %v1780 = vmax.f32 %v1570, 0.0
    %v1781 = vmax.f32 %v1573, 0.0
    %v1782 = vmax.f32 %v1578, 0.0
    %v1783 = vmax.f32 %v1581, 0.0
    %v1784 = vmax.f32 %v1586, 0.0
    %v1785 = vmax.f32 %v1589, 0.0
    %v1786 = vmax.f32 %v1594, 0.0
    %v1787 = vmax.f32 %v1597, 0.0
    %v1788 = vmax.f32 %v1602, 0.0
    %v1789 = vmax.f32 %v1605, 0.0
    %v1790 = vmax.f32 %v1610, 0.0
    %v1791 = vmax.f32 %v1613, 0.0
    %v1792 = vmax.f32 %v1618, 0.0
    %v1793 = vmax.f32 %v1621, 0.0
    %1794 = vst.msk [vmem:[#allocation2] sm:$0xff] %vm655, %v1624
    %1795 = vst.msk [vmem:[#allocation2 + $0x8] sm:$0xff] %vm655, %v1625
    %1796 = vst.msk [vmem:[#allocation2 + $0x10] sm:$0xff] %vm655, %v1626
    %1797 = vst.msk [vmem:[#allocation2 + $0x18] sm:$0xff] %vm655, %v1627
    %1798 = vst.msk [vmem:[#allocation2 + $0x20] sm:$0xff] %vm655, %v1628
    %1799 = vst.msk [vmem:[#allocation2 + $0x28] sm:$0xff] %vm655, %v1629
    %1800 = vst.msk [vmem:[#allocation2 + $0x30] sm:$0xff] %vm655, %v1630
    %1801 = vst.msk [vmem:[#allocation2 + $0x38] sm:$0xff] %vm655, %v1631
    %1802 = vst.msk [vmem:[#allocation2 + $0x40] sm:$0xff] %vm655, %v1632
    %1803 = vst.msk [vmem:[#allocation2 + $0x48] sm:$0xff] %vm655, %v1633
    %1804 = vst.msk [vmem:[#allocation2 + $0x50] sm:$0xff] %vm655, %v1634
    %1805 = vst.msk [vmem:[#allocation2 + $0x58] sm:$0xff] %vm655, %v1635
    %1806 = vst.msk [vmem:[#allocation2 + $0x60] sm:$0xff] %vm655, %v1636
    %1807 = vst.msk [vmem:[#allocation2 + $0x68] sm:$0xff] %vm655, %v1637
    %1808 = vst.msk [vmem:[#allocation2 + $0x70] sm:$0xff] %vm655, %v1638
    %1809 = vst.msk [vmem:[#allocation2 + $0x78] sm:$0xff] %vm655, %v1639
    %1810 = vst.msk [vmem:[#allocation2 + $0x80] sm:$0xff] %vm655, %v1640
    %1811 = vst.msk [vmem:[#allocation2 + $0x88] sm:$0xff] %vm655, %v1641
    %1812 = vst.msk [vmem:[#allocation2 + $0x90] sm:$0xff] %vm655, %v1642
    %1813 = vst.msk [vmem:[#allocation2 + $0x98] sm:$0xff] %vm655, %v1643
    %1814 = vst.msk [vmem:[#allocation2 + $0xa0] sm:$0xff] %vm655, %v1644
    %1815 = vst.msk [vmem:[#allocation2 + $0xa8] sm:$0xff] %vm655, %v1645
    %1816 = vst.msk [vmem:[#allocation2 + $0xb0] sm:$0xff] %vm655, %v1646
    %1817 = vst.msk [vmem:[#allocation2 + $0xb8] sm:$0xff] %vm655, %v1647
    %1818 = vst.msk [vmem:[#allocation2 + $0xc0] sm:$0xff] %vm655, %v1648
    %1819 = vst.msk [vmem:[#allocation2 + $0xc8] sm:$0xff] %vm655, %v1649
    %1820 = vst.msk [vmem:[#allocation2 + $0xd0] sm:$0xff] %vm655, %v1650
    %1821 = vst.msk [vmem:[#allocation2 + $0xd8] sm:$0xff] %vm655, %v1651
    %1822 = vst.msk [vmem:[#allocation2 + $0xe0] sm:$0xff] %vm655, %v1652
    %1823 = vst.msk [vmem:[#allocation2 + $0xe8] sm:$0xff] %vm655, %v1653
    %1824 = vst.msk [vmem:[#allocation2 + $0xf0] sm:$0xff] %vm655, %v1654
    %1825 = vst.msk [vmem:[#allocation2 + $0xf8] sm:$0xff] %vm655, %v1655
    %1826 = vst.msk [vmem:[#allocation2 + $0x100] sm:$0xff] %vm655, %v1656
    %1827 = vst.msk [vmem:[#allocation2 + $0x108] sm:$0xff] %vm655, %v1657
    %1828 = vst.msk [vmem:[#allocation2 + $0x110] sm:$0xff] %vm655, %v1658
    %1829 = vst.msk [vmem:[#allocation2 + $0x118] sm:$0xff] %vm655, %v1659
    %1830 = vst.msk [vmem:[#allocation2 + $0x120] sm:$0xff] %vm655, %v1660
    %1831 = vst.msk [vmem:[#allocation2 + $0x128] sm:$0xff] %vm655, %v1661
    %1832 = vst.msk [vmem:[#allocation2 + $0x130] sm:$0xff] %vm655, %v1662
    %1833 = vst.msk [vmem:[#allocation2 + $0x138] sm:$0xff] %vm655, %v1663
    %1834 = vst.msk [vmem:[#allocation2 + $0x140] sm:$0xff] %vm655, %v1664
    %1835 = vst.msk [vmem:[#allocation2 + $0x148] sm:$0xff] %vm655, %v1665
    %1836 = vst.msk [vmem:[#allocation2 + $0x150] sm:$0xff] %vm655, %v1666
    %1837 = vst.msk [vmem:[#allocation2 + $0x158] sm:$0xff] %vm655, %v1667
    %1838 = vst.msk [vmem:[#allocation2 + $0x160] sm:$0xff] %vm655, %v1668
    %1839 = vst.msk [vmem:[#allocation2 + $0x168] sm:$0xff] %vm655, %v1669
    %1840 = vst.msk [vmem:[#allocation2 + $0x170] sm:$0xff] %vm655, %v1670
    %1841 = vst.msk [vmem:[#allocation2 + $0x178] sm:$0xff] %vm655, %v1671
    %1842 = vst.msk [vmem:[#allocation2 + $0x180] sm:$0xff] %vm655, %v1672
    %1843 = vst.msk [vmem:[#allocation2 + $0x188] sm:$0xff] %vm655, %v1673
    %1844 = vst.msk [vmem:[#allocation2 + $0x190] sm:$0xff] %vm655, %v1674
    %1845 = vst.msk [vmem:[#allocation2 + $0x198] sm:$0xff] %vm655, %v1675
    %1846 = vst.msk [vmem:[#allocation2 + $0x1a0] sm:$0xff] %vm655, %v1676
    %1847 = vst.msk [vmem:[#allocation2 + $0x1a8] sm:$0xff] %vm655, %v1677
    %1848 = vst.msk [vmem:[#allocation2 + $0x1b0] sm:$0xff] %vm655, %v1678
    %1849 = vst.msk [vmem:[#allocation2 + $0x1b8] sm:$0xff] %vm655, %v1679
    %1850 = vst.msk [vmem:[#allocation2 + $0x1c0] sm:$0xff] %vm655, %v1680
    %1851 = vst.msk [vmem:[#allocation2 + $0x1c8] sm:$0xff] %vm655, %v1681
    %1852 = vst.msk [vmem:[#allocation2 + $0x1d0] sm:$0xff] %vm655, %v1682
    %1853 = vst.msk [vmem:[#allocation2 + $0x1d8] sm:$0xff] %vm655, %v1683
    %1854 = vst.msk [vmem:[#allocation2 + $0x1e0] sm:$0xff] %vm655, %v1684
    %1855 = vst.msk [vmem:[#allocation2 + $0x1e8] sm:$0xff] %vm655, %v1685
    %1856 = vst.msk [vmem:[#allocation2 + $0x1f0] sm:$0xff] %vm655, %v1686
    %1857 = vst.msk [vmem:[#allocation2 + $0x1f8] sm:$0xff] %vm655, %v1687
    %1858 = vst.msk [vmem:[#allocation2 + $0x200] sm:$0xff] %vm655, %v1688
    %1859 = vst.msk [vmem:[#allocation2 + $0x208] sm:$0xff] %vm655, %v1689
    %1860 = vst.msk [vmem:[#allocation2 + $0x210] sm:$0xff] %vm655, %v1690
    %1861 = vst.msk [vmem:[#allocation2 + $0x218] sm:$0xff] %vm655, %v1691
    %1862 = vst.msk [vmem:[#allocation2 + $0x220] sm:$0xff] %vm655, %v1692
    %1863 = vst.msk [vmem:[#allocation2 + $0x228] sm:$0xff] %vm655, %v1693
    %1864 = vst.msk [vmem:[#allocation2 + $0x230] sm:$0xff] %vm655, %v1694
    %1865 = vst.msk [vmem:[#allocation2 + $0x238] sm:$0xff] %vm655, %v1695
    %1866 = vst.msk [vmem:[#allocation2 + $0x240] sm:$0xff] %vm655, %v1696
    %1867 = vst.msk [vmem:[#allocation2 + $0x248] sm:$0xff] %vm655, %v1697
    %1868 = vst.msk [vmem:[#allocation2 + $0x250] sm:$0xff] %vm655, %v1698
    %1869 = vst.msk [vmem:[#allocation2 + $0x258] sm:$0xff] %vm655, %v1699
    %1870 = vst.msk [vmem:[#allocation2 + $0x260] sm:$0xff] %vm655, %v1700
    %1871 = vst.msk [vmem:[#allocation2 + $0x268] sm:$0xff] %vm655, %v1701
    %1872 = vst.msk [vmem:[#allocation2 + $0x270] sm:$0xff] %vm655, %v1702
    %1873 = vst.msk [vmem:[#allocation2 + $0x278] sm:$0xff] %vm655, %v1703
    %1874 = vst.msk [vmem:[#allocation2 + $0x280] sm:$0xff] %vm655, %v1704
    %1875 = vst.msk [vmem:[#allocation2 + $0x288] sm:$0xff] %vm655, %v1705
    %1876 = vst.msk [vmem:[#allocation2 + $0x290] sm:$0xff] %vm655, %v1706
    %1877 = vst.msk [vmem:[#allocation2 + $0x298] sm:$0xff] %vm655, %v1707
    %1878 = vst.msk [vmem:[#allocation2 + $0x2a0] sm:$0xff] %vm655, %v1708
    %1879 = vst.msk [vmem:[#allocation2 + $0x2a8] sm:$0xff] %vm655, %v1709
    %1880 = vst.msk [vmem:[#allocation2 + $0x2b0] sm:$0xff] %vm655, %v1710
    %1881 = vst.msk [vmem:[#allocation2 + $0x2b8] sm:$0xff] %vm655, %v1711
    %1882 = vst.msk [vmem:[#allocation2 + $0x2c0] sm:$0xff] %vm655, %v1712
    %1883 = vst.msk [vmem:[#allocation2 + $0x2c8] sm:$0xff] %vm655, %v1713
    %1884 = vst.msk [vmem:[#allocation2 + $0x2d0] sm:$0xff] %vm655, %v1714
    %1885 = vst.msk [vmem:[#allocation2 + $0x2d8] sm:$0xff] %vm655, %v1715
    %1886 = vst.msk [vmem:[#allocation2 + $0x2e0] sm:$0xff] %vm655, %v1716
    %1887 = vst.msk [vmem:[#allocation2 + $0x2e8] sm:$0xff] %vm655, %v1717
    %1888 = vst.msk [vmem:[#allocation2 + $0x2f0] sm:$0xff] %vm655, %v1718
    %1889 = vst.msk [vmem:[#allocation2 + $0x2f8] sm:$0xff] %vm655, %v1719
    %1890 = vst.msk [vmem:[#allocation2 + $0x300] sm:$0xff] %vm655, %v1720
    %1891 = vst.msk [vmem:[#allocation2 + $0x308] sm:$0xff] %vm655, %v1721
    %1892 = vst.msk [vmem:[#allocation2 + $0x310] sm:$0xff] %vm655, %v1722
    %1893 = vst.msk [vmem:[#allocation2 + $0x318] sm:$0xff] %vm655, %v1723
    %1894 = vst.msk [vmem:[#allocation2 + $0x320] sm:$0xff] %vm655, %v1724
    %1895 = vst.msk [vmem:[#allocation2 + $0x328] sm:$0xff] %vm655, %v1725
    %1896 = vst.msk [vmem:[#allocation2 + $0x330] sm:$0xff] %vm655, %v1726
    %1897 = vst.msk [vmem:[#allocation2 + $0x338] sm:$0xff] %vm655, %v1727
    %1898 = vst.msk [vmem:[#allocation2 + $0x340] sm:$0xff] %vm655, %v1728
    %1899 = vst.msk [vmem:[#allocation2 + $0x348] sm:$0xff] %vm655, %v1729
    %1900 = vst.msk [vmem:[#allocation2 + $0x350] sm:$0xff] %vm655, %v1730
    %1901 = vst.msk [vmem:[#allocation2 + $0x358] sm:$0xff] %vm655, %v1731
    %1902 = vst.msk [vmem:[#allocation2 + $0x360] sm:$0xff] %vm655, %v1732
    %1903 = vst.msk [vmem:[#allocation2 + $0x368] sm:$0xff] %vm655, %v1733
    %1904 = vst.msk [vmem:[#allocation2 + $0x370] sm:$0xff] %vm655, %v1734
    %1905 = vst.msk [vmem:[#allocation2 + $0x378] sm:$0xff] %vm655, %v1735
    %1906 = vst.msk [vmem:[#allocation2 + $0x380] sm:$0xff] %vm655, %v1736
    %1907 = vst.msk [vmem:[#allocation2 + $0x388] sm:$0xff] %vm655, %v1737
    %1908 = vst.msk [vmem:[#allocation2 + $0x390] sm:$0xff] %vm655, %v1738
    %1909 = vst.msk [vmem:[#allocation2 + $0x398] sm:$0xff] %vm655, %v1739
    %1910 = vst.msk [vmem:[#allocation2 + $0x3a0] sm:$0xff] %vm655, %v1740
    %1911 = vst.msk [vmem:[#allocation2 + $0x3a8] sm:$0xff] %vm655, %v1741
    %1912 = vst.msk [vmem:[#allocation2 + $0x3b0] sm:$0xff] %vm655, %v1742
    %1913 = vst.msk [vmem:[#allocation2 + $0x3b8] sm:$0xff] %vm655, %v1743
    %1914 = vst.msk [vmem:[#allocation2 + $0x3c0] sm:$0xff] %vm655, %v1744
    %1915 = vst.msk [vmem:[#allocation2 + $0x3c8] sm:$0xff] %vm655, %v1745
    %1916 = vst.msk [vmem:[#allocation2 + $0x3d0] sm:$0xff] %vm655, %v1746
    %1917 = vst.msk [vmem:[#allocation2 + $0x3d8] sm:$0xff] %vm655, %v1747
    %1918 = vst.msk [vmem:[#allocation2 + $0x3e0] sm:$0xff] %vm655, %v1748
    %1919 = vst.msk [vmem:[#allocation2 + $0x3e8] sm:$0xff] %vm655, %v1749
    %1920 = vst.msk [vmem:[#allocation2 + $0x3f0] sm:$0xff] %vm655, %v1750
    %1921 = vst.msk [vmem:[#allocation2 + $0x3f8] sm:$0xff] %vm655, %v1751
    %1922 = vst.msk [vmem:[#allocation2 + $0x400] sm:$0xff] %vm655, %v1752
    %1923 = vst.msk [vmem:[#allocation2 + $0x408] sm:$0xff] %vm655, %v1753
    %1924 = vst.msk [vmem:[#allocation2 + $0x410] sm:$0xff] %vm655, %v1754
    %1925 = vst.msk [vmem:[#allocation2 + $0x418] sm:$0xff] %vm655, %v1755
    %1926 = vst.msk [vmem:[#allocation2 + $0x420] sm:$0xff] %vm655, %v1756
    %1927 = vst.msk [vmem:[#allocation2 + $0x428] sm:$0xff] %vm655, %v1757
    %1928 = vst.msk [vmem:[#allocation2 + $0x430] sm:$0xff] %vm655, %v1758
    %1929 = vst.msk [vmem:[#allocation2 + $0x438] sm:$0xff] %vm655, %v1759
    %1930 = vst.msk [vmem:[#allocation2 + $0x440] sm:$0xff] %vm655, %v1760
    %1931 = vst.msk [vmem:[#allocation2 + $0x448] sm:$0xff] %vm655, %v1761
    %1932 = vst.msk [vmem:[#allocation2 + $0x450] sm:$0xff] %vm655, %v1762
    %1933 = vst.msk [vmem:[#allocation2 + $0x458] sm:$0xff] %vm655, %v1763
    %1934 = vst.msk [vmem:[#allocation2 + $0x460] sm:$0xff] %vm655, %v1764
    %1935 = vst.msk [vmem:[#allocation2 + $0x468] sm:$0xff] %vm655, %v1765
    %1936 = vst.msk [vmem:[#allocation2 + $0x470] sm:$0xff] %vm655, %v1766
    %1937 = vst.msk [vmem:[#allocation2 + $0x478] sm:$0xff] %vm655, %v1767
    %1938 = vst.msk [vmem:[#allocation2 + $0x480] sm:$0xff] %vm655, %v1768
    %1939 = vst.msk [vmem:[#allocation2 + $0x488] sm:$0xff] %vm655, %v1769
    %1940 = vst.msk [vmem:[#allocation2 + $0x490] sm:$0xff] %vm655, %v1770
    %1941 = vst.msk [vmem:[#allocation2 + $0x498] sm:$0xff] %vm655, %v1771
    %1942 = vst.msk [vmem:[#allocation2 + $0x4a0] sm:$0xff] %vm655, %v1772
    %1943 = vst.msk [vmem:[#allocation2 + $0x4a8] sm:$0xff] %vm655, %v1773
    %1944 = vst.msk [vmem:[#allocation2 + $0x4b0] sm:$0xff] %vm655, %v1774
    %1945 = vst.msk [vmem:[#allocation2 + $0x4b8] sm:$0xff] %vm655, %v1775
    %1946 = vst.msk [vmem:[#allocation2 + $0x4c0] sm:$0xff] %vm655, %v1776
    %1947 = vst.msk [vmem:[#allocation2 + $0x4c8] sm:$0xff] %vm655, %v1777
    %1948 = vst.msk [vmem:[#allocation2 + $0x4d0] sm:$0xff] %vm655, %v1778
    %1949 = vst.msk [vmem:[#allocation2 + $0x4d8] sm:$0xff] %vm655, %v1779
    %1950 = vst.msk [vmem:[#allocation2 + $0x4e0] sm:$0xff] %vm655, %v1780
    %1951 = vst.msk [vmem:[#allocation2 + $0x4e8] sm:$0xff] %vm655, %v1781
    %1952 = vst.msk [vmem:[#allocation2 + $0x4f0] sm:$0xff] %vm655, %v1782
    %1953 = vst.msk [vmem:[#allocation2 + $0x4f8] sm:$0xff] %vm655, %v1783
    %1954 = vst.msk [vmem:[#allocation2 + $0x500] sm:$0xff] %vm655, %v1784
    %1955 = vst.msk [vmem:[#allocation2 + $0x508] sm:$0xff] %vm655, %v1785
    %1956 = vst.msk [vmem:[#allocation2 + $0x510] sm:$0xff] %vm655, %v1786
    %1957 = vst.msk [vmem:[#allocation2 + $0x518] sm:$0xff] %vm655, %v1787
    %1958 = vst.msk [vmem:[#allocation2 + $0x520] sm:$0xff] %vm655, %v1788
    %1959 = vst.msk [vmem:[#allocation2 + $0x528] sm:$0xff] %vm655, %v1789
    %1960 = vst.msk [vmem:[#allocation2 + $0x530] sm:$0xff] %vm655, %v1790
    %1961 = vst.msk [vmem:[#allocation2 + $0x538] sm:$0xff] %vm655, %v1791
    %1962 = vst.msk [vmem:[#allocation2 + $0x540] sm:$0xff] %vm655, %v1792
    %1963 = vst.msk [vmem:[#allocation2 + $0x548] sm:$0xff] %vm655, %v1793
    %v1964 = vld [vmem:[#allocation2] sm:$0xff]
    %v1965 = vld [vmem:[#allocation2 + $0x8] sm:$0xff]
    %v1966 = vld [vmem:[#allocation2 + $0x10] sm:$0xff]
    %v1967 = vld [vmem:[#allocation2 + $0x18] sm:$0xff]
    %v1968 = vld [vmem:[#allocation2 + $0x20] sm:$0xff]
    %v1969 = vld [vmem:[#allocation2 + $0x28] sm:$0xff]
    %v1970 = vld [vmem:[#allocation2 + $0x30] sm:$0xff]
    %v1971 = vld [vmem:[#allocation2 + $0x38] sm:$0xff]
    %v1972 = vld [vmem:[#allocation2 + $0x40] sm:$0xff]
    %v1973 = vld [vmem:[#allocation2 + $0x48] sm:$0xff]
    %v1974 = vld [vmem:[#allocation2 + $0x50] sm:$0xff]
    %v1975 = vld [vmem:[#allocation2 + $0x58] sm:$0xff]
    %v1976 = vld [vmem:[#allocation2 + $0x60] sm:$0xff]
    %v1977 = vld [vmem:[#allocation2 + $0x68] sm:$0xff]
    %v1978 = vld [vmem:[#allocation2 + $0x70] sm:$0xff]
    %v1979 = vld [vmem:[#allocation2 + $0x78] sm:$0xff]
    %v1980 = vld [vmem:[#allocation2 + $0x80] sm:$0xff]
    %v1981 = vld [vmem:[#allocation2 + $0x88] sm:$0xff]
    %v1982 = vld [vmem:[#allocation2 + $0x90] sm:$0xff]
    %v1983 = vld [vmem:[#allocation2 + $0x98] sm:$0xff]
    %v1984 = vld [vmem:[#allocation2 + $0xa0] sm:$0xff]
    %v1985 = vld [vmem:[#allocation2 + $0xa8] sm:$0xff]
    %v1986 = vld [vmem:[#allocation2 + $0xb0] sm:$0xff]
    %v1987 = vld [vmem:[#allocation2 + $0xb8] sm:$0xff]
    %v1988 = vld [vmem:[#allocation2 + $0xc0] sm:$0xff]
    %v1989 = vld [vmem:[#allocation2 + $0xc8] sm:$0xff]
    %v1990 = vld [vmem:[#allocation2 + $0xd0] sm:$0xff]
    %v1991 = vld [vmem:[#allocation2 + $0xd8] sm:$0xff]
    %v1992 = vld [vmem:[#allocation2 + $0xe0] sm:$0xff]
    %v1993 = vld [vmem:[#allocation2 + $0xe8] sm:$0xff]
    %v1994 = vld [vmem:[#allocation2 + $0xf0] sm:$0xff]
    %v1995 = vld [vmem:[#allocation2 + $0xf8] sm:$0xff]
    %v1996 = vld [vmem:[#allocation2 + $0x100] sm:$0xff]
    %v1997 = vld [vmem:[#allocation2 + $0x108] sm:$0xff]
    %v1998 = vld [vmem:[#allocation2 + $0x110] sm:$0xff]
    %v1999 = vld [vmem:[#allocation2 + $0x118] sm:$0xff]
    %v2000 = vld [vmem:[#allocation2 + $0x120] sm:$0xff]
    %v2001 = vld [vmem:[#allocation2 + $0x128] sm:$0xff]
    %v2002 = vld [vmem:[#allocation2 + $0x130] sm:$0xff]
    %v2003 = vld [vmem:[#allocation2 + $0x138] sm:$0xff]
    %v2004 = vld [vmem:[#allocation2 + $0x140] sm:$0xff]
    %v2005 = vld [vmem:[#allocation2 + $0x148] sm:$0xff]
    %v2006 = vld [vmem:[#allocation2 + $0x150] sm:$0xff]
    %v2007 = vld [vmem:[#allocation2 + $0x158] sm:$0xff]
    %v2008 = vld [vmem:[#allocation2 + $0x160] sm:$0xff]
    %v2009 = vld [vmem:[#allocation2 + $0x168] sm:$0xff]
    %v2010 = vld [vmem:[#allocation2 + $0x170] sm:$0xff]
    %v2011 = vld [vmem:[#allocation2 + $0x178] sm:$0xff]
    %v2012 = vld [vmem:[#allocation2 + $0x180] sm:$0xff]
    %v2013 = vld [vmem:[#allocation2 + $0x188] sm:$0xff]
    %v2014 = vld [vmem:[#allocation2 + $0x190] sm:$0xff]
    %v2015 = vld [vmem:[#allocation2 + $0x198] sm:$0xff]
    %v2016 = vld [vmem:[#allocation2 + $0x1a0] sm:$0xff]
    %v2017 = vld [vmem:[#allocation2 + $0x1a8] sm:$0xff]
    %v2018 = vld [vmem:[#allocation2 + $0x1b0] sm:$0xff]
    %v2019 = vld [vmem:[#allocation2 + $0x1b8] sm:$0xff]
    %v2020 = vld [vmem:[#allocation2 + $0x1c0] sm:$0xff]
    %v2021 = vld [vmem:[#allocation2 + $0x1c8] sm:$0xff]
    %v2022 = vld [vmem:[#allocation2 + $0x1d0] sm:$0xff]
    %v2023 = vld [vmem:[#allocation2 + $0x1d8] sm:$0xff]
    %v2024 = vld [vmem:[#allocation2 + $0x1e0] sm:$0xff]
    %v2025 = vld [vmem:[#allocation2 + $0x1e8] sm:$0xff]
    %v2026 = vld [vmem:[#allocation2 + $0x1f0] sm:$0xff]
    %v2027 = vld [vmem:[#allocation2 + $0x1f8] sm:$0xff]
    %v2028 = vld [vmem:[#allocation2 + $0x200] sm:$0xff]
    %v2029 = vld [vmem:[#allocation2 + $0x208] sm:$0xff]
    %v2030 = vld [vmem:[#allocation2 + $0x210] sm:$0xff]
    %v2031 = vld [vmem:[#allocation2 + $0x218] sm:$0xff]
    %v2032 = vld [vmem:[#allocation2 + $0x220] sm:$0xff]
    %v2033 = vld [vmem:[#allocation2 + $0x228] sm:$0xff]
    %v2034 = vld [vmem:[#allocation2 + $0x230] sm:$0xff]
    %v2035 = vld [vmem:[#allocation2 + $0x238] sm:$0xff]
    %v2036 = vld [vmem:[#allocation2 + $0x240] sm:$0xff]
    %v2037 = vld [vmem:[#allocation2 + $0x248] sm:$0xff]
    %v2038 = vld [vmem:[#allocation2 + $0x250] sm:$0xff]
    %v2039 = vld [vmem:[#allocation2 + $0x258] sm:$0xff]
    %v2040 = vld [vmem:[#allocation2 + $0x260] sm:$0xff]
    %v2041 = vld [vmem:[#allocation2 + $0x268] sm:$0xff]
    %v2042 = vld [vmem:[#allocation2 + $0x270] sm:$0xff]
    %v2043 = vld [vmem:[#allocation2 + $0x278] sm:$0xff]
    %v2044 = vld [vmem:[#allocation2 + $0x280] sm:$0xff]
    %v2045 = vld [vmem:[#allocation2 + $0x288] sm:$0xff]
    %v2046 = vld [vmem:[#allocation2 + $0x290] sm:$0xff]
    %v2047 = vld [vmem:[#allocation2 + $0x298] sm:$0xff]
    %v2048 = vld [vmem:[#allocation2 + $0x2a0] sm:$0xff]
    %v2049 = vld [vmem:[#allocation2 + $0x2a8] sm:$0xff]
    %v2050 = vld [vmem:[#allocation2 + $0x2b0] sm:$0xff]
    %v2051 = vld [vmem:[#allocation2 + $0x2b8] sm:$0xff]
    %v2052 = vld [vmem:[#allocation2 + $0x2c0] sm:$0xff]
    %v2053 = vld [vmem:[#allocation2 + $0x2c8] sm:$0xff]
    %v2054 = vld [vmem:[#allocation2 + $0x2d0] sm:$0xff]
    %v2055 = vld [vmem:[#allocation2 + $0x2d8] sm:$0xff]
    %v2056 = vld [vmem:[#allocation2 + $0x2e0] sm:$0xff]
    %v2057 = vld [vmem:[#allocation2 + $0x2e8] sm:$0xff]
    %v2058 = vld [vmem:[#allocation2 + $0x2f0] sm:$0xff]
    %v2059 = vld [vmem:[#allocation2 + $0x2f8] sm:$0xff]
    %v2060 = vld [vmem:[#allocation2 + $0x300] sm:$0xff]
    %v2061 = vld [vmem:[#allocation2 + $0x308] sm:$0xff]
    %v2062 = vld [vmem:[#allocation2 + $0x310] sm:$0xff]
    %v2063 = vld [vmem:[#allocation2 + $0x318] sm:$0xff]
    %v2064 = vld [vmem:[#allocation2 + $0x320] sm:$0xff]
    %v2065 = vld [vmem:[#allocation2 + $0x328] sm:$0xff]
    %v2066 = vld [vmem:[#allocation2 + $0x330] sm:$0xff]
    %v2067 = vld [vmem:[#allocation2 + $0x338] sm:$0xff]
    %v2068 = vld [vmem:[#allocation2 + $0x340] sm:$0xff]
    %v2069 = vld [vmem:[#allocation2 + $0x348] sm:$0xff]
    %v2070 = vld [vmem:[#allocation2 + $0x350] sm:$0xff]
    %v2071 = vld [vmem:[#allocation2 + $0x358] sm:$0xff]
    %v2072 = vld [vmem:[#allocation2 + $0x360] sm:$0xff]
    %v2073 = vld [vmem:[#allocation2 + $0x368] sm:$0xff]
    %v2074 = vld [vmem:[#allocation2 + $0x370] sm:$0xff]
    %v2075 = vld [vmem:[#allocation2 + $0x378] sm:$0xff]
    %v2076 = vld [vmem:[#allocation2 + $0x380] sm:$0xff]
    %v2077 = vld [vmem:[#allocation2 + $0x388] sm:$0xff]
    %v2078 = vld [vmem:[#allocation2 + $0x390] sm:$0xff]
    %v2079 = vld [vmem:[#allocation2 + $0x398] sm:$0xff]
    %v2080 = vld [vmem:[#allocation2 + $0x3a0] sm:$0xff]
    %v2081 = vld [vmem:[#allocation2 + $0x3a8] sm:$0xff]
    %v2082 = vld [vmem:[#allocation2 + $0x3b0] sm:$0xff]
    %v2083 = vld [vmem:[#allocation2 + $0x3b8] sm:$0xff]
    %v2084 = vld [vmem:[#allocation2 + $0x3c0] sm:$0xff]
    %v2085 = vld [vmem:[#allocation2 + $0x3c8] sm:$0xff]
    %v2086 = vld [vmem:[#allocation2 + $0x3d0] sm:$0xff]
    %v2087 = vld [vmem:[#allocation2 + $0x3d8] sm:$0xff]
    %v2088 = vld [vmem:[#allocation2 + $0x3e0] sm:$0xff]
    %v2089 = vld [vmem:[#allocation2 + $0x3e8] sm:$0xff]
    %v2090 = vld [vmem:[#allocation2 + $0x3f0] sm:$0xff]
    %v2091 = vld [vmem:[#allocation2 + $0x3f8] sm:$0xff]
    %v2092 = vld [vmem:[#allocation2 + $0x400] sm:$0xff]
    %v2093 = vld [vmem:[#allocation2 + $0x408] sm:$0xff]
    %v2094 = vld [vmem:[#allocation2 + $0x410] sm:$0xff]
    %v2095 = vld [vmem:[#allocation2 + $0x418] sm:$0xff]
    %v2096 = vld [vmem:[#allocation2 + $0x420] sm:$0xff]
    %v2097 = vld [vmem:[#allocation2 + $0x428] sm:$0xff]
    %v2098 = vld [vmem:[#allocation2 + $0x430] sm:$0xff]
    %v2099 = vld [vmem:[#allocation2 + $0x438] sm:$0xff]
    %v2100 = vld [vmem:[#allocation2 + $0x440] sm:$0xff]
    %v2101 = vld [vmem:[#allocation2 + $0x448] sm:$0xff]
    %v2102 = vld [vmem:[#allocation2 + $0x450] sm:$0xff]
    %v2103 = vld [vmem:[#allocation2 + $0x458] sm:$0xff]
    %v2104 = vld [vmem:[#allocation2 + $0x460] sm:$0xff]
    %v2105 = vld [vmem:[#allocation2 + $0x468] sm:$0xff]
    %v2106 = vld [vmem:[#allocation2 + $0x470] sm:$0xff]
    %v2107 = vld [vmem:[#allocation2 + $0x478] sm:$0xff]
    %v2108 = vld [vmem:[#allocation2 + $0x480] sm:$0xff]
    %v2109 = vld [vmem:[#allocation2 + $0x488] sm:$0xff]
    %v2110 = vld [vmem:[#allocation2 + $0x490] sm:$0xff]
    %v2111 = vld [vmem:[#allocation2 + $0x498] sm:$0xff]
    %v2112 = vld [vmem:[#allocation2 + $0x4a0] sm:$0xff]
    %v2113 = vld [vmem:[#allocation2 + $0x4a8] sm:$0xff]
    %v2114 = vld [vmem:[#allocation2 + $0x4b0] sm:$0xff]
    %v2115 = vld [vmem:[#allocation2 + $0x4b8] sm:$0xff]
    %v2116 = vld [vmem:[#allocation2 + $0x4c0] sm:$0xff]
    %v2117 = vld [vmem:[#allocation2 + $0x4c8] sm:$0xff]
    %v2118 = vld [vmem:[#allocation2 + $0x4d0] sm:$0xff]
    %v2119 = vld [vmem:[#allocation2 + $0x4d8] sm:$0xff]
    %v2120 = vld [vmem:[#allocation2 + $0x4e0] sm:$0xff]
    %v2121 = vld [vmem:[#allocation2 + $0x4e8] sm:$0xff]
    %v2122 = vld [vmem:[#allocation2 + $0x4f0] sm:$0xff]
    %v2123 = vld [vmem:[#allocation2 + $0x4f8] sm:$0xff]
    %v2124 = vld [vmem:[#allocation2 + $0x500] sm:$0xff]
    %v2125 = vld [vmem:[#allocation2 + $0x508] sm:$0xff]
    %v2126 = vld [vmem:[#allocation2 + $0x510] sm:$0xff]
    %v2127 = vld [vmem:[#allocation2 + $0x518] sm:$0xff]
    %v2128 = vld [vmem:[#allocation2 + $0x520] sm:$0xff]
    %v2129 = vld [vmem:[#allocation2 + $0x528] sm:$0xff]
    %v2130 = vld [vmem:[#allocation2 + $0x530] sm:$0xff]
    %v2131 = vld [vmem:[#allocation2 + $0x538] sm:$0xff]
    %v2132 = vld [vmem:[#allocation2 + $0x540] sm:$0xff]
    %v2133 = vld [vmem:[#allocation2 + $0x2] sm:$0xff]
    %v2134 = vld [vmem:[#allocation2 + $0xa] sm:$0xff]
    %v2135 = vld [vmem:[#allocation2 + $0x12] sm:$0xff]
    %v2136 = vld [vmem:[#allocation2 + $0x1a] sm:$0xff]
    %v2137 = vld [vmem:[#allocation2 + $0x22] sm:$0xff]
    %v2138 = vld [vmem:[#allocation2 + $0x2a] sm:$0xff]
    %v2139 = vld [vmem:[#allocation2 + $0x32] sm:$0xff]
    %v2140 = vld [vmem:[#allocation2 + $0x3a] sm:$0xff]
    %v2141 = vld [vmem:[#allocation2 + $0x42] sm:$0xff]
    %v2142 = vld [vmem:[#allocation2 + $0x4a] sm:$0xff]
    %v2143 = vld [vmem:[#allocation2 + $0x52] sm:$0xff]
    %v2144 = vld [vmem:[#allocation2 + $0x5a] sm:$0xff]
    %v2145 = vld [vmem:[#allocation2 + $0x62] sm:$0xff]
    %v2146 = vld [vmem:[#allocation2 + $0x6a] sm:$0xff]
    %v2147 = vld [vmem:[#allocation2 + $0x72] sm:$0xff]
    %v2148 = vld [vmem:[#allocation2 + $0x7a] sm:$0xff]
    %v2149 = vld [vmem:[#allocation2 + $0x82] sm:$0xff]
    %v2150 = vld [vmem:[#allocation2 + $0x8a] sm:$0xff]
    %v2151 = vld [vmem:[#allocation2 + $0x92] sm:$0xff]
    %v2152 = vld [vmem:[#allocation2 + $0x9a] sm:$0xff]
    %v2153 = vld [vmem:[#allocation2 + $0xa2] sm:$0xff]
    %v2154 = vld [vmem:[#allocation2 + $0xaa] sm:$0xff]
    %v2155 = vld [vmem:[#allocation2 + $0xb2] sm:$0xff]
    %v2156 = vld [vmem:[#allocation2 + $0xba] sm:$0xff]
    %v2157 = vld [vmem:[#allocation2 + $0xc2] sm:$0xff]
    %v2158 = vld [vmem:[#allocation2 + $0xca] sm:$0xff]
    %v2159 = vld [vmem:[#allocation2 + $0xd2] sm:$0xff]
    %v2160 = vld [vmem:[#allocation2 + $0xda] sm:$0xff]
    %v2161 = vld [vmem:[#allocation2 + $0xe2] sm:$0xff]
    %v2162 = vld [vmem:[#allocation2 + $0xea] sm:$0xff]
    %v2163 = vld [vmem:[#allocation2 + $0xf2] sm:$0xff]
    %v2164 = vld [vmem:[#allocation2 + $0xfa] sm:$0xff]
    %v2165 = vld [vmem:[#allocation2 + $0x102] sm:$0xff]
    %v2166 = vld [vmem:[#allocation2 + $0x10a] sm:$0xff]
    %v2167 = vld [vmem:[#allocation2 + $0x112] sm:$0xff]
    %v2168 = vld [vmem:[#allocation2 + $0x11a] sm:$0xff]
    %v2169 = vld [vmem:[#allocation2 + $0x122] sm:$0xff]
    %v2170 = vld [vmem:[#allocation2 + $0x12a] sm:$0xff]
    %v2171 = vld [vmem:[#allocation2 + $0x132] sm:$0xff]
    %v2172 = vld [vmem:[#allocation2 + $0x13a] sm:$0xff]
    %v2173 = vld [vmem:[#allocation2 + $0x142] sm:$0xff]
    %v2174 = vld [vmem:[#allocation2 + $0x14a] sm:$0xff]
    %v2175 = vld [vmem:[#allocation2 + $0x152] sm:$0xff]
    %v2176 = vld [vmem:[#allocation2 + $0x15a] sm:$0xff]
    %v2177 = vld [vmem:[#allocation2 + $0x162] sm:$0xff]
    %v2178 = vld [vmem:[#allocation2 + $0x16a] sm:$0xff]
    %v2179 = vld [vmem:[#allocation2 + $0x172] sm:$0xff]
    %v2180 = vld [vmem:[#allocation2 + $0x17a] sm:$0xff]
    %v2181 = vld [vmem:[#allocation2 + $0x182] sm:$0xff]
    %v2182 = vld [vmem:[#allocation2 + $0x18a] sm:$0xff]
    %v2183 = vld [vmem:[#allocation2 + $0x192] sm:$0xff]
    %v2184 = vld [vmem:[#allocation2 + $0x19a] sm:$0xff]
    %v2185 = vld [vmem:[#allocation2 + $0x1a2] sm:$0xff]
    %v2186 = vld [vmem:[#allocation2 + $0x1aa] sm:$0xff]
    %v2187 = vld [vmem:[#allocation2 + $0x1b2] sm:$0xff]
    %v2188 = vld [vmem:[#allocation2 + $0x1ba] sm:$0xff]
    %v2189 = vld [vmem:[#allocation2 + $0x1c2] sm:$0xff]
    %v2190 = vld [vmem:[#allocation2 + $0x1ca] sm:$0xff]
    %v2191 = vld [vmem:[#allocation2 + $0x1d2] sm:$0xff]
    %v2192 = vld [vmem:[#allocation2 + $0x1da] sm:$0xff]
    %v2193 = vld [vmem:[#allocation2 + $0x1e2] sm:$0xff]
    %v2194 = vld [vmem:[#allocation2 + $0x1ea] sm:$0xff]
    %v2195 = vld [vmem:[#allocation2 + $0x1f2] sm:$0xff]
    %v2196 = vld [vmem:[#allocation2 + $0x1fa] sm:$0xff]
    %v2197 = vld [vmem:[#allocation2 + $0x202] sm:$0xff]
    %v2198 = vld [vmem:[#allocation2 + $0x20a] sm:$0xff]
    %v2199 = vld [vmem:[#allocation2 + $0x212] sm:$0xff]
    %v2200 = vld [vmem:[#allocation2 + $0x21a] sm:$0xff]
    %v2201 = vld [vmem:[#allocation2 + $0x222] sm:$0xff]
    %v2202 = vld [vmem:[#allocation2 + $0x22a] sm:$0xff]
    %v2203 = vld [vmem:[#allocation2 + $0x232] sm:$0xff]
    %v2204 = vld [vmem:[#allocation2 + $0x23a] sm:$0xff]
    %v2205 = vld [vmem:[#allocation2 + $0x242] sm:$0xff]
    %v2206 = vld [vmem:[#allocation2 + $0x24a] sm:$0xff]
    %v2207 = vld [vmem:[#allocation2 + $0x252] sm:$0xff]
    %v2208 = vld [vmem:[#allocation2 + $0x25a] sm:$0xff]
    %v2209 = vld [vmem:[#allocation2 + $0x262] sm:$0xff]
    %v2210 = vld [vmem:[#allocation2 + $0x26a] sm:$0xff]
    %v2211 = vld [vmem:[#allocation2 + $0x272] sm:$0xff]
    %v2212 = vld [vmem:[#allocation2 + $0x27a] sm:$0xff]
    %v2213 = vld [vmem:[#allocation2 + $0x282] sm:$0xff]
    %v2214 = vld [vmem:[#allocation2 + $0x28a] sm:$0xff]
    %v2215 = vld [vmem:[#allocation2 + $0x292] sm:$0xff]
    %v2216 = vld [vmem:[#allocation2 + $0x29a] sm:$0xff]
    %v2217 = vld [vmem:[#allocation2 + $0x2a2] sm:$0xff]
    %v2218 = vld [vmem:[#allocation2 + $0x2aa] sm:$0xff]
    %v2219 = vld [vmem:[#allocation2 + $0x2b2] sm:$0xff]
    %v2220 = vld [vmem:[#allocation2 + $0x2ba] sm:$0xff]
    %v2221 = vld [vmem:[#allocation2 + $0x2c2] sm:$0xff]
    %v2222 = vld [vmem:[#allocation2 + $0x2ca] sm:$0xff]
    %v2223 = vld [vmem:[#allocation2 + $0x2d2] sm:$0xff]
    %v2224 = vld [vmem:[#allocation2 + $0x2da] sm:$0xff]
    %v2225 = vld [vmem:[#allocation2 + $0x2e2] sm:$0xff]
    %v2226 = vld [vmem:[#allocation2 + $0x2ea] sm:$0xff]
    %v2227 = vld [vmem:[#allocation2 + $0x2f2] sm:$0xff]
    %v2228 = vld [vmem:[#allocation2 + $0x2fa] sm:$0xff]
    %v2229 = vld [vmem:[#allocation2 + $0x302] sm:$0xff]
    %v2230 = vld [vmem:[#allocation2 + $0x30a] sm:$0xff]
    %v2231 = vld [vmem:[#allocation2 + $0x312] sm:$0xff]
    %v2232 = vld [vmem:[#allocation2 + $0x31a] sm:$0xff]
    %v2233 = vld [vmem:[#allocation2 + $0x322] sm:$0xff]
    %v2234 = vld [vmem:[#allocation2 + $0x32a] sm:$0xff]
    %v2235 = vld [vmem:[#allocation2 + $0x332] sm:$0xff]
    %v2236 = vld [vmem:[#allocation2 + $0x33a] sm:$0xff]
    %v2237 = vld [vmem:[#allocation2 + $0x342] sm:$0xff]
    %v2238 = vld [vmem:[#allocation2 + $0x34a] sm:$0xff]
    %v2239 = vld [vmem:[#allocation2 + $0x352] sm:$0xff]
    %v2240 = vld [vmem:[#allocation2 + $0x35a] sm:$0xff]
    %v2241 = vld [vmem:[#allocation2 + $0x362] sm:$0xff]
    %v2242 = vld [vmem:[#allocation2 + $0x36a] sm:$0xff]
    %v2243 = vld [vmem:[#allocation2 + $0x372] sm:$0xff]
    %v2244 = vld [vmem:[#allocation2 + $0x37a] sm:$0xff]
    %v2245 = vld [vmem:[#allocation2 + $0x382] sm:$0xff]
    %v2246 = vld [vmem:[#allocation2 + $0x38a] sm:$0xff]
    %v2247 = vld [vmem:[#allocation2 + $0x392] sm:$0xff]
    %v2248 = vld [vmem:[#allocation2 + $0x39a] sm:$0xff]
    %v2249 = vld [vmem:[#allocation2 + $0x3a2] sm:$0xff]
    %v2250 = vld [vmem:[#allocation2 + $0x3aa] sm:$0xff]
    %v2251 = vld [vmem:[#allocation2 + $0x3b2] sm:$0xff]
    %v2252 = vld [vmem:[#allocation2 + $0x3ba] sm:$0xff]
    %v2253 = vld [vmem:[#allocation2 + $0x3c2] sm:$0xff]
    %v2254 = vld [vmem:[#allocation2 + $0x3ca] sm:$0xff]
    %v2255 = vld [vmem:[#allocation2 + $0x3d2] sm:$0xff]
    %v2256 = vld [vmem:[#allocation2 + $0x3da] sm:$0xff]
    %v2257 = vld [vmem:[#allocation2 + $0x3e2] sm:$0xff]
    %v2258 = vld [vmem:[#allocation2 + $0x3ea] sm:$0xff]
    %v2259 = vld [vmem:[#allocation2 + $0x3f2] sm:$0xff]
    %v2260 = vld [vmem:[#allocation2 + $0x3fa] sm:$0xff]
    %v2261 = vld [vmem:[#allocation2 + $0x402] sm:$0xff]
    %v2262 = vld [vmem:[#allocation2 + $0x40a] sm:$0xff]
    %v2263 = vld [vmem:[#allocation2 + $0x412] sm:$0xff]
    %v2264 = vld [vmem:[#allocation2 + $0x41a] sm:$0xff]
    %v2265 = vld [vmem:[#allocation2 + $0x422] sm:$0xff]
    %v2266 = vld [vmem:[#allocation2 + $0x42a] sm:$0xff]
    %v2267 = vld [vmem:[#allocation2 + $0x432] sm:$0xff]
    %v2268 = vld [vmem:[#allocation2 + $0x43a] sm:$0xff]
    %v2269 = vld [vmem:[#allocation2 + $0x442] sm:$0xff]
    %v2270 = vld [vmem:[#allocation2 + $0x44a] sm:$0xff]
    %v2271 = vld [vmem:[#allocation2 + $0x452] sm:$0xff]
    %v2272 = vld [vmem:[#allocation2 + $0x45a] sm:$0xff]
    %v2273 = vld [vmem:[#allocation2 + $0x462] sm:$0xff]
    %v2274 = vld [vmem:[#allocation2 + $0x46a] sm:$0xff]
    %v2275 = vld [vmem:[#allocation2 + $0x472] sm:$0xff]
    %v2276 = vld [vmem:[#allocation2 + $0x47a] sm:$0xff]
    %v2277 = vld [vmem:[#allocation2 + $0x482] sm:$0xff]
    %v2278 = vld [vmem:[#allocation2 + $0x48a] sm:$0xff]
    %v2279 = vld [vmem:[#allocation2 + $0x492] sm:$0xff]
    %v2280 = vld [vmem:[#allocation2 + $0x49a] sm:$0xff]
    %v2281 = vld [vmem:[#allocation2 + $0x4a2] sm:$0xff]
    %v2282 = vld [vmem:[#allocation2 + $0x4aa] sm:$0xff]
    %v2283 = vld [vmem:[#allocation2 + $0x4b2] sm:$0xff]
    %v2284 = vld [vmem:[#allocation2 + $0x4ba] sm:$0xff]
    %v2285 = vld [vmem:[#allocation2 + $0x4c2] sm:$0xff]
    %v2286 = vld [vmem:[#allocation2 + $0x4ca] sm:$0xff]
    %v2287 = vld [vmem:[#allocation2 + $0x4d2] sm:$0xff]
    %v2288 = vld [vmem:[#allocation2 + $0x4da] sm:$0xff]
    %v2289 = vld [vmem:[#allocation2 + $0x4e2] sm:$0xff]
    %v2290 = vld [vmem:[#allocation2 + $0x4ea] sm:$0xff]
    %v2291 = vld [vmem:[#allocation2 + $0x4f2] sm:$0xff]
    %v2292 = vld [vmem:[#allocation2 + $0x4fa] sm:$0xff]
    %v2293 = vld [vmem:[#allocation2 + $0x502] sm:$0xff]
    %v2294 = vld [vmem:[#allocation2 + $0x50a] sm:$0xff]
    %v2295 = vld [vmem:[#allocation2 + $0x512] sm:$0xff]
    %v2296 = vld [vmem:[#allocation2 + $0x51a] sm:$0xff]
    %v2297 = vld [vmem:[#allocation2 + $0x522] sm:$0xff]
    %v2298 = vld [vmem:[#allocation2 + $0x52a] sm:$0xff]
    %v2299 = vld [vmem:[#allocation2 + $0x532] sm:$0xff]
    %v2300 = vld [vmem:[#allocation2 + $0x53a] sm:$0xff]
    %v2301 = vld [vmem:[#allocation2 + $0x542] sm:$0xff]
    %v2302 = vmax.f32 %v1964, %v2133
    %v2303 = vmax.f32 %v1965, %v2134
    %v2304 = vmax.f32 %v1966, %v2135
    %v2305 = vmax.f32 %v1967, %v2136
    %v2306 = vmax.f32 %v1968, %v2137
    %v2307 = vmax.f32 %v1969, %v2138
    %v2308 = vmax.f32 %v1970, %v2139
    %v2309 = vmax.f32 %v1971, %v2140
    %v2310 = vmax.f32 %v1972, %v2141
    %v2311 = vmax.f32 %v1973, %v2142
    %v2312 = vmax.f32 %v1974, %v2143
    %v2313 = vmax.f32 %v1975, %v2144
    %v2314 = vmax.f32 %v1976, %v2145
    %v2315 = vmax.f32 %v1977, %v2146
    %v2316 = vmax.f32 %v1978, %v2147
    %v2317 = vmax.f32 %v1979, %v2148
    %v2318 = vmax.f32 %v1980, %v2149
    %v2319 = vmax.f32 %v1981, %v2150
    %v2320 = vmax.f32 %v1982, %v2151
    %v2321 = vmax.f32 %v1983, %v2152
    %v2322 = vmax.f32 %v1984, %v2153
    %v2323 = vmax.f32 %v1985, %v2154
    %v2324 = vmax.f32 %v1986, %v2155
    %v2325 = vmax.f32 %v1987, %v2156
    %v2326 = vmax.f32 %v1988, %v2157
    %v2327 = vmax.f32 %v1989, %v2158
    %v2328 = vmax.f32 %v1990, %v2159
    %v2329 = vmax.f32 %v1991, %v2160
    %v2330 = vmax.f32 %v1992, %v2161
    %v2331 = vmax.f32 %v1993, %v2162
    %v2332 = vmax.f32 %v1994, %v2163
    %v2333 = vmax.f32 %v1995, %v2164
    %v2334 = vmax.f32 %v1996, %v2165
    %v2335 = vmax.f32 %v1997, %v2166
    %v2336 = vmax.f32 %v1998, %v2167
    %v2337 = vmax.f32 %v1999, %v2168
    %v2338 = vmax.f32 %v2000, %v2169
    %v2339 = vmax.f32 %v2001, %v2170
    %v2340 = vmax.f32 %v2002, %v2171
    %v2341 = vmax.f32 %v2003, %v2172
    %v2342 = vmax.f32 %v2004, %v2173
    %v2343 = vmax.f32 %v2005, %v2174
    %v2344 = vmax.f32 %v2006, %v2175
    %v2345 = vmax.f32 %v2007, %v2176
    %v2346 = vmax.f32 %v2008, %v2177
    %v2347 = vmax.f32 %v2009, %v2178
    %v2348 = vmax.f32 %v2010, %v2179
    %v2349 = vmax.f32 %v2011, %v2180
    %v2350 = vmax.f32 %v2012, %v2181
    %v2351 = vmax.f32 %v2013, %v2182
    %v2352 = vmax.f32 %v2014, %v2183
    %v2353 = vmax.f32 %v2015, %v2184
    %v2354 = vmax.f32 %v2016, %v2185
    %v2355 = vmax.f32 %v2017, %v2186
    %v2356 = vmax.f32 %v2018, %v2187
    %v2357 = vmax.f32 %v2019, %v2188
    %v2358 = vmax.f32 %v2020, %v2189
    %v2359 = vmax.f32 %v2021, %v2190
    %v2360 = vmax.f32 %v2022, %v2191
    %v2361 = vmax.f32 %v2023, %v2192
    %v2362 = vmax.f32 %v2024, %v2193
    %v2363 = vmax.f32 %v2025, %v2194
    %v2364 = vmax.f32 %v2026, %v2195
    %v2365 = vmax.f32 %v2027, %v2196
    %v2366 = vmax.f32 %v2028, %v2197
    %v2367 = vmax.f32 %v2029, %v2198
    %v2368 = vmax.f32 %v2030, %v2199
    %v2369 = vmax.f32 %v2031, %v2200
    %v2370 = vmax.f32 %v2032, %v2201
    %v2371 = vmax.f32 %v2033, %v2202
    %v2372 = vmax.f32 %v2034, %v2203
    %v2373 = vmax.f32 %v2035, %v2204
    %v2374 = vmax.f32 %v2036, %v2205
    %v2375 = vmax.f32 %v2037, %v2206
    %v2376 = vmax.f32 %v2038, %v2207
    %v2377 = vmax.f32 %v2039, %v2208
    %v2378 = vmax.f32 %v2040, %v2209
    %v2379 = vmax.f32 %v2041, %v2210
    %v2380 = vmax.f32 %v2042, %v2211
    %v2381 = vmax.f32 %v2043, %v2212
    %v2382 = vmax.f32 %v2044, %v2213
    %v2383 = vmax.f32 %v2045, %v2214
    %v2384 = vmax.f32 %v2046, %v2215
    %v2385 = vmax.f32 %v2047, %v2216
    %v2386 = vmax.f32 %v2048, %v2217
    %v2387 = vmax.f32 %v2049, %v2218
    %v2388 = vmax.f32 %v2050, %v2219
    %v2389 = vmax.f32 %v2051, %v2220
    %v2390 = vmax.f32 %v2052, %v2221
    %v2391 = vmax.f32 %v2053, %v2222
    %v2392 = vmax.f32 %v2054, %v2223
    %v2393 = vmax.f32 %v2055, %v2224
    %v2394 = vmax.f32 %v2056, %v2225
    %v2395 = vmax.f32 %v2057, %v2226
    %v2396 = vmax.f32 %v2058, %v2227
    %v2397 = vmax.f32 %v2059, %v2228
    %v2398 = vmax.f32 %v2060, %v2229
    %v2399 = vmax.f32 %v2061, %v2230
    %v2400 = vmax.f32 %v2062, %v2231
    %v2401 = vmax.f32 %v2063, %v2232
    %v2402 = vmax.f32 %v2064, %v2233
    %v2403 = vmax.f32 %v2065, %v2234
    %v2404 = vmax.f32 %v2066, %v2235
    %v2405 = vmax.f32 %v2067, %v2236
    %v2406 = vmax.f32 %v2068, %v2237
    %v2407 = vmax.f32 %v2069, %v2238
    %v2408 = vmax.f32 %v2070, %v2239
    %v2409 = vmax.f32 %v2071, %v2240
    %v2410 = vmax.f32 %v2072, %v2241
    %v2411 = vmax.f32 %v2073, %v2242
    %v2412 = vmax.f32 %v2074, %v2243
    %v2413 = vmax.f32 %v2075, %v2244
    %v2414 = vmax.f32 %v2076, %v2245
    %v2415 = vmax.f32 %v2077, %v2246
    %v2416 = vmax.f32 %v2078, %v2247
    %v2417 = vmax.f32 %v2079, %v2248
    %v2418 = vmax.f32 %v2080, %v2249
    %v2419 = vmax.f32 %v2081, %v2250
    %v2420 = vmax.f32 %v2082, %v2251
    %v2421 = vmax.f32 %v2083, %v2252
    %v2422 = vmax.f32 %v2084, %v2253
    %v2423 = vmax.f32 %v2085, %v2254
    %v2424 = vmax.f32 %v2086, %v2255
    %v2425 = vmax.f32 %v2087, %v2256
    %v2426 = vmax.f32 %v2088, %v2257
    %v2427 = vmax.f32 %v2089, %v2258
    %v2428 = vmax.f32 %v2090, %v2259
    %v2429 = vmax.f32 %v2091, %v2260
    %v2430 = vmax.f32 %v2092, %v2261
    %v2431 = vmax.f32 %v2093, %v2262
    %v2432 = vmax.f32 %v2094, %v2263
    %v2433 = vmax.f32 %v2095, %v2264
    %v2434 = vmax.f32 %v2096, %v2265
    %v2435 = vmax.f32 %v2097, %v2266
    %v2436 = vmax.f32 %v2098, %v2267
    %v2437 = vmax.f32 %v2099, %v2268
    %v2438 = vmax.f32 %v2100, %v2269
    %v2439 = vmax.f32 %v2101, %v2270
    %v2440 = vmax.f32 %v2102, %v2271
    %v2441 = vmax.f32 %v2103, %v2272
    %v2442 = vmax.f32 %v2104, %v2273
    %v2443 = vmax.f32 %v2105, %v2274
    %v2444 = vmax.f32 %v2106, %v2275
    %v2445 = vmax.f32 %v2107, %v2276
    %v2446 = vmax.f32 %v2108, %v2277
    %v2447 = vmax.f32 %v2109, %v2278
    %v2448 = vmax.f32 %v2110, %v2279
    %v2449 = vmax.f32 %v2111, %v2280
    %v2450 = vmax.f32 %v2112, %v2281
    %v2451 = vmax.f32 %v2113, %v2282
    %v2452 = vmax.f32 %v2114, %v2283
    %v2453 = vmax.f32 %v2115, %v2284
    %v2454 = vmax.f32 %v2116, %v2285
    %v2455 = vmax.f32 %v2117, %v2286
    %v2456 = vmax.f32 %v2118, %v2287
    %v2457 = vmax.f32 %v2119, %v2288
    %v2458 = vmax.f32 %v2120, %v2289
    %v2459 = vmax.f32 %v2121, %v2290
    %v2460 = vmax.f32 %v2122, %v2291
    %v2461 = vmax.f32 %v2123, %v2292
    %v2462 = vmax.f32 %v2124, %v2293
    %v2463 = vmax.f32 %v2125, %v2294
    %v2464 = vmax.f32 %v2126, %v2295
    %v2465 = vmax.f32 %v2127, %v2296
    %v2466 = vmax.f32 %v2128, %v2297
    %v2467 = vmax.f32 %v2129, %v2298
    %v2468 = vmax.f32 %v2130, %v2299
    %v2469 = vmax.f32 %v2131, %v2300
    %v2470 = vmax.f32 %v2132, %v2301
    %v2471 = vld [vmem:[#allocation2 + $0x4] sm:$0xff]
    %v2472 = vld [vmem:[#allocation2 + $0xc] sm:$0xff]
    %v2473 = vld [vmem:[#allocation2 + $0x14] sm:$0xff]
    %v2474 = vld [vmem:[#allocation2 + $0x1c] sm:$0xff]
    %v2475 = vld [vmem:[#allocation2 + $0x24] sm:$0xff]
    %v2476 = vld [vmem:[#allocation2 + $0x2c] sm:$0xff]
    %v2477 = vld [vmem:[#allocation2 + $0x34] sm:$0xff]
    %v2478 = vld [vmem:[#allocation2 + $0x3c] sm:$0xff]
    %v2479 = vld [vmem:[#allocation2 + $0x44] sm:$0xff]
    %v2480 = vld [vmem:[#allocation2 + $0x4c] sm:$0xff]
    %v2481 = vld [vmem:[#allocation2 + $0x54] sm:$0xff]
    %v2482 = vld [vmem:[#allocation2 + $0x5c] sm:$0xff]
    %v2483 = vld [vmem:[#allocation2 + $0x64] sm:$0xff]
    %v2484 = vld [vmem:[#allocation2 + $0x6c] sm:$0xff]
    %v2485 = vld [vmem:[#allocation2 + $0x74] sm:$0xff]
    %v2486 = vld [vmem:[#allocation2 + $0x7c] sm:$0xff]
    %v2487 = vld [vmem:[#allocation2 + $0x84] sm:$0xff]
    %v2488 = vld [vmem:[#allocation2 + $0x8c] sm:$0xff]
    %v2489 = vld [vmem:[#allocation2 + $0x94] sm:$0xff]
    %v2490 = vld [vmem:[#allocation2 + $0x9c] sm:$0xff]
    %v2491 = vld [vmem:[#allocation2 + $0xa4] sm:$0xff]
    %v2492 = vld [vmem:[#allocation2 + $0xac] sm:$0xff]
    %v2493 = vld [vmem:[#allocation2 + $0xb4] sm:$0xff]
    %v2494 = vld [vmem:[#allocation2 + $0xbc] sm:$0xff]
    %v2495 = vld [vmem:[#allocation2 + $0xc4] sm:$0xff]
    %v2496 = vld [vmem:[#allocation2 + $0xcc] sm:$0xff]
    %v2497 = vld [vmem:[#allocation2 + $0xd4] sm:$0xff]
    %v2498 = vld [vmem:[#allocation2 + $0xdc] sm:$0xff]
    %v2499 = vld [vmem:[#allocation2 + $0xe4] sm:$0xff]
    %v2500 = vld [vmem:[#allocation2 + $0xec] sm:$0xff]
    %v2501 = vld [vmem:[#allocation2 + $0xf4] sm:$0xff]
    %v2502 = vld [vmem:[#allocation2 + $0xfc] sm:$0xff]
    %v2503 = vld [vmem:[#allocation2 + $0x104] sm:$0xff]
    %v2504 = vld [vmem:[#allocation2 + $0x10c] sm:$0xff]
    %v2505 = vld [vmem:[#allocation2 + $0x114] sm:$0xff]
    %v2506 = vld [vmem:[#allocation2 + $0x11c] sm:$0xff]
    %v2507 = vld [vmem:[#allocation2 + $0x124] sm:$0xff]
    %v2508 = vld [vmem:[#allocation2 + $0x12c] sm:$0xff]
    %v2509 = vld [vmem:[#allocation2 + $0x134] sm:$0xff]
    %v2510 = vld [vmem:[#allocation2 + $0x13c] sm:$0xff]
    %v2511 = vld [vmem:[#allocation2 + $0x144] sm:$0xff]
    %v2512 = vld [vmem:[#allocation2 + $0x14c] sm:$0xff]
    %v2513 = vld [vmem:[#allocation2 + $0x154] sm:$0xff]
    %v2514 = vld [vmem:[#allocation2 + $0x15c] sm:$0xff]
    %v2515 = vld [vmem:[#allocation2 + $0x164] sm:$0xff]
    %v2516 = vld [vmem:[#allocation2 + $0x16c] sm:$0xff]
    %v2517 = vld [vmem:[#allocation2 + $0x174] sm:$0xff]
    %v2518 = vld [vmem:[#allocation2 + $0x17c] sm:$0xff]
    %v2519 = vld [vmem:[#allocation2 + $0x184] sm:$0xff]
    %v2520 = vld [vmem:[#allocation2 + $0x18c] sm:$0xff]
    %v2521 = vld [vmem:[#allocation2 + $0x194] sm:$0xff]
    %v2522 = vld [vmem:[#allocation2 + $0x19c] sm:$0xff]
    %v2523 = vld [vmem:[#allocation2 + $0x1a4] sm:$0xff]
    %v2524 = vld [vmem:[#allocation2 + $0x1ac] sm:$0xff]
    %v2525 = vld [vmem:[#allocation2 + $0x1b4] sm:$0xff]
    %v2526 = vld [vmem:[#allocation2 + $0x1bc] sm:$0xff]
    %v2527 = vld [vmem:[#allocation2 + $0x1c4] sm:$0xff]
    %v2528 = vld [vmem:[#allocation2 + $0x1cc] sm:$0xff]
    %v2529 = vld [vmem:[#allocation2 + $0x1d4] sm:$0xff]
    %v2530 = vld [vmem:[#allocation2 + $0x1dc] sm:$0xff]
    %v2531 = vld [vmem:[#allocation2 + $0x1e4] sm:$0xff]
    %v2532 = vld [vmem:[#allocation2 + $0x1ec] sm:$0xff]
    %v2533 = vld [vmem:[#allocation2 + $0x1f4] sm:$0xff]
    %v2534 = vld [vmem:[#allocation2 + $0x1fc] sm:$0xff]
    %v2535 = vld [vmem:[#allocation2 + $0x204] sm:$0xff]
    %v2536 = vld [vmem:[#allocation2 + $0x20c] sm:$0xff]
    %v2537 = vld [vmem:[#allocation2 + $0x214] sm:$0xff]
    %v2538 = vld [vmem:[#allocation2 + $0x21c] sm:$0xff]
    %v2539 = vld [vmem:[#allocation2 + $0x224] sm:$0xff]
    %v2540 = vld [vmem:[#allocation2 + $0x22c] sm:$0xff]
    %v2541 = vld [vmem:[#allocation2 + $0x234] sm:$0xff]
    %v2542 = vld [vmem:[#allocation2 + $0x23c] sm:$0xff]
    %v2543 = vld [vmem:[#allocation2 + $0x244] sm:$0xff]
    %v2544 = vld [vmem:[#allocation2 + $0x24c] sm:$0xff]
    %v2545 = vld [vmem:[#allocation2 + $0x254] sm:$0xff]
    %v2546 = vld [vmem:[#allocation2 + $0x25c] sm:$0xff]
    %v2547 = vld [vmem:[#allocation2 + $0x264] sm:$0xff]
    %v2548 = vld [vmem:[#allocation2 + $0x26c] sm:$0xff]
    %v2549 = vld [vmem:[#allocation2 + $0x274] sm:$0xff]
    %v2550 = vld [vmem:[#allocation2 + $0x27c] sm:$0xff]
    %v2551 = vld [vmem:[#allocation2 + $0x284] sm:$0xff]
    %v2552 = vld [vmem:[#allocation2 + $0x28c] sm:$0xff]
    %v2553 = vld [vmem:[#allocation2 + $0x294] sm:$0xff]
    %v2554 = vld [vmem:[#allocation2 + $0x29c] sm:$0xff]
    %v2555 = vld [vmem:[#allocation2 + $0x2a4] sm:$0xff]
    %v2556 = vld [vmem:[#allocation2 + $0x2ac] sm:$0xff]
    %v2557 = vld [vmem:[#allocation2 + $0x2b4] sm:$0xff]
    %v2558 = vld [vmem:[#allocation2 + $0x2bc] sm:$0xff]
    %v2559 = vld [vmem:[#allocation2 + $0x2c4] sm:$0xff]
    %v2560 = vld [vmem:[#allocation2 + $0x2cc] sm:$0xff]
    %v2561 = vld [vmem:[#allocation2 + $0x2d4] sm:$0xff]
    %v2562 = vld [vmem:[#allocation2 + $0x2dc] sm:$0xff]
    %v2563 = vld [vmem:[#allocation2 + $0x2e4] sm:$0xff]
    %v2564 = vld [vmem:[#allocation2 + $0x2ec] sm:$0xff]
    %v2565 = vld [vmem:[#allocation2 + $0x2f4] sm:$0xff]
    %v2566 = vld [vmem:[#allocation2 + $0x2fc] sm:$0xff]
    %v2567 = vld [vmem:[#allocation2 + $0x304] sm:$0xff]
    %v2568 = vld [vmem:[#allocation2 + $0x30c] sm:$0xff]
    %v2569 = vld [vmem:[#allocation2 + $0x314] sm:$0xff]
    %v2570 = vld [vmem:[#allocation2 + $0x31c] sm:$0xff]
    %v2571 = vld [vmem:[#allocation2 + $0x324] sm:$0xff]
    %v2572 = vld [vmem:[#allocation2 + $0x32c] sm:$0xff]
    %v2573 = vld [vmem:[#allocation2 + $0x334] sm:$0xff]
    %v2574 = vld [vmem:[#allocation2 + $0x33c] sm:$0xff]
    %v2575 = vld [vmem:[#allocation2 + $0x344] sm:$0xff]
    %v2576 = vld [vmem:[#allocation2 + $0x34c] sm:$0xff]
    %v2577 = vld [vmem:[#allocation2 + $0x354] sm:$0xff]
    %v2578 = vld [vmem:[#allocation2 + $0x35c] sm:$0xff]
    %v2579 = vld [vmem:[#allocation2 + $0x364] sm:$0xff]
    %v2580 = vld [vmem:[#allocation2 + $0x36c] sm:$0xff]
    %v2581 = vld [vmem:[#allocation2 + $0x374] sm:$0xff]
    %v2582 = vld [vmem:[#allocation2 + $0x37c] sm:$0xff]
    %v2583 = vld [vmem:[#allocation2 + $0x384] sm:$0xff]
    %v2584 = vld [vmem:[#allocation2 + $0x38c] sm:$0xff]
    %v2585 = vld [vmem:[#allocation2 + $0x394] sm:$0xff]
    %v2586 = vld [vmem:[#allocation2 + $0x39c] sm:$0xff]
    %v2587 = vld [vmem:[#allocation2 + $0x3a4] sm:$0xff]
    %v2588 = vld [vmem:[#allocation2 + $0x3ac] sm:$0xff]
    %v2589 = vld [vmem:[#allocation2 + $0x3b4] sm:$0xff]
    %v2590 = vld [vmem:[#allocation2 + $0x3bc] sm:$0xff]
    %v2591 = vld [vmem:[#allocation2 + $0x3c4] sm:$0xff]
    %v2592 = vld [vmem:[#allocation2 + $0x3cc] sm:$0xff]
    %v2593 = vld [vmem:[#allocation2 + $0x3d4] sm:$0xff]
    %v2594 = vld [vmem:[#allocation2 + $0x3dc] sm:$0xff]
    %v2595 = vld [vmem:[#allocation2 + $0x3e4] sm:$0xff]
    %v2596 = vld [vmem:[#allocation2 + $0x3ec] sm:$0xff]
    %v2597 = vld [vmem:[#allocation2 + $0x3f4] sm:$0xff]
    %v2598 = vld [vmem:[#allocation2 + $0x3fc] sm:$0xff]
    %v2599 = vld [vmem:[#allocation2 + $0x404] sm:$0xff]
    %v2600 = vld [vmem:[#allocation2 + $0x40c] sm:$0xff]
    %v2601 = vld [vmem:[#allocation2 + $0x414] sm:$0xff]
    %v2602 = vld [vmem:[#allocation2 + $0x41c] sm:$0xff]
    %v2603 = vld [vmem:[#allocation2 + $0x424] sm:$0xff]
    %v2604 = vld [vmem:[#allocation2 + $0x42c] sm:$0xff]
    %v2605 = vld [vmem:[#allocation2 + $0x434] sm:$0xff]
    %v2606 = vld [vmem:[#allocation2 + $0x43c] sm:$0xff]
    %v2607 = vld [vmem:[#allocation2 + $0x444] sm:$0xff]
    %v2608 = vld [vmem:[#allocation2 + $0x44c] sm:$0xff]
    %v2609 = vld [vmem:[#allocation2 + $0x454] sm:$0xff]
    %v2610 = vld [vmem:[#allocation2 + $0x45c] sm:$0xff]
    %v2611 = vld [vmem:[#allocation2 + $0x464] sm:$0xff]
    %v2612 = vld [vmem:[#allocation2 + $0x46c] sm:$0xff]
    %v2613 = vld [vmem:[#allocation2 + $0x474] sm:$0xff]
    %v2614 = vld [vmem:[#allocation2 + $0x47c] sm:$0xff]
    %v2615 = vld [vmem:[#allocation2 + $0x484] sm:$0xff]
    %v2616 = vld [vmem:[#allocation2 + $0x48c] sm:$0xff]
    %v2617 = vld [vmem:[#allocation2 + $0x494] sm:$0xff]
    %v2618 = vld [vmem:[#allocation2 + $0x49c] sm:$0xff]
    %v2619 = vld [vmem:[#allocation2 + $0x4a4] sm:$0xff]
    %v2620 = vld [vmem:[#allocation2 + $0x4ac] sm:$0xff]
    %v2621 = vld [vmem:[#allocation2 + $0x4b4] sm:$0xff]
    %v2622 = vld [vmem:[#allocation2 + $0x4bc] sm:$0xff]
    %v2623 = vld [vmem:[#allocation2 + $0x4c4] sm:$0xff]
    %v2624 = vld [vmem:[#allocation2 + $0x4cc] sm:$0xff]
    %v2625 = vld [vmem:[#allocation2 + $0x4d4] sm:$0xff]
    %v2626 = vld [vmem:[#allocation2 + $0x4dc] sm:$0xff]
    %v2627 = vld [vmem:[#allocation2 + $0x4e4] sm:$0xff]
    %v2628 = vld [vmem:[#allocation2 + $0x4ec] sm:$0xff]
    %v2629 = vld [vmem:[#allocation2 + $0x4f4] sm:$0xff]
    %v2630 = vld [vmem:[#allocation2 + $0x4fc] sm:$0xff]
    %v2631 = vld [vmem:[#allocation2 + $0x504] sm:$0xff]
    %v2632 = vld [vmem:[#allocation2 + $0x50c] sm:$0xff]
    %v2633 = vld [vmem:[#allocation2 + $0x514] sm:$0xff]
    %v2634 = vld [vmem:[#allocation2 + $0x51c] sm:$0xff]
    %v2635 = vld [vmem:[#allocation2 + $0x524] sm:$0xff]
    %v2636 = vld [vmem:[#allocation2 + $0x52c] sm:$0xff]
    %v2637 = vld [vmem:[#allocation2 + $0x534] sm:$0xff]
    %v2638 = vld [vmem:[#allocation2 + $0x53c] sm:$0xff]
    %v2639 = vld [vmem:[#allocation2 + $0x544] sm:$0xff]
    %v2640 = vmax.f32 %v2302, %v2471
    %v2641 = vmax.f32 %v2303, %v2472
    %v2642 = vmax.f32 %v2304, %v2473
    %v2643 = vmax.f32 %v2305, %v2474
    %v2644 = vmax.f32 %v2306, %v2475
    %v2645 = vmax.f32 %v2307, %v2476
    %v2646 = vmax.f32 %v2308, %v2477
    %v2647 = vmax.f32 %v2309, %v2478
    %v2648 = vmax.f32 %v2310, %v2479
    %v2649 = vmax.f32 %v2311, %v2480
    %v2650 = vmax.f32 %v2312, %v2481
    %v2651 = vmax.f32 %v2313, %v2482
    %v2652 = vmax.f32 %v2314, %v2483
    %v2653 = vmax.f32 %v2315, %v2484
    %v2654 = vmax.f32 %v2316, %v2485
    %v2655 = vmax.f32 %v2317, %v2486
    %v2656 = vmax.f32 %v2318, %v2487
    %v2657 = vmax.f32 %v2319, %v2488
    %v2658 = vmax.f32 %v2320, %v2489
    %v2659 = vmax.f32 %v2321, %v2490
    %v2660 = vmax.f32 %v2322, %v2491
    %v2661 = vmax.f32 %v2323, %v2492
    %v2662 = vmax.f32 %v2324, %v2493
    %v2663 = vmax.f32 %v2325, %v2494
    %v2664 = vmax.f32 %v2326, %v2495
    %v2665 = vmax.f32 %v2327, %v2496
    %v2666 = vmax.f32 %v2328, %v2497
    %v2667 = vmax.f32 %v2329, %v2498
    %v2668 = vmax.f32 %v2330, %v2499
    %v2669 = vmax.f32 %v2331, %v2500
    %v2670 = vmax.f32 %v2332, %v2501
    %v2671 = vmax.f32 %v2333, %v2502
    %v2672 = vmax.f32 %v2334, %v2503
    %v2673 = vmax.f32 %v2335, %v2504
    %v2674 = vmax.f32 %v2336, %v2505
    %v2675 = vmax.f32 %v2337, %v2506
    %v2676 = vmax.f32 %v2338, %v2507
    %v2677 = vmax.f32 %v2339, %v2508
    %v2678 = vmax.f32 %v2340, %v2509
    %v2679 = vmax.f32 %v2341, %v2510
    %v2680 = vmax.f32 %v2342, %v2511
    %v2681 = vmax.f32 %v2343, %v2512
    %v2682 = vmax.f32 %v2344, %v2513
    %v2683 = vmax.f32 %v2345, %v2514
    %v2684 = vmax.f32 %v2346, %v2515
    %v2685 = vmax.f32 %v2347, %v2516
    %v2686 = vmax.f32 %v2348, %v2517
    %v2687 = vmax.f32 %v2349, %v2518
    %v2688 = vmax.f32 %v2350, %v2519
    %v2689 = vmax.f32 %v2351, %v2520
    %v2690 = vmax.f32 %v2352, %v2521
    %v2691 = vmax.f32 %v2353, %v2522
    %v2692 = vmax.f32 %v2354, %v2523
    %v2693 = vmax.f32 %v2355, %v2524
    %v2694 = vmax.f32 %v2356, %v2525
    %v2695 = vmax.f32 %v2357, %v2526
    %v2696 = vmax.f32 %v2358, %v2527
    %v2697 = vmax.f32 %v2359, %v2528
    %v2698 = vmax.f32 %v2360, %v2529
    %v2699 = vmax.f32 %v2361, %v2530
    %v2700 = vmax.f32 %v2362, %v2531
    %v2701 = vmax.f32 %v2363, %v2532
    %v2702 = vmax.f32 %v2364, %v2533
    %v2703 = vmax.f32 %v2365, %v2534
    %v2704 = vmax.f32 %v2366, %v2535
    %v2705 = vmax.f32 %v2367, %v2536
    %v2706 = vmax.f32 %v2368, %v2537
    %v2707 = vmax.f32 %v2369, %v2538
    %v2708 = vmax.f32 %v2370, %v2539
    %v2709 = vmax.f32 %v2371, %v2540
    %v2710 = vmax.f32 %v2372, %v2541
    %v2711 = vmax.f32 %v2373, %v2542
    %v2712 = vmax.f32 %v2374, %v2543
    %v2713 = vmax.f32 %v2375, %v2544
    %v2714 = vmax.f32 %v2376, %v2545
    %v2715 = vmax.f32 %v2377, %v2546
    %v2716 = vmax.f32 %v2378, %v2547
    %v2717 = vmax.f32 %v2379, %v2548
    %v2718 = vmax.f32 %v2380, %v2549
    %v2719 = vmax.f32 %v2381, %v2550
    %v2720 = vmax.f32 %v2382, %v2551
    %v2721 = vmax.f32 %v2383, %v2552
    %v2722 = vmax.f32 %v2384, %v2553
    %v2723 = vmax.f32 %v2385, %v2554
    %v2724 = vmax.f32 %v2386, %v2555
    %v2725 = vmax.f32 %v2387, %v2556
    %v2726 = vmax.f32 %v2388, %v2557
    %v2727 = vmax.f32 %v2389, %v2558
    %v2728 = vmax.f32 %v2390, %v2559
    %v2729 = vmax.f32 %v2391, %v2560
    %v2730 = vmax.f32 %v2392, %v2561
    %v2731 = vmax.f32 %v2393, %v2562
    %v2732 = vmax.f32 %v2394, %v2563
    %v2733 = vmax.f32 %v2395, %v2564
    %v2734 = vmax.f32 %v2396, %v2565
    %v2735 = vmax.f32 %v2397, %v2566
    %v2736 = vmax.f32 %v2398, %v2567
    %v2737 = vmax.f32 %v2399, %v2568
    %v2738 = vmax.f32 %v2400, %v2569
    %v2739 = vmax.f32 %v2401, %v2570
    %v2740 = vmax.f32 %v2402, %v2571
    %v2741 = vmax.f32 %v2403, %v2572
    %v2742 = vmax.f32 %v2404, %v2573
    %v2743 = vmax.f32 %v2405, %v2574
    %v2744 = vmax.f32 %v2406, %v2575
    %v2745 = vmax.f32 %v2407, %v2576
    %v2746 = vmax.f32 %v2408, %v2577
    %v2747 = vmax.f32 %v2409, %v2578
    %v2748 = vmax.f32 %v2410, %v2579
    %v2749 = vmax.f32 %v2411, %v2580
    %v2750 = vmax.f32 %v2412, %v2581
    %v2751 = vmax.f32 %v2413, %v2582
    %v2752 = vmax.f32 %v2414, %v2583
    %v2753 = vmax.f32 %v2415, %v2584
    %v2754 = vmax.f32 %v2416, %v2585
    %v2755 = vmax.f32 %v2417, %v2586
    %v2756 = vmax.f32 %v2418, %v2587
    %v2757 = vmax.f32 %v2419, %v2588
    %v2758 = vmax.f32 %v2420, %v2589
    %v2759 = vmax.f32 %v2421, %v2590
    %v2760 = vmax.f32 %v2422, %v2591
    %v2761 = vmax.f32 %v2423, %v2592
    %v2762 = vmax.f32 %v2424, %v2593
    %v2763 = vmax.f32 %v2425, %v2594
    %v2764 = vmax.f32 %v2426, %v2595
    %v2765 = vmax.f32 %v2427, %v2596
    %v2766 = vmax.f32 %v2428, %v2597
    %v2767 = vmax.f32 %v2429, %v2598
    %v2768 = vmax.f32 %v2430, %v2599
    %v2769 = vmax.f32 %v2431, %v2600
    %v2770 = vmax.f32 %v2432, %v2601
    %v2771 = vmax.f32 %v2433, %v2602
    %v2772 = vmax.f32 %v2434, %v2603
    %v2773 = vmax.f32 %v2435, %v2604
    %v2774 = vmax.f32 %v2436, %v2605
    %v2775 = vmax.f32 %v2437, %v2606
    %v2776 = vmax.f32 %v2438, %v2607
    %v2777 = vmax.f32 %v2439, %v2608
    %v2778 = vmax.f32 %v2440, %v2609
    %v2779 = vmax.f32 %v2441, %v2610
    %v2780 = vmax.f32 %v2442, %v2611
    %v2781 = vmax.f32 %v2443, %v2612
    %v2782 = vmax.f32 %v2444, %v2613
    %v2783 = vmax.f32 %v2445, %v2614
    %v2784 = vmax.f32 %v2446, %v2615
    %v2785 = vmax.f32 %v2447, %v2616
    %v2786 = vmax.f32 %v2448, %v2617
    %v2787 = vmax.f32 %v2449, %v2618
    %v2788 = vmax.f32 %v2450, %v2619
    %v2789 = vmax.f32 %v2451, %v2620
    %v2790 = vmax.f32 %v2452, %v2621
    %v2791 = vmax.f32 %v2453, %v2622
    %v2792 = vmax.f32 %v2454, %v2623
    %v2793 = vmax.f32 %v2455, %v2624
    %v2794 = vmax.f32 %v2456, %v2625
    %v2795 = vmax.f32 %v2457, %v2626
    %v2796 = vmax.f32 %v2458, %v2627
    %v2797 = vmax.f32 %v2459, %v2628
    %v2798 = vmax.f32 %v2460, %v2629
    %v2799 = vmax.f32 %v2461, %v2630
    %v2800 = vmax.f32 %v2462, %v2631
    %v2801 = vmax.f32 %v2463, %v2632
    %v2802 = vmax.f32 %v2464, %v2633
    %v2803 = vmax.f32 %v2465, %v2634
    %v2804 = vmax.f32 %v2466, %v2635
    %v2805 = vmax.f32 %v2467, %v2636
    %v2806 = vmax.f32 %v2468, %v2637
    %v2807 = vmax.f32 %v2469, %v2638
    %v2808 = vmax.f32 %v2470, %v2639
    %2809 = vst.msk [vmem:[#allocation3] sm:$0xff] %vm655, %v2640
    %2810 = vst.msk [vmem:[#allocation3 + $0x8] sm:$0xff] %vm655, %v2641
    %2811 = vst.msk [vmem:[#allocation3 + $0x10] sm:$0xff] %vm655, %v2642
    %2812 = vst.msk [vmem:[#allocation3 + $0x18] sm:$0xff] %vm655, %v2643
    %2813 = vst.msk [vmem:[#allocation3 + $0x20] sm:$0xff] %vm655, %v2644
    %2814 = vst.msk [vmem:[#allocation3 + $0x28] sm:$0xff] %vm655, %v2645
    %2815 = vst.msk [vmem:[#allocation3 + $0x30] sm:$0xff] %vm655, %v2646
    %2816 = vst.msk [vmem:[#allocation3 + $0x38] sm:$0xff] %vm655, %v2647
    %2817 = vst.msk [vmem:[#allocation3 + $0x40] sm:$0xff] %vm655, %v2648
    %2818 = vst.msk [vmem:[#allocation3 + $0x48] sm:$0xff] %vm655, %v2649
    %2819 = vst.msk [vmem:[#allocation3 + $0x50] sm:$0xff] %vm655, %v2650
    %2820 = vst.msk [vmem:[#allocation3 + $0x58] sm:$0xff] %vm655, %v2651
    %2821 = vst.msk [vmem:[#allocation3 + $0x60] sm:$0xff] %vm655, %v2652
    %2822 = vst.msk [vmem:[#allocation3 + $0x68] sm:$0xff] %vm655, %v2653
    %2823 = vst.msk [vmem:[#allocation3 + $0x70] sm:$0xff] %vm655, %v2654
    %2824 = vst.msk [vmem:[#allocation3 + $0x78] sm:$0xff] %vm655, %v2655
    %2825 = vst.msk [vmem:[#allocation3 + $0x80] sm:$0xff] %vm655, %v2656
    %2826 = vst.msk [vmem:[#allocation3 + $0x88] sm:$0xff] %vm655, %v2657
    %2827 = vst.msk [vmem:[#allocation3 + $0x90] sm:$0xff] %vm655, %v2658
    %2828 = vst.msk [vmem:[#allocation3 + $0x98] sm:$0xff] %vm655, %v2659
    %2829 = vst.msk [vmem:[#allocation3 + $0xa0] sm:$0xff] %vm655, %v2660
    %2830 = vst.msk [vmem:[#allocation3 + $0xa8] sm:$0xff] %vm655, %v2661
    %2831 = vst.msk [vmem:[#allocation3 + $0xb0] sm:$0xff] %vm655, %v2662
    %2832 = vst.msk [vmem:[#allocation3 + $0xb8] sm:$0xff] %vm655, %v2663
    %2833 = vst.msk [vmem:[#allocation3 + $0xc0] sm:$0xff] %vm655, %v2664
    %2834 = vst.msk [vmem:[#allocation3 + $0xc8] sm:$0xff] %vm655, %v2665
    %2835 = vst.msk [vmem:[#allocation3 + $0xd0] sm:$0xff] %vm655, %v2666
    %2836 = vst.msk [vmem:[#allocation3 + $0xd8] sm:$0xff] %vm655, %v2667
    %2837 = vst.msk [vmem:[#allocation3 + $0xe0] sm:$0xff] %vm655, %v2668
    %2838 = vst.msk [vmem:[#allocation3 + $0xe8] sm:$0xff] %vm655, %v2669
    %2839 = vst.msk [vmem:[#allocation3 + $0xf0] sm:$0xff] %vm655, %v2670
    %2840 = vst.msk [vmem:[#allocation3 + $0xf8] sm:$0xff] %vm655, %v2671
    %2841 = vst.msk [vmem:[#allocation3 + $0x100] sm:$0xff] %vm655, %v2672
    %2842 = vst.msk [vmem:[#allocation3 + $0x108] sm:$0xff] %vm655, %v2673
    %2843 = vst.msk [vmem:[#allocation3 + $0x110] sm:$0xff] %vm655, %v2674
    %2844 = vst.msk [vmem:[#allocation3 + $0x118] sm:$0xff] %vm655, %v2675
    %2845 = vst.msk [vmem:[#allocation3 + $0x120] sm:$0xff] %vm655, %v2676
    %2846 = vst.msk [vmem:[#allocation3 + $0x128] sm:$0xff] %vm655, %v2677
    %2847 = vst.msk [vmem:[#allocation3 + $0x130] sm:$0xff] %vm655, %v2678
    %2848 = vst.msk [vmem:[#allocation3 + $0x138] sm:$0xff] %vm655, %v2679
    %2849 = vst.msk [vmem:[#allocation3 + $0x140] sm:$0xff] %vm655, %v2680
    %2850 = vst.msk [vmem:[#allocation3 + $0x148] sm:$0xff] %vm655, %v2681
    %2851 = vst.msk [vmem:[#allocation3 + $0x150] sm:$0xff] %vm655, %v2682
    %2852 = vst.msk [vmem:[#allocation3 + $0x158] sm:$0xff] %vm655, %v2683
    %2853 = vst.msk [vmem:[#allocation3 + $0x160] sm:$0xff] %vm655, %v2684
    %2854 = vst.msk [vmem:[#allocation3 + $0x168] sm:$0xff] %vm655, %v2685
    %2855 = vst.msk [vmem:[#allocation3 + $0x170] sm:$0xff] %vm655, %v2686
    %2856 = vst.msk [vmem:[#allocation3 + $0x178] sm:$0xff] %vm655, %v2687
    %2857 = vst.msk [vmem:[#allocation3 + $0x180] sm:$0xff] %vm655, %v2688
    %2858 = vst.msk [vmem:[#allocation3 + $0x188] sm:$0xff] %vm655, %v2689
    %2859 = vst.msk [vmem:[#allocation3 + $0x190] sm:$0xff] %vm655, %v2690
    %2860 = vst.msk [vmem:[#allocation3 + $0x198] sm:$0xff] %vm655, %v2691
    %2861 = vst.msk [vmem:[#allocation3 + $0x1a0] sm:$0xff] %vm655, %v2692
    %2862 = vst.msk [vmem:[#allocation3 + $0x1a8] sm:$0xff] %vm655, %v2693
    %2863 = vst.msk [vmem:[#allocation3 + $0x1b0] sm:$0xff] %vm655, %v2694
    %2864 = vst.msk [vmem:[#allocation3 + $0x1b8] sm:$0xff] %vm655, %v2695
    %2865 = vst.msk [vmem:[#allocation3 + $0x1c0] sm:$0xff] %vm655, %v2696
    %2866 = vst.msk [vmem:[#allocation3 + $0x1c8] sm:$0xff] %vm655, %v2697
    %2867 = vst.msk [vmem:[#allocation3 + $0x1d0] sm:$0xff] %vm655, %v2698
    %2868 = vst.msk [vmem:[#allocation3 + $0x1d8] sm:$0xff] %vm655, %v2699
    %2869 = vst.msk [vmem:[#allocation3 + $0x1e0] sm:$0xff] %vm655, %v2700
    %2870 = vst.msk [vmem:[#allocation3 + $0x1e8] sm:$0xff] %vm655, %v2701
    %2871 = vst.msk [vmem:[#allocation3 + $0x1f0] sm:$0xff] %vm655, %v2702
    %2872 = vst.msk [vmem:[#allocation3 + $0x1f8] sm:$0xff] %vm655, %v2703
    %2873 = vst.msk [vmem:[#allocation3 + $0x200] sm:$0xff] %vm655, %v2704
    %2874 = vst.msk [vmem:[#allocation3 + $0x208] sm:$0xff] %vm655, %v2705
    %2875 = vst.msk [vmem:[#allocation3 + $0x210] sm:$0xff] %vm655, %v2706
    %2876 = vst.msk [vmem:[#allocation3 + $0x218] sm:$0xff] %vm655, %v2707
    %2877 = vst.msk [vmem:[#allocation3 + $0x220] sm:$0xff] %vm655, %v2708
    %2878 = vst.msk [vmem:[#allocation3 + $0x228] sm:$0xff] %vm655, %v2709
    %2879 = vst.msk [vmem:[#allocation3 + $0x230] sm:$0xff] %vm655, %v2710
    %2880 = vst.msk [vmem:[#allocation3 + $0x238] sm:$0xff] %vm655, %v2711
    %2881 = vst.msk [vmem:[#allocation3 + $0x240] sm:$0xff] %vm655, %v2712
    %2882 = vst.msk [vmem:[#allocation3 + $0x248] sm:$0xff] %vm655, %v2713
    %2883 = vst.msk [vmem:[#allocation3 + $0x250] sm:$0xff] %vm655, %v2714
    %2884 = vst.msk [vmem:[#allocation3 + $0x258] sm:$0xff] %vm655, %v2715
    %2885 = vst.msk [vmem:[#allocation3 + $0x260] sm:$0xff] %vm655, %v2716
    %2886 = vst.msk [vmem:[#allocation3 + $0x268] sm:$0xff] %vm655, %v2717
    %2887 = vst.msk [vmem:[#allocation3 + $0x270] sm:$0xff] %vm655, %v2718
    %2888 = vst.msk [vmem:[#allocation3 + $0x278] sm:$0xff] %vm655, %v2719
    %2889 = vst.msk [vmem:[#allocation3 + $0x280] sm:$0xff] %vm655, %v2720
    %2890 = vst.msk [vmem:[#allocation3 + $0x288] sm:$0xff] %vm655, %v2721
    %2891 = vst.msk [vmem:[#allocation3 + $0x290] sm:$0xff] %vm655, %v2722
    %2892 = vst.msk [vmem:[#allocation3 + $0x298] sm:$0xff] %vm655, %v2723
    %2893 = vst.msk [vmem:[#allocation3 + $0x2a0] sm:$0xff] %vm655, %v2724
    %2894 = vst.msk [vmem:[#allocation3 + $0x2a8] sm:$0xff] %vm655, %v2725
    %2895 = vst.msk [vmem:[#allocation3 + $0x2b0] sm:$0xff] %vm655, %v2726
    %2896 = vst.msk [vmem:[#allocation3 + $0x2b8] sm:$0xff] %vm655, %v2727
    %2897 = vst.msk [vmem:[#allocation3 + $0x2c0] sm:$0xff] %vm655, %v2728
    %2898 = vst.msk [vmem:[#allocation3 + $0x2c8] sm:$0xff] %vm655, %v2729
    %2899 = vst.msk [vmem:[#allocation3 + $0x2d0] sm:$0xff] %vm655, %v2730
    %2900 = vst.msk [vmem:[#allocation3 + $0x2d8] sm:$0xff] %vm655, %v2731
    %2901 = vst.msk [vmem:[#allocation3 + $0x2e0] sm:$0xff] %vm655, %v2732
    %2902 = vst.msk [vmem:[#allocation3 + $0x2e8] sm:$0xff] %vm655, %v2733
    %2903 = vst.msk [vmem:[#allocation3 + $0x2f0] sm:$0xff] %vm655, %v2734
    %2904 = vst.msk [vmem:[#allocation3 + $0x2f8] sm:$0xff] %vm655, %v2735
    %2905 = vst.msk [vmem:[#allocation3 + $0x300] sm:$0xff] %vm655, %v2736
    %2906 = vst.msk [vmem:[#allocation3 + $0x308] sm:$0xff] %vm655, %v2737
    %2907 = vst.msk [vmem:[#allocation3 + $0x310] sm:$0xff] %vm655, %v2738
    %2908 = vst.msk [vmem:[#allocation3 + $0x318] sm:$0xff] %vm655, %v2739
    %2909 = vst.msk [vmem:[#allocation3 + $0x320] sm:$0xff] %vm655, %v2740
    %2910 = vst.msk [vmem:[#allocation3 + $0x328] sm:$0xff] %vm655, %v2741
    %2911 = vst.msk [vmem:[#allocation3 + $0x330] sm:$0xff] %vm655, %v2742
    %2912 = vst.msk [vmem:[#allocation3 + $0x338] sm:$0xff] %vm655, %v2743
    %2913 = vst.msk [vmem:[#allocation3 + $0x340] sm:$0xff] %vm655, %v2744
    %2914 = vst.msk [vmem:[#allocation3 + $0x348] sm:$0xff] %vm655, %v2745
    %2915 = vst.msk [vmem:[#allocation3 + $0x350] sm:$0xff] %vm655, %v2746
    %2916 = vst.msk [vmem:[#allocation3 + $0x358] sm:$0xff] %vm655, %v2747
    %2917 = vst.msk [vmem:[#allocation3 + $0x360] sm:$0xff] %vm655, %v2748
    %2918 = vst.msk [vmem:[#allocation3 + $0x368] sm:$0xff] %vm655, %v2749
    %2919 = vst.msk [vmem:[#allocation3 + $0x370] sm:$0xff] %vm655, %v2750
    %2920 = vst.msk [vmem:[#allocation3 + $0x378] sm:$0xff] %vm655, %v2751
    %2921 = vst.msk [vmem:[#allocation3 + $0x380] sm:$0xff] %vm655, %v2752
    %2922 = vst.msk [vmem:[#allocation3 + $0x388] sm:$0xff] %vm655, %v2753
    %2923 = vst.msk [vmem:[#allocation3 + $0x390] sm:$0xff] %vm655, %v2754
    %2924 = vst.msk [vmem:[#allocation3 + $0x398] sm:$0xff] %vm655, %v2755
    %2925 = vst.msk [vmem:[#allocation3 + $0x3a0] sm:$0xff] %vm655, %v2756
    %2926 = vst.msk [vmem:[#allocation3 + $0x3a8] sm:$0xff] %vm655, %v2757
    %2927 = vst.msk [vmem:[#allocation3 + $0x3b0] sm:$0xff] %vm655, %v2758
    %2928 = vst.msk [vmem:[#allocation3 + $0x3b8] sm:$0xff] %vm655, %v2759
    %2929 = vst.msk [vmem:[#allocation3 + $0x3c0] sm:$0xff] %vm655, %v2760
    %2930 = vst.msk [vmem:[#allocation3 + $0x3c8] sm:$0xff] %vm655, %v2761
    %2931 = vst.msk [vmem:[#allocation3 + $0x3d0] sm:$0xff] %vm655, %v2762
    %2932 = vst.msk [vmem:[#allocation3 + $0x3d8] sm:$0xff] %vm655, %v2763
    %2933 = vst.msk [vmem:[#allocation3 + $0x3e0] sm:$0xff] %vm655, %v2764
    %2934 = vst.msk [vmem:[#allocation3 + $0x3e8] sm:$0xff] %vm655, %v2765
    %2935 = vst.msk [vmem:[#allocation3 + $0x3f0] sm:$0xff] %vm655, %v2766
    %2936 = vst.msk [vmem:[#allocation3 + $0x3f8] sm:$0xff] %vm655, %v2767
    %2937 = vst.msk [vmem:[#allocation3 + $0x400] sm:$0xff] %vm655, %v2768
    %2938 = vst.msk [vmem:[#allocation3 + $0x408] sm:$0xff] %vm655, %v2769
    %2939 = vst.msk [vmem:[#allocation3 + $0x410] sm:$0xff] %vm655, %v2770
    %2940 = vst.msk [vmem:[#allocation3 + $0x418] sm:$0xff] %vm655, %v2771
    %2941 = vst.msk [vmem:[#allocation3 + $0x420] sm:$0xff] %vm655, %v2772
    %2942 = vst.msk [vmem:[#allocation3 + $0x428] sm:$0xff] %vm655, %v2773
    %2943 = vst.msk [vmem:[#allocation3 + $0x430] sm:$0xff] %vm655, %v2774
    %2944 = vst.msk [vmem:[#allocation3 + $0x438] sm:$0xff] %vm655, %v2775
    %2945 = vst.msk [vmem:[#allocation3 + $0x440] sm:$0xff] %vm655, %v2776
    %2946 = vst.msk [vmem:[#allocation3 + $0x448] sm:$0xff] %vm655, %v2777
    %2947 = vst.msk [vmem:[#allocation3 + $0x450] sm:$0xff] %vm655, %v2778
    %2948 = vst.msk [vmem:[#allocation3 + $0x458] sm:$0xff] %vm655, %v2779
    %2949 = vst.msk [vmem:[#allocation3 + $0x460] sm:$0xff] %vm655, %v2780
    %2950 = vst.msk [vmem:[#allocation3 + $0x468] sm:$0xff] %vm655, %v2781
    %2951 = vst.msk [vmem:[#allocation3 + $0x470] sm:$0xff] %vm655, %v2782
    %2952 = vst.msk [vmem:[#allocation3 + $0x478] sm:$0xff] %vm655, %v2783
    %2953 = vst.msk [vmem:[#allocation3 + $0x480] sm:$0xff] %vm655, %v2784
    %2954 = vst.msk [vmem:[#allocation3 + $0x488] sm:$0xff] %vm655, %v2785
    %2955 = vst.msk [vmem:[#allocation3 + $0x490] sm:$0xff] %vm655, %v2786
    %2956 = vst.msk [vmem:[#allocation3 + $0x498] sm:$0xff] %vm655, %v2787
    %2957 = vst.msk [vmem:[#allocation3 + $0x4a0] sm:$0xff] %vm655, %v2788
    %2958 = vst.msk [vmem:[#allocation3 + $0x4a8] sm:$0xff] %vm655, %v2789
    %2959 = vst.msk [vmem:[#allocation3 + $0x4b0] sm:$0xff] %vm655, %v2790
    %2960 = vst.msk [vmem:[#allocation3 + $0x4b8] sm:$0xff] %vm655, %v2791
    %2961 = vst.msk [vmem:[#allocation3 + $0x4c0] sm:$0xff] %vm655, %v2792
    %2962 = vst.msk [vmem:[#allocation3 + $0x4c8] sm:$0xff] %vm655, %v2793
    %2963 = vst.msk [vmem:[#allocation3 + $0x4d0] sm:$0xff] %vm655, %v2794
    %2964 = vst.msk [vmem:[#allocation3 + $0x4d8] sm:$0xff] %vm655, %v2795
    %2965 = vst.msk [vmem:[#allocation3 + $0x4e0] sm:$0xff] %vm655, %v2796
    %2966 = vst.msk [vmem:[#allocation3 + $0x4e8] sm:$0xff] %vm655, %v2797
    %2967 = vst.msk [vmem:[#allocation3 + $0x4f0] sm:$0xff] %vm655, %v2798
    %2968 = vst.msk [vmem:[#allocation3 + $0x4f8] sm:$0xff] %vm655, %v2799
    %2969 = vst.msk [vmem:[#allocation3 + $0x500] sm:$0xff] %vm655, %v2800
    %2970 = vst.msk [vmem:[#allocation3 + $0x508] sm:$0xff] %vm655, %v2801
    %2971 = vst.msk [vmem:[#allocation3 + $0x510] sm:$0xff] %vm655, %v2802
    %2972 = vst.msk [vmem:[#allocation3 + $0x518] sm:$0xff] %vm655, %v2803
    %2973 = vst.msk [vmem:[#allocation3 + $0x520] sm:$0xff] %vm655, %v2804
    %2974 = vst.msk [vmem:[#allocation3 + $0x528] sm:$0xff] %vm655, %v2805
    %2975 = vst.msk [vmem:[#allocation3 + $0x530] sm:$0xff] %vm655, %v2806
    %2976 = vst.msk [vmem:[#allocation3 + $0x538] sm:$0xff] %vm655, %v2807
    %2977 = vst.msk [vmem:[#allocation3 + $0x540] sm:$0xff] %vm655, %v2808
    %v2978 = vld [vmem:[#allocation3] sm:$0xff]
    %v2979 = vld [vmem:[#allocation3 + $0x8] sm:$0xff]
    %v2980 = vld [vmem:[#allocation3 + $0x10] sm:$0xff]
    %v2981 = vld [vmem:[#allocation3 + $0x18] sm:$0xff]
    %v2982 = vld [vmem:[#allocation3 + $0x20] sm:$0xff]
    %v2983 = vld [vmem:[#allocation3 + $0x28] sm:$0xff]
    %v2984 = vld [vmem:[#allocation3 + $0x30] sm:$0xff]
    %v2985 = vld [vmem:[#allocation3 + $0x38] sm:$0xff]
    %v2986 = vld [vmem:[#allocation3 + $0x40] sm:$0xff]
    %v2987 = vld [vmem:[#allocation3 + $0x48] sm:$0xff]
    %v2988 = vld [vmem:[#allocation3 + $0x50] sm:$0xff]
    %v2989 = vld [vmem:[#allocation3 + $0x58] sm:$0xff]
    %v2990 = vld [vmem:[#allocation3 + $0x60] sm:$0xff]
    %v2991 = vld [vmem:[#allocation3 + $0x68] sm:$0xff]
    %v2992 = vld [vmem:[#allocation3 + $0x70] sm:$0xff]
    %v2993 = vld [vmem:[#allocation3 + $0x78] sm:$0xff]
    %v2994 = vld [vmem:[#allocation3 + $0x80] sm:$0xff]
    %v2995 = vld [vmem:[#allocation3 + $0x88] sm:$0xff]
    %v2996 = vld [vmem:[#allocation3 + $0x90] sm:$0xff]
    %v2997 = vld [vmem:[#allocation3 + $0x98] sm:$0xff]
    %v2998 = vld [vmem:[#allocation3 + $0xa0] sm:$0xff]
    %v2999 = vld [vmem:[#allocation3 + $0xa8] sm:$0xff]
    %v3000 = vld [vmem:[#allocation3 + $0xb0] sm:$0xff]
    %v3001 = vld [vmem:[#allocation3 + $0xb8] sm:$0xff]
    %v3002 = vld [vmem:[#allocation3 + $0xc0] sm:$0xff]
    %v3003 = vld [vmem:[#allocation3 + $0xc8] sm:$0xff]
    %v3004 = vld [vmem:[#allocation3 + $0xd0] sm:$0xff]
    %v3005 = vld [vmem:[#allocation3 + $0xd8] sm:$0xff]
    %v3006 = vld [vmem:[#allocation3 + $0xe0] sm:$0xff]
    %v3007 = vld [vmem:[#allocation3 + $0xe8] sm:$0xff]
    %v3008 = vld [vmem:[#allocation3 + $0xf0] sm:$0xff]
    %v3009 = vld [vmem:[#allocation3 + $0xf8] sm:$0xff]
    %v3010 = vld [vmem:[#allocation3 + $0x100] sm:$0xff]
    %v3011 = vld [vmem:[#allocation3 + $0x108] sm:$0xff]
    %v3012 = vld [vmem:[#allocation3 + $0x110] sm:$0xff]
    %v3013 = vld [vmem:[#allocation3 + $0x118] sm:$0xff]
    %v3014 = vld [vmem:[#allocation3 + $0x120] sm:$0xff]
    %v3015 = vld [vmem:[#allocation3 + $0x128] sm:$0xff]
    %v3016 = vld [vmem:[#allocation3 + $0x130] sm:$0xff]
    %v3017 = vld [vmem:[#allocation3 + $0x138] sm:$0xff]
    %v3018 = vld [vmem:[#allocation3 + $0x140] sm:$0xff]
    %v3019 = vld [vmem:[#allocation3 + $0x148] sm:$0xff]
    %v3020 = vld [vmem:[#allocation3 + $0x150] sm:$0xff]
    %v3021 = vld [vmem:[#allocation3 + $0x158] sm:$0xff]
    %v3022 = vld [vmem:[#allocation3 + $0x160] sm:$0xff]
    %v3023 = vld [vmem:[#allocation3 + $0x168] sm:$0xff]
    %v3024 = vld [vmem:[#allocation3 + $0x170] sm:$0xff]
    %v3025 = vld [vmem:[#allocation3 + $0x178] sm:$0xff]
    %v3026 = vld [vmem:[#allocation3 + $0x180] sm:$0xff]
    %v3027 = vld [vmem:[#allocation3 + $0x188] sm:$0xff]
    %v3028 = vld [vmem:[#allocation3 + $0x190] sm:$0xff]
    %v3029 = vld [vmem:[#allocation3 + $0x198] sm:$0xff]
    %v3030 = vld [vmem:[#allocation3 + $0x1a0] sm:$0xff]
    %v3031 = vld [vmem:[#allocation3 + $0x1a8] sm:$0xff]
    %v3032 = vld [vmem:[#allocation3 + $0x1b0] sm:$0xff]
    %v3033 = vld [vmem:[#allocation3 + $0x1b8] sm:$0xff]
    %v3034 = vld [vmem:[#allocation3 + $0x1c0] sm:$0xff]
    %v3035 = vld [vmem:[#allocation3 + $0x1c8] sm:$0xff]
    %v3036 = vld [vmem:[#allocation3 + $0x1d0] sm:$0xff]
    %v3037 = vld [vmem:[#allocation3 + $0x1d8] sm:$0xff]
    %v3038 = vld [vmem:[#allocation3 + $0x1e0] sm:$0xff]
    %v3039 = vld [vmem:[#allocation3 + $0x1e8] sm:$0xff]
    %v3040 = vld [vmem:[#allocation3 + $0x1f0] sm:$0xff]
    %v3041 = vld [vmem:[#allocation3 + $0x1f8] sm:$0xff]
    %v3042 = vld [vmem:[#allocation3 + $0x200] sm:$0xff]
    %v3043 = vld [vmem:[#allocation3 + $0x208] sm:$0xff]
    %v3044 = vld [vmem:[#allocation3 + $0x210] sm:$0xff]
    %v3045 = vld [vmem:[#allocation3 + $0x218] sm:$0xff]
    %v3046 = vld [vmem:[#allocation3 + $0x220] sm:$0xff]
    %v3047 = vld [vmem:[#allocation3 + $0x228] sm:$0xff]
    %v3048 = vld [vmem:[#allocation3 + $0x230] sm:$0xff]
    %v3049 = vld [vmem:[#allocation3 + $0x238] sm:$0xff]
    %v3050 = vld [vmem:[#allocation3 + $0x240] sm:$0xff]
    %v3051 = vld [vmem:[#allocation3 + $0x248] sm:$0xff]
    %v3052 = vld [vmem:[#allocation3 + $0x250] sm:$0xff]
    %v3053 = vld [vmem:[#allocation3 + $0x258] sm:$0xff]
    %v3054 = vld [vmem:[#allocation3 + $0x260] sm:$0xff]
    %v3055 = vld [vmem:[#allocation3 + $0x268] sm:$0xff]
    %v3056 = vld [vmem:[#allocation3 + $0x270] sm:$0xff]
    %v3057 = vld [vmem:[#allocation3 + $0x278] sm:$0xff]
    %v3058 = vld [vmem:[#allocation3 + $0x280] sm:$0xff]
    %v3059 = vld [vmem:[#allocation3 + $0x288] sm:$0xff]
    %v3060 = vld [vmem:[#allocation3 + $0x290] sm:$0xff]
    %v3061 = vld [vmem:[#allocation3 + $0x298] sm:$0xff]
    %v3062 = vld [vmem:[#allocation3 + $0x2a0] sm:$0xff]
    %v3063 = vld [vmem:[#allocation3 + $0x2a8] sm:$0xff]
    %v3064 = vld [vmem:[#allocation3 + $0x2b0] sm:$0xff]
    %v3065 = vld [vmem:[#allocation3 + $0x2b8] sm:$0xff]
    %v3066 = vld [vmem:[#allocation3 + $0x2c0] sm:$0xff]
    %v3067 = vld [vmem:[#allocation3 + $0x2c8] sm:$0xff]
    %v3068 = vld [vmem:[#allocation3 + $0x2d0] sm:$0xff]
    %v3069 = vld [vmem:[#allocation3 + $0x2d8] sm:$0xff]
    %v3070 = vld [vmem:[#allocation3 + $0x2e0] sm:$0xff]
    %v3071 = vld [vmem:[#allocation3 + $0x2e8] sm:$0xff]
    %v3072 = vld [vmem:[#allocation3 + $0x2f0] sm:$0xff]
    %v3073 = vld [vmem:[#allocation3 + $0x2f8] sm:$0xff]
    %v3074 = vld [vmem:[#allocation3 + $0x300] sm:$0xff]
    %v3075 = vld [vmem:[#allocation3 + $0x308] sm:$0xff]
    %v3076 = vld [vmem:[#allocation3 + $0x310] sm:$0xff]
    %v3077 = vld [vmem:[#allocation3 + $0x318] sm:$0xff]
    %v3078 = vld [vmem:[#allocation3 + $0x320] sm:$0xff]
    %v3079 = vld [vmem:[#allocation3 + $0x328] sm:$0xff]
    %v3080 = vld [vmem:[#allocation3 + $0x330] sm:$0xff]
    %v3081 = vld [vmem:[#allocation3 + $0x338] sm:$0xff]
    %v3082 = vld [vmem:[#allocation3 + $0x340] sm:$0xff]
    %v3083 = vld [vmem:[#allocation3 + $0x348] sm:$0xff]
    %v3084 = vld [vmem:[#allocation3 + $0x350] sm:$0xff]
    %v3085 = vld [vmem:[#allocation3 + $0x358] sm:$0xff]
    %v3086 = vld [vmem:[#allocation3 + $0x360] sm:$0xff]
    %v3087 = vld [vmem:[#allocation3 + $0x368] sm:$0xff]
    %v3088 = vld [vmem:[#allocation3 + $0x370] sm:$0xff]
    %v3089 = vld [vmem:[#allocation3 + $0x378] sm:$0xff]
    %v3090 = vld [vmem:[#allocation3 + $0x380] sm:$0xff]
    %v3091 = vld [vmem:[#allocation3 + $0x388] sm:$0xff]
    %v3092 = vld [vmem:[#allocation3 + $0x390] sm:$0xff]
    %v3093 = vld [vmem:[#allocation3 + $0x398] sm:$0xff]
    %v3094 = vld [vmem:[#allocation3 + $0x3a0] sm:$0xff]
    %v3095 = vld [vmem:[#allocation3 + $0x3a8] sm:$0xff]
    %v3096 = vld [vmem:[#allocation3 + $0x3b0] sm:$0xff]
    %v3097 = vld [vmem:[#allocation3 + $0x3b8] sm:$0xff]
    %v3098 = vld [vmem:[#allocation3 + $0x3c0] sm:$0xff]
    %v3099 = vld [vmem:[#allocation3 + $0x3c8] sm:$0xff]
    %v3100 = vld [vmem:[#allocation3 + $0x3d0] sm:$0xff]
    %v3101 = vld [vmem:[#allocation3 + $0x3d8] sm:$0xff]
    %v3102 = vld [vmem:[#allocation3 + $0x3e0] sm:$0xff]
    %v3103 = vld [vmem:[#allocation3 + $0x3e8] sm:$0xff]
    %v3104 = vld [vmem:[#allocation3 + $0x3f0] sm:$0xff]
    %v3105 = vld [vmem:[#allocation3 + $0x3f8] sm:$0xff]
    %v3106 = vld [vmem:[#allocation3 + $0x400] sm:$0xff]
    %v3107 = vld [vmem:[#allocation3 + $0x408] sm:$0xff]
    %v3108 = vld [vmem:[#allocation3 + $0x410] sm:$0xff]
    %v3109 = vld [vmem:[#allocation3 + $0x418] sm:$0xff]
    %v3110 = vld [vmem:[#allocation3 + $0x420] sm:$0xff]
    %v3111 = vld [vmem:[#allocation3 + $0x428] sm:$0xff]
    %v3112 = vld [vmem:[#allocation3 + $0x430] sm:$0xff]
    %v3113 = vld [vmem:[#allocation3 + $0x438] sm:$0xff]
    %v3114 = vld [vmem:[#allocation3 + $0x440] sm:$0xff]
    %v3115 = vld [vmem:[#allocation3 + $0x448] sm:$0xff]
    %v3116 = vld [vmem:[#allocation3 + $0x450] sm:$0xff]
    %v3117 = vld [vmem:[#allocation3 + $0x458] sm:$0xff]
    %v3118 = vld [vmem:[#allocation3 + $0x460] sm:$0xff]
    %v3119 = vld [vmem:[#allocation3 + $0x468] sm:$0xff]
    %v3120 = vld [vmem:[#allocation3 + $0x470] sm:$0xff]
    %v3121 = vld [vmem:[#allocation3 + $0x478] sm:$0xff]
    %v3122 = vld [vmem:[#allocation3 + $0x480] sm:$0xff]
    %v3123 = vld [vmem:[#allocation3 + $0x488] sm:$0xff]
    %v3124 = vld [vmem:[#allocation3 + $0x490] sm:$0xff]
    %v3125 = vld [vmem:[#allocation3 + $0x498] sm:$0xff]
    %v3126 = vld [vmem:[#allocation3 + $0x4a0] sm:$0xff]
    %v3127 = vld [vmem:[#allocation3 + $0x4a8] sm:$0xff]
    %v3128 = vld [vmem:[#allocation3 + $0x4b0] sm:$0xff]
    %v3129 = vld [vmem:[#allocation3 + $0x4b8] sm:$0xff]
    %v3130 = vld [vmem:[#allocation3 + $0x4c0] sm:$0xff]
    %v3131 = vld [vmem:[#allocation3 + $0x4c8] sm:$0xff]
    %v3132 = vld [vmem:[#allocation3 + $0x4d0] sm:$0xff]
    %v3133 = vld [vmem:[#allocation3 + $0x36] sm:$0xff]
    %v3134 = vld [vmem:[#allocation3 + $0x3e] sm:$0xff]
    %v3135 = vld [vmem:[#allocation3 + $0x46] sm:$0xff]
    %v3136 = vld [vmem:[#allocation3 + $0x4e] sm:$0xff]
    %v3137 = vld [vmem:[#allocation3 + $0x56] sm:$0xff]
    %v3138 = vld [vmem:[#allocation3 + $0x5e] sm:$0xff]
    %v3139 = vld [vmem:[#allocation3 + $0x66] sm:$0xff]
    %v3140 = vld [vmem:[#allocation3 + $0x6e] sm:$0xff]
    %v3141 = vld [vmem:[#allocation3 + $0x76] sm:$0xff]
    %v3142 = vld [vmem:[#allocation3 + $0x7e] sm:$0xff]
    %v3143 = vld [vmem:[#allocation3 + $0x86] sm:$0xff]
    %v3144 = vld [vmem:[#allocation3 + $0x8e] sm:$0xff]
    %v3145 = vld [vmem:[#allocation3 + $0x96] sm:$0xff]
    %v3146 = vld [vmem:[#allocation3 + $0x9e] sm:$0xff]
    %v3147 = vld [vmem:[#allocation3 + $0xa6] sm:$0xff]
    %v3148 = vld [vmem:[#allocation3 + $0xae] sm:$0xff]
    %v3149 = vld [vmem:[#allocation3 + $0xb6] sm:$0xff]
    %v3150 = vld [vmem:[#allocation3 + $0xbe] sm:$0xff]
    %v3151 = vld [vmem:[#allocation3 + $0xc6] sm:$0xff]
    %v3152 = vld [vmem:[#allocation3 + $0xce] sm:$0xff]
    %v3153 = vld [vmem:[#allocation3 + $0xd6] sm:$0xff]
    %v3154 = vld [vmem:[#allocation3 + $0xde] sm:$0xff]
    %v3155 = vld [vmem:[#allocation3 + $0xe6] sm:$0xff]
    %v3156 = vld [vmem:[#allocation3 + $0xee] sm:$0xff]
    %v3157 = vld [vmem:[#allocation3 + $0xf6] sm:$0xff]
    %v3158 = vld [vmem:[#allocation3 + $0xfe] sm:$0xff]
    %v3159 = vld [vmem:[#allocation3 + $0x106] sm:$0xff]
    %v3160 = vld [vmem:[#allocation3 + $0x10e] sm:$0xff]
    %v3161 = vld [vmem:[#allocation3 + $0x116] sm:$0xff]
    %v3162 = vld [vmem:[#allocation3 + $0x11e] sm:$0xff]
    %v3163 = vld [vmem:[#allocation3 + $0x126] sm:$0xff]
    %v3164 = vld [vmem:[#allocation3 + $0x12e] sm:$0xff]
    %v3165 = vld [vmem:[#allocation3 + $0x136] sm:$0xff]
    %v3166 = vld [vmem:[#allocation3 + $0x13e] sm:$0xff]
    %v3167 = vld [vmem:[#allocation3 + $0x146] sm:$0xff]
    %v3168 = vld [vmem:[#allocation3 + $0x14e] sm:$0xff]
    %v3169 = vld [vmem:[#allocation3 + $0x156] sm:$0xff]
    %v3170 = vld [vmem:[#allocation3 + $0x15e] sm:$0xff]
    %v3171 = vld [vmem:[#allocation3 + $0x166] sm:$0xff]
    %v3172 = vld [vmem:[#allocation3 + $0x16e] sm:$0xff]
    %v3173 = vld [vmem:[#allocation3 + $0x176] sm:$0xff]
    %v3174 = vld [vmem:[#allocation3 + $0x17e] sm:$0xff]
    %v3175 = vld [vmem:[#allocation3 + $0x186] sm:$0xff]
    %v3176 = vld [vmem:[#allocation3 + $0x18e] sm:$0xff]
    %v3177 = vld [vmem:[#allocation3 + $0x196] sm:$0xff]
    %v3178 = vld [vmem:[#allocation3 + $0x19e] sm:$0xff]
    %v3179 = vld [vmem:[#allocation3 + $0x1a6] sm:$0xff]
    %v3180 = vld [vmem:[#allocation3 + $0x1ae] sm:$0xff]
    %v3181 = vld [vmem:[#allocation3 + $0x1b6] sm:$0xff]
    %v3182 = vld [vmem:[#allocation3 + $0x1be] sm:$0xff]
    %v3183 = vld [vmem:[#allocation3 + $0x1c6] sm:$0xff]
    %v3184 = vld [vmem:[#allocation3 + $0x1ce] sm:$0xff]
    %v3185 = vld [vmem:[#allocation3 + $0x1d6] sm:$0xff]
    %v3186 = vld [vmem:[#allocation3 + $0x1de] sm:$0xff]
    %v3187 = vld [vmem:[#allocation3 + $0x1e6] sm:$0xff]
    %v3188 = vld [vmem:[#allocation3 + $0x1ee] sm:$0xff]
    %v3189 = vld [vmem:[#allocation3 + $0x1f6] sm:$0xff]
    %v3190 = vld [vmem:[#allocation3 + $0x1fe] sm:$0xff]
    %v3191 = vld [vmem:[#allocation3 + $0x206] sm:$0xff]
    %v3192 = vld [vmem:[#allocation3 + $0x20e] sm:$0xff]
    %v3193 = vld [vmem:[#allocation3 + $0x216] sm:$0xff]
    %v3194 = vld [vmem:[#allocation3 + $0x21e] sm:$0xff]
    %v3195 = vld [vmem:[#allocation3 + $0x226] sm:$0xff]
    %v3196 = vld [vmem:[#allocation3 + $0x22e] sm:$0xff]
    %v3197 = vld [vmem:[#allocation3 + $0x236] sm:$0xff]
    %v3198 = vld [vmem:[#allocation3 + $0x23e] sm:$0xff]
    %v3199 = vld [vmem:[#allocation3 + $0x246] sm:$0xff]
    %v3200 = vld [vmem:[#allocation3 + $0x24e] sm:$0xff]
    %v3201 = vld [vmem:[#allocation3 + $0x256] sm:$0xff]
    %v3202 = vld [vmem:[#allocation3 + $0x25e] sm:$0xff]
    %v3203 = vld [vmem:[#allocation3 + $0x266] sm:$0xff]
    %v3204 = vld [vmem:[#allocation3 + $0x26e] sm:$0xff]
    %v3205 = vld [vmem:[#allocation3 + $0x276] sm:$0xff]
    %v3206 = vld [vmem:[#allocation3 + $0x27e] sm:$0xff]
    %v3207 = vld [vmem:[#allocation3 + $0x286] sm:$0xff]
    %v3208 = vld [vmem:[#allocation3 + $0x28e] sm:$0xff]
    %v3209 = vld [vmem:[#allocation3 + $0x296] sm:$0xff]
    %v3210 = vld [vmem:[#allocation3 + $0x29e] sm:$0xff]
    %v3211 = vld [vmem:[#allocation3 + $0x2a6] sm:$0xff]
    %v3212 = vld [vmem:[#allocation3 + $0x2ae] sm:$0xff]
    %v3213 = vld [vmem:[#allocation3 + $0x2b6] sm:$0xff]
    %v3214 = vld [vmem:[#allocation3 + $0x2be] sm:$0xff]
    %v3215 = vld [vmem:[#allocation3 + $0x2c6] sm:$0xff]
    %v3216 = vld [vmem:[#allocation3 + $0x2ce] sm:$0xff]
    %v3217 = vld [vmem:[#allocation3 + $0x2d6] sm:$0xff]
    %v3218 = vld [vmem:[#allocation3 + $0x2de] sm:$0xff]
    %v3219 = vld [vmem:[#allocation3 + $0x2e6] sm:$0xff]
    %v3220 = vld [vmem:[#allocation3 + $0x2ee] sm:$0xff]
    %v3221 = vld [vmem:[#allocation3 + $0x2f6] sm:$0xff]
    %v3222 = vld [vmem:[#allocation3 + $0x2fe] sm:$0xff]
    %v3223 = vld [vmem:[#allocation3 + $0x306] sm:$0xff]
    %v3224 = vld [vmem:[#allocation3 + $0x30e] sm:$0xff]
    %v3225 = vld [vmem:[#allocation3 + $0x316] sm:$0xff]
    %v3226 = vld [vmem:[#allocation3 + $0x31e] sm:$0xff]
    %v3227 = vld [vmem:[#allocation3 + $0x326] sm:$0xff]
    %v3228 = vld [vmem:[#allocation3 + $0x32e] sm:$0xff]
    %v3229 = vld [vmem:[#allocation3 + $0x336] sm:$0xff]
    %v3230 = vld [vmem:[#allocation3 + $0x33e] sm:$0xff]
    %v3231 = vld [vmem:[#allocation3 + $0x346] sm:$0xff]
    %v3232 = vld [vmem:[#allocation3 + $0x34e] sm:$0xff]
    %v3233 = vld [vmem:[#allocation3 + $0x356] sm:$0xff]
    %v3234 = vld [vmem:[#allocation3 + $0x35e] sm:$0xff]
    %v3235 = vld [vmem:[#allocation3 + $0x366] sm:$0xff]
    %v3236 = vld [vmem:[#allocation3 + $0x36e] sm:$0xff]
    %v3237 = vld [vmem:[#allocation3 + $0x376] sm:$0xff]
    %v3238 = vld [vmem:[#allocation3 + $0x37e] sm:$0xff]
    %v3239 = vld [vmem:[#allocation3 + $0x386] sm:$0xff]
    %v3240 = vld [vmem:[#allocation3 + $0x38e] sm:$0xff]
    %v3241 = vld [vmem:[#allocation3 + $0x396] sm:$0xff]
    %v3242 = vld [vmem:[#allocation3 + $0x39e] sm:$0xff]
    %v3243 = vld [vmem:[#allocation3 + $0x3a6] sm:$0xff]
    %v3244 = vld [vmem:[#allocation3 + $0x3ae] sm:$0xff]
    %v3245 = vld [vmem:[#allocation3 + $0x3b6] sm:$0xff]
    %v3246 = vld [vmem:[#allocation3 + $0x3be] sm:$0xff]
    %v3247 = vld [vmem:[#allocation3 + $0x3c6] sm:$0xff]
    %v3248 = vld [vmem:[#allocation3 + $0x3ce] sm:$0xff]
    %v3249 = vld [vmem:[#allocation3 + $0x3d6] sm:$0xff]
    %v3250 = vld [vmem:[#allocation3 + $0x3de] sm:$0xff]
    %v3251 = vld [vmem:[#allocation3 + $0x3e6] sm:$0xff]
    %v3252 = vld [vmem:[#allocation3 + $0x3ee] sm:$0xff]
    %v3253 = vld [vmem:[#allocation3 + $0x3f6] sm:$0xff]
    %v3254 = vld [vmem:[#allocation3 + $0x3fe] sm:$0xff]
    %v3255 = vld [vmem:[#allocation3 + $0x406] sm:$0xff]
    %v3256 = vld [vmem:[#allocation3 + $0x40e] sm:$0xff]
    %v3257 = vld [vmem:[#allocation3 + $0x416] sm:$0xff]
    %v3258 = vld [vmem:[#allocation3 + $0x41e] sm:$0xff]
    %v3259 = vld [vmem:[#allocation3 + $0x426] sm:$0xff]
    %v3260 = vld [vmem:[#allocation3 + $0x42e] sm:$0xff]
    %v3261 = vld [vmem:[#allocation3 + $0x436] sm:$0xff]
    %v3262 = vld [vmem:[#allocation3 + $0x43e] sm:$0xff]
    %v3263 = vld [vmem:[#allocation3 + $0x446] sm:$0xff]
    %v3264 = vld [vmem:[#allocation3 + $0x44e] sm:$0xff]
    %v3265 = vld [vmem:[#allocation3 + $0x456] sm:$0xff]
    %v3266 = vld [vmem:[#allocation3 + $0x45e] sm:$0xff]
    %v3267 = vld [vmem:[#allocation3 + $0x466] sm:$0xff]
    %v3268 = vld [vmem:[#allocation3 + $0x46e] sm:$0xff]
    %v3269 = vld [vmem:[#allocation3 + $0x476] sm:$0xff]
    %v3270 = vld [vmem:[#allocation3 + $0x47e] sm:$0xff]
    %v3271 = vld [vmem:[#allocation3 + $0x486] sm:$0xff]
    %v3272 = vld [vmem:[#allocation3 + $0x48e] sm:$0xff]
    %v3273 = vld [vmem:[#allocation3 + $0x496] sm:$0xff]
    %v3274 = vld [vmem:[#allocation3 + $0x49e] sm:$0xff]
    %v3275 = vld [vmem:[#allocation3 + $0x4a6] sm:$0xff]
    %v3276 = vld [vmem:[#allocation3 + $0x4ae] sm:$0xff]
    %v3277 = vld [vmem:[#allocation3 + $0x4b6] sm:$0xff]
    %v3278 = vld [vmem:[#allocation3 + $0x4be] sm:$0xff]
    %v3279 = vld [vmem:[#allocation3 + $0x4c6] sm:$0xff]
    %v3280 = vld [vmem:[#allocation3 + $0x4ce] sm:$0xff]
    %v3281 = vld [vmem:[#allocation3 + $0x4d6] sm:$0xff]
    %v3282 = vld [vmem:[#allocation3 + $0x4de] sm:$0xff]
    %v3283 = vld [vmem:[#allocation3 + $0x4e6] sm:$0xff]
    %v3284 = vld [vmem:[#allocation3 + $0x4ee] sm:$0xff]
    %v3285 = vld [vmem:[#allocation3 + $0x4f6] sm:$0xff]
    %v3286 = vld [vmem:[#allocation3 + $0x4fe] sm:$0xff]
    %v3287 = vld [vmem:[#allocation3 + $0x506] sm:$0xff]
    %v3288 = vmax.f32 %v2978, %v3133
    %v3289 = vmax.f32 %v2979, %v3134
    %v3290 = vmax.f32 %v2980, %v3135
    %v3291 = vmax.f32 %v2981, %v3136
    %v3292 = vmax.f32 %v2982, %v3137
    %v3293 = vmax.f32 %v2983, %v3138
    %v3294 = vmax.f32 %v2984, %v3139
    %v3295 = vmax.f32 %v2985, %v3140
    %v3296 = vmax.f32 %v2986, %v3141
    %v3297 = vmax.f32 %v2987, %v3142
    %v3298 = vmax.f32 %v2988, %v3143
    %v3299 = vmax.f32 %v2989, %v3144
    %v3300 = vmax.f32 %v2990, %v3145
    %v3301 = vmax.f32 %v2991, %v3146
    %v3302 = vmax.f32 %v2992, %v3147
    %v3303 = vmax.f32 %v2993, %v3148
    %v3304 = vmax.f32 %v2994, %v3149
    %v3305 = vmax.f32 %v2995, %v3150
    %v3306 = vmax.f32 %v2996, %v3151
    %v3307 = vmax.f32 %v2997, %v3152
    %v3308 = vmax.f32 %v2998, %v3153
    %v3309 = vmax.f32 %v2999, %v3154
    %v3310 = vmax.f32 %v3000, %v3155
    %v3311 = vmax.f32 %v3001, %v3156
    %v3312 = vmax.f32 %v3002, %v3157
    %v3313 = vmax.f32 %v3003, %v3158
    %v3314 = vmax.f32 %v3004, %v3159
    %v3315 = vmax.f32 %v3005, %v3160
    %v3316 = vmax.f32 %v3006, %v3161
    %v3317 = vmax.f32 %v3007, %v3162
    %v3318 = vmax.f32 %v3008, %v3163
    %v3319 = vmax.f32 %v3009, %v3164
    %v3320 = vmax.f32 %v3010, %v3165
    %v3321 = vmax.f32 %v3011, %v3166
    %v3322 = vmax.f32 %v3012, %v3167
    %v3323 = vmax.f32 %v3013, %v3168
    %v3324 = vmax.f32 %v3014, %v3169
    %v3325 = vmax.f32 %v3015, %v3170
    %v3326 = vmax.f32 %v3016, %v3171
    %v3327 = vmax.f32 %v3017, %v3172
    %v3328 = vmax.f32 %v3018, %v3173
    %v3329 = vmax.f32 %v3019, %v3174
    %v3330 = vmax.f32 %v3020, %v3175
    %v3331 = vmax.f32 %v3021, %v3176
    %v3332 = vmax.f32 %v3022, %v3177
    %v3333 = vmax.f32 %v3023, %v3178
    %v3334 = vmax.f32 %v3024, %v3179
    %v3335 = vmax.f32 %v3025, %v3180
    %v3336 = vmax.f32 %v3026, %v3181
    %v3337 = vmax.f32 %v3027, %v3182
    %v3338 = vmax.f32 %v3028, %v3183
    %v3339 = vmax.f32 %v3029, %v3184
    %v3340 = vmax.f32 %v3030, %v3185
    %v3341 = vmax.f32 %v3031, %v3186
    %v3342 = vmax.f32 %v3032, %v3187
    %v3343 = vmax.f32 %v3033, %v3188
    %v3344 = vmax.f32 %v3034, %v3189
    %v3345 = vmax.f32 %v3035, %v3190
    %v3346 = vmax.f32 %v3036, %v3191
    %v3347 = vmax.f32 %v3037, %v3192
    %v3348 = vmax.f32 %v3038, %v3193
    %v3349 = vmax.f32 %v3039, %v3194
    %v3350 = vmax.f32 %v3040, %v3195
    %v3351 = vmax.f32 %v3041, %v3196
    %v3352 = vmax.f32 %v3042, %v3197
    %v3353 = vmax.f32 %v3043, %v3198
    %v3354 = vmax.f32 %v3044, %v3199
    %v3355 = vmax.f32 %v3045, %v3200
    %v3356 = vmax.f32 %v3046, %v3201
    %v3357 = vmax.f32 %v3047, %v3202
    %v3358 = vmax.f32 %v3048, %v3203
    %v3359 = vmax.f32 %v3049, %v3204
    %v3360 = vmax.f32 %v3050, %v3205
    %v3361 = vmax.f32 %v3051, %v3206
    %v3362 = vmax.f32 %v3052, %v3207
    %v3363 = vmax.f32 %v3053, %v3208
    %v3364 = vmax.f32 %v3054, %v3209
    %v3365 = vmax.f32 %v3055, %v3210
    %v3366 = vmax.f32 %v3056, %v3211
    %v3367 = vmax.f32 %v3057, %v3212
    %v3368 = vmax.f32 %v3058, %v3213
    %v3369 = vmax.f32 %v3059, %v3214
    %v3370 = vmax.f32 %v3060, %v3215
    %v3371 = vmax.f32 %v3061, %v3216
    %v3372 = vmax.f32 %v3062, %v3217
    %v3373 = vmax.f32 %v3063, %v3218
    %v3374 = vmax.f32 %v3064, %v3219
    %v3375 = vmax.f32 %v3065, %v3220
    %v3376 = vmax.f32 %v3066, %v3221
    %v3377 = vmax.f32 %v3067, %v3222
    %v3378 = vmax.f32 %v3068, %v3223
    %v3379 = vmax.f32 %v3069, %v3224
    %v3380 = vmax.f32 %v3070, %v3225
    %v3381 = vmax.f32 %v3071, %v3226
    %v3382 = vmax.f32 %v3072, %v3227
    %v3383 = vmax.f32 %v3073, %v3228
    %v3384 = vmax.f32 %v3074, %v3229
    %v3385 = vmax.f32 %v3075, %v3230
    %v3386 = vmax.f32 %v3076, %v3231
    %v3387 = vmax.f32 %v3077, %v3232
    %v3388 = vmax.f32 %v3078, %v3233
    %v3389 = vmax.f32 %v3079, %v3234
    %v3390 = vmax.f32 %v3080, %v3235
    %v3391 = vmax.f32 %v3081, %v3236
    %v3392 = vmax.f32 %v3082, %v3237
    %v3393 = vmax.f32 %v3083, %v3238
    %v3394 = vmax.f32 %v3084, %v3239
    %v3395 = vmax.f32 %v3085, %v3240
    %v3396 = vmax.f32 %v3086, %v3241
    %v3397 = vmax.f32 %v3087, %v3242
    %v3398 = vmax.f32 %v3088, %v3243
    %v3399 = vmax.f32 %v3089, %v3244
    %v3400 = vmax.f32 %v3090, %v3245
    %v3401 = vmax.f32 %v3091, %v3246
    %v3402 = vmax.f32 %v3092, %v3247
    %v3403 = vmax.f32 %v3093, %v3248
    %v3404 = vmax.f32 %v3094, %v3249
    %v3405 = vmax.f32 %v3095, %v3250
    %v3406 = vmax.f32 %v3096, %v3251
    %v3407 = vmax.f32 %v3097, %v3252
    %v3408 = vmax.f32 %v3098, %v3253
    %v3409 = vmax.f32 %v3099, %v3254
    %v3410 = vmax.f32 %v3100, %v3255
    %v3411 = vmax.f32 %v3101, %v3256
    %v3412 = vmax.f32 %v3102, %v3257
    %v3413 = vmax.f32 %v3103, %v3258
    %v3414 = vmax.f32 %v3104, %v3259
    %v3415 = vmax.f32 %v3105, %v3260
    %v3416 = vmax.f32 %v3106, %v3261
    %v3417 = vmax.f32 %v3107, %v3262
    %v3418 = vmax.f32 %v3108, %v3263
    %v3419 = vmax.f32 %v3109, %v3264
    %v3420 = vmax.f32 %v3110, %v3265
    %v3421 = vmax.f32 %v3111, %v3266
    %v3422 = vmax.f32 %v3112, %v3267
    %v3423 = vmax.f32 %v3113, %v3268
    %v3424 = vmax.f32 %v3114, %v3269
    %v3425 = vmax.f32 %v3115, %v3270
    %v3426 = vmax.f32 %v3116, %v3271
    %v3427 = vmax.f32 %v3117, %v3272
    %v3428 = vmax.f32 %v3118, %v3273
    %v3429 = vmax.f32 %v3119, %v3274
    %v3430 = vmax.f32 %v3120, %v3275
    %v3431 = vmax.f32 %v3121, %v3276
    %v3432 = vmax.f32 %v3122, %v3277
    %v3433 = vmax.f32 %v3123, %v3278
    %v3434 = vmax.f32 %v3124, %v3279
    %v3435 = vmax.f32 %v3125, %v3280
    %v3436 = vmax.f32 %v3126, %v3281
    %v3437 = vmax.f32 %v3127, %v3282
    %v3438 = vmax.f32 %v3128, %v3283
    %v3439 = vmax.f32 %v3129, %v3284
    %v3440 = vmax.f32 %v3130, %v3285
    %v3441 = vmax.f32 %v3131, %v3286
    %v3442 = vmax.f32 %v3132, %v3287
    %v3443 = vld [vmem:[#allocation3 + $0x6c] sm:$0xff]
    %v3444 = vld [vmem:[#allocation3 + $0x74] sm:$0xff]
    %v3445 = vld [vmem:[#allocation3 + $0x7c] sm:$0xff]
    %v3446 = vld [vmem:[#allocation3 + $0x84] sm:$0xff]
    %v3447 = vld [vmem:[#allocation3 + $0x8c] sm:$0xff]
    %v3448 = vld [vmem:[#allocation3 + $0x94] sm:$0xff]
    %v3449 = vld [vmem:[#allocation3 + $0x9c] sm:$0xff]
    %v3450 = vld [vmem:[#allocation3 + $0xa4] sm:$0xff]
    %v3451 = vld [vmem:[#allocation3 + $0xac] sm:$0xff]
    %v3452 = vld [vmem:[#allocation3 + $0xb4] sm:$0xff]
    %v3453 = vld [vmem:[#allocation3 + $0xbc] sm:$0xff]
    %v3454 = vld [vmem:[#allocation3 + $0xc4] sm:$0xff]
    %v3455 = vld [vmem:[#allocation3 + $0xcc] sm:$0xff]
    %v3456 = vld [vmem:[#allocation3 + $0xd4] sm:$0xff]
    %v3457 = vld [vmem:[#allocation3 + $0xdc] sm:$0xff]
    %v3458 = vld [vmem:[#allocation3 + $0xe4] sm:$0xff]
    %v3459 = vld [vmem:[#allocation3 + $0xec] sm:$0xff]
    %v3460 = vld [vmem:[#allocation3 + $0xf4] sm:$0xff]
    %v3461 = vld [vmem:[#allocation3 + $0xfc] sm:$0xff]
    %v3462 = vld [vmem:[#allocation3 + $0x104] sm:$0xff]
    %v3463 = vld [vmem:[#allocation3 + $0x10c] sm:$0xff]
    %v3464 = vld [vmem:[#allocation3 + $0x114] sm:$0xff]
    %v3465 = vld [vmem:[#allocation3 + $0x11c] sm:$0xff]
    %v3466 = vld [vmem:[#allocation3 + $0x124] sm:$0xff]
    %v3467 = vld [vmem:[#allocation3 + $0x12c] sm:$0xff]
    %v3468 = vld [vmem:[#allocation3 + $0x134] sm:$0xff]
    %v3469 = vld [vmem:[#allocation3 + $0x13c] sm:$0xff]
    %v3470 = vld [vmem:[#allocation3 + $0x144] sm:$0xff]
    %v3471 = vld [vmem:[#allocation3 + $0x14c] sm:$0xff]
    %v3472 = vld [vmem:[#allocation3 + $0x154] sm:$0xff]
    %v3473 = vld [vmem:[#allocation3 + $0x15c] sm:$0xff]
    %v3474 = vld [vmem:[#allocation3 + $0x164] sm:$0xff]
    %v3475 = vld [vmem:[#allocation3 + $0x16c] sm:$0xff]
    %v3476 = vld [vmem:[#allocation3 + $0x174] sm:$0xff]
    %v3477 = vld [vmem:[#allocation3 + $0x17c] sm:$0xff]
    %v3478 = vld [vmem:[#allocation3 + $0x184] sm:$0xff]
    %v3479 = vld [vmem:[#allocation3 + $0x18c] sm:$0xff]
    %v3480 = vld [vmem:[#allocation3 + $0x194] sm:$0xff]
    %v3481 = vld [vmem:[#allocation3 + $0x19c] sm:$0xff]
    %v3482 = vld [vmem:[#allocation3 + $0x1a4] sm:$0xff]
    %v3483 = vld [vmem:[#allocation3 + $0x1ac] sm:$0xff]
    %v3484 = vld [vmem:[#allocation3 + $0x1b4] sm:$0xff]
    %v3485 = vld [vmem:[#allocation3 + $0x1bc] sm:$0xff]
    %v3486 = vld [vmem:[#allocation3 + $0x1c4] sm:$0xff]
    %v3487 = vld [vmem:[#allocation3 + $0x1cc] sm:$0xff]
    %v3488 = vld [vmem:[#allocation3 + $0x1d4] sm:$0xff]
    %v3489 = vld [vmem:[#allocation3 + $0x1dc] sm:$0xff]
    %v3490 = vld [vmem:[#allocation3 + $0x1e4] sm:$0xff]
    %v3491 = vld [vmem:[#allocation3 + $0x1ec] sm:$0xff]
    %v3492 = vld [vmem:[#allocation3 + $0x1f4] sm:$0xff]
    %v3493 = vld [vmem:[#allocation3 + $0x1fc] sm:$0xff]
    %v3494 = vld [vmem:[#allocation3 + $0x204] sm:$0xff]
    %v3495 = vld [vmem:[#allocation3 + $0x20c] sm:$0xff]
    %v3496 = vld [vmem:[#allocation3 + $0x214] sm:$0xff]
    %v3497 = vld [vmem:[#allocation3 + $0x21c] sm:$0xff]
    %v3498 = vld [vmem:[#allocation3 + $0x224] sm:$0xff]
    %v3499 = vld [vmem:[#allocation3 + $0x22c] sm:$0xff]
    %v3500 = vld [vmem:[#allocation3 + $0x234] sm:$0xff]
    %v3501 = vld [vmem:[#allocation3 + $0x23c] sm:$0xff]
    %v3502 = vld [vmem:[#allocation3 + $0x244] sm:$0xff]
    %v3503 = vld [vmem:[#allocation3 + $0x24c] sm:$0xff]
    %v3504 = vld [vmem:[#allocation3 + $0x254] sm:$0xff]
    %v3505 = vld [vmem:[#allocation3 + $0x25c] sm:$0xff]
    %v3506 = vld [vmem:[#allocation3 + $0x264] sm:$0xff]
    %v3507 = vld [vmem:[#allocation3 + $0x26c] sm:$0xff]
    %v3508 = vld [vmem:[#allocation3 + $0x274] sm:$0xff]
    %v3509 = vld [vmem:[#allocation3 + $0x27c] sm:$0xff]
    %v3510 = vld [vmem:[#allocation3 + $0x284] sm:$0xff]
    %v3511 = vld [vmem:[#allocation3 + $0x28c] sm:$0xff]
    %v3512 = vld [vmem:[#allocation3 + $0x294] sm:$0xff]
    %v3513 = vld [vmem:[#allocation3 + $0x29c] sm:$0xff]
    %v3514 = vld [vmem:[#allocation3 + $0x2a4] sm:$0xff]
    %v3515 = vld [vmem:[#allocation3 + $0x2ac] sm:$0xff]
    %v3516 = vld [vmem:[#allocation3 + $0x2b4] sm:$0xff]
    %v3517 = vld [vmem:[#allocation3 + $0x2bc] sm:$0xff]
    %v3518 = vld [vmem:[#allocation3 + $0x2c4] sm:$0xff]
    %v3519 = vld [vmem:[#allocation3 + $0x2cc] sm:$0xff]
    %v3520 = vld [vmem:[#allocation3 + $0x2d4] sm:$0xff]
    %v3521 = vld [vmem:[#allocation3 + $0x2dc] sm:$0xff]
    %v3522 = vld [vmem:[#allocation3 + $0x2e4] sm:$0xff]
    %v3523 = vld [vmem:[#allocation3 + $0x2ec] sm:$0xff]
    %v3524 = vld [vmem:[#allocation3 + $0x2f4] sm:$0xff]
    %v3525 = vld [vmem:[#allocation3 + $0x2fc] sm:$0xff]
    %v3526 = vld [vmem:[#allocation3 + $0x304] sm:$0xff]
    %v3527 = vld [vmem:[#allocation3 + $0x30c] sm:$0xff]
    %v3528 = vld [vmem:[#allocation3 + $0x314] sm:$0xff]
    %v3529 = vld [vmem:[#allocation3 + $0x31c] sm:$0xff]
    %v3530 = vld [vmem:[#allocation3 + $0x324] sm:$0xff]
    %v3531 = vld [vmem:[#allocation3 + $0x32c] sm:$0xff]
    %v3532 = vld [vmem:[#allocation3 + $0x334] sm:$0xff]
    %v3533 = vld [vmem:[#allocation3 + $0x33c] sm:$0xff]
    %v3534 = vld [vmem:[#allocation3 + $0x344] sm:$0xff]
    %v3535 = vld [vmem:[#allocation3 + $0x34c] sm:$0xff]
    %v3536 = vld [vmem:[#allocation3 + $0x354] sm:$0xff]
    %v3537 = vld [vmem:[#allocation3 + $0x35c] sm:$0xff]
    %v3538 = vld [vmem:[#allocation3 + $0x364] sm:$0xff]
    %v3539 = vld [vmem:[#allocation3 + $0x36c] sm:$0xff]
    %v3540 = vld [vmem:[#allocation3 + $0x374] sm:$0xff]
    %v3541 = vld [vmem:[#allocation3 + $0x37c] sm:$0xff]
    %v3542 = vld [vmem:[#allocation3 + $0x384] sm:$0xff]
    %v3543 = vld [vmem:[#allocation3 + $0x38c] sm:$0xff]
    %v3544 = vld [vmem:[#allocation3 + $0x394] sm:$0xff]
    %v3545 = vld [vmem:[#allocation3 + $0x39c] sm:$0xff]
    %v3546 = vld [vmem:[#allocation3 + $0x3a4] sm:$0xff]
    %v3547 = vld [vmem:[#allocation3 + $0x3ac] sm:$0xff]
    %v3548 = vld [vmem:[#allocation3 + $0x3b4] sm:$0xff]
    %v3549 = vld [vmem:[#allocation3 + $0x3bc] sm:$0xff]
    %v3550 = vld [vmem:[#allocation3 + $0x3c4] sm:$0xff]
    %v3551 = vld [vmem:[#allocation3 + $0x3cc] sm:$0xff]
    %v3552 = vld [vmem:[#allocation3 + $0x3d4] sm:$0xff]
    %v3553 = vld [vmem:[#allocation3 + $0x3dc] sm:$0xff]
    %v3554 = vld [vmem:[#allocation3 + $0x3e4] sm:$0xff]
    %v3555 = vld [vmem:[#allocation3 + $0x3ec] sm:$0xff]
    %v3556 = vld [vmem:[#allocation3 + $0x3f4] sm:$0xff]
    %v3557 = vld [vmem:[#allocation3 + $0x3fc] sm:$0xff]
    %v3558 = vld [vmem:[#allocation3 + $0x404] sm:$0xff]
    %v3559 = vld [vmem:[#allocation3 + $0x40c] sm:$0xff]
    %v3560 = vld [vmem:[#allocation3 + $0x414] sm:$0xff]
    %v3561 = vld [vmem:[#allocation3 + $0x41c] sm:$0xff]
    %v3562 = vld [vmem:[#allocation3 + $0x424] sm:$0xff]
    %v3563 = vld [vmem:[#allocation3 + $0x42c] sm:$0xff]
    %v3564 = vld [vmem:[#allocation3 + $0x434] sm:$0xff]
    %v3565 = vld [vmem:[#allocation3 + $0x43c] sm:$0xff]
    %v3566 = vld [vmem:[#allocation3 + $0x444] sm:$0xff]
    %v3567 = vld [vmem:[#allocation3 + $0x44c] sm:$0xff]
    %v3568 = vld [vmem:[#allocation3 + $0x454] sm:$0xff]
    %v3569 = vld [vmem:[#allocation3 + $0x45c] sm:$0xff]
    %v3570 = vld [vmem:[#allocation3 + $0x464] sm:$0xff]
    %v3571 = vld [vmem:[#allocation3 + $0x46c] sm:$0xff]
    %v3572 = vld [vmem:[#allocation3 + $0x474] sm:$0xff]
    %v3573 = vld [vmem:[#allocation3 + $0x47c] sm:$0xff]
    %v3574 = vld [vmem:[#allocation3 + $0x484] sm:$0xff]
    %v3575 = vld [vmem:[#allocation3 + $0x48c] sm:$0xff]
    %v3576 = vld [vmem:[#allocation3 + $0x494] sm:$0xff]
    %v3577 = vld [vmem:[#allocation3 + $0x49c] sm:$0xff]
    %v3578 = vld [vmem:[#allocation3 + $0x4a4] sm:$0xff]
    %v3579 = vld [vmem:[#allocation3 + $0x4ac] sm:$0xff]
    %v3580 = vld [vmem:[#allocation3 + $0x4b4] sm:$0xff]
    %v3581 = vld [vmem:[#allocation3 + $0x4bc] sm:$0xff]
    %v3582 = vld [vmem:[#allocation3 + $0x4c4] sm:$0xff]
    %v3583 = vld [vmem:[#allocation3 + $0x4cc] sm:$0xff]
    %v3584 = vld [vmem:[#allocation3 + $0x4d4] sm:$0xff]
    %v3585 = vld [vmem:[#allocation3 + $0x4dc] sm:$0xff]
    %v3586 = vld [vmem:[#allocation3 + $0x4e4] sm:$0xff]
    %v3587 = vld [vmem:[#allocation3 + $0x4ec] sm:$0xff]
    %v3588 = vld [vmem:[#allocation3 + $0x4f4] sm:$0xff]
    %v3589 = vld [vmem:[#allocation3 + $0x4fc] sm:$0xff]
    %v3590 = vld [vmem:[#allocation3 + $0x504] sm:$0xff]
    %v3591 = vld [vmem:[#allocation3 + $0x50c] sm:$0xff]
    %v3592 = vld [vmem:[#allocation3 + $0x514] sm:$0xff]
    %v3593 = vld [vmem:[#allocation3 + $0x51c] sm:$0xff]
    %v3594 = vld [vmem:[#allocation3 + $0x524] sm:$0xff]
    %v3595 = vld [vmem:[#allocation3 + $0x52c] sm:$0xff]
    %v3596 = vld [vmem:[#allocation3 + $0x534] sm:$0xff]
    %v3597 = vld [vmem:[#allocation3 + $0x53c] sm:$0xff]
    %v3598 = vmax.f32 %v3288, %v3443
    %v3599 = vmax.f32 %v3289, %v3444
    %v3600 = vmax.f32 %v3290, %v3445
    %v3601 = vmax.f32 %v3291, %v3446
    %v3602 = vmax.f32 %v3292, %v3447
    %v3603 = vmax.f32 %v3293, %v3448
    %v3604 = vmax.f32 %v3294, %v3449
    %v3605 = vmax.f32 %v3295, %v3450
    %v3606 = vmax.f32 %v3296, %v3451
    %v3607 = vmax.f32 %v3297, %v3452
    %v3608 = vmax.f32 %v3298, %v3453
    %v3609 = vmax.f32 %v3299, %v3454
    %v3610 = vmax.f32 %v3300, %v3455
    %v3611 = vmax.f32 %v3301, %v3456
    %v3612 = vmax.f32 %v3302, %v3457
    %v3613 = vmax.f32 %v3303, %v3458
    %v3614 = vmax.f32 %v3304, %v3459
    %v3615 = vmax.f32 %v3305, %v3460
    %v3616 = vmax.f32 %v3306, %v3461
    %v3617 = vmax.f32 %v3307, %v3462
    %v3618 = vmax.f32 %v3308, %v3463
    %v3619 = vmax.f32 %v3309, %v3464
    %v3620 = vmax.f32 %v3310, %v3465
    %v3621 = vmax.f32 %v3311, %v3466
    %v3622 = vmax.f32 %v3312, %v3467
    %v3623 = vmax.f32 %v3313, %v3468
    %v3624 = vmax.f32 %v3314, %v3469
    %v3625 = vmax.f32 %v3315, %v3470
    %v3626 = vmax.f32 %v3316, %v3471
    %v3627 = vmax.f32 %v3317, %v3472
    %v3628 = vmax.f32 %v3318, %v3473
    %v3629 = vmax.f32 %v3319, %v3474
    %v3630 = vmax.f32 %v3320, %v3475
    %v3631 = vmax.f32 %v3321, %v3476
    %v3632 = vmax.f32 %v3322, %v3477
    %v3633 = vmax.f32 %v3323, %v3478
    %v3634 = vmax.f32 %v3324, %v3479
    %v3635 = vmax.f32 %v3325, %v3480
    %v3636 = vmax.f32 %v3326, %v3481
    %v3637 = vmax.f32 %v3327, %v3482
    %v3638 = vmax.f32 %v3328, %v3483
    %v3639 = vmax.f32 %v3329, %v3484
    %v3640 = vmax.f32 %v3330, %v3485
    %v3641 = vmax.f32 %v3331, %v3486
    %v3642 = vmax.f32 %v3332, %v3487
    %v3643 = vmax.f32 %v3333, %v3488
    %v3644 = vmax.f32 %v3334, %v3489
    %v3645 = vmax.f32 %v3335, %v3490
    %v3646 = vmax.f32 %v3336, %v3491
    %v3647 = vmax.f32 %v3337, %v3492
    %v3648 = vmax.f32 %v3338, %v3493
    %v3649 = vmax.f32 %v3339, %v3494
    %v3650 = vmax.f32 %v3340, %v3495
    %v3651 = vmax.f32 %v3341, %v3496
    %v3652 = vmax.f32 %v3342, %v3497
    %v3653 = vmax.f32 %v3343, %v3498
    %v3654 = vmax.f32 %v3344, %v3499
    %v3655 = vmax.f32 %v3345, %v3500
    %v3656 = vmax.f32 %v3346, %v3501
    %v3657 = vmax.f32 %v3347, %v3502
    %v3658 = vmax.f32 %v3348, %v3503
    %v3659 = vmax.f32 %v3349, %v3504
    %v3660 = vmax.f32 %v3350, %v3505
    %v3661 = vmax.f32 %v3351, %v3506
    %v3662 = vmax.f32 %v3352, %v3507
    %v3663 = vmax.f32 %v3353, %v3508
    %v3664 = vmax.f32 %v3354, %v3509
    %v3665 = vmax.f32 %v3355, %v3510
    %v3666 = vmax.f32 %v3356, %v3511
    %v3667 = vmax.f32 %v3357, %v3512
    %v3668 = vmax.f32 %v3358, %v3513
    %v3669 = vmax.f32 %v3359, %v3514
    %v3670 = vmax.f32 %v3360, %v3515
    %v3671 = vmax.f32 %v3361, %v3516
    %v3672 = vmax.f32 %v3362, %v3517
    %v3673 = vmax.f32 %v3363, %v3518
    %v3674 = vmax.f32 %v3364, %v3519
    %v3675 = vmax.f32 %v3365, %v3520
    %v3676 = vmax.f32 %v3366, %v3521
    %v3677 = vmax.f32 %v3367, %v3522
    %v3678 = vmax.f32 %v3368, %v3523
    %v3679 = vmax.f32 %v3369, %v3524
    %v3680 = vmax.f32 %v3370, %v3525
    %v3681 = vmax.f32 %v3371, %v3526
    %v3682 = vmax.f32 %v3372, %v3527
    %v3683 = vmax.f32 %v3373, %v3528
    %v3684 = vmax.f32 %v3374, %v3529
    %v3685 = vmax.f32 %v3375, %v3530
    %v3686 = vmax.f32 %v3376, %v3531
    %v3687 = vmax.f32 %v3377, %v3532
    %v3688 = vmax.f32 %v3378, %v3533
    %v3689 = vmax.f32 %v3379, %v3534
    %v3690 = vmax.f32 %v3380, %v3535
    %v3691 = vmax.f32 %v3381, %v3536
    %v3692 = vmax.f32 %v3382, %v3537
    %v3693 = vmax.f32 %v3383, %v3538
    %v3694 = vmax.f32 %v3384, %v3539
    %v3695 = vmax.f32 %v3385, %v3540
    %v3696 = vmax.f32 %v3386, %v3541
    %v3697 = vmax.f32 %v3387, %v3542
    %v3698 = vmax.f32 %v3388, %v3543
    %v3699 = vmax.f32 %v3389, %v3544
    %v3700 = vmax.f32 %v3390, %v3545
    %v3701 = vmax.f32 %v3391, %v3546
    %v3702 = vmax.f32 %v3392, %v3547
    %v3703 = vmax.f32 %v3393, %v3548
    %v3704 = vmax.f32 %v3394, %v3549
    %v3705 = vmax.f32 %v3395, %v3550
    %v3706 = vmax.f32 %v3396, %v3551
    %v3707 = vmax.f32 %v3397, %v3552
    %v3708 = vmax.f32 %v3398, %v3553
    %v3709 = vmax.f32 %v3399, %v3554
    %v3710 = vmax.f32 %v3400, %v3555
    %v3711 = vmax.f32 %v3401, %v3556
    %v3712 = vmax.f32 %v3402, %v3557
    %v3713 = vmax.f32 %v3403, %v3558
    %v3714 = vmax.f32 %v3404, %v3559
    %v3715 = vmax.f32 %v3405, %v3560
    %v3716 = vmax.f32 %v3406, %v3561
    %v3717 = vmax.f32 %v3407, %v3562
    %v3718 = vmax.f32 %v3408, %v3563
    %v3719 = vmax.f32 %v3409, %v3564
    %v3720 = vmax.f32 %v3410, %v3565
    %v3721 = vmax.f32 %v3411, %v3566
    %v3722 = vmax.f32 %v3412, %v3567
    %v3723 = vmax.f32 %v3413, %v3568
    %v3724 = vmax.f32 %v3414, %v3569
    %v3725 = vmax.f32 %v3415, %v3570
    %v3726 = vmax.f32 %v3416, %v3571
    %v3727 = vmax.f32 %v3417, %v3572
    %v3728 = vmax.f32 %v3418, %v3573
    %v3729 = vmax.f32 %v3419, %v3574
    %v3730 = vmax.f32 %v3420, %v3575
    %v3731 = vmax.f32 %v3421, %v3576
    %v3732 = vmax.f32 %v3422, %v3577
    %v3733 = vmax.f32 %v3423, %v3578
    %v3734 = vmax.f32 %v3424, %v3579
    %v3735 = vmax.f32 %v3425, %v3580
    %v3736 = vmax.f32 %v3426, %v3581
    %v3737 = vmax.f32 %v3427, %v3582
    %v3738 = vmax.f32 %v3428, %v3583
    %v3739 = vmax.f32 %v3429, %v3584
    %v3740 = vmax.f32 %v3430, %v3585
    %v3741 = vmax.f32 %v3431, %v3586
    %v3742 = vmax.f32 %v3432, %v3587
    %v3743 = vmax.f32 %v3433, %v3588
    %v3744 = vmax.f32 %v3434, %v3589
    %v3745 = vmax.f32 %v3435, %v3590
    %v3746 = vmax.f32 %v3436, %v3591
    %v3747 = vmax.f32 %v3437, %v3592
    %v3748 = vmax.f32 %v3438, %v3593
    %v3749 = vmax.f32 %v3439, %v3594
    %v3750 = vmax.f32 %v3440, %v3595
    %v3751 = vmax.f32 %v3441, %v3596
    %v3752 = vmax.f32 %v3442, %v3597
    %3753 = vst.msk [vmem:[#allocation4] sm:$0xff] %vm655, %v3598
    %3754 = vst.msk [vmem:[#allocation4 + $0x8] sm:$0xff] %vm655, %v3599
    %3755 = vst.msk [vmem:[#allocation4 + $0x10] sm:$0xff] %vm655, %v3600
    %3756 = vst.msk [vmem:[#allocation4 + $0x18] sm:$0xff] %vm655, %v3601
    %3757 = vst.msk [vmem:[#allocation4 + $0x20] sm:$0xff] %vm655, %v3602
    %3758 = vst.msk [vmem:[#allocation4 + $0x28] sm:$0xff] %vm655, %v3603
    %3759 = vst.msk [vmem:[#allocation4 + $0x30] sm:$0xff] %vm655, %v3604
    %3760 = vst.msk [vmem:[#allocation4 + $0x38] sm:$0xff] %vm655, %v3605
    %3761 = vst.msk [vmem:[#allocation4 + $0x40] sm:$0xff] %vm655, %v3606
    %3762 = vst.msk [vmem:[#allocation4 + $0x48] sm:$0xff] %vm655, %v3607
    %3763 = vst.msk [vmem:[#allocation4 + $0x50] sm:$0xff] %vm655, %v3608
    %3764 = vst.msk [vmem:[#allocation4 + $0x58] sm:$0xff] %vm655, %v3609
    %3765 = vst.msk [vmem:[#allocation4 + $0x60] sm:$0xff] %vm655, %v3610
    %3766 = vst.msk [vmem:[#allocation4 + $0x68] sm:$0xff] %vm655, %v3611
    %3767 = vst.msk [vmem:[#allocation4 + $0x70] sm:$0xff] %vm655, %v3612
    %3768 = vst.msk [vmem:[#allocation4 + $0x78] sm:$0xff] %vm655, %v3613
    %3769 = vst.msk [vmem:[#allocation4 + $0x80] sm:$0xff] %vm655, %v3614
    %3770 = vst.msk [vmem:[#allocation4 + $0x88] sm:$0xff] %vm655, %v3615
    %3771 = vst.msk [vmem:[#allocation4 + $0x90] sm:$0xff] %vm655, %v3616
    %3772 = vst.msk [vmem:[#allocation4 + $0x98] sm:$0xff] %vm655, %v3617
    %3773 = vst.msk [vmem:[#allocation4 + $0xa0] sm:$0xff] %vm655, %v3618
    %3774 = vst.msk [vmem:[#allocation4 + $0xa8] sm:$0xff] %vm655, %v3619
    %3775 = vst.msk [vmem:[#allocation4 + $0xb0] sm:$0xff] %vm655, %v3620
    %3776 = vst.msk [vmem:[#allocation4 + $0xb8] sm:$0xff] %vm655, %v3621
    %3777 = vst.msk [vmem:[#allocation4 + $0xc0] sm:$0xff] %vm655, %v3622
    %3778 = vst.msk [vmem:[#allocation4 + $0xc8] sm:$0xff] %vm655, %v3623
    %3779 = vst.msk [vmem:[#allocation4 + $0xd0] sm:$0xff] %vm655, %v3624
    %3780 = vst.msk [vmem:[#allocation4 + $0xd8] sm:$0xff] %vm655, %v3625
    %3781 = vst.msk [vmem:[#allocation4 + $0xe0] sm:$0xff] %vm655, %v3626
    %3782 = vst.msk [vmem:[#allocation4 + $0xe8] sm:$0xff] %vm655, %v3627
    %3783 = vst.msk [vmem:[#allocation4 + $0xf0] sm:$0xff] %vm655, %v3628
    %3784 = vst.msk [vmem:[#allocation4 + $0xf8] sm:$0xff] %vm655, %v3629
    %3785 = vst.msk [vmem:[#allocation4 + $0x100] sm:$0xff] %vm655, %v3630
    %3786 = vst.msk [vmem:[#allocation4 + $0x108] sm:$0xff] %vm655, %v3631
    %3787 = vst.msk [vmem:[#allocation4 + $0x110] sm:$0xff] %vm655, %v3632
    %3788 = vst.msk [vmem:[#allocation4 + $0x118] sm:$0xff] %vm655, %v3633
    %3789 = vst.msk [vmem:[#allocation4 + $0x120] sm:$0xff] %vm655, %v3634
    %3790 = vst.msk [vmem:[#allocation4 + $0x128] sm:$0xff] %vm655, %v3635
    %3791 = vst.msk [vmem:[#allocation4 + $0x130] sm:$0xff] %vm655, %v3636
    %3792 = vst.msk [vmem:[#allocation4 + $0x138] sm:$0xff] %vm655, %v3637
    %3793 = vst.msk [vmem:[#allocation4 + $0x140] sm:$0xff] %vm655, %v3638
    %3794 = vst.msk [vmem:[#allocation4 + $0x148] sm:$0xff] %vm655, %v3639
    %3795 = vst.msk [vmem:[#allocation4 + $0x150] sm:$0xff] %vm655, %v3640
    %3796 = vst.msk [vmem:[#allocation4 + $0x158] sm:$0xff] %vm655, %v3641
    %3797 = vst.msk [vmem:[#allocation4 + $0x160] sm:$0xff] %vm655, %v3642
    %3798 = vst.msk [vmem:[#allocation4 + $0x168] sm:$0xff] %vm655, %v3643
    %3799 = vst.msk [vmem:[#allocation4 + $0x170] sm:$0xff] %vm655, %v3644
    %3800 = vst.msk [vmem:[#allocation4 + $0x178] sm:$0xff] %vm655, %v3645
    %3801 = vst.msk [vmem:[#allocation4 + $0x180] sm:$0xff] %vm655, %v3646
    %3802 = vst.msk [vmem:[#allocation4 + $0x188] sm:$0xff] %vm655, %v3647
    %3803 = vst.msk [vmem:[#allocation4 + $0x190] sm:$0xff] %vm655, %v3648
    %3804 = vst.msk [vmem:[#allocation4 + $0x198] sm:$0xff] %vm655, %v3649
    %3805 = vst.msk [vmem:[#allocation4 + $0x1a0] sm:$0xff] %vm655, %v3650
    %3806 = vst.msk [vmem:[#allocation4 + $0x1a8] sm:$0xff] %vm655, %v3651
    %3807 = vst.msk [vmem:[#allocation4 + $0x1b0] sm:$0xff] %vm655, %v3652
    %3808 = vst.msk [vmem:[#allocation4 + $0x1b8] sm:$0xff] %vm655, %v3653
    %3809 = vst.msk [vmem:[#allocation4 + $0x1c0] sm:$0xff] %vm655, %v3654
    %3810 = vst.msk [vmem:[#allocation4 + $0x1c8] sm:$0xff] %vm655, %v3655
    %3811 = vst.msk [vmem:[#allocation4 + $0x1d0] sm:$0xff] %vm655, %v3656
    %3812 = vst.msk [vmem:[#allocation4 + $0x1d8] sm:$0xff] %vm655, %v3657
    %3813 = vst.msk [vmem:[#allocation4 + $0x1e0] sm:$0xff] %vm655, %v3658
    %3814 = vst.msk [vmem:[#allocation4 + $0x1e8] sm:$0xff] %vm655, %v3659
    %3815 = vst.msk [vmem:[#allocation4 + $0x1f0] sm:$0xff] %vm655, %v3660
    %3816 = vst.msk [vmem:[#allocation4 + $0x1f8] sm:$0xff] %vm655, %v3661
    %3817 = vst.msk [vmem:[#allocation4 + $0x200] sm:$0xff] %vm655, %v3662
    %3818 = vst.msk [vmem:[#allocation4 + $0x208] sm:$0xff] %vm655, %v3663
    %3819 = vst.msk [vmem:[#allocation4 + $0x210] sm:$0xff] %vm655, %v3664
    %3820 = vst.msk [vmem:[#allocation4 + $0x218] sm:$0xff] %vm655, %v3665
    %3821 = vst.msk [vmem:[#allocation4 + $0x220] sm:$0xff] %vm655, %v3666
    %3822 = vst.msk [vmem:[#allocation4 + $0x228] sm:$0xff] %vm655, %v3667
    %3823 = vst.msk [vmem:[#allocation4 + $0x230] sm:$0xff] %vm655, %v3668
    %3824 = vst.msk [vmem:[#allocation4 + $0x238] sm:$0xff] %vm655, %v3669
    %3825 = vst.msk [vmem:[#allocation4 + $0x240] sm:$0xff] %vm655, %v3670
    %3826 = vst.msk [vmem:[#allocation4 + $0x248] sm:$0xff] %vm655, %v3671
    %3827 = vst.msk [vmem:[#allocation4 + $0x250] sm:$0xff] %vm655, %v3672
    %3828 = vst.msk [vmem:[#allocation4 + $0x258] sm:$0xff] %vm655, %v3673
    %3829 = vst.msk [vmem:[#allocation4 + $0x260] sm:$0xff] %vm655, %v3674
    %3830 = vst.msk [vmem:[#allocation4 + $0x268] sm:$0xff] %vm655, %v3675
    %3831 = vst.msk [vmem:[#allocation4 + $0x270] sm:$0xff] %vm655, %v3676
    %3832 = vst.msk [vmem:[#allocation4 + $0x278] sm:$0xff] %vm655, %v3677
    %3833 = vst.msk [vmem:[#allocation4 + $0x280] sm:$0xff] %vm655, %v3678
    %3834 = vst.msk [vmem:[#allocation4 + $0x288] sm:$0xff] %vm655, %v3679
    %3835 = vst.msk [vmem:[#allocation4 + $0x290] sm:$0xff] %vm655, %v3680
    %3836 = vst.msk [vmem:[#allocation4 + $0x298] sm:$0xff] %vm655, %v3681
    %3837 = vst.msk [vmem:[#allocation4 + $0x2a0] sm:$0xff] %vm655, %v3682
    %3838 = vst.msk [vmem:[#allocation4 + $0x2a8] sm:$0xff] %vm655, %v3683
    %3839 = vst.msk [vmem:[#allocation4 + $0x2b0] sm:$0xff] %vm655, %v3684
    %3840 = vst.msk [vmem:[#allocation4 + $0x2b8] sm:$0xff] %vm655, %v3685
    %3841 = vst.msk [vmem:[#allocation4 + $0x2c0] sm:$0xff] %vm655, %v3686
    %3842 = vst.msk [vmem:[#allocation4 + $0x2c8] sm:$0xff] %vm655, %v3687
    %3843 = vst.msk [vmem:[#allocation4 + $0x2d0] sm:$0xff] %vm655, %v3688
    %3844 = vst.msk [vmem:[#allocation4 + $0x2d8] sm:$0xff] %vm655, %v3689
    %3845 = vst.msk [vmem:[#allocation4 + $0x2e0] sm:$0xff] %vm655, %v3690
    %3846 = vst.msk [vmem:[#allocation4 + $0x2e8] sm:$0xff] %vm655, %v3691
    %3847 = vst.msk [vmem:[#allocation4 + $0x2f0] sm:$0xff] %vm655, %v3692
    %3848 = vst.msk [vmem:[#allocation4 + $0x2f8] sm:$0xff] %vm655, %v3693
    %3849 = vst.msk [vmem:[#allocation4 + $0x300] sm:$0xff] %vm655, %v3694
    %3850 = vst.msk [vmem:[#allocation4 + $0x308] sm:$0xff] %vm655, %v3695
    %3851 = vst.msk [vmem:[#allocation4 + $0x310] sm:$0xff] %vm655, %v3696
    %3852 = vst.msk [vmem:[#allocation4 + $0x318] sm:$0xff] %vm655, %v3697
    %3853 = vst.msk [vmem:[#allocation4 + $0x320] sm:$0xff] %vm655, %v3698
    %3854 = vst.msk [vmem:[#allocation4 + $0x328] sm:$0xff] %vm655, %v3699
    %3855 = vst.msk [vmem:[#allocation4 + $0x330] sm:$0xff] %vm655, %v3700
    %3856 = vst.msk [vmem:[#allocation4 + $0x338] sm:$0xff] %vm655, %v3701
    %3857 = vst.msk [vmem:[#allocation4 + $0x340] sm:$0xff] %vm655, %v3702
    %3858 = vst.msk [vmem:[#allocation4 + $0x348] sm:$0xff] %vm655, %v3703
    %3859 = vst.msk [vmem:[#allocation4 + $0x350] sm:$0xff] %vm655, %v3704
    %3860 = vst.msk [vmem:[#allocation4 + $0x358] sm:$0xff] %vm655, %v3705
    %3861 = vst.msk [vmem:[#allocation4 + $0x360] sm:$0xff] %vm655, %v3706
    %3862 = vst.msk [vmem:[#allocation4 + $0x368] sm:$0xff] %vm655, %v3707
    %3863 = vst.msk [vmem:[#allocation4 + $0x370] sm:$0xff] %vm655, %v3708
    %3864 = vst.msk [vmem:[#allocation4 + $0x378] sm:$0xff] %vm655, %v3709
    %3865 = vst.msk [vmem:[#allocation4 + $0x380] sm:$0xff] %vm655, %v3710
    %3866 = vst.msk [vmem:[#allocation4 + $0x388] sm:$0xff] %vm655, %v3711
    %3867 = vst.msk [vmem:[#allocation4 + $0x390] sm:$0xff] %vm655, %v3712
    %3868 = vst.msk [vmem:[#allocation4 + $0x398] sm:$0xff] %vm655, %v3713
    %3869 = vst.msk [vmem:[#allocation4 + $0x3a0] sm:$0xff] %vm655, %v3714
    %3870 = vst.msk [vmem:[#allocation4 + $0x3a8] sm:$0xff] %vm655, %v3715
    %3871 = vst.msk [vmem:[#allocation4 + $0x3b0] sm:$0xff] %vm655, %v3716
    %3872 = vst.msk [vmem:[#allocation4 + $0x3b8] sm:$0xff] %vm655, %v3717
    %3873 = vst.msk [vmem:[#allocation4 + $0x3c0] sm:$0xff] %vm655, %v3718
    %3874 = vst.msk [vmem:[#allocation4 + $0x3c8] sm:$0xff] %vm655, %v3719
    %3875 = vst.msk [vmem:[#allocation4 + $0x3d0] sm:$0xff] %vm655, %v3720
    %3876 = vst.msk [vmem:[#allocation4 + $0x3d8] sm:$0xff] %vm655, %v3721
    %3877 = vst.msk [vmem:[#allocation4 + $0x3e0] sm:$0xff] %vm655, %v3722
    %3878 = vst.msk [vmem:[#allocation4 + $0x3e8] sm:$0xff] %vm655, %v3723
    %3879 = vst.msk [vmem:[#allocation4 + $0x3f0] sm:$0xff] %vm655, %v3724
    %3880 = vst.msk [vmem:[#allocation4 + $0x3f8] sm:$0xff] %vm655, %v3725
    %3881 = vst.msk [vmem:[#allocation4 + $0x400] sm:$0xff] %vm655, %v3726
    %3882 = vst.msk [vmem:[#allocation4 + $0x408] sm:$0xff] %vm655, %v3727
    %3883 = vst.msk [vmem:[#allocation4 + $0x410] sm:$0xff] %vm655, %v3728
    %3884 = vst.msk [vmem:[#allocation4 + $0x418] sm:$0xff] %vm655, %v3729
    %3885 = vst.msk [vmem:[#allocation4 + $0x420] sm:$0xff] %vm655, %v3730
    %3886 = vst.msk [vmem:[#allocation4 + $0x428] sm:$0xff] %vm655, %v3731
    %3887 = vst.msk [vmem:[#allocation4 + $0x430] sm:$0xff] %vm655, %v3732
    %3888 = vst.msk [vmem:[#allocation4 + $0x438] sm:$0xff] %vm655, %v3733
    %3889 = vst.msk [vmem:[#allocation4 + $0x440] sm:$0xff] %vm655, %v3734
    %3890 = vst.msk [vmem:[#allocation4 + $0x448] sm:$0xff] %vm655, %v3735
    %3891 = vst.msk [vmem:[#allocation4 + $0x450] sm:$0xff] %vm655, %v3736
    %3892 = vst.msk [vmem:[#allocation4 + $0x458] sm:$0xff] %vm655, %v3737
    %3893 = vst.msk [vmem:[#allocation4 + $0x460] sm:$0xff] %vm655, %v3738
    %3894 = vst.msk [vmem:[#allocation4 + $0x468] sm:$0xff] %vm655, %v3739
    %3895 = vst.msk [vmem:[#allocation4 + $0x470] sm:$0xff] %vm655, %v3740
    %3896 = vst.msk [vmem:[#allocation4 + $0x478] sm:$0xff] %vm655, %v3741
    %3897 = vst.msk [vmem:[#allocation4 + $0x480] sm:$0xff] %vm655, %v3742
    %3898 = vst.msk [vmem:[#allocation4 + $0x488] sm:$0xff] %vm655, %v3743
    %3899 = vst.msk [vmem:[#allocation4 + $0x490] sm:$0xff] %vm655, %v3744
    %3900 = vst.msk [vmem:[#allocation4 + $0x498] sm:$0xff] %vm655, %v3745
    %3901 = vst.msk [vmem:[#allocation4 + $0x4a0] sm:$0xff] %vm655, %v3746
    %3902 = vst.msk [vmem:[#allocation4 + $0x4a8] sm:$0xff] %vm655, %v3747
    %3903 = vst.msk [vmem:[#allocation4 + $0x4b0] sm:$0xff] %vm655, %v3748
    %3904 = vst.msk [vmem:[#allocation4 + $0x4b8] sm:$0xff] %vm655, %v3749
    %3905 = vst.msk [vmem:[#allocation4 + $0x4c0] sm:$0xff] %vm655, %v3750
    %3906 = vst.msk [vmem:[#allocation4 + $0x4c8] sm:$0xff] %vm655, %v3751
    %3907 = vst.msk [vmem:[#allocation4 + $0x4d0] sm:$0xff] %vm655, %v3752
    %v3908 = vld [vmem:[%s5] sm:$0xff]
    %v3909 = vld [vmem:[%s5 + $0x8] sm:$0xff]
    %v3910 = vld [vmem:[%s5 + $0x10] sm:$0xff]
    %v3911 = vld [vmem:[#allocation4] sm:$0xff]
    %v3912 = vld [vmem:[#allocation4 + $0x8] sm:$0xff]
    %v3913 = vld [vmem:[#allocation4 + $0x10] sm:$0xff]
    %v3914 = vld [vmem:[#allocation4 + $0x18] sm:$0xff]
    %v3915 = vld [vmem:[#allocation4 + $0x20] sm:$0xff]
    %v3916 = vld [vmem:[#allocation4 + $0x28] sm:$0xff]
    %vm3917 = vcmask 392192
    %v3919 = vsel %vm3917, %v3908, 0
    %v3922 = vsel %vm3917, %v3909, 0
    %v3925 = vsel %vm3917, %v3910, 0
    %3927 = vmatprep.subr.mxu0 0.0
    %3928 = vmatpush1.msra.mxu0 %v3911
    %3929 = vmatprep.subr.mxu0 0.0
    %3930 = vmatpush1.msra.mxu0 %v3912
    %3931 = vmatprep.subr.mxu0 0.0
    %3932 = vmatpush1.msra.mxu0 %v3913
    %3933 = vmatprep.subr.mxu0 0.0
    %3934 = vmatpush1.msra.mxu0 %v3914
    %3935 = vmatprep.subr.mxu0 0.0
    %3936 = vmatpush1.msra.mxu0 %v3915
    %3937 = vmatprep.subr.mxu0 0.0
    %3938 = vmatpush1.msra.mxu0 %v3916
    %3939 = vmatprep.subr.mxu0 0.0
    %3940 = vmatpush1.msra.mxu0 0.0
    %3941 = vmatprep.subr.mxu0 0.0
    %3942 = vmatpush1.msra.mxu0 0.0
    %3943 = vmatprep.subr.mxu0 0.0
    %3944 = vmatpush1.msra.mxu0 0.0
    %3945 = vmatprep.subr.mxu0 0.0
    %3946 = vmatpush1.msra.mxu0 0.0
    %3947 = vmatprep.subr.mxu0 0.0
    %3948 = vmatpush1.msra.mxu0 0.0
    %3949 = vmatprep.subr.mxu0 0.0
    %3950 = vmatpush1.msra.mxu0 0.0
    %3951 = vmatprep.subr.mxu0 0.0
    %3952 = vmatpush1.msra.mxu0 0.0
    %3953 = vmatprep.subr.mxu0 0.0
    %3954 = vmatpush1.msra.mxu0 0.0
    %3955 = vmatprep.subr.mxu0 0.0
    %3956 = vmatpush1.msra.mxu0 0.0
    %3957 = vmatprep.subr.mxu0 0.0
    %3958 = vmatpush1.msra.mxu0 0.0
    %3959 = vmatprep.subr.mxu0 0.0
    %3960 = vmatpush1.msra.mxu0 0.0
    %3961 = vmatprep.subr.mxu0 0.0
    %3962 = vmatpush1.msra.mxu0 0.0
    %3963 = vmatprep.subr.mxu0 0.0
    %3964 = vmatpush1.msra.mxu0 0.0
    %3965 = vmatprep.subr.mxu0 0.0
    %3966 = vmatpush1.msra.mxu0 0.0
    %3967 = vmatprep.subr.mxu0 0.0
    %3968 = vmatpush1.msra.mxu0 0.0
    %3969 = vmatprep.subr.mxu0 0.0
    %3970 = vmatpush1.msra.mxu0 0.0
    %3971 = vmatprep.subr.mxu0 0.0
    %3972 = vmatpush1.msra.mxu0 0.0
    %3973 = vmatprep.subr.mxu0 0.0
    %3974 = vmatpush1.msra.mxu0 0.0
    %3975 = vmatprep.subr.mxu0 0.0
    %3976 = vmatpush1.msra.mxu0 0.0
    %3977 = vmatprep.subr.mxu0 0.0
    %3978 = vmatpush1.msra.mxu0 0.0
    %3979 = vmatprep.subr.mxu0 0.0
    %3980 = vmatpush1.msra.mxu0 0.0
    %3981 = vmatprep.subr.mxu0 0.0
    %3982 = vmatpush1.msra.mxu0 0.0
    %3983 = vmatprep.subr.mxu0 0.0
    %3984 = vmatpush1.msra.mxu0 0.0
    %3985 = vmatprep.subr.mxu0 0.0
    %3986 = vmatpush1.msra.mxu0 0.0
    %3987 = vmatprep.subr.mxu0 0.0
    %3988 = vmatpush1.msra.mxu0 0.0
    %3989 = vmatprep.subr.mxu0 0.0
    %3990 = vmatpush1.msra.mxu0 0.0
    %3991 = vmatprep.mubr.f32.mxu0 0.0
    %3992 = vmatmul.mubr.f32.gmra.mrb[0].mxu0 %v3919
    %v3993 = vpop.f32.mrb[0].mxu0
    %v3994 = vadd.f32 0.0, %v3993
    %v3995 = vpop.f32.mrb[0].mxu0
    %3996 = vmatprep.mubr.f32.mxu0 0.0
    %3997 = vmatmul.mubr.f32.gmra.mrb[0].mxu0 %v3922
    %v3998 = vpop.f32.mrb[0].mxu0
    %v3999 = vadd.f32 0.0, %v3998
    %v4000 = vpop.f32.mrb[0].mxu0
    %4001 = vmatprep.mubr.f32.mxu0 0.0
    %4002 = vmatmul.mubr.f32.gmra.mrb[0].mxu0 %v3925
    %v4003 = vpop.f32.mrb[0].mxu0
    %v4004 = vadd.f32 0.0, %v4003
    %v4005 = vpop.f32.mrb[0].mxu0
    %4006 = vdwg.mxu0
    %4007 = vst.msk [vmem:[#allocation5] sm:$0xff] %vm655, %v3994
    %4008 = vst.msk [vmem:[#allocation5 + $0x8] sm:$0xff] %vm655, %v3999
    %4009 = vst.msk [vmem:[#allocation5 + $0x10] sm:$0xff] %vm655, %v4004
    %v4010 = vld [vmem:[%s5] sm:$0xff]
    %v4011 = vld [vmem:[%s5 + $0x8] sm:$0xff]
    %v4012 = vld [vmem:[%s5 + $0x10] sm:$0xff]
    %v4013 = vld [vmem:[#allocation4 + $0x6c] sm:$0xff]
    %v4014 = vld [vmem:[#allocation4 + $0x74] sm:$0xff]
    %v4015 = vld [vmem:[#allocation4 + $0x7c] sm:$0xff]
    %v4016 = vld [vmem:[#allocation4 + $0x84] sm:$0xff]
    %v4017 = vld [vmem:[#allocation4 + $0x8c] sm:$0xff]
    %v4018 = vld [vmem:[#allocation4 + $0x94] sm:$0xff]
    %v4020 = vsel %vm3917, %v4010, 0
    %v4023 = vsel %vm3917, %v4011, 0
    %v4026 = vsel %vm3917, %v4012, 0
    %4028 = vmatprep.subr.mxu0 0.0
    %4029 = vmatpush1.msra.mxu0 %v4013
    %4030 = vmatprep.subr.mxu0 0.0
    %4031 = vmatpush1.msra.mxu0 %v4014
    %4032 = vmatprep.subr.mxu0 0.0
    %4033 = vmatpush1.msra.mxu0 %v4015
    %4034 = vmatprep.subr.mxu0 0.0
    %4035 = vmatpush1.msra.mxu0 %v4016
    %4036 = vmatprep.subr.mxu0 0.0
    %4037 = vmatpush1.msra.mxu0 %v4017
    %4038 = vmatprep.subr.mxu0 0.0
    %4039 = vmatpush1.msra.mxu0 %v4018
    %4040 = vmatprep.subr.mxu0 0.0
    %4041 = vmatpush1.msra.mxu0 0.0
    %4042 = vmatprep.subr.mxu0 0.0
    %4043 = vmatpush1.msra.mxu0 0.0
    %4044 = vmatprep.subr.mxu0 0.0
    %4045 = vmatpush1.msra.mxu0 0.0
    %4046 = vmatprep.subr.mxu0 0.0
    %4047 = vmatpush1.msra.mxu0 0.0
    %4048 = vmatprep.subr.mxu0 0.0
    %4049 = vmatpush1.msra.mxu0 0.0
    %4050 = vmatprep.subr.mxu0 0.0
    %4051 = vmatpush1.msra.mxu0 0.0
    %4052 = vmatprep.subr.mxu0 0.0
    %4053 = vmatpush1.msra.mxu0 0.0
    %4054 = vmatprep.subr.mxu0 0.0
    %4055 = vmatpush1.msra.mxu0 0.0
    %4056 = vmatprep.subr.mxu0 0.0
    %4057 = vmatpush1.msra.mxu0 0.0
    %4058 = vmatprep.subr.mxu0 0.0
    %4059 = vmatpush1.msra.mxu0 0.0
    %4060 = vmatprep.subr.mxu0 0.0
    %4061 = vmatpush1.msra.mxu0 0.0
    %4062 = vmatprep.subr.mxu0 0.0
    %4063 = vmatpush1.msra.mxu0 0.0
    %4064 = vmatprep.subr.mxu0 0.0
    %4065 = vmatpush1.msra.mxu0 0.0
    %4066 = vmatprep.subr.mxu0 0.0
    %4067 = vmatpush1.msra.mxu0 0.0
    %4068 = vmatprep.subr.mxu0 0.0
    %4069 = vmatpush1.msra.mxu0 0.0
    %4070 = vmatprep.subr.mxu0 0.0
    %4071 = vmatpush1.msra.mxu0 0.0
    %4072 = vmatprep.subr.mxu0 0.0
    %4073 = vmatpush1.msra.mxu0 0.0
    %4074 = vmatprep.subr.mxu0 0.0
    %4075 = vmatpush1.msra.mxu0 0.0
    %4076 = vmatprep.subr.mxu0 0.0
    %4077 = vmatpush1.msra.mxu0 0.0
    %4078 = vmatprep.subr.mxu0 0.0
    %4079 = vmatpush1.msra.mxu0 0.0
    %4080 = vmatprep.subr.mxu0 0.0
    %4081 = vmatpush1.msra.mxu0 0.0
    %4082 = vmatprep.subr.mxu0 0.0
    %4083 = vmatpush1.msra.mxu0 0.0
    %4084 = vmatprep.subr.mxu0 0.0
    %4085 = vmatpush1.msra.mxu0 0.0
    %4086 = vmatprep.subr.mxu0 0.0
    %4087 = vmatpush1.msra.mxu0 0.0
    %4088 = vmatprep.subr.mxu0 0.0
    %4089 = vmatpush1.msra.mxu0 0.0
    %4090 = vmatprep.subr.mxu0 0.0
    %4091 = vmatpush1.msra.mxu0 0.0
    %4092 = vmatprep.mubr.f32.mxu0 0.0
    %4093 = vmatmul.mubr.f32.gmra.mrb[0].mxu0 %v4020
    %v4094 = vpop.f32.mrb[0].mxu0
    %v4095 = vadd.f32 0.0, %v4094
    %v4096 = vpop.f32.mrb[0].mxu0
    %4097 = vmatprep.mubr.f32.mxu0 0.0
    %4098 = vmatmul.mubr.f32.gmra.mrb[0].mxu0 %v4023
    %v4099 = vpop.f32.mrb[0].mxu0
    %v4100 = vadd.f32 0.0, %v4099
    %v4101 = vpop.f32.mrb[0].mxu0
    %4102 = vmatprep.mubr.f32.mxu0 0.0
    %4103 = vmatmul.mubr.f32.gmra.mrb[0].mxu0 %v4026
    %v4104 = vpop.f32.mrb[0].mxu0
    %v4105 = vadd.f32 0.0, %v4104
    %v4106 = vpop.f32.mrb[0].mxu0
    %4107 = vdwg.mxu0
    %4108 = vst.msk [vmem:[#allocation5 + $0x18] sm:$0xff] %vm655, %v4095
    %4109 = vst.msk [vmem:[#allocation5 + $0x20] sm:$0xff] %vm655, %v4100
    %4110 = vst.msk [vmem:[#allocation5 + $0x28] sm:$0xff] %vm655, %v4105
    %v4111 = vld [vmem:[%s5] sm:$0xff]
    %v4112 = vld [vmem:[%s5 + $0x8] sm:$0xff]
    %v4113 = vld [vmem:[%s5 + $0x10] sm:$0xff]
    %v4114 = vld [vmem:[#allocation4 + $0xd8] sm:$0xff]
    %v4115 = vld [vmem:[#allocation4 + $0xe0] sm:$0xff]
    %v4116 = vld [vmem:[#allocation4 + $0xe8] sm:$0xff]
    %v4117 = vld [vmem:[#allocation4 + $0xf0] sm:$0xff]
    %v4118 = vld [vmem:[#allocation4 + $0xf8] sm:$0xff]
    %v4119 = vld [vmem:[#allocation4 + $0x100] sm:$0xff]
    %v4121 = vsel %vm3917, %v4111, 0
    %v4124 = vsel %vm3917, %v4112, 0
    %v4127 = vsel %vm3917, %v4113, 0
    %4129 = vmatprep.subr.mxu0 0.0
    %4130 = vmatpush1.msra.mxu0 %v4114
    %4131 = vmatprep.subr.mxu0 0.0
    %4132 = vmatpush1.msra.mxu0 %v4115
    %4133 = vmatprep.subr.mxu0 0.0
    %4134 = vmatpush1.msra.mxu0 %v4116
    %4135 = vmatprep.subr.mxu0 0.0
    %4136 = vmatpush1.msra.mxu0 %v4117
    %4137 = vmatprep.subr.mxu0 0.0
    %4138 = vmatpush1.msra.mxu0 %v4118
    %4139 = vmatprep.subr.mxu0 0.0
    %4140 = vmatpush1.msra.mxu0 %v4119
    %4141 = vmatprep.subr.mxu0 0.0
    %4142 = vmatpush1.msra.mxu0 0.0
    %4143 = vmatprep.subr.mxu0 0.0
    %4144 = vmatpush1.msra.mxu0 0.0
    %4145 = vmatprep.subr.mxu0 0.0
    %4146 = vmatpush1.msra.mxu0 0.0
    %4147 = vmatprep.subr.mxu0 0.0
    %4148 = vmatpush1.msra.mxu0 0.0
    %4149 = vmatprep.subr.mxu0 0.0
    %4150 = vmatpush1.msra.mxu0 0.0
    %4151 = vmatprep.subr.mxu0 0.0
    %4152 = vmatpush1.msra.mxu0 0.0
    %4153 = vmatprep.subr.mxu0 0.0
    %4154 = vmatpush1.msra.mxu0 0.0
    %4155 = vmatprep.subr.mxu0 0.0
    %4156 = vmatpush1.msra.mxu0 0.0
    %4157 = vmatprep.subr.mxu0 0.0
    %4158 = vmatpush1.msra.mxu0 0.0
    %4159 = vmatprep.subr.mxu0 0.0
    %4160 = vmatpush1.msra.mxu0 0.0
    %4161 = vmatprep.subr.mxu0 0.0
    %4162 = vmatpush1.msra.mxu0 0.0
    %4163 = vmatprep.subr.mxu0 0.0
    %4164 = vmatpush1.msra.mxu0 0.0
    %4165 = vmatprep.subr.mxu0 0.0
    %4166 = vmatpush1.msra.mxu0 0.0
    %4167 = vmatprep.subr.mxu0 0.0
    %4168 = vmatpush1.msra.mxu0 0.0
    %4169 = vmatprep.subr.mxu0 0.0
    %4170 = vmatpush1.msra.mxu0 0.0
    %4171 = vmatprep.subr.mxu0 0.0
    %4172 = vmatpush1.msra.mxu0 0.0
    %4173 = vmatprep.subr.mxu0 0.0
    %4174 = vmatpush1.msra.mxu0 0.0
    %4175 = vmatprep.subr.mxu0 0.0
    %4176 = vmatpush1.msra.mxu0 0.0
    %4177 = vmatprep.subr.mxu0 0.0
    %4178 = vmatpush1.msra.mxu0 0.0
    %4179 = vmatprep.subr.mxu0 0.0
    %4180 = vmatpush1.msra.mxu0 0.0
    %4181 = vmatprep.subr.mxu0 0.0
    %4182 = vmatpush1.msra.mxu0 0.0
    %4183 = vmatprep.subr.mxu0 0.0
    %4184 = vmatpush1.msra.mxu0 0.0
    %4185 = vmatprep.subr.mxu0 0.0
    %4186 = vmatpush1.msra.mxu0 0.0
    %4187 = vmatprep.subr.mxu0 0.0
    %4188 = vmatpush1.msra.mxu0 0.0
    %4189 = vmatprep.subr.mxu0 0.0
    %4190 = vmatpush1.msra.mxu0 0.0
    %4191 = vmatprep.subr.mxu0 0.0
    %4192 = vmatpush1.msra.mxu0 0.0
    %4193 = vmatprep.mubr.f32.mxu0 0.0
    %4194 = vmatmul.mubr.f32.gmra.mrb[0].mxu0 %v4121
    %v4195 = vpop.f32.mrb[0].mxu0
    %v4196 = vadd.f32 0.0, %v4195
    %v4197 = vpop.f32.mrb[0].mxu0
    %4198 = vmatprep.mubr.f32.mxu0 0.0
    %4199 = vmatmul.mubr.f32.gmra.mrb[0].mxu0 %v4124
    %v4200 = vpop.f32.mrb[0].mxu0
    %v4201 = vadd.f32 0.0, %v4200
    %v4202 = vpop.f32.mrb[0].mxu0
    %4203 = vmatprep.mubr.f32.mxu0 0.0
    %4204 = vmatmul.mubr.f32.gmra.mrb[0].mxu0 %v4127
    %v4205 = vpop.f32.mrb[0].mxu0
    %v4206 = vadd.f32 0.0, %v4205
    %v4207 = vpop.f32.mrb[0].mxu0
    %4208 = vdwg.mxu0
    %4209 = vst.msk [vmem:[#allocation5 + $0x30] sm:$0xff] %vm655, %v4196
    %4210 = vst.msk [vmem:[#allocation5 + $0x38] sm:$0xff] %vm655, %v4201
    %4211 = vst.msk [vmem:[#allocation5 + $0x40] sm:$0xff] %vm655, %v4206
    %v4212 = vld [vmem:[%s5] sm:$0xff]
    %v4213 = vld [vmem:[%s5 + $0x8] sm:$0xff]
    %v4214 = vld [vmem:[%s5 + $0x10] sm:$0xff]
    %v4215 = vld [vmem:[#allocation4 + $0x144] sm:$0xff]
    %v4216 = vld [vmem:[#allocation4 + $0x14c] sm:$0xff]
    %v4217 = vld [vmem:[#allocation4 + $0x154] sm:$0xff]
    %v4218 = vld [vmem:[#allocation4 + $0x15c] sm:$0xff]
    %v4219 = vld [vmem:[#allocation4 + $0x164] sm:$0xff]
    %v4220 = vld [vmem:[#allocation4 + $0x16c] sm:$0xff]
    %v4222 = vsel %vm3917, %v4212, 0
    %v4225 = vsel %vm3917, %v4213, 0
    %v4228 = vsel %vm3917, %v4214, 0
    %4230 = vmatprep.subr.mxu0 0.0
    %4231 = vmatpush1.msra.mxu0 %v4215
    %4232 = vmatprep.subr.mxu0 0.0
    %4233 = vmatpush1.msra.mxu0 %v4216
    %4234 = vmatprep.subr.mxu0 0.0
    %4235 = vmatpush1.msra.mxu0 %v4217
    %4236 = vmatprep.subr.mxu0 0.0
    %4237 = vmatpush1.msra.mxu0 %v4218
    %4238 = vmatprep.subr.mxu0 0.0
    %4239 = vmatpush1.msra.mxu0 %v4219
    %4240 = vmatprep.subr.mxu0 0.0
    %4241 = vmatpush1.msra.mxu0 %v4220
    %4242 = vmatprep.subr.mxu0 0.0
    %4243 = vmatpush1.msra.mxu0 0.0
    %4244 = vmatprep.subr.mxu0 0.0
    %4245 = vmatpush1.msra.mxu0 0.0
    %4246 = vmatprep.subr.mxu0 0.0
    %4247 = vmatpush1.msra.mxu0 0.0
    %4248 = vmatprep.subr.mxu0 0.0
    %4249 = vmatpush1.msra.mxu0 0.0
    %4250 = vmatprep.subr.mxu0 0.0
    %4251 = vmatpush1.msra.mxu0 0.0
    %4252 = vmatprep.subr.mxu0 0.0
    %4253 = vmatpush1.msra.mxu0 0.0
    %4254 = vmatprep.subr.mxu0 0.0
    %4255 = vmatpush1.msra.mxu0 0.0
    %4256 = vmatprep.subr.mxu0 0.0
    %4257 = vmatpush1.msra.mxu0 0.0
    %4258 = vmatprep.subr.mxu0 0.0
    %4259 = vmatpush1.msra.mxu0 0.0
    %4260 = vmatprep.subr.mxu0 0.0
    %4261 = vmatpush1.msra.mxu0 0.0
    %4262 = vmatprep.subr.mxu0 0.0
    %4263 = vmatpush1.msra.mxu0 0.0
    %4264 = vmatprep.subr.mxu0 0.0
    %4265 = vmatpush1.msra.mxu0 0.0
    %4266 = vmatprep.subr.mxu0 0.0
    %4267 = vmatpush1.msra.mxu0 0.0
    %4268 = vmatprep.subr.mxu0 0.0
    %4269 = vmatpush1.msra.mxu0 0.0
    %4270 = vmatprep.subr.mxu0 0.0
    %4271 = vmatpush1.msra.mxu0 0.0
    %4272 = vmatprep.subr.mxu0 0.0
    %4273 = vmatpush1.msra.mxu0 0.0
    %4274 = vmatprep.subr.mxu0 0.0
    %4275 = vmatpush1.msra.mxu0 0.0
    %4276 = vmatprep.subr.mxu0 0.0
    %4277 = vmatpush1.msra.mxu0 0.0
    %4278 = vmatprep.subr.mxu0 0.0
    %4279 = vmatpush1.msra.mxu0 0.0
    %4280 = vmatprep.subr.mxu0 0.0
    %4281 = vmatpush1.msra.mxu0 0.0
    %4282 = vmatprep.subr.mxu0 0.0
    %4283 = vmatpush1.msra.mxu0 0.0
    %4284 = vmatprep.subr.mxu0 0.0
    %4285 = vmatpush1.msra.mxu0 0.0
    %4286 = vmatprep.subr.mxu0 0.0
    %4287 = vmatpush1.msra.mxu0 0.0
    %4288 = vmatprep.subr.mxu0 0.0
    %4289 = vmatpush1.msra.mxu0 0.0
    %4290 = vmatprep.subr.mxu0 0.0
    %4291 = vmatpush1.msra.mxu0 0.0
    %4292 = vmatprep.subr.mxu0 0.0
    %4293 = vmatpush1.msra.mxu0 0.0
    %4294 = vmatprep.mubr.f32.mxu0 0.0
    %4295 = vmatmul.mubr.f32.gmra.mrb[0].mxu0 %v4222
    %v4296 = vpop.f32.mrb[0].mxu0
    %v4297 = vadd.f32 0.0, %v4296
    %v4298 = vpop.f32.mrb[0].mxu0
    %4299 = vmatprep.mubr.f32.mxu0 0.0
    %4300 = vmatmul.mubr.f32.gmra.mrb[0].mxu0 %v4225
    %v4301 = vpop.f32.mrb[0].mxu0
    %v4302 = vadd.f32 0.0, %v4301
    %v4303 = vpop.f32.mrb[0].mxu0
    %4304 = vmatprep.mubr.f32.mxu0 0.0
    %4305 = vmatmul.mubr.f32.gmra.mrb[0].mxu0 %v4228
    %v4306 = vpop.f32.mrb[0].mxu0
    %v4307 = vadd.f32 0.0, %v4306
    %v4308 = vpop.f32.mrb[0].mxu0
    %4309 = vdwg.mxu0
    %4310 = vst.msk [vmem:[#allocation5 + $0x48] sm:$0xff] %vm655, %v4297
    %4311 = vst.msk [vmem:[#allocation5 + $0x50] sm:$0xff] %vm655, %v4302
    %4312 = vst.msk [vmem:[#allocation5 + $0x58] sm:$0xff] %vm655, %v4307
    %v4313 = vld [vmem:[%s5] sm:$0xff]
    %v4314 = vld [vmem:[%s5 + $0x8] sm:$0xff]
    %v4315 = vld [vmem:[%s5 + $0x10] sm:$0xff]
    %v4316 = vld [vmem:[#allocation4 + $0x1b0] sm:$0xff]
    %v4317 = vld [vmem:[#allocation4 + $0x1b8] sm:$0xff]
    %v4318 = vld [vmem:[#allocation4 + $0x1c0] sm:$0xff]
    %v4319 = vld [vmem:[#allocation4 + $0x1c8] sm:$0xff]
    %v4320 = vld [vmem:[#allocation4 + $0x1d0] sm:$0xff]
    %v4321 = vld [vmem:[#allocation4 + $0x1d8] sm:$0xff]
    %v4323 = vsel %vm3917, %v4313, 0
    %v4326 = vsel %vm3917, %v4314, 0
    %v4329 = vsel %vm3917, %v4315, 0
    %4331 = vmatprep.subr.mxu0 0.0
    %4332 = vmatpush1.msra.mxu0 %v4316
    %4333 = vmatprep.subr.mxu0 0.0
    %4334 = vmatpush1.msra.mxu0 %v4317
    %4335 = vmatprep.subr.mxu0 0.0
    %4336 = vmatpush1.msra.mxu0 %v4318
    %4337 = vmatprep.subr.mxu0 0.0
    %4338 = vmatpush1.msra.mxu0 %v4319
    %4339 = vmatprep.subr.mxu0 0.0
    %4340 = vmatpush1.msra.mxu0 %v4320
    %4341 = vmatprep.subr.mxu0 0.0
    %4342 = vmatpush1.msra.mxu0 %v4321
    %4343 = vmatprep.subr.mxu0 0.0
    %4344 = vmatpush1.msra.mxu0 0.0
    %4345 = vmatprep.subr.mxu0 0.0
    %4346 = vmatpush1.msra.mxu0 0.0
    %4347 = vmatprep.subr.mxu0 0.0
    %4348 = vmatpush1.msra.mxu0 0.0
    %4349 = vmatprep.subr.mxu0 0.0
    %4350 = vmatpush1.msra.mxu0 0.0
    %4351 = vmatprep.subr.mxu0 0.0
    %4352 = vmatpush1.msra.mxu0 0.0
    %4353 = vmatprep.subr.mxu0 0.0
    %4354 = vmatpush1.msra.mxu0 0.0
    %4355 = vmatprep.subr.mxu0 0.0
    %4356 = vmatpush1.msra.mxu0 0.0
    %4357 = vmatprep.subr.mxu0 0.0
    %4358 = vmatpush1.msra.mxu0 0.0
    %4359 = vmatprep.subr.mxu0 0.0
    %4360 = vmatpush1.msra.mxu0 0.0
    %4361 = vmatprep.subr.mxu0 0.0
    %4362 = vmatpush1.msra.mxu0 0.0
    %4363 = vmatprep.subr.mxu0 0.0
    %4364 = vmatpush1.msra.mxu0 0.0
    %4365 = vmatprep.subr.mxu0 0.0
    %4366 = vmatpush1.msra.mxu0 0.0
    %4367 = vmatprep.subr.mxu0 0.0
    %4368 = vmatpush1.msra.mxu0 0.0
    %4369 = vmatprep.subr.mxu0 0.0
    %4370 = vmatpush1.msra.mxu0 0.0
    %4371 = vmatprep.subr.mxu0 0.0
    %4372 = vmatpush1.msra.mxu0 0.0
    %4373 = vmatprep.subr.mxu0 0.0
    %4374 = vmatpush1.msra.mxu0 0.0
    %4375 = vmatprep.subr.mxu0 0.0
    %4376 = vmatpush1.msra.mxu0 0.0
    %4377 = vmatprep.subr.mxu0 0.0
    %4378 = vmatpush1.msra.mxu0 0.0
    %4379 = vmatprep.subr.mxu0 0.0
    %4380 = vmatpush1.msra.mxu0 0.0
    %4381 = vmatprep.subr.mxu0 0.0
    %4382 = vmatpush1.msra.mxu0 0.0
    %4383 = vmatprep.subr.mxu0 0.0
    %4384 = vmatpush1.msra.mxu0 0.0
    %4385 = vmatprep.subr.mxu0 0.0
    %4386 = vmatpush1.msra.mxu0 0.0
    %4387 = vmatprep.subr.mxu0 0.0
    %4388 = vmatpush1.msra.mxu0 0.0
    %4389 = vmatprep.subr.mxu0 0.0
    %4390 = vmatpush1.msra.mxu0 0.0
    %4391 = vmatprep.subr.mxu0 0.0
    %4392 = vmatpush1.msra.mxu0 0.0
    %4393 = vmatprep.subr.mxu0 0.0
    %4394 = vmatpush1.msra.mxu0 0.0
    %4395 = vmatprep.mubr.f32.mxu0 0.0
    %4396 = vmatmul.mubr.f32.gmra.mrb[0].mxu0 %v4323
    %v4397 = vpop.f32.mrb[0].mxu0
    %v4398 = vadd.f32 0.0, %v4397
    %v4399 = vpop.f32.mrb[0].mxu0
    %4400 = vmatprep.mubr.f32.mxu0 0.0
    %4401 = vmatmul.mubr.f32.gmra.mrb[0].mxu0 %v4326
    %v4402 = vpop.f32.mrb[0].mxu0
    %v4403 = vadd.f32 0.0, %v4402
    %v4404 = vpop.f32.mrb[0].mxu0
    %4405 = vmatprep.mubr.f32.mxu0 0.0
    %4406 = vmatmul.mubr.f32.gmra.mrb[0].mxu0 %v4329
    %v4407 = vpop.f32.mrb[0].mxu0
    %v4408 = vadd.f32 0.0, %v4407
    %v4409 = vpop.f32.mrb[0].mxu0
    %4410 = vdwg.mxu0
    %4411 = vst.msk [vmem:[#allocation5 + $0x60] sm:$0xff] %vm655, %v4398
    %4412 = vst.msk [vmem:[#allocation5 + $0x68] sm:$0xff] %vm655, %v4403
    %4413 = vst.msk [vmem:[#allocation5 + $0x70] sm:$0xff] %vm655, %v4408
    %v4414 = vld [vmem:[%s5] sm:$0xff]
    %v4415 = vld [vmem:[%s5 + $0x8] sm:$0xff]
    %v4416 = vld [vmem:[%s5 + $0x10] sm:$0xff]
    %v4417 = vld [vmem:[#allocation4 + $0x21c] sm:$0xff]
    %v4418 = vld [vmem:[#allocation4 + $0x224] sm:$0xff]
    %v4419 = vld [vmem:[#allocation4 + $0x22c] sm:$0xff]
    %v4420 = vld [vmem:[#allocation4 + $0x234] sm:$0xff]
    %v4421 = vld [vmem:[#allocation4 + $0x23c] sm:$0xff]
    %v4422 = vld [vmem:[#allocation4 + $0x244] sm:$0xff]
    %v4424 = vsel %vm3917, %v4414, 0
    %v4427 = vsel %vm3917, %v4415, 0
    %v4430 = vsel %vm3917, %v4416, 0
    %4432 = vmatprep.subr.mxu0 0.0
    %4433 = vmatpush1.msra.mxu0 %v4417
    %4434 = vmatprep.subr.mxu0 0.0
    %4435 = vmatpush1.msra.mxu0 %v4418
    %4436 = vmatprep.subr.mxu0 0.0
    %4437 = vmatpush1.msra.mxu0 %v4419
    %4438 = vmatprep.subr.mxu0 0.0
    %4439 = vmatpush1.msra.mxu0 %v4420
    %4440 = vmatprep.subr.mxu0 0.0
    %4441 = vmatpush1.msra.mxu0 %v4421
    %4442 = vmatprep.subr.mxu0 0.0
    %4443 = vmatpush1.msra.mxu0 %v4422
    %4444 = vmatprep.subr.mxu0 0.0
    %4445 = vmatpush1.msra.mxu0 0.0
    %4446 = vmatprep.subr.mxu0 0.0
    %4447 = vmatpush1.msra.mxu0 0.0
    %4448 = vmatprep.subr.mxu0 0.0
    %4449 = vmatpush1.msra.mxu0 0.0
    %4450 = vmatprep.subr.mxu0 0.0
    %4451 = vmatpush1.msra.mxu0 0.0
    %4452 = vmatprep.subr.mxu0 0.0
    %4453 = vmatpush1.msra.mxu0 0.0
    %4454 = vmatprep.subr.mxu0 0.0
    %4455 = vmatpush1.msra.mxu0 0.0
    %4456 = vmatprep.subr.mxu0 0.0
    %4457 = vmatpush1.msra.mxu0 0.0
    %4458 = vmatprep.subr.mxu0 0.0
    %4459 = vmatpush1.msra.mxu0 0.0
    %4460 = vmatprep.subr.mxu0 0.0
    %4461 = vmatpush1.msra.mxu0 0.0
    %4462 = vmatprep.subr.mxu0 0.0
    %4463 = vmatpush1.msra.mxu0 0.0
    %4464 = vmatprep.subr.mxu0 0.0
    %4465 = vmatpush1.msra.mxu0 0.0
    %4466 = vmatprep.subr.mxu0 0.0
    %4467 = vmatpush1.msra.mxu0 0.0
    %4468 = vmatprep.subr.mxu0 0.0
    %4469 = vmatpush1.msra.mxu0 0.0
    %4470 = vmatprep.subr.mxu0 0.0
    %4471 = vmatpush1.msra.mxu0 0.0
    %4472 = vmatprep.subr.mxu0 0.0
    %4473 = vmatpush1.msra.mxu0 0.0
    %4474 = vmatprep.subr.mxu0 0.0
    %4475 = vmatpush1.msra.mxu0 0.0
    %4476 = vmatprep.subr.mxu0 0.0
    %4477 = vmatpush1.msra.mxu0 0.0
    %4478 = vmatprep.subr.mxu0 0.0
    %4479 = vmatpush1.msra.mxu0 0.0
    %4480 = vmatprep.subr.mxu0 0.0
    %4481 = vmatpush1.msra.mxu0 0.0
    %4482 = vmatprep.subr.mxu0 0.0
    %4483 = vmatpush1.msra.mxu0 0.0
    %4484 = vmatprep.subr.mxu0 0.0
    %4485 = vmatpush1.msra.mxu0 0.0
    %4486 = vmatprep.subr.mxu0 0.0
    %4487 = vmatpush1.msra.mxu0 0.0
    %4488 = vmatprep.subr.mxu0 0.0
    %4489 = vmatpush1.msra.mxu0 0.0
    %4490 = vmatprep.subr.mxu0 0.0
    %4491 = vmatpush1.msra.mxu0 0.0
    %4492 = vmatprep.subr.mxu0 0.0
    %4493 = vmatpush1.msra.mxu0 0.0
    %4494 = vmatprep.subr.mxu0 0.0
    %4495 = vmatpush1.msra.mxu0 0.0
    %4496 = vmatprep.mubr.f32.mxu0 0.0
    %4497 = vmatmul.mubr.f32.gmra.mrb[0].mxu0 %v4424
    %v4498 = vpop.f32.mrb[0].mxu0
    %v4499 = vadd.f32 0.0, %v4498
    %v4500 = vpop.f32.mrb[0].mxu0
    %4501 = vmatprep.mubr.f32.mxu0 0.0
    %4502 = vmatmul.mubr.f32.gmra.mrb[0].mxu0 %v4427
    %v4503 = vpop.f32.mrb[0].mxu0
    %v4504 = vadd.f32 0.0, %v4503
    %v4505 = vpop.f32.mrb[0].mxu0
    %4506 = vmatprep.mubr.f32.mxu0 0.0
    %4507 = vmatmul.mubr.f32.gmra.mrb[0].mxu0 %v4430
    %v4508 = vpop.f32.mrb[0].mxu0
    %v4509 = vadd.f32 0.0, %v4508
    %v4510 = vpop.f32.mrb[0].mxu0
    %4511 = vdwg.mxu0
    %4512 = vst.msk [vmem:[#allocation5 + $0x78] sm:$0xff] %vm655, %v4499
    %4513 = vst.msk [vmem:[#allocation5 + $0x80] sm:$0xff] %vm655, %v4504
    %4514 = vst.msk [vmem:[#allocation5 + $0x88] sm:$0xff] %vm655, %v4509
    %v4515 = vld [vmem:[%s5] sm:$0xff]
    %v4516 = vld [vmem:[%s5 + $0x8] sm:$0xff]
    %v4517 = vld [vmem:[%s5 + $0x10] sm:$0xff]
    %v4518 = vld [vmem:[#allocation4 + $0x288] sm:$0xff]
    %v4519 = vld [vmem:[#allocation4 + $0x290] sm:$0xff]
    %v4520 = vld [vmem:[#allocation4 + $0x298] sm:$0xff]
    %v4521 = vld [vmem:[#allocation4 + $0x2a0] sm:$0xff]
    %v4522 = vld [vmem:[#allocation4 + $0x2a8] sm:$0xff]
    %v4523 = vld [vmem:[#allocation4 + $0x2b0] sm:$0xff]
    %v4525 = vsel %vm3917, %v4515, 0
    %v4528 = vsel %vm3917, %v4516, 0
    %v4531 = vsel %vm3917, %v4517, 0
    %4533 = vmatprep.subr.mxu0 0.0
    %4534 = vmatpush1.msra.mxu0 %v4518
    %4535 = vmatprep.subr.mxu0 0.0
    %4536 = vmatpush1.msra.mxu0 %v4519
    %4537 = vmatprep.subr.mxu0 0.0
    %4538 = vmatpush1.msra.mxu0 %v4520
    %4539 = vmatprep.subr.mxu0 0.0
    %4540 = vmatpush1.msra.mxu0 %v4521
    %4541 = vmatprep.subr.mxu0 0.0
    %4542 = vmatpush1.msra.mxu0 %v4522
    %4543 = vmatprep.subr.mxu0 0.0
    %4544 = vmatpush1.msra.mxu0 %v4523
    %4545 = vmatprep.subr.mxu0 0.0
    %4546 = vmatpush1.msra.mxu0 0.0
    %4547 = vmatprep.subr.mxu0 0.0
    %4548 = vmatpush1.msra.mxu0 0.0
    %4549 = vmatprep.subr.mxu0 0.0
    %4550 = vmatpush1.msra.mxu0 0.0
    %4551 = vmatprep.subr.mxu0 0.0
    %4552 = vmatpush1.msra.mxu0 0.0
    %4553 = vmatprep.subr.mxu0 0.0
    %4554 = vmatpush1.msra.mxu0 0.0
    %4555 = vmatprep.subr.mxu0 0.0
    %4556 = vmatpush1.msra.mxu0 0.0
    %4557 = vmatprep.subr.mxu0 0.0
    %4558 = vmatpush1.msra.mxu0 0.0
    %4559 = vmatprep.subr.mxu0 0.0
    %4560 = vmatpush1.msra.mxu0 0.0
    %4561 = vmatprep.subr.mxu0 0.0
    %4562 = vmatpush1.msra.mxu0 0.0
    %4563 = vmatprep.subr.mxu0 0.0
    %4564 = vmatpush1.msra.mxu0 0.0
    %4565 = vmatprep.subr.mxu0 0.0
    %4566 = vmatpush1.msra.mxu0 0.0
    %4567 = vmatprep.subr.mxu0 0.0
    %4568 = vmatpush1.msra.mxu0 0.0
    %4569 = vmatprep.subr.mxu0 0.0
    %4570 = vmatpush1.msra.mxu0 0.0
    %4571 = vmatprep.subr.mxu0 0.0
    %4572 = vmatpush1.msra.mxu0 0.0
    %4573 = vmatprep.subr.mxu0 0.0
    %4574 = vmatpush1.msra.mxu0 0.0
    %4575 = vmatprep.subr.mxu0 0.0
    %4576 = vmatpush1.msra.mxu0 0.0
    %4577 = vmatprep.subr.mxu0 0.0
    %4578 = vmatpush1.msra.mxu0 0.0
    %4579 = vmatprep.subr.mxu0 0.0
    %4580 = vmatpush1.msra.mxu0 0.0
    %4581 = vmatprep.subr.mxu0 0.0
    %4582 = vmatpush1.msra.mxu0 0.0
    %4583 = vmatprep.subr.mxu0 0.0
    %4584 = vmatpush1.msra.mxu0 0.0
    %4585 = vmatprep.subr.mxu0 0.0
    %4586 = vmatpush1.msra.mxu0 0.0
    %4587 = vmatprep.subr.mxu0 0.0
    %4588 = vmatpush1.msra.mxu0 0.0
    %4589 = vmatprep.subr.mxu0 0.0
    %4590 = vmatpush1.msra.mxu0 0.0
    %4591 = vmatprep.subr.mxu0 0.0
    %4592 = vmatpush1.msra.mxu0 0.0
    %4593 = vmatprep.subr.mxu0 0.0
    %4594 = vmatpush1.msra.mxu0 0.0
    %4595 = vmatprep.subr.mxu0 0.0
    %4596 = vmatpush1.msra.mxu0 0.0
    %4597 = vmatprep.mubr.f32.mxu0 0.0
    %4598 = vmatmul.mubr.f32.gmra.mrb[0].mxu0 %v4525
    %v4599 = vpop.f32.mrb[0].mxu0
    %v4600 = vadd.f32 0.0, %v4599
    %v4601 = vpop.f32.mrb[0].mxu0
    %4602 = vmatprep.mubr.f32.mxu0 0.0
    %4603 = vmatmul.mubr.f32.gmra.mrb[0].mxu0 %v4528
    %v4604 = vpop.f32.mrb[0].mxu0
    %v4605 = vadd.f32 0.0, %v4604
    %v4606 = vpop.f32.mrb[0].mxu0
    %4607 = vmatprep.mubr.f32.mxu0 0.0
    %4608 = vmatmul.mubr.f32.gmra.mrb[0].mxu0 %v4531
    %v4609 = vpop.f32.mrb[0].mxu0
    %v4610 = vadd.f32 0.0, %v4609
    %v4611 = vpop.f32.mrb[0].mxu0
    %4612 = vdwg.mxu0
    %4613 = vst.msk [vmem:[#allocation5 + $0x90] sm:$0xff] %vm655, %v4600
    %4614 = vst.msk [vmem:[#allocation5 + $0x98] sm:$0xff] %vm655, %v4605
    %4615 = vst.msk [vmem:[#allocation5 + $0xa0] sm:$0xff] %vm655, %v4610
    %v4616 = vld [vmem:[%s5] sm:$0xff]
    %v4617 = vld [vmem:[%s5 + $0x8] sm:$0xff]
    %v4618 = vld [vmem:[%s5 + $0x10] sm:$0xff]
    %v4619 = vld [vmem:[#allocation4 + $0x2f4] sm:$0xff]
    %v4620 = vld [vmem:[#allocation4 + $0x2fc] sm:$0xff]
    %v4621 = vld [vmem:[#allocation4 + $0x304] sm:$0xff]
    %v4622 = vld [vmem:[#allocation4 + $0x30c] sm:$0xff]
    %v4623 = vld [vmem:[#allocation4 + $0x314] sm:$0xff]
    %v4624 = vld [vmem:[#allocation4 + $0x31c] sm:$0xff]
    %v4626 = vsel %vm3917, %v4616, 0
    %v4629 = vsel %vm3917, %v4617, 0
    %v4632 = vsel %vm3917, %v4618, 0
    %4634 = vmatprep.subr.mxu0 0.0
    %4635 = vmatpush1.msra.mxu0 %v4619
    %4636 = vmatprep.subr.mxu0 0.0
    %4637 = vmatpush1.msra.mxu0 %v4620
    %4638 = vmatprep.subr.mxu0 0.0
    %4639 = vmatpush1.msra.mxu0 %v4621
    %4640 = vmatprep.subr.mxu0 0.0
    %4641 = vmatpush1.msra.mxu0 %v4622
    %4642 = vmatprep.subr.mxu0 0.0
    %4643 = vmatpush1.msra.mxu0 %v4623
    %4644 = vmatprep.subr.mxu0 0.0
    %4645 = vmatpush1.msra.mxu0 %v4624
    %4646 = vmatprep.subr.mxu0 0.0
    %4647 = vmatpush1.msra.mxu0 0.0
    %4648 = vmatprep.subr.mxu0 0.0
    %4649 = vmatpush1.msra.mxu0 0.0
    %4650 = vmatprep.subr.mxu0 0.0
    %4651 = vmatpush1.msra.mxu0 0.0
    %4652 = vmatprep.subr.mxu0 0.0
    %4653 = vmatpush1.msra.mxu0 0.0
    %4654 = vmatprep.subr.mxu0 0.0
    %4655 = vmatpush1.msra.mxu0 0.0
    %4656 = vmatprep.subr.mxu0 0.0
    %4657 = vmatpush1.msra.mxu0 0.0
    %4658 = vmatprep.subr.mxu0 0.0
    %4659 = vmatpush1.msra.mxu0 0.0
    %4660 = vmatprep.subr.mxu0 0.0
    %4661 = vmatpush1.msra.mxu0 0.0
    %4662 = vmatprep.subr.mxu0 0.0
    %4663 = vmatpush1.msra.mxu0 0.0
    %4664 = vmatprep.subr.mxu0 0.0
    %4665 = vmatpush1.msra.mxu0 0.0
    %4666 = vmatprep.subr.mxu0 0.0
    %4667 = vmatpush1.msra.mxu0 0.0
    %4668 = vmatprep.subr.mxu0 0.0
    %4669 = vmatpush1.msra.mxu0 0.0
    %4670 = vmatprep.subr.mxu0 0.0
    %4671 = vmatpush1.msra.mxu0 0.0
    %4672 = vmatprep.subr.mxu0 0.0
    %4673 = vmatpush1.msra.mxu0 0.0
    %4674 = vmatprep.subr.mxu0 0.0
    %4675 = vmatpush1.msra.mxu0 0.0
    %4676 = vmatprep.subr.mxu0 0.0
    %4677 = vmatpush1.msra.mxu0 0.0
    %4678 = vmatprep.subr.mxu0 0.0
    %4679 = vmatpush1.msra.mxu0 0.0
    %4680 = vmatprep.subr.mxu0 0.0
    %4681 = vmatpush1.msra.mxu0 0.0
    %4682 = vmatprep.subr.mxu0 0.0
    %4683 = vmatpush1.msra.mxu0 0.0
    %4684 = vmatprep.subr.mxu0 0.0
    %4685 = vmatpush1.msra.mxu0 0.0
    %4686 = vmatprep.subr.mxu0 0.0
    %4687 = vmatpush1.msra.mxu0 0.0
    %4688 = vmatprep.subr.mxu0 0.0
    %4689 = vmatpush1.msra.mxu0 0.0
    %4690 = vmatprep.subr.mxu0 0.0
    %4691 = vmatpush1.msra.mxu0 0.0
    %4692 = vmatprep.subr.mxu0 0.0
    %4693 = vmatpush1.msra.mxu0 0.0
    %4694 = vmatprep.subr.mxu0 0.0
    %4695 = vmatpush1.msra.mxu0 0.0
    %4696 = vmatprep.subr.mxu0 0.0
    %4697 = vmatpush1.msra.mxu0 0.0
    %4698 = vmatprep.mubr.f32.mxu0 0.0
    %4699 = vmatmul.mubr.f32.gmra.mrb[0].mxu0 %v4626
    %v4700 = vpop.f32.mrb[0].mxu0
    %v4701 = vadd.f32 0.0, %v4700
    %v4702 = vpop.f32.mrb[0].mxu0
    %4703 = vmatprep.mubr.f32.mxu0 0.0
    %4704 = vmatmul.mubr.f32.gmra.mrb[0].mxu0 %v4629
    %v4705 = vpop.f32.mrb[0].mxu0
    %v4706 = vadd.f32 0.0, %v4705
    %v4707 = vpop.f32.mrb[0].mxu0
    %4708 = vmatprep.mubr.f32.mxu0 0.0
    %4709 = vmatmul.mubr.f32.gmra.mrb[0].mxu0 %v4632
    %v4710 = vpop.f32.mrb[0].mxu0
    %v4711 = vadd.f32 0.0, %v4710
    %v4712 = vpop.f32.mrb[0].mxu0
    %4713 = vdwg.mxu0
    %4714 = vst.msk [vmem:[#allocation5 + $0xa8] sm:$0xff] %vm655, %v4701
    %4715 = vst.msk [vmem:[#allocation5 + $0xb0] sm:$0xff] %vm655, %v4706
    %4716 = vst.msk [vmem:[#allocation5 + $0xb8] sm:$0xff] %vm655, %v4711
    %v4717 = vld [vmem:[%s5] sm:$0xff]
    %v4718 = vld [vmem:[%s5 + $0x8] sm:$0xff]
    %v4719 = vld [vmem:[%s5 + $0x10] sm:$0xff]
    %v4720 = vld [vmem:[#allocation4 + $0x360] sm:$0xff]
    %v4721 = vld [vmem:[#allocation4 + $0x368] sm:$0xff]
    %v4722 = vld [vmem:[#allocation4 + $0x370] sm:$0xff]
    %v4723 = vld [vmem:[#allocation4 + $0x378] sm:$0xff]
    %v4724 = vld [vmem:[#allocation4 + $0x380] sm:$0xff]
    %v4725 = vld [vmem:[#allocation4 + $0x388] sm:$0xff]
    %v4727 = vsel %vm3917, %v4717, 0
    %v4730 = vsel %vm3917, %v4718, 0
    %v4733 = vsel %vm3917, %v4719, 0
    %4735 = vmatprep.subr.mxu0 0.0
    %4736 = vmatpush1.msra.mxu0 %v4720
    %4737 = vmatprep.subr.mxu0 0.0
    %4738 = vmatpush1.msra.mxu0 %v4721
    %4739 = vmatprep.subr.mxu0 0.0
    %4740 = vmatpush1.msra.mxu0 %v4722
    %4741 = vmatprep.subr.mxu0 0.0
    %4742 = vmatpush1.msra.mxu0 %v4723
    %4743 = vmatprep.subr.mxu0 0.0
    %4744 = vmatpush1.msra.mxu0 %v4724
    %4745 = vmatprep.subr.mxu0 0.0
    %4746 = vmatpush1.msra.mxu0 %v4725
    %4747 = vmatprep.subr.mxu0 0.0
    %4748 = vmatpush1.msra.mxu0 0.0
    %4749 = vmatprep.subr.mxu0 0.0
    %4750 = vmatpush1.msra.mxu0 0.0
    %4751 = vmatprep.subr.mxu0 0.0
    %4752 = vmatpush1.msra.mxu0 0.0
    %4753 = vmatprep.subr.mxu0 0.0
    %4754 = vmatpush1.msra.mxu0 0.0
    %4755 = vmatprep.subr.mxu0 0.0
    %4756 = vmatpush1.msra.mxu0 0.0
    %4757 = vmatprep.subr.mxu0 0.0
    %4758 = vmatpush1.msra.mxu0 0.0
    %4759 = vmatprep.subr.mxu0 0.0
    %4760 = vmatpush1.msra.mxu0 0.0
    %4761 = vmatprep.subr.mxu0 0.0
    %4762 = vmatpush1.msra.mxu0 0.0
    %4763 = vmatprep.subr.mxu0 0.0
    %4764 = vmatpush1.msra.mxu0 0.0
    %4765 = vmatprep.subr.mxu0 0.0
    %4766 = vmatpush1.msra.mxu0 0.0
    %4767 = vmatprep.subr.mxu0 0.0
    %4768 = vmatpush1.msra.mxu0 0.0
    %4769 = vmatprep.subr.mxu0 0.0
    %4770 = vmatpush1.msra.mxu0 0.0
    %4771 = vmatprep.subr.mxu0 0.0
    %4772 = vmatpush1.msra.mxu0 0.0
    %4773 = vmatprep.subr.mxu0 0.0
    %4774 = vmatpush1.msra.mxu0 0.0
    %4775 = vmatprep.subr.mxu0 0.0
    %4776 = vmatpush1.msra.mxu0 0.0
    %4777 = vmatprep.subr.mxu0 0.0
    %4778 = vmatpush1.msra.mxu0 0.0
    %4779 = vmatprep.subr.mxu0 0.0
    %4780 = vmatpush1.msra.mxu0 0.0
    %4781 = vmatprep.subr.mxu0 0.0
    %4782 = vmatpush1.msra.mxu0 0.0
    %4783 = vmatprep.subr.mxu0 0.0
    %4784 = vmatpush1.msra.mxu0 0.0
    %4785 = vmatprep.subr.mxu0 0.0
    %4786 = vmatpush1.msra.mxu0 0.0
    %4787 = vmatprep.subr.mxu0 0.0
    %4788 = vmatpush1.msra.mxu0 0.0
    %4789 = vmatprep.subr.mxu0 0.0
    %4790 = vmatpush1.msra.mxu0 0.0
    %4791 = vmatprep.subr.mxu0 0.0
    %4792 = vmatpush1.msra.mxu0 0.0
    %4793 = vmatprep.subr.mxu0 0.0
    %4794 = vmatpush1.msra.mxu0 0.0
    %4795 = vmatprep.subr.mxu0 0.0
    %4796 = vmatpush1.msra.mxu0 0.0
    %4797 = vmatprep.subr.mxu0 0.0
    %4798 = vmatpush1.msra.mxu0 0.0
    %4799 = vmatprep.mubr.f32.mxu0 0.0
    %4800 = vmatmul.mubr.f32.gmra.mrb[0].mxu0 %v4727
    %v4801 = vpop.f32.mrb[0].mxu0
    %v4802 = vadd.f32 0.0, %v4801
    %v4803 = vpop.f32.mrb[0].mxu0
    %4804 = vmatprep.mubr.f32.mxu0 0.0
    %4805 = vmatmul.mubr.f32.gmra.mrb[0].mxu0 %v4730
    %v4806 = vpop.f32.mrb[0].mxu0
    %v4807 = vadd.f32 0.0, %v4806
    %v4808 = vpop.f32.mrb[0].mxu0
    %4809 = vmatprep.mubr.f32.mxu0 0.0
    %4810 = vmatmul.mubr.f32.gmra.mrb[0].mxu0 %v4733
    %v4811 = vpop.f32.mrb[0].mxu0
    %v4812 = vadd.f32 0.0, %v4811
    %v4813 = vpop.f32.mrb[0].mxu0
    %4814 = vdwg.mxu0
    %4815 = vst.msk [vmem:[#allocation5 + $0xc0] sm:$0xff] %vm655, %v4802
    %4816 = vst.msk [vmem:[#allocation5 + $0xc8] sm:$0xff] %vm655, %v4807
    %4817 = vst.msk [vmem:[#allocation5 + $0xd0] sm:$0xff] %vm655, %v4812
    %v4818 = vld [vmem:[%s5] sm:$0xff]
    %v4819 = vld [vmem:[%s5 + $0x8] sm:$0xff]
    %v4820 = vld [vmem:[%s5 + $0x10] sm:$0xff]
    %v4821 = vld [vmem:[#allocation4 + $0x3cc] sm:$0xff]
    %v4822 = vld [vmem:[#allocation4 + $0x3d4] sm:$0xff]
    %v4823 = vld [vmem:[#allocation4 + $0x3dc] sm:$0xff]
    %v4824 = vld [vmem:[#allocation4 + $0x3e4] sm:$0xff]
    %v4825 = vld [vmem:[#allocation4 + $0x3ec] sm:$0xff]
    %v4826 = vld [vmem:[#allocation4 + $0x3f4] sm:$0xff]
    %v4828 = vsel %vm3917, %v4818, 0
    %v4831 = vsel %vm3917, %v4819, 0
    %v4834 = vsel %vm3917, %v4820, 0
    %4836 = vmatprep.subr.mxu0 0.0
    %4837 = vmatpush1.msra.mxu0 %v4821
    %4838 = vmatprep.subr.mxu0 0.0
    %4839 = vmatpush1.msra.mxu0 %v4822
    %4840 = vmatprep.subr.mxu0 0.0
    %4841 = vmatpush1.msra.mxu0 %v4823
    %4842 = vmatprep.subr.mxu0 0.0
    %4843 = vmatpush1.msra.mxu0 %v4824
    %4844 = vmatprep.subr.mxu0 0.0
    %4845 = vmatpush1.msra.mxu0 %v4825
    %4846 = vmatprep.subr.mxu0 0.0
    %4847 = vmatpush1.msra.mxu0 %v4826
    %4848 = vmatprep.subr.mxu0 0.0
    %4849 = vmatpush1.msra.mxu0 0.0
    %4850 = vmatprep.subr.mxu0 0.0
    %4851 = vmatpush1.msra.mxu0 0.0
    %4852 = vmatprep.subr.mxu0 0.0
    %4853 = vmatpush1.msra.mxu0 0.0
    %4854 = vmatprep.subr.mxu0 0.0
    %4855 = vmatpush1.msra.mxu0 0.0
    %4856 = vmatprep.subr.mxu0 0.0
    %4857 = vmatpush1.msra.mxu0 0.0
    %4858 = vmatprep.subr.mxu0 0.0
    %4859 = vmatpush1.msra.mxu0 0.0
    %4860 = vmatprep.subr.mxu0 0.0
    %4861 = vmatpush1.msra.mxu0 0.0
    %4862 = vmatprep.subr.mxu0 0.0
    %4863 = vmatpush1.msra.mxu0 0.0
    %4864 = vmatprep.subr.mxu0 0.0
    %4865 = vmatpush1.msra.mxu0 0.0
    %4866 = vmatprep.subr.mxu0 0.0
    %4867 = vmatpush1.msra.mxu0 0.0
    %4868 = vmatprep.subr.mxu0 0.0
    %4869 = vmatpush1.msra.mxu0 0.0
    %4870 = vmatprep.subr.mxu0 0.0
    %4871 = vmatpush1.msra.mxu0 0.0
    %4872 = vmatprep.subr.mxu0 0.0
    %4873 = vmatpush1.msra.mxu0 0.0
    %4874 = vmatprep.subr.mxu0 0.0
    %4875 = vmatpush1.msra.mxu0 0.0
    %4876 = vmatprep.subr.mxu0 0.0
    %4877 = vmatpush1.msra.mxu0 0.0
    %4878 = vmatprep.subr.mxu0 0.0
    %4879 = vmatpush1.msra.mxu0 0.0
    %4880 = vmatprep.subr.mxu0 0.0
    %4881 = vmatpush1.msra.mxu0 0.0
    %4882 = vmatprep.subr.mxu0 0.0
    %4883 = vmatpush1.msra.mxu0 0.0
    %4884 = vmatprep.subr.mxu0 0.0
    %4885 = vmatpush1.msra.mxu0 0.0
    %4886 = vmatprep.subr.mxu0 0.0
    %4887 = vmatpush1.msra.mxu0 0.0
    %4888 = vmatprep.subr.mxu0 0.0
    %4889 = vmatpush1.msra.mxu0 0.0
    %4890 = vmatprep.subr.mxu0 0.0
    %4891 = vmatpush1.msra.mxu0 0.0
    %4892 = vmatprep.subr.mxu0 0.0
    %4893 = vmatpush1.msra.mxu0 0.0
    %4894 = vmatprep.subr.mxu0 0.0
    %4895 = vmatpush1.msra.mxu0 0.0
    %4896 = vmatprep.subr.mxu0 0.0
    %4897 = vmatpush1.msra.mxu0 0.0
    %4898 = vmatprep.subr.mxu0 0.0
    %4899 = vmatpush1.msra.mxu0 0.0
    %4900 = vmatprep.mubr.f32.mxu0 0.0
    %4901 = vmatmul.mubr.f32.gmra.mrb[0].mxu0 %v4828
    %v4902 = vpop.f32.mrb[0].mxu0
    %v4903 = vadd.f32 0.0, %v4902
    %v4904 = vpop.f32.mrb[0].mxu0
    %4905 = vmatprep.mubr.f32.mxu0 0.0
    %4906 = vmatmul.mubr.f32.gmra.mrb[0].mxu0 %v4831
    %v4907 = vpop.f32.mrb[0].mxu0
    %v4908 = vadd.f32 0.0, %v4907
    %v4909 = vpop.f32.mrb[0].mxu0
    %4910 = vmatprep.mubr.f32.mxu0 0.0
    %4911 = vmatmul.mubr.f32.gmra.mrb[0].mxu0 %v4834
    %v4912 = vpop.f32.mrb[0].mxu0
    %v4913 = vadd.f32 0.0, %v4912
    %v4914 = vpop.f32.mrb[0].mxu0
    %4915 = vdwg.mxu0
    %4916 = vst.msk [vmem:[#allocation5 + $0xd8] sm:$0xff] %vm655, %v4903
    %4917 = vst.msk [vmem:[#allocation5 + $0xe0] sm:$0xff] %vm655, %v4908
    %4918 = vst.msk [vmem:[#allocation5 + $0xe8] sm:$0xff] %vm655, %v4913
    %v4919 = vld [vmem:[%s5] sm:$0xff]
    %v4920 = vld [vmem:[%s5 + $0x8] sm:$0xff]
    %v4921 = vld [vmem:[%s5 + $0x10] sm:$0xff]
    %v4922 = vld [vmem:[#allocation4 + $0x438] sm:$0xff]
    %v4923 = vld [vmem:[#allocation4 + $0x440] sm:$0xff]
    %v4924 = vld [vmem:[#allocation4 + $0x448] sm:$0xff]
    %v4925 = vld [vmem:[#allocation4 + $0x450] sm:$0xff]
    %v4926 = vld [vmem:[#allocation4 + $0x458] sm:$0xff]
    %v4927 = vld [vmem:[#allocation4 + $0x460] sm:$0xff]
    %v4929 = vsel %vm3917, %v4919, 0
    %v4932 = vsel %vm3917, %v4920, 0
    %v4935 = vsel %vm3917, %v4921, 0
    %4937 = vmatprep.subr.mxu0 0.0
    %4938 = vmatpush1.msra.mxu0 %v4922
    %4939 = vmatprep.subr.mxu0 0.0
    %4940 = vmatpush1.msra.mxu0 %v4923
    %4941 = vmatprep.subr.mxu0 0.0
    %4942 = vmatpush1.msra.mxu0 %v4924
    %4943 = vmatprep.subr.mxu0 0.0
    %4944 = vmatpush1.msra.mxu0 %v4925
    %4945 = vmatprep.subr.mxu0 0.0
    %4946 = vmatpush1.msra.mxu0 %v4926
    %4947 = vmatprep.subr.mxu0 0.0
    %4948 = vmatpush1.msra.mxu0 %v4927
    %4949 = vmatprep.subr.mxu0 0.0
    %4950 = vmatpush1.msra.mxu0 0.0
    %4951 = vmatprep.subr.mxu0 0.0
    %4952 = vmatpush1.msra.mxu0 0.0
    %4953 = vmatprep.subr.mxu0 0.0
    %4954 = vmatpush1.msra.mxu0 0.0
    %4955 = vmatprep.subr.mxu0 0.0
    %4956 = vmatpush1.msra.mxu0 0.0
    %4957 = vmatprep.subr.mxu0 0.0
    %4958 = vmatpush1.msra.mxu0 0.0
    %4959 = vmatprep.subr.mxu0 0.0
    %4960 = vmatpush1.msra.mxu0 0.0
    %4961 = vmatprep.subr.mxu0 0.0
    %4962 = vmatpush1.msra.mxu0 0.0
    %4963 = vmatprep.subr.mxu0 0.0
    %4964 = vmatpush1.msra.mxu0 0.0
    %4965 = vmatprep.subr.mxu0 0.0
    %4966 = vmatpush1.msra.mxu0 0.0
    %4967 = vmatprep.subr.mxu0 0.0
    %4968 = vmatpush1.msra.mxu0 0.0
    %4969 = vmatprep.subr.mxu0 0.0
    %4970 = vmatpush1.msra.mxu0 0.0
    %4971 = vmatprep.subr.mxu0 0.0
    %4972 = vmatpush1.msra.mxu0 0.0
    %4973 = vmatprep.subr.mxu0 0.0
    %4974 = vmatpush1.msra.mxu0 0.0
    %4975 = vmatprep.subr.mxu0 0.0
    %4976 = vmatpush1.msra.mxu0 0.0
    %4977 = vmatprep.subr.mxu0 0.0
    %4978 = vmatpush1.msra.mxu0 0.0
    %4979 = vmatprep.subr.mxu0 0.0
    %4980 = vmatpush1.msra.mxu0 0.0
    %4981 = vmatprep.subr.mxu0 0.0
    %4982 = vmatpush1.msra.mxu0 0.0
    %4983 = vmatprep.subr.mxu0 0.0
    %4984 = vmatpush1.msra.mxu0 0.0
    %4985 = vmatprep.subr.mxu0 0.0
    %4986 = vmatpush1.msra.mxu0 0.0
    %4987 = vmatprep.subr.mxu0 0.0
    %4988 = vmatpush1.msra.mxu0 0.0
    %4989 = vmatprep.subr.mxu0 0.0
    %4990 = vmatpush1.msra.mxu0 0.0
    %4991 = vmatprep.subr.mxu0 0.0
    %4992 = vmatpush1.msra.mxu0 0.0
    %4993 = vmatprep.subr.mxu0 0.0
    %4994 = vmatpush1.msra.mxu0 0.0
    %4995 = vmatprep.subr.mxu0 0.0
    %4996 = vmatpush1.msra.mxu0 0.0
    %4997 = vmatprep.subr.mxu0 0.0
    %4998 = vmatpush1.msra.mxu0 0.0
    %4999 = vmatprep.subr.mxu0 0.0
    %5000 = vmatpush1.msra.mxu0 0.0
    %5001 = vmatprep.mubr.f32.mxu0 0.0
    %5002 = vmatmul.mubr.f32.gmra.mrb[0].mxu0 %v4929
    %v5003 = vpop.f32.mrb[0].mxu0
    %v5004 = vadd.f32 0.0, %v5003
    %v5005 = vpop.f32.mrb[0].mxu0
    %5006 = vmatprep.mubr.f32.mxu0 0.0
    %5007 = vmatmul.mubr.f32.gmra.mrb[0].mxu0 %v4932
    %v5008 = vpop.f32.mrb[0].mxu0
    %v5009 = vadd.f32 0.0, %v5008
    %v5010 = vpop.f32.mrb[0].mxu0
    %5011 = vmatprep.mubr.f32.mxu0 0.0
    %5012 = vmatmul.mubr.f32.gmra.mrb[0].mxu0 %v4935
    %v5013 = vpop.f32.mrb[0].mxu0
    %v5014 = vadd.f32 0.0, %v5013
    %v5015 = vpop.f32.mrb[0].mxu0
    %5016 = vdwg.mxu0
    %5017 = vst.msk [vmem:[#allocation5 + $0xf0] sm:$0xff] %vm655, %v5004
    %5018 = vst.msk [vmem:[#allocation5 + $0xf8] sm:$0xff] %vm655, %v5009
    %5019 = vst.msk [vmem:[#allocation5 + $0x100] sm:$0xff] %vm655, %v5014
    %v5020 = vld [vmem:[%s5] sm:$0xff]
    %v5021 = vld [vmem:[%s5 + $0x8] sm:$0xff]
    %v5022 = vld [vmem:[%s5 + $0x10] sm:$0xff]
    %v5023 = vld [vmem:[#allocation4 + $0x4a4] sm:$0xff]
    %v5024 = vld [vmem:[#allocation4 + $0x4ac] sm:$0xff]
    %v5025 = vld [vmem:[#allocation4 + $0x4b4] sm:$0xff]
    %v5026 = vld [vmem:[#allocation4 + $0x4bc] sm:$0xff]
    %v5027 = vld [vmem:[#allocation4 + $0x4c4] sm:$0xff]
    %v5028 = vld [vmem:[#allocation4 + $0x4cc] sm:$0xff]
    %v5030 = vsel %vm3917, %v5020, 0
    %v5033 = vsel %vm3917, %v5021, 0
    %v5036 = vsel %vm3917, %v5022, 0
    %5038 = vmatprep.subr.mxu0 0.0
    %5039 = vmatpush1.msra.mxu0 %v5023
    %5040 = vmatprep.subr.mxu0 0.0
    %5041 = vmatpush1.msra.mxu0 %v5024
    %5042 = vmatprep.subr.mxu0 0.0
    %5043 = vmatpush1.msra.mxu0 %v5025
    %5044 = vmatprep.subr.mxu0 0.0
    %5045 = vmatpush1.msra.mxu0 %v5026
    %5046 = vmatprep.subr.mxu0 0.0
    %5047 = vmatpush1.msra.mxu0 %v5027
    %5048 = vmatprep.subr.mxu0 0.0
    %5049 = vmatpush1.msra.mxu0 %v5028
    %5050 = vmatprep.subr.mxu0 0.0
    %5051 = vmatpush1.msra.mxu0 0.0
    %5052 = vmatprep.subr.mxu0 0.0
    %5053 = vmatpush1.msra.mxu0 0.0
    %5054 = vmatprep.subr.mxu0 0.0
    %5055 = vmatpush1.msra.mxu0 0.0
    %5056 = vmatprep.subr.mxu0 0.0
    %5057 = vmatpush1.msra.mxu0 0.0
    %5058 = vmatprep.subr.mxu0 0.0
    %5059 = vmatpush1.msra.mxu0 0.0
    %5060 = vmatprep.subr.mxu0 0.0
    %5061 = vmatpush1.msra.mxu0 0.0
    %5062 = vmatprep.subr.mxu0 0.0
    %5063 = vmatpush1.msra.mxu0 0.0
    %5064 = vmatprep.subr.mxu0 0.0
    %5065 = vmatpush1.msra.mxu0 0.0
    %5066 = vmatprep.subr.mxu0 0.0
    %5067 = vmatpush1.msra.mxu0 0.0
    %5068 = vmatprep.subr.mxu0 0.0
    %5069 = vmatpush1.msra.mxu0 0.0
    %5070 = vmatprep.subr.mxu0 0.0
    %5071 = vmatpush1.msra.mxu0 0.0
    %5072 = vmatprep.subr.mxu0 0.0
    %5073 = vmatpush1.msra.mxu0 0.0
    %5074 = vmatprep.subr.mxu0 0.0
    %5075 = vmatpush1.msra.mxu0 0.0
    %5076 = vmatprep.subr.mxu0 0.0
    %5077 = vmatpush1.msra.mxu0 0.0
    %5078 = vmatprep.subr.mxu0 0.0
    %5079 = vmatpush1.msra.mxu0 0.0
    %5080 = vmatprep.subr.mxu0 0.0
    %5081 = vmatpush1.msra.mxu0 0.0
    %5082 = vmatprep.subr.mxu0 0.0
    %5083 = vmatpush1.msra.mxu0 0.0
    %5084 = vmatprep.subr.mxu0 0.0
    %5085 = vmatpush1.msra.mxu0 0.0
    %5086 = vmatprep.subr.mxu0 0.0
    %5087 = vmatpush1.msra.mxu0 0.0
    %5088 = vmatprep.subr.mxu0 0.0
    %5089 = vmatpush1.msra.mxu0 0.0
    %5090 = vmatprep.subr.mxu0 0.0
    %5091 = vmatpush1.msra.mxu0 0.0
    %5092 = vmatprep.subr.mxu0 0.0
    %5093 = vmatpush1.msra.mxu0 0.0
    %5094 = vmatprep.subr.mxu0 0.0
    %5095 = vmatpush1.msra.mxu0 0.0
    %5096 = vmatprep.subr.mxu0 0.0
    %5097 = vmatpush1.msra.mxu0 0.0
    %5098 = vmatprep.subr.mxu0 0.0
    %5099 = vmatpush1.msra.mxu0 0.0
    %5100 = vmatprep.subr.mxu0 0.0
    %5101 = vmatpush1.msra.mxu0 0.0
    %5102 = vmatprep.mubr.f32.mxu0 0.0
    %5103 = vmatmul.mubr.f32.gmra.mrb[0].mxu0 %v5030
    %v5104 = vpop.f32.mrb[0].mxu0
    %v5105 = vadd.f32 0.0, %v5104
    %v5106 = vpop.f32.mrb[0].mxu0
    %5107 = vmatprep.mubr.f32.mxu0 0.0
    %5108 = vmatmul.mubr.f32.gmra.mrb[0].mxu0 %v5033
    %v5109 = vpop.f32.mrb[0].mxu0
    %v5110 = vadd.f32 0.0, %v5109
    %v5111 = vpop.f32.mrb[0].mxu0
    %5112 = vmatprep.mubr.f32.mxu0 0.0
    %5113 = vmatmul.mubr.f32.gmra.mrb[0].mxu0 %v5036
    %v5114 = vpop.f32.mrb[0].mxu0
    %v5115 = vadd.f32 0.0, %v5114
    %v5116 = vpop.f32.mrb[0].mxu0
    %5117 = vdwg.mxu0
    %5118 = vst.msk [vmem:[#allocation5 + $0x108] sm:$0xff] %vm655, %v5105
    %5119 = vst.msk [vmem:[#allocation5 + $0x110] sm:$0xff] %vm655, %v5110
    %5120 = vst.msk [vmem:[#allocation5 + $0x118] sm:$0xff] %vm655, %v5115
    %v5121 = vld [vmem:[#allocation5] sm:$0xff]
    %v5122 = vld [vmem:[#allocation5 + $0x8] sm:$0xff]
    %v5123 = vld [vmem:[#allocation5 + $0x10] sm:$0xff]
    %v5124 = vld [vmem:[#allocation5 + $0x18] sm:$0xff]
    %v5125 = vld [vmem:[#allocation5 + $0x20] sm:$0xff]
    %v5126 = vld [vmem:[#allocation5 + $0x28] sm:$0xff]
    %v5127 = vld [vmem:[#allocation5 + $0x30] sm:$0xff]
    %v5128 = vld [vmem:[#allocation5 + $0x38] sm:$0xff]
    %v5129 = vld [vmem:[#allocation5 + $0x40] sm:$0xff]
    %v5130 = vld [vmem:[#allocation5 + $0x48] sm:$0xff]
    %v5131 = vld [vmem:[#allocation5 + $0x50] sm:$0xff]
    %v5132 = vld [vmem:[#allocation5 + $0x58] sm:$0xff]
    %v5133 = vld [vmem:[#allocation5 + $0x60] sm:$0xff]
    %v5134 = vld [vmem:[#allocation5 + $0x68] sm:$0xff]
    %v5135 = vld [vmem:[#allocation5 + $0x70] sm:$0xff]
    %v5136 = vld [vmem:[#allocation5 + $0x78] sm:$0xff]
    %v5137 = vld [vmem:[#allocation5 + $0x80] sm:$0xff]
    %v5138 = vld [vmem:[#allocation5 + $0x88] sm:$0xff]
    %v5139 = vld [vmem:[#allocation5 + $0x90] sm:$0xff]
    %v5140 = vld [vmem:[#allocation5 + $0x98] sm:$0xff]
    %v5141 = vld [vmem:[#allocation5 + $0xa0] sm:$0xff]
    %v5142 = vld [vmem:[#allocation5 + $0xa8] sm:$0xff]
    %v5143 = vld [vmem:[#allocation5 + $0xb0] sm:$0xff]
    %v5144 = vld [vmem:[#allocation5 + $0xb8] sm:$0xff]
    %v5145 = vld [vmem:[#allocation5 + $0xc0] sm:$0xff]
    %v5146 = vld [vmem:[#allocation5 + $0xc8] sm:$0xff]
    %v5147 = vld [vmem:[#allocation5 + $0xd0] sm:$0xff]
    %v5148 = vpack.c.bf16 %v5122, %v5121
    %v5149 = vpack.c.bf16 %v5124, %v5123
    %v5150 = vpack.c.bf16 %v5126, %v5125
    %v5151 = vpack.c.bf16 %v5128, %v5127
    %v5152 = vpack.c.bf16 %v5130, %v5129
    %v5153 = vpack.c.bf16 %v5132, %v5131
    %v5154 = vpack.c.bf16 %v5134, %v5133
    %v5155 = vpack.c.bf16 %v5136, %v5135
    %v5156 = vpack.c.bf16 %v5138, %v5137
    %v5157 = vpack.c.bf16 %v5140, %v5139
    %v5158 = vpack.c.bf16 %v5142, %v5141
    %v5159 = vpack.c.bf16 %v5144, %v5143
    %v5160 = vpack.c.bf16 %v5146, %v5145
    %v5161 = vpack.c.bf16 %v5147, %v5147
    %v5162 = vld [vmem:[%s3] sm:$0xf]
    %v5163 = vld [vmem:[%s3 + $0x4] sm:$0xf]
    %v5164 = vld [vmem:[%s3 + $0x8] sm:$0xf]
    %v5165 = vld [vmem:[%s3 + $0xc] sm:$0xf]
    %v5166 = vld [vmem:[%s4] sm:$0x1]
    %v5168 = vlaneseq
    %v5169 = vshrl.u32 %v5168, 7
    %v5170 = vsub.s32 0, %v5169
    %v5171 = vrot.slane %v5166, %v5170
    %v5177 = vunpack.c.l.b16 %v5162
    %v5178 = vunpack.c.l.b16 %v5163
    %v5179 = vunpack.c.l.b16 %v5164
    %v5180 = vunpack.c.l.b16 %v5165
    %v5181 = vpack.c.b16 %v5178, %v5177
    %v5182 = vpack.c.b16 %v5180, %v5179
    %v5186 = vsel %vm655, %v5148, 0
    %v5189 = vsel %vm655, %v5149, 0
    %v5192 = vsel %vm655, %v5150, 0
    %v5195 = vsel %vm655, %v5151, 0
    %v5198 = vsel %vm655, %v5152, 0
    %v5201 = vsel %vm655, %v5153, 0
    %v5204 = vsel %vm655, %v5154, 0
    %v5207 = vsel %vm655, %v5155, 0
    %v5210 = vsel %vm655, %v5156, 0
    %v5213 = vsel %vm655, %v5157, 0
    %v5216 = vsel %vm655, %v5158, 0
    %v5219 = vsel %vm655, %v5159, 0
    %v5222 = vsel %vm655, %v5160, 0
    %v5225 = vsel %vm655, %v5161, 0
    %5227 = vmatprep.subr.bf16.mxu0 0
    %5228 = vmatpush1.bf16.msra.mxu0 %v5181
    %5229 = vmatprep.subr.bf16.mxu0 0
    %5230 = vmatpush1.bf16.msra.mxu0 %v5182
    %5231 = vmatprep.subr.bf16.mxu0 0
    %5232 = vmatpush1.bf16.msra.mxu0 0
    %5233 = vmatprep.subr.bf16.mxu0 0
    %5234 = vmatpush1.bf16.msra.mxu0 0
    %5235 = vmatprep.subr.bf16.mxu0 0
    %5236 = vmatpush1.bf16.msra.mxu0 0
    %5237 = vmatprep.subr.bf16.mxu0 0
    %5238 = vmatpush1.bf16.msra.mxu0 0
    %5239 = vmatprep.subr.bf16.mxu0 0
    %5240 = vmatpush1.bf16.msra.mxu0 0
    %5241 = vmatprep.subr.bf16.mxu0 0
    %5242 = vmatpush1.bf16.msra.mxu0 0
    %5243 = vmatprep.subr.bf16.mxu0 0
    %5244 = vmatpush1.bf16.msra.mxu0 0
    %5245 = vmatprep.subr.bf16.mxu0 0
    %5246 = vmatpush1.bf16.msra.mxu0 0
    %5247 = vmatprep.subr.bf16.mxu0 0
    %5248 = vmatpush1.bf16.msra.mxu0 0
    %5249 = vmatprep.subr.bf16.mxu0 0
    %5250 = vmatpush1.bf16.msra.mxu0 0
    %5251 = vmatprep.subr.bf16.mxu0 0
    %5252 = vmatpush1.bf16.msra.mxu0 0
    %5253 = vmatprep.subr.bf16.mxu0 0
    %5254 = vmatpush1.bf16.msra.mxu0 0
    %5255 = vmatprep.subr.bf16.mxu0 0
    %5256 = vmatpush1.bf16.msra.mxu0 0
    %5257 = vmatprep.subr.bf16.mxu0 0
    %5258 = vmatpush1.bf16.msra.mxu0 0
    %5259 = vmatprep.mubr.bf16.mxu0 0
    %5260 = vmatmul.mubr.bf16.gmra.mrb[0].mxu0 %v5186
    %v5261 = vpop.f32.mrb[0].mxu0
    %v5262 = vadd.f32 %v5171, %v5261
    %v5263 = vpop.f32.mrb[0].mxu0
    %v5264 = vpop.f32.mrb[0].mxu0
    %v5265 = vadd.f32 %v5171, %v5264
    %v5266 = vpop.f32.mrb[0].mxu0
    %5267 = vmatprep.mubr.bf16.mxu0 0
    %5268 = vmatmul.mubr.bf16.gmra.mrb[0].mxu0 %v5189
    %v5269 = vpop.f32.mrb[0].mxu0
    %v5270 = vadd.f32 %v5171, %v5269
    %v5271 = vpop.f32.mrb[0].mxu0
    %v5272 = vpop.f32.mrb[0].mxu0
    %v5273 = vadd.f32 %v5171, %v5272
    %v5274 = vpop.f32.mrb[0].mxu0
    %5275 = vmatprep.mubr.bf16.mxu0 0
    %5276 = vmatmul.mubr.bf16.gmra.mrb[0].mxu0 %v5192
    %v5277 = vpop.f32.mrb[0].mxu0
    %v5278 = vadd.f32 %v5171, %v5277
    %v5279 = vpop.f32.mrb[0].mxu0
    %v5280 = vpop.f32.mrb[0].mxu0
    %v5281 = vadd.f32 %v5171, %v5280
    %v5282 = vpop.f32.mrb[0].mxu0
    %5283 = vmatprep.mubr.bf16.mxu0 0
    %5284 = vmatmul.mubr.bf16.gmra.mrb[0].mxu0 %v5195
    %v5285 = vpop.f32.mrb[0].mxu0
    %v5286 = vadd.f32 %v5171, %v5285
    %v5287 = vpop.f32.mrb[0].mxu0
    %v5288 = vpop.f32.mrb[0].mxu0
    %v5289 = vadd.f32 %v5171, %v5288
    %v5290 = vpop.f32.mrb[0].mxu0
    %5291 = vmatprep.mubr.bf16.mxu0 0
    %5292 = vmatmul.mubr.bf16.gmra.mrb[0].mxu0 %v5198
    %v5293 = vpop.f32.mrb[0].mxu0
    %v5294 = vadd.f32 %v5171, %v5293
    %v5295 = vpop.f32.mrb[0].mxu0
    %v5296 = vpop.f32.mrb[0].mxu0
    %v5297 = vadd.f32 %v5171, %v5296
    %v5298 = vpop.f32.mrb[0].mxu0
    %5299 = vmatprep.mubr.bf16.mxu0 0
    %5300 = vmatmul.mubr.bf16.gmra.mrb[0].mxu0 %v5201
    %v5301 = vpop.f32.mrb[0].mxu0
    %v5302 = vadd.f32 %v5171, %v5301
    %v5303 = vpop.f32.mrb[0].mxu0
    %v5304 = vpop.f32.mrb[0].mxu0
    %v5305 = vadd.f32 %v5171, %v5304
    %v5306 = vpop.f32.mrb[0].mxu0
    %5307 = vmatprep.mubr.bf16.mxu0 0
    %5308 = vmatmul.mubr.bf16.gmra.mrb[0].mxu0 %v5204
    %v5309 = vpop.f32.mrb[0].mxu0
    %v5310 = vadd.f32 %v5171, %v5309
    %v5311 = vpop.f32.mrb[0].mxu0
    %v5312 = vpop.f32.mrb[0].mxu0
    %v5313 = vadd.f32 %v5171, %v5312
    %v5314 = vpop.f32.mrb[0].mxu0
    %5315 = vmatprep.mubr.bf16.mxu0 0
    %5316 = vmatmul.mubr.bf16.gmra.mrb[0].mxu0 %v5207
    %v5317 = vpop.f32.mrb[0].mxu0
    %v5318 = vadd.f32 %v5171, %v5317
    %v5319 = vpop.f32.mrb[0].mxu0
    %v5320 = vpop.f32.mrb[0].mxu0
    %v5321 = vadd.f32 %v5171, %v5320
    %v5322 = vpop.f32.mrb[0].mxu0
    %5323 = vmatprep.mubr.bf16.mxu0 0
    %5324 = vmatmul.mubr.bf16.gmra.mrb[0].mxu0 %v5210
    %v5325 = vpop.f32.mrb[0].mxu0
    %v5326 = vadd.f32 %v5171, %v5325
    %v5327 = vpop.f32.mrb[0].mxu0
    %v5328 = vpop.f32.mrb[0].mxu0
    %v5329 = vadd.f32 %v5171, %v5328
    %v5330 = vpop.f32.mrb[0].mxu0
    %5331 = vmatprep.mubr.bf16.mxu0 0
    %5332 = vmatmul.mubr.bf16.gmra.mrb[0].mxu0 %v5213
    %v5333 = vpop.f32.mrb[0].mxu0
    %v5334 = vadd.f32 %v5171, %v5333
    %v5335 = vpop.f32.mrb[0].mxu0
    %v5336 = vpop.f32.mrb[0].mxu0
    %v5337 = vadd.f32 %v5171, %v5336
    %v5338 = vpop.f32.mrb[0].mxu0
    %5339 = vmatprep.mubr.bf16.mxu0 0
    %5340 = vmatmul.mubr.bf16.gmra.mrb[0].mxu0 %v5216
    %v5341 = vpop.f32.mrb[0].mxu0
    %v5342 = vadd.f32 %v5171, %v5341
    %v5343 = vpop.f32.mrb[0].mxu0
    %v5344 = vpop.f32.mrb[0].mxu0
    %v5345 = vadd.f32 %v5171, %v5344
    %v5346 = vpop.f32.mrb[0].mxu0
    %5347 = vmatprep.mubr.bf16.mxu0 0
    %5348 = vmatmul.mubr.bf16.gmra.mrb[0].mxu0 %v5219
    %v5349 = vpop.f32.mrb[0].mxu0
    %v5350 = vadd.f32 %v5171, %v5349
    %v5351 = vpop.f32.mrb[0].mxu0
    %v5352 = vpop.f32.mrb[0].mxu0
    %v5353 = vadd.f32 %v5171, %v5352
    %v5354 = vpop.f32.mrb[0].mxu0
    %5355 = vmatprep.mubr.bf16.mxu0 0
    %5356 = vmatmul.mubr.bf16.gmra.mrb[0].mxu0 %v5222
    %v5357 = vpop.f32.mrb[0].mxu0
    %v5358 = vadd.f32 %v5171, %v5357
    %v5359 = vpop.f32.mrb[0].mxu0
    %v5360 = vpop.f32.mrb[0].mxu0
    %v5361 = vadd.f32 %v5171, %v5360
    %v5362 = vpop.f32.mrb[0].mxu0
    %5363 = vmatprep.mubr.bf16.mxu0 0
    %5364 = vmatmul.mubr.bf16.gmra.mrb[0].mxu0 %v5225
    %v5365 = vpop.f32.mrb[0].mxu0
    %v5366 = vadd.f32 %v5171, %v5365
    %v5367 = vpop.f32.mrb[0].mxu0
    %v5368 = vpop.f32.mrb[0].mxu0
    %v5369 = vpop.f32.mrb[0].mxu0
    %5370 = vdwg.mxu0
    %v5371 = vld [vmem:[#allocation5 + $0x2] sm:$0xff]
    %v5372 = vld [vmem:[#allocation5 + $0xa] sm:$0xff]
    %v5373 = vld [vmem:[#allocation5 + $0x12] sm:$0xff]
    %v5374 = vld [vmem:[#allocation5 + $0x1a] sm:$0xff]
    %v5375 = vld [vmem:[#allocation5 + $0x22] sm:$0xff]
    %v5376 = vld [vmem:[#allocation5 + $0x2a] sm:$0xff]
    %v5377 = vld [vmem:[#allocation5 + $0x32] sm:$0xff]
    %v5378 = vld [vmem:[#allocation5 + $0x3a] sm:$0xff]
    %v5379 = vld [vmem:[#allocation5 + $0x42] sm:$0xff]
    %v5380 = vld [vmem:[#allocation5 + $0x4a] sm:$0xff]
    %v5381 = vld [vmem:[#allocation5 + $0x52] sm:$0xff]
    %v5382 = vld [vmem:[#allocation5 + $0x5a] sm:$0xff]
    %v5383 = vld [vmem:[#allocation5 + $0x62] sm:$0xff]
    %v5384 = vld [vmem:[#allocation5 + $0x6a] sm:$0xff]
    %v5385 = vld [vmem:[#allocation5 + $0x72] sm:$0xff]
    %v5386 = vld [vmem:[#allocation5 + $0x7a] sm:$0xff]
    %v5387 = vld [vmem:[#allocation5 + $0x82] sm:$0xff]
    %v5388 = vld [vmem:[#allocation5 + $0x8a] sm:$0xff]
    %v5389 = vld [vmem:[#allocation5 + $0x92] sm:$0xff]
    %v5390 = vld [vmem:[#allocation5 + $0x9a] sm:$0xff]
    %v5391 = vld [vmem:[#allocation5 + $0xa2] sm:$0xff]
    %v5392 = vld [vmem:[#allocation5 + $0xaa] sm:$0xff]
    %v5393 = vld [vmem:[#allocation5 + $0xb2] sm:$0xff]
    %v5394 = vld [vmem:[#allocation5 + $0xba] sm:$0xff]
    %v5395 = vld [vmem:[#allocation5 + $0xc2] sm:$0xff]
    %v5396 = vld [vmem:[#allocation5 + $0xca] sm:$0xff]
    %v5397 = vld [vmem:[#allocation5 + $0xd2] sm:$0xff]
    %v5398 = vpack.c.bf16 %v5372, %v5371
    %v5399 = vpack.c.bf16 %v5374, %v5373
    %v5400 = vpack.c.bf16 %v5376, %v5375
    %v5401 = vpack.c.bf16 %v5378, %v5377
    %v5402 = vpack.c.bf16 %v5380, %v5379
    %v5403 = vpack.c.bf16 %v5382, %v5381
    %v5404 = vpack.c.bf16 %v5384, %v5383
    %v5405 = vpack.c.bf16 %v5386, %v5385
    %v5406 = vpack.c.bf16 %v5388, %v5387
    %v5407 = vpack.c.bf16 %v5390, %v5389
    %v5408 = vpack.c.bf16 %v5392, %v5391
    %v5409 = vpack.c.bf16 %v5394, %v5393
    %v5410 = vpack.c.bf16 %v5396, %v5395
    %v5411 = vpack.c.bf16 %v5397, %v5397
    %s5412 = scalar_lea.vmem %s3, 16
    %v5413 = vld [vmem:[%s5412] sm:$0xf]
    %v5414 = vld [vmem:[%s5412 + $0x4] sm:$0xf]
    %v5415 = vld [vmem:[%s5412 + $0x8] sm:$0xf]
    %v5416 = vld [vmem:[%s5412 + $0xc] sm:$0xf]
    %v5421 = vunpack.c.l.b16 %v5413
    %v5422 = vunpack.c.l.b16 %v5414
    %v5423 = vunpack.c.l.b16 %v5415
    %v5424 = vunpack.c.l.b16 %v5416
    %v5425 = vpack.c.b16 %v5422, %v5421
    %v5426 = vpack.c.b16 %v5424, %v5423
    %v5430 = vsel %vm655, %v5398, 0
    %v5433 = vsel %vm655, %v5399, 0
    %v5436 = vsel %vm655, %v5400, 0
    %v5439 = vsel %vm655, %v5401, 0
    %v5442 = vsel %vm655, %v5402, 0
    %v5445 = vsel %vm655, %v5403, 0
    %v5448 = vsel %vm655, %v5404, 0
    %v5451 = vsel %vm655, %v5405, 0
    %v5454 = vsel %vm655, %v5406, 0
    %v5457 = vsel %vm655, %v5407, 0
    %v5460 = vsel %vm655, %v5408, 0
    %v5463 = vsel %vm655, %v5409, 0
    %v5466 = vsel %vm655, %v5410, 0
    %v5469 = vsel %vm655, %v5411, 0
    %5471 = vmatprep.subr.bf16.mxu0 0
    %5472 = vmatpush1.bf16.msra.mxu0 %v5425
    %5473 = vmatprep.subr.bf16.mxu0 0
    %5474 = vmatpush1.bf16.msra.mxu0 %v5426
    %5475 = vmatprep.subr.bf16.mxu0 0
    %5476 = vmatpush1.bf16.msra.mxu0 0
    %5477 = vmatprep.subr.bf16.mxu0 0
    %5478 = vmatpush1.bf16.msra.mxu0 0
    %5479 = vmatprep.subr.bf16.mxu0 0
    %5480 = vmatpush1.bf16.msra.mxu0 0
    %5481 = vmatprep.subr.bf16.mxu0 0
    %5482 = vmatpush1.bf16.msra.mxu0 0
    %5483 = vmatprep.subr.bf16.mxu0 0
    %5484 = vmatpush1.bf16.msra.mxu0 0
    %5485 = vmatprep.subr.bf16.mxu0 0
    %5486 = vmatpush1.bf16.msra.mxu0 0
    %5487 = vmatprep.subr.bf16.mxu0 0
    %5488 = vmatpush1.bf16.msra.mxu0 0
    %5489 = vmatprep.subr.bf16.mxu0 0
    %5490 = vmatpush1.bf16.msra.mxu0 0
    %5491 = vmatprep.subr.bf16.mxu0 0
    %5492 = vmatpush1.bf16.msra.mxu0 0
    %5493 = vmatprep.subr.bf16.mxu0 0
    %5494 = vmatpush1.bf16.msra.mxu0 0
    %5495 = vmatprep.subr.bf16.mxu0 0
    %5496 = vmatpush1.bf16.msra.mxu0 0
    %5497 = vmatprep.subr.bf16.mxu0 0
    %5498 = vmatpush1.bf16.msra.mxu0 0
    %5499 = vmatprep.subr.bf16.mxu0 0
    %5500 = vmatpush1.bf16.msra.mxu0 0
    %5501 = vmatprep.subr.bf16.mxu0 0
    %5502 = vmatpush1.bf16.msra.mxu0 0
    %5503 = vmatprep.mubr.bf16.mxu0 0
    %5504 = vmatmul.mubr.bf16.gmra.mrb[0].mxu0 %v5430
    %v5505 = vpop.f32.mrb[0].mxu0
    %v5506 = vadd.f32 0.0, %v5505
    %v5507 = vpop.f32.mrb[0].mxu0
    %v5508 = vpop.f32.mrb[0].mxu0
    %v5509 = vadd.f32 0.0, %v5508
    %v5510 = vpop.f32.mrb[0].mxu0
    %5511 = vmatprep.mubr.bf16.mxu0 0
    %5512 = vmatmul.mubr.bf16.gmra.mrb[0].mxu0 %v5433
    %v5513 = vpop.f32.mrb[0].mxu0
    %v5514 = vadd.f32 0.0, %v5513
    %v5515 = vpop.f32.mrb[0].mxu0
    %v5516 = vpop.f32.mrb[0].mxu0
    %v5517 = vadd.f32 0.0, %v5516
    %v5518 = vpop.f32.mrb[0].mxu0
    %5519 = vmatprep.mubr.bf16.mxu0 0
    %5520 = vmatmul.mubr.bf16.gmra.mrb[0].mxu0 %v5436
    %v5521 = vpop.f32.mrb[0].mxu0
    %v5522 = vadd.f32 0.0, %v5521
    %v5523 = vpop.f32.mrb[0].mxu0
    %v5524 = vpop.f32.mrb[0].mxu0
    %v5525 = vadd.f32 0.0, %v5524
    %v5526 = vpop.f32.mrb[0].mxu0
    %5527 = vmatprep.mubr.bf16.mxu0 0
    %5528 = vmatmul.mubr.bf16.gmra.mrb[0].mxu0 %v5439
    %v5529 = vpop.f32.mrb[0].mxu0
    %v5530 = vadd.f32 0.0, %v5529
    %v5531 = vpop.f32.mrb[0].mxu0
    %v5532 = vpop.f32.mrb[0].mxu0
    %v5533 = vadd.f32 0.0, %v5532
    %v5534 = vpop.f32.mrb[0].mxu0
    %5535 = vmatprep.mubr.bf16.mxu0 0
    %5536 = vmatmul.mubr.bf16.gmra.mrb[0].mxu0 %v5442
    %v5537 = vpop.f32.mrb[0].mxu0
    %v5538 = vadd.f32 0.0, %v5537
    %v5539 = vpop.f32.mrb[0].mxu0
    %v5540 = vpop.f32.mrb[0].mxu0
    %v5541 = vadd.f32 0.0, %v5540
    %v5542 = vpop.f32.mrb[0].mxu0
    %5543 = vmatprep.mubr.bf16.mxu0 0
    %5544 = vmatmul.mubr.bf16.gmra.mrb[0].mxu0 %v5445
    %v5545 = vpop.f32.mrb[0].mxu0
    %v5546 = vadd.f32 0.0, %v5545
    %v5547 = vpop.f32.mrb[0].mxu0
    %v5548 = vpop.f32.mrb[0].mxu0
    %v5549 = vadd.f32 0.0, %v5548
    %v5550 = vpop.f32.mrb[0].mxu0
    %5551 = vmatprep.mubr.bf16.mxu0 0
    %5552 = vmatmul.mubr.bf16.gmra.mrb[0].mxu0 %v5448
    %v5553 = vpop.f32.mrb[0].mxu0
    %v5554 = vadd.f32 0.0, %v5553
    %v5555 = vpop.f32.mrb[0].mxu0
    %v5556 = vpop.f32.mrb[0].mxu0
    %v5557 = vadd.f32 0.0, %v5556
    %v5558 = vpop.f32.mrb[0].mxu0
    %5559 = vmatprep.mubr.bf16.mxu0 0
    %5560 = vmatmul.mubr.bf16.gmra.mrb[0].mxu0 %v5451
    %v5561 = vpop.f32.mrb[0].mxu0
    %v5562 = vadd.f32 0.0, %v5561
    %v5563 = vpop.f32.mrb[0].mxu0
    %v5564 = vpop.f32.mrb[0].mxu0
    %v5565 = vadd.f32 0.0, %v5564
    %v5566 = vpop.f32.mrb[0].mxu0
    %5567 = vmatprep.mubr.bf16.mxu0 0
    %5568 = vmatmul.mubr.bf16.gmra.mrb[0].mxu0 %v5454
    %v5569 = vpop.f32.mrb[0].mxu0
    %v5570 = vadd.f32 0.0, %v5569
    %v5571 = vpop.f32.mrb[0].mxu0
    %v5572 = vpop.f32.mrb[0].mxu0
    %v5573 = vadd.f32 0.0, %v5572
    %v5574 = vpop.f32.mrb[0].mxu0
    %5575 = vmatprep.mubr.bf16.mxu0 0
    %5576 = vmatmul.mubr.bf16.gmra.mrb[0].mxu0 %v5457
    %v5577 = vpop.f32.mrb[0].mxu0
    %v5578 = vadd.f32 0.0, %v5577
    %v5579 = vpop.f32.mrb[0].mxu0
    %v5580 = vpop.f32.mrb[0].mxu0
    %v5581 = vadd.f32 0.0, %v5580
    %v5582 = vpop.f32.mrb[0].mxu0
    %5583 = vmatprep.mubr.bf16.mxu0 0
    %5584 = vmatmul.mubr.bf16.gmra.mrb[0].mxu0 %v5460
    %v5585 = vpop.f32.mrb[0].mxu0
    %v5586 = vadd.f32 0.0, %v5585
    %v5587 = vpop.f32.mrb[0].mxu0
    %v5588 = vpop.f32.mrb[0].mxu0
    %v5589 = vadd.f32 0.0, %v5588
    %v5590 = vpop.f32.mrb[0].mxu0
    %5591 = vmatprep.mubr.bf16.mxu0 0
    %5592 = vmatmul.mubr.bf16.gmra.mrb[0].mxu0 %v5463
    %v5593 = vpop.f32.mrb[0].mxu0
    %v5594 = vadd.f32 0.0, %v5593
    %v5595 = vpop.f32.mrb[0].mxu0
    %v5596 = vpop.f32.mrb[0].mxu0
    %v5597 = vadd.f32 0.0, %v5596
    %v5598 = vpop.f32.mrb[0].mxu0
    %5599 = vmatprep.mubr.bf16.mxu0 0
    %5600 = vmatmul.mubr.bf16.gmra.mrb[0].mxu0 %v5466
    %v5601 = vpop.f32.mrb[0].mxu0
    %v5602 = vadd.f32 0.0, %v5601
    %v5603 = vpop.f32.mrb[0].mxu0
    %v5604 = vpop.f32.mrb[0].mxu0
    %v5605 = vadd.f32 0.0, %v5604
    %v5606 = vpop.f32.mrb[0].mxu0
    %5607 = vmatprep.mubr.bf16.mxu0 0
    %5608 = vmatmul.mubr.bf16.gmra.mrb[0].mxu0 %v5469
    %v5609 = vpop.f32.mrb[0].mxu0
    %v5610 = vadd.f32 0.0, %v5609
    %v5611 = vpop.f32.mrb[0].mxu0
    %v5612 = vpop.f32.mrb[0].mxu0
    %v5613 = vpop.f32.mrb[0].mxu0
    %5614 = vdwg.mxu0
    %v5615 = vadd.f32 %v5262, %v5506
    %v5616 = vadd.f32 %v5265, %v5509
    %v5617 = vadd.f32 %v5270, %v5514
    %v5618 = vadd.f32 %v5273, %v5517
    %v5619 = vadd.f32 %v5278, %v5522
    %v5620 = vadd.f32 %v5281, %v5525
    %v5621 = vadd.f32 %v5286, %v5530
    %v5622 = vadd.f32 %v5289, %v5533
    %v5623 = vadd.f32 %v5294, %v5538
    %v5624 = vadd.f32 %v5297, %v5541
    %v5625 = vadd.f32 %v5302, %v5546
    %v5626 = vadd.f32 %v5305, %v5549
    %v5627 = vadd.f32 %v5310, %v5554
    %v5628 = vadd.f32 %v5313, %v5557
    %v5629 = vadd.f32 %v5318, %v5562
    %v5630 = vadd.f32 %v5321, %v5565
    %v5631 = vadd.f32 %v5326, %v5570
    %v5632 = vadd.f32 %v5329, %v5573
    %v5633 = vadd.f32 %v5334, %v5578
    %v5634 = vadd.f32 %v5337, %v5581
    %v5635 = vadd.f32 %v5342, %v5586
    %v5636 = vadd.f32 %v5345, %v5589
    %v5637 = vadd.f32 %v5350, %v5594
    %v5638 = vadd.f32 %v5353, %v5597
    %v5639 = vadd.f32 %v5358, %v5602
    %v5640 = vadd.f32 %v5361, %v5605
    %v5641 = vadd.f32 %v5366, %v5610
    %v5642 = vld [vmem:[#allocation5 + $0x4] sm:$0xff]
    %v5643 = vld [vmem:[#allocation5 + $0xc] sm:$0xff]
    %v5644 = vld [vmem:[#allocation5 + $0x14] sm:$0xff]
    %v5645 = vld [vmem:[#allocation5 + $0x1c] sm:$0xff]
    %v5646 = vld [vmem:[#allocation5 + $0x24] sm:$0xff]
    %v5647 = vld [vmem:[#allocation5 + $0x2c] sm:$0xff]
    %v5648 = vld [vmem:[#allocation5 + $0x34] sm:$0xff]
    %v5649 = vld [vmem:[#allocation5 + $0x3c] sm:$0xff]
    %v5650 = vld [vmem:[#allocation5 + $0x44] sm:$0xff]
    %v5651 = vld [vmem:[#allocation5 + $0x4c] sm:$0xff]
    %v5652 = vld [vmem:[#allocation5 + $0x54] sm:$0xff]
    %v5653 = vld [vmem:[#allocation5 + $0x5c] sm:$0xff]
    %v5654 = vld [vmem:[#allocation5 + $0x64] sm:$0xff]
    %v5655 = vld [vmem:[#allocation5 + $0x6c] sm:$0xff]
    %v5656 = vld [vmem:[#allocation5 + $0x74] sm:$0xff]
    %v5657 = vld [vmem:[#allocation5 + $0x7c] sm:$0xff]
    %v5658 = vld [vmem:[#allocation5 + $0x84] sm:$0xff]
    %v5659 = vld [vmem:[#allocation5 + $0x8c] sm:$0xff]
    %v5660 = vld [vmem:[#allocation5 + $0x94] sm:$0xff]
    %v5661 = vld [vmem:[#allocation5 + $0x9c] sm:$0xff]
    %v5662 = vld [vmem:[#allocation5 + $0xa4] sm:$0xff]
    %v5663 = vld [vmem:[#allocation5 + $0xac] sm:$0xff]
    %v5664 = vld [vmem:[#allocation5 + $0xb4] sm:$0xff]
    %v5665 = vld [vmem:[#allocation5 + $0xbc] sm:$0xff]
    %v5666 = vld [vmem:[#allocation5 + $0xc4] sm:$0xff]
    %v5667 = vld [vmem:[#allocation5 + $0xcc] sm:$0xff]
    %v5668 = vld [vmem:[#allocation5 + $0xd4] sm:$0xff]
    %v5669 = vpack.c.bf16 %v5643, %v5642
    %v5670 = vpack.c.bf16 %v5645, %v5644
    %v5671 = vpack.c.bf16 %v5647, %v5646
    %v5672 = vpack.c.bf16 %v5649, %v5648
    %v5673 = vpack.c.bf16 %v5651, %v5650
    %v5674 = vpack.c.bf16 %v5653, %v5652
    %v5675 = vpack.c.bf16 %v5655, %v5654
    %v5676 = vpack.c.bf16 %v5657, %v5656
    %v5677 = vpack.c.bf16 %v5659, %v5658
    %v5678 = vpack.c.bf16 %v5661, %v5660
    %v5679 = vpack.c.bf16 %v5663, %v5662
    %v5680 = vpack.c.bf16 %v5665, %v5664
    %v5681 = vpack.c.bf16 %v5667, %v5666
    %v5682 = vpack.c.bf16 %v5668, %v5668
    %s5683 = scalar_lea.vmem %s3, 32
    %v5684 = vld [vmem:[%s5683] sm:$0xf]
    %v5685 = vld [vmem:[%s5683 + $0x4] sm:$0xf]
    %v5686 = vld [vmem:[%s5683 + $0x8] sm:$0xf]
    %v5687 = vld [vmem:[%s5683 + $0xc] sm:$0xf]
    %v5692 = vunpack.c.l.b16 %v5684
    %v5693 = vunpack.c.l.b16 %v5685
    %v5694 = vunpack.c.l.b16 %v5686
    %v5695 = vunpack.c.l.b16 %v5687
    %v5696 = vpack.c.b16 %v5693, %v5692
    %v5697 = vpack.c.b16 %v5695, %v5694
    %v5701 = vsel %vm655, %v5669, 0
    %v5704 = vsel %vm655, %v5670, 0
    %v5707 = vsel %vm655, %v5671, 0
    %v5710 = vsel %vm655, %v5672, 0
    %v5713 = vsel %vm655, %v5673, 0
    %v5716 = vsel %vm655, %v5674, 0
    %v5719 = vsel %vm655, %v5675, 0
    %v5722 = vsel %vm655, %v5676, 0
    %v5725 = vsel %vm655, %v5677, 0
    %v5728 = vsel %vm655, %v5678, 0
    %v5731 = vsel %vm655, %v5679, 0
    %v5734 = vsel %vm655, %v5680, 0
    %v5737 = vsel %vm655, %v5681, 0
    %v5740 = vsel %vm655, %v5682, 0
    %5742 = vmatprep.subr.bf16.mxu0 0
    %5743 = vmatpush1.bf16.msra.mxu0 %v5696
    %5744 = vmatprep.subr.bf16.mxu0 0
    %5745 = vmatpush1.bf16.msra.mxu0 %v5697
    %5746 = vmatprep.subr.bf16.mxu0 0
    %5747 = vmatpush1.bf16.msra.mxu0 0
    %5748 = vmatprep.subr.bf16.mxu0 0
    %5749 = vmatpush1.bf16.msra.mxu0 0
    %5750 = vmatprep.subr.bf16.mxu0 0
    %5751 = vmatpush1.bf16.msra.mxu0 0
    %5752 = vmatprep.subr.bf16.mxu0 0
    %5753 = vmatpush1.bf16.msra.mxu0 0
    %5754 = vmatprep.subr.bf16.mxu0 0
    %5755 = vmatpush1.bf16.msra.mxu0 0
    %5756 = vmatprep.subr.bf16.mxu0 0
    %5757 = vmatpush1.bf16.msra.mxu0 0
    %5758 = vmatprep.subr.bf16.mxu0 0
    %5759 = vmatpush1.bf16.msra.mxu0 0
    %5760 = vmatprep.subr.bf16.mxu0 0
    %5761 = vmatpush1.bf16.msra.mxu0 0
    %5762 = vmatprep.subr.bf16.mxu0 0
    %5763 = vmatpush1.bf16.msra.mxu0 0
    %5764 = vmatprep.subr.bf16.mxu0 0
    %5765 = vmatpush1.bf16.msra.mxu0 0
    %5766 = vmatprep.subr.bf16.mxu0 0
    %5767 = vmatpush1.bf16.msra.mxu0 0
    %5768 = vmatprep.subr.bf16.mxu0 0
    %5769 = vmatpush1.bf16.msra.mxu0 0
    %5770 = vmatprep.subr.bf16.mxu0 0
    %5771 = vmatpush1.bf16.msra.mxu0 0
    %5772 = vmatprep.subr.bf16.mxu0 0
    %5773 = vmatpush1.bf16.msra.mxu0 0
    %5774 = vmatprep.mubr.bf16.mxu0 0
    %5775 = vmatmul.mubr.bf16.gmra.mrb[0].mxu0 %v5701
    %v5776 = vpop.f32.mrb[0].mxu0
    %v5777 = vadd.f32 0.0, %v5776
    %v5778 = vpop.f32.mrb[0].mxu0
    %v5779 = vpop.f32.mrb[0].mxu0
    %v5780 = vadd.f32 0.0, %v5779
    %v5781 = vpop.f32.mrb[0].mxu0
    %5782 = vmatprep.mubr.bf16.mxu0 0
    %5783 = vmatmul.mubr.bf16.gmra.mrb[0].mxu0 %v5704
    %v5784 = vpop.f32.mrb[0].mxu0
    %v5785 = vadd.f32 0.0, %v5784
    %v5786 = vpop.f32.mrb[0].mxu0
    %v5787 = vpop.f32.mrb[0].mxu0
    %v5788 = vadd.f32 0.0, %v5787
    %v5789 = vpop.f32.mrb[0].mxu0
    %5790 = vmatprep.mubr.bf16.mxu0 0
    %5791 = vmatmul.mubr.bf16.gmra.mrb[0].mxu0 %v5707
    %v5792 = vpop.f32.mrb[0].mxu0
    %v5793 = vadd.f32 0.0, %v5792
    %v5794 = vpop.f32.mrb[0].mxu0
    %v5795 = vpop.f32.mrb[0].mxu0
    %v5796 = vadd.f32 0.0, %v5795
    %v5797 = vpop.f32.mrb[0].mxu0
    %5798 = vmatprep.mubr.bf16.mxu0 0
    %5799 = vmatmul.mubr.bf16.gmra.mrb[0].mxu0 %v5710
    %v5800 = vpop.f32.mrb[0].mxu0
    %v5801 = vadd.f32 0.0, %v5800
    %v5802 = vpop.f32.mrb[0].mxu0
    %v5803 = vpop.f32.mrb[0].mxu0
    %v5804 = vadd.f32 0.0, %v5803
    %v5805 = vpop.f32.mrb[0].mxu0
    %5806 = vmatprep.mubr.bf16.mxu0 0
    %5807 = vmatmul.mubr.bf16.gmra.mrb[0].mxu0 %v5713
    %v5808 = vpop.f32.mrb[0].mxu0
    %v5809 = vadd.f32 0.0, %v5808
    %v5810 = vpop.f32.mrb[0].mxu0
    %v5811 = vpop.f32.mrb[0].mxu0
    %v5812 = vadd.f32 0.0, %v5811
    %v5813 = vpop.f32.mrb[0].mxu0
    %5814 = vmatprep.mubr.bf16.mxu0 0
    %5815 = vmatmul.mubr.bf16.gmra.mrb[0].mxu0 %v5716
    %v5816 = vpop.f32.mrb[0].mxu0
    %v5817 = vadd.f32 0.0, %v5816
    %v5818 = vpop.f32.mrb[0].mxu0
    %v5819 = vpop.f32.mrb[0].mxu0
    %v5820 = vadd.f32 0.0, %v5819
    %v5821 = vpop.f32.mrb[0].mxu0
    %5822 = vmatprep.mubr.bf16.mxu0 0
    %5823 = vmatmul.mubr.bf16.gmra.mrb[0].mxu0 %v5719
    %v5824 = vpop.f32.mrb[0].mxu0
    %v5825 = vadd.f32 0.0, %v5824
    %v5826 = vpop.f32.mrb[0].mxu0
    %v5827 = vpop.f32.mrb[0].mxu0
    %v5828 = vadd.f32 0.0, %v5827
    %v5829 = vpop.f32.mrb[0].mxu0
    %5830 = vmatprep.mubr.bf16.mxu0 0
    %5831 = vmatmul.mubr.bf16.gmra.mrb[0].mxu0 %v5722
    %v5832 = vpop.f32.mrb[0].mxu0
    %v5833 = vadd.f32 0.0, %v5832
    %v5834 = vpop.f32.mrb[0].mxu0
    %v5835 = vpop.f32.mrb[0].mxu0
    %v5836 = vadd.f32 0.0, %v5835
    %v5837 = vpop.f32.mrb[0].mxu0
    %5838 = vmatprep.mubr.bf16.mxu0 0
    %5839 = vmatmul.mubr.bf16.gmra.mrb[0].mxu0 %v5725
    %v5840 = vpop.f32.mrb[0].mxu0
    %v5841 = vadd.f32 0.0, %v5840
    %v5842 = vpop.f32.mrb[0].mxu0
    %v5843 = vpop.f32.mrb[0].mxu0
    %v5844 = vadd.f32 0.0, %v5843
    %v5845 = vpop.f32.mrb[0].mxu0
    %5846 = vmatprep.mubr.bf16.mxu0 0
    %5847 = vmatmul.mubr.bf16.gmra.mrb[0].mxu0 %v5728
    %v5848 = vpop.f32.mrb[0].mxu0
    %v5849 = vadd.f32 0.0, %v5848
    %v5850 = vpop.f32.mrb[0].mxu0
    %v5851 = vpop.f32.mrb[0].mxu0
    %v5852 = vadd.f32 0.0, %v5851
    %v5853 = vpop.f32.mrb[0].mxu0
    %5854 = vmatprep.mubr.bf16.mxu0 0
    %5855 = vmatmul.mubr.bf16.gmra.mrb[0].mxu0 %v5731
    %v5856 = vpop.f32.mrb[0].mxu0
    %v5857 = vadd.f32 0.0, %v5856
    %v5858 = vpop.f32.mrb[0].mxu0
    %v5859 = vpop.f32.mrb[0].mxu0
    %v5860 = vadd.f32 0.0, %v5859
    %v5861 = vpop.f32.mrb[0].mxu0
    %5862 = vmatprep.mubr.bf16.mxu0 0
    %5863 = vmatmul.mubr.bf16.gmra.mrb[0].mxu0 %v5734
    %v5864 = vpop.f32.mrb[0].mxu0
    %v5865 = vadd.f32 0.0, %v5864
    %v5866 = vpop.f32.mrb[0].mxu0
    %v5867 = vpop.f32.mrb[0].mxu0
    %v5868 = vadd.f32 0.0, %v5867
    %v5869 = vpop.f32.mrb[0].mxu0
    %5870 = vmatprep.mubr.bf16.mxu0 0
    %5871 = vmatmul.mubr.bf16.gmra.mrb[0].mxu0 %v5737
    %v5872 = vpop.f32.mrb[0].mxu0
    %v5873 = vadd.f32 0.0, %v5872
    %v5874 = vpop.f32.mrb[0].mxu0
    %v5875 = vpop.f32.mrb[0].mxu0
    %v5876 = vadd.f32 0.0, %v5875
    %v5877 = vpop.f32.mrb[0].mxu0
    %5878 = vmatprep.mubr.bf16.mxu0 0
    %5879 = vmatmul.mubr.bf16.gmra.mrb[0].mxu0 %v5740
    %v5880 = vpop.f32.mrb[0].mxu0
    %v5881 = vadd.f32 0.0, %v5880
    %v5882 = vpop.f32.mrb[0].mxu0
    %v5883 = vpop.f32.mrb[0].mxu0
    %v5884 = vpop.f32.mrb[0].mxu0
    %5885 = vdwg.mxu0
    %v5886 = vadd.f32 %v5615, %v5777
    %v5887 = vadd.f32 %v5616, %v5780
    %v5888 = vadd.f32 %v5617, %v5785
    %v5889 = vadd.f32 %v5618, %v5788
    %v5890 = vadd.f32 %v5619, %v5793
    %v5891 = vadd.f32 %v5620, %v5796
    %v5892 = vadd.f32 %v5621, %v5801
    %v5893 = vadd.f32 %v5622, %v5804
    %v5894 = vadd.f32 %v5623, %v5809
    %v5895 = vadd.f32 %v5624, %v5812
    %v5896 = vadd.f32 %v5625, %v5817
    %v5897 = vadd.f32 %v5626, %v5820
    %v5898 = vadd.f32 %v5627, %v5825
    %v5899 = vadd.f32 %v5628, %v5828
    %v5900 = vadd.f32 %v5629, %v5833
    %v5901 = vadd.f32 %v5630, %v5836
    %v5902 = vadd.f32 %v5631, %v5841
    %v5903 = vadd.f32 %v5632, %v5844
    %v5904 = vadd.f32 %v5633, %v5849
    %v5905 = vadd.f32 %v5634, %v5852
    %v5906 = vadd.f32 %v5635, %v5857
    %v5907 = vadd.f32 %v5636, %v5860
    %v5908 = vadd.f32 %v5637, %v5865
    %v5909 = vadd.f32 %v5638, %v5868
    %v5910 = vadd.f32 %v5639, %v5873
    %v5911 = vadd.f32 %v5640, %v5876
    %v5912 = vadd.f32 %v5641, %v5881
    %v5913 = vld [vmem:[#allocation5 + $0x18] sm:$0xff]
    %v5914 = vld [vmem:[#allocation5 + $0x20] sm:$0xff]
    %v5915 = vld [vmem:[#allocation5 + $0x28] sm:$0xff]
    %v5916 = vld [vmem:[#allocation5 + $0x30] sm:$0xff]
    %v5917 = vld [vmem:[#allocation5 + $0x38] sm:$0xff]
    %v5918 = vld [vmem:[#allocation5 + $0x40] sm:$0xff]
    %v5919 = vld [vmem:[#allocation5 + $0x48] sm:$0xff]
    %v5920 = vld [vmem:[#allocation5 + $0x50] sm:$0xff]
    %v5921 = vld [vmem:[#allocation5 + $0x58] sm:$0xff]
    %v5922 = vld [vmem:[#allocation5 + $0x60] sm:$0xff]
    %v5923 = vld [vmem:[#allocation5 + $0x68] sm:$0xff]
    %v5924 = vld [vmem:[#allocation5 + $0x70] sm:$0xff]
    %v5925 = vld [vmem:[#allocation5 + $0x78] sm:$0xff]
    %v5926 = vld [vmem:[#allocation5 + $0x80] sm:$0xff]
    %v5927 = vld [vmem:[#allocation5 + $0x88] sm:$0xff]
    %v5928 = vld [vmem:[#allocation5 + $0x90] sm:$0xff]
    %v5929 = vld [vmem:[#allocation5 + $0x98] sm:$0xff]
    %v5930 = vld [vmem:[#allocation5 + $0xa0] sm:$0xff]
    %v5931 = vld [vmem:[#allocation5 + $0xa8] sm:$0xff]
    %v5932 = vld [vmem:[#allocation5 + $0xb0] sm:$0xff]
    %v5933 = vld [vmem:[#allocation5 + $0xb8] sm:$0xff]
    %v5934 = vld [vmem:[#allocation5 + $0xc0] sm:$0xff]
    %v5935 = vld [vmem:[#allocation5 + $0xc8] sm:$0xff]
    %v5936 = vld [vmem:[#allocation5 + $0xd0] sm:$0xff]
    %v5937 = vld [vmem:[#allocation5 + $0xd8] sm:$0xff]
    %v5938 = vld [vmem:[#allocation5 + $0xe0] sm:$0xff]
    %v5939 = vld [vmem:[#allocation5 + $0xe8] sm:$0xff]
    %v5940 = vpack.c.bf16 %v5914, %v5913
    %v5941 = vpack.c.bf16 %v5916, %v5915
    %v5942 = vpack.c.bf16 %v5918, %v5917
    %v5943 = vpack.c.bf16 %v5920, %v5919
    %v5944 = vpack.c.bf16 %v5922, %v5921
    %v5945 = vpack.c.bf16 %v5924, %v5923
    %v5946 = vpack.c.bf16 %v5926, %v5925
    %v5947 = vpack.c.bf16 %v5928, %v5927
    %v5948 = vpack.c.bf16 %v5930, %v5929
    %v5949 = vpack.c.bf16 %v5932, %v5931
    %v5950 = vpack.c.bf16 %v5934, %v5933
    %v5951 = vpack.c.bf16 %v5936, %v5935
    %v5952 = vpack.c.bf16 %v5938, %v5937
    %v5953 = vpack.c.bf16 %v5939, %v5939
    %s5954 = scalar_lea.vmem %s3, 48
    %v5955 = vld [vmem:[%s5954] sm:$0xf]
    %v5956 = vld [vmem:[%s5954 + $0x4] sm:$0xf]
    %v5957 = vld [vmem:[%s5954 + $0x8] sm:$0xf]
    %v5958 = vld [vmem:[%s5954 + $0xc] sm:$0xf]
    %v5963 = vunpack.c.l.b16 %v5955
    %v5964 = vunpack.c.l.b16 %v5956
    %v5965 = vunpack.c.l.b16 %v5957
    %v5966 = vunpack.c.l.b16 %v5958
    %v5967 = vpack.c.b16 %v5964, %v5963
    %v5968 = vpack.c.b16 %v5966, %v5965
    %v5972 = vsel %vm655, %v5940, 0
    %v5975 = vsel %vm655, %v5941, 0
    %v5978 = vsel %vm655, %v5942, 0
    %v5981 = vsel %vm655, %v5943, 0
    %v5984 = vsel %vm655, %v5944, 0
    %v5987 = vsel %vm655, %v5945, 0
    %v5990 = vsel %vm655, %v5946, 0
    %v5993 = vsel %vm655, %v5947, 0
    %v5996 = vsel %vm655, %v5948, 0
    %v5999 = vsel %vm655, %v5949, 0
    %v6002 = vsel %vm655, %v5950, 0
    %v6005 = vsel %vm655, %v5951, 0
    %v6008 = vsel %vm655, %v5952, 0
    %v6011 = vsel %vm655, %v5953, 0
    %6013 = vmatprep.subr.bf16.mxu0 0
    %6014 = vmatpush1.bf16.msra.mxu0 %v5967
    %6015 = vmatprep.subr.bf16.mxu0 0
    %6016 = vmatpush1.bf16.msra.mxu0 %v5968
    %6017 = vmatprep.subr.bf16.mxu0 0
    %6018 = vmatpush1.bf16.msra.mxu0 0
    %6019 = vmatprep.subr.bf16.mxu0 0
    %6020 = vmatpush1.bf16.msra.mxu0 0
    %6021 = vmatprep.subr.bf16.mxu0 0
    %6022 = vmatpush1.bf16.msra.mxu0 0
    %6023 = vmatprep.subr.bf16.mxu0 0
    %6024 = vmatpush1.bf16.msra.mxu0 0
    %6025 = vmatprep.subr.bf16.mxu0 0
    %6026 = vmatpush1.bf16.msra.mxu0 0
    %6027 = vmatprep.subr.bf16.mxu0 0
    %6028 = vmatpush1.bf16.msra.mxu0 0
    %6029 = vmatprep.subr.bf16.mxu0 0
    %6030 = vmatpush1.bf16.msra.mxu0 0
    %6031 = vmatprep.subr.bf16.mxu0 0
    %6032 = vmatpush1.bf16.msra.mxu0 0
    %6033 = vmatprep.subr.bf16.mxu0 0
    %6034 = vmatpush1.bf16.msra.mxu0 0
    %6035 = vmatprep.subr.bf16.mxu0 0
    %6036 = vmatpush1.bf16.msra.mxu0 0
    %6037 = vmatprep.subr.bf16.mxu0 0
    %6038 = vmatpush1.bf16.msra.mxu0 0
    %6039 = vmatprep.subr.bf16.mxu0 0
    %6040 = vmatpush1.bf16.msra.mxu0 0
    %6041 = vmatprep.subr.bf16.mxu0 0
    %6042 = vmatpush1.bf16.msra.mxu0 0
    %6043 = vmatprep.subr.bf16.mxu0 0
    %6044 = vmatpush1.bf16.msra.mxu0 0
    %6045 = vmatprep.mubr.bf16.mxu0 0
    %6046 = vmatmul.mubr.bf16.gmra.mrb[0].mxu0 %v5972
    %v6047 = vpop.f32.mrb[0].mxu0
    %v6048 = vadd.f32 0.0, %v6047
    %v6049 = vpop.f32.mrb[0].mxu0
    %v6050 = vpop.f32.mrb[0].mxu0
    %v6051 = vadd.f32 0.0, %v6050
    %v6052 = vpop.f32.mrb[0].mxu0
    %6053 = vmatprep.mubr.bf16.mxu0 0
    %6054 = vmatmul.mubr.bf16.gmra.mrb[0].mxu0 %v5975
    %v6055 = vpop.f32.mrb[0].mxu0
    %v6056 = vadd.f32 0.0, %v6055
    %v6057 = vpop.f32.mrb[0].mxu0
    %v6058 = vpop.f32.mrb[0].mxu0
    %v6059 = vadd.f32 0.0, %v6058
    %v6060 = vpop.f32.mrb[0].mxu0
    %6061 = vmatprep.mubr.bf16.mxu0 0
    %6062 = vmatmul.mubr.bf16.gmra.mrb[0].mxu0 %v5978
    %v6063 = vpop.f32.mrb[0].mxu0
    %v6064 = vadd.f32 0.0, %v6063
    %v6065 = vpop.f32.mrb[0].mxu0
    %v6066 = vpop.f32.mrb[0].mxu0
    %v6067 = vadd.f32 0.0, %v6066
    %v6068 = vpop.f32.mrb[0].mxu0
    %6069 = vmatprep.mubr.bf16.mxu0 0
    %6070 = vmatmul.mubr.bf16.gmra.mrb[0].mxu0 %v5981
    %v6071 = vpop.f32.mrb[0].mxu0
    %v6072 = vadd.f32 0.0, %v6071
    %v6073 = vpop.f32.mrb[0].mxu0
    %v6074 = vpop.f32.mrb[0].mxu0
    %v6075 = vadd.f32 0.0, %v6074
    %v6076 = vpop.f32.mrb[0].mxu0
    %6077 = vmatprep.mubr.bf16.mxu0 0
    %6078 = vmatmul.mubr.bf16.gmra.mrb[0].mxu0 %v5984
    %v6079 = vpop.f32.mrb[0].mxu0
    %v6080 = vadd.f32 0.0, %v6079
    %v6081 = vpop.f32.mrb[0].mxu0
    %v6082 = vpop.f32.mrb[0].mxu0
    %v6083 = vadd.f32 0.0, %v6082
    %v6084 = vpop.f32.mrb[0].mxu0
    %6085 = vmatprep.mubr.bf16.mxu0 0
    %6086 = vmatmul.mubr.bf16.gmra.mrb[0].mxu0 %v5987
    %v6087 = vpop.f32.mrb[0].mxu0
    %v6088 = vadd.f32 0.0, %v6087
    %v6089 = vpop.f32.mrb[0].mxu0
    %v6090 = vpop.f32.mrb[0].mxu0
    %v6091 = vadd.f32 0.0, %v6090
    %v6092 = vpop.f32.mrb[0].mxu0
    %6093 = vmatprep.mubr.bf16.mxu0 0
    %6094 = vmatmul.mubr.bf16.gmra.mrb[0].mxu0 %v5990
    %v6095 = vpop.f32.mrb[0].mxu0
    %v6096 = vadd.f32 0.0, %v6095
    %v6097 = vpop.f32.mrb[0].mxu0
    %v6098 = vpop.f32.mrb[0].mxu0
    %v6099 = vadd.f32 0.0, %v6098
    %v6100 = vpop.f32.mrb[0].mxu0
    %6101 = vmatprep.mubr.bf16.mxu0 0
    %6102 = vmatmul.mubr.bf16.gmra.mrb[0].mxu0 %v5993
    %v6103 = vpop.f32.mrb[0].mxu0
    %v6104 = vadd.f32 0.0, %v6103
    %v6105 = vpop.f32.mrb[0].mxu0
    %v6106 = vpop.f32.mrb[0].mxu0
    %v6107 = vadd.f32 0.0, %v6106
    %v6108 = vpop.f32.mrb[0].mxu0
    %6109 = vmatprep.mubr.bf16.mxu0 0
    %6110 = vmatmul.mubr.bf16.gmra.mrb[0].mxu0 %v5996
    %v6111 = vpop.f32.mrb[0].mxu0
    %v6112 = vadd.f32 0.0, %v6111
    %v6113 = vpop.f32.mrb[0].mxu0
    %v6114 = vpop.f32.mrb[0].mxu0
    %v6115 = vadd.f32 0.0, %v6114
    %v6116 = vpop.f32.mrb[0].mxu0
    %6117 = vmatprep.mubr.bf16.mxu0 0
    %6118 = vmatmul.mubr.bf16.gmra.mrb[0].mxu0 %v5999
    %v6119 = vpop.f32.mrb[0].mxu0
    %v6120 = vadd.f32 0.0, %v6119
    %v6121 = vpop.f32.mrb[0].mxu0
    %v6122 = vpop.f32.mrb[0].mxu0
    %v6123 = vadd.f32 0.0, %v6122
    %v6124 = vpop.f32.mrb[0].mxu0
    %6125 = vmatprep.mubr.bf16.mxu0 0
    %6126 = vmatmul.mubr.bf16.gmra.mrb[0].mxu0 %v6002
    %v6127 = vpop.f32.mrb[0].mxu0
    %v6128 = vadd.f32 0.0, %v6127
    %v6129 = vpop.f32.mrb[0].mxu0
    %v6130 = vpop.f32.mrb[0].mxu0
    %v6131 = vadd.f32 0.0, %v6130
    %v6132 = vpop.f32.mrb[0].mxu0
    %6133 = vmatprep.mubr.bf16.mxu0 0
    %6134 = vmatmul.mubr.bf16.gmra.mrb[0].mxu0 %v6005
    %v6135 = vpop.f32.mrb[0].mxu0
    %v6136 = vadd.f32 0.0, %v6135
    %v6137 = vpop.f32.mrb[0].mxu0
    %v6138 = vpop.f32.mrb[0].mxu0
    %v6139 = vadd.f32 0.0, %v6138
    %v6140 = vpop.f32.mrb[0].mxu0
    %6141 = vmatprep.mubr.bf16.mxu0 0
    %6142 = vmatmul.mubr.bf16.gmra.mrb[0].mxu0 %v6008
    %v6143 = vpop.f32.mrb[0].mxu0
    %v6144 = vadd.f32 0.0, %v6143
    %v6145 = vpop.f32.mrb[0].mxu0
    %v6146 = vpop.f32.mrb[0].mxu0
    %v6147 = vadd.f32 0.0, %v6146
    %v6148 = vpop.f32.mrb[0].mxu0
    %6149 = vmatprep.mubr.bf16.mxu0 0
    %6150 = vmatmul.mubr.bf16.gmra.mrb[0].mxu0 %v6011
    %v6151 = vpop.f32.mrb[0].mxu0
    %v6152 = vadd.f32 0.0, %v6151
    %v6153 = vpop.f32.mrb[0].mxu0
    %v6154 = vpop.f32.mrb[0].mxu0
    %v6155 = vpop.f32.mrb[0].mxu0
    %6156 = vdwg.mxu0
    %v6157 = vadd.f32 %v5886, %v6048
    %v6158 = vadd.f32 %v5887, %v6051
    %v6159 = vadd.f32 %v5888, %v6056
    %v6160 = vadd.f32 %v5889, %v6059
    %v6161 = vadd.f32 %v5890, %v6064
    %v6162 = vadd.f32 %v5891, %v6067
    %v6163 = vadd.f32 %v5892, %v6072
    %v6164 = vadd.f32 %v5893, %v6075
    %v6165 = vadd.f32 %v5894, %v6080
    %v6166 = vadd.f32 %v5895, %v6083
    %v6167 = vadd.f32 %v5896, %v6088
    %v6168 = vadd.f32 %v5897, %v6091
    %v6169 = vadd.f32 %v5898, %v6096
    %v6170 = vadd.f32 %v5899, %v6099
    %v6171 = vadd.f32 %v5900, %v6104
    %v6172 = vadd.f32 %v5901, %v6107
    %v6173 = vadd.f32 %v5902, %v6112
    %v6174 = vadd.f32 %v5903, %v6115
    %v6175 = vadd.f32 %v5904, %v6120
    %v6176 = vadd.f32 %v5905, %v6123
    %v6177 = vadd.f32 %v5906, %v6128
    %v6178 = vadd.f32 %v5907, %v6131
    %v6179 = vadd.f32 %v5908, %v6136
    %v6180 = vadd.f32 %v5909, %v6139
    %v6181 = vadd.f32 %v5910, %v6144
    %v6182 = vadd.f32 %v5911, %v6147
    %v6183 = vadd.f32 %v5912, %v6152
    %v6184 = vld [vmem:[#allocation5 + $0x1a] sm:$0xff]
    %v6185 = vld [vmem:[#allocation5 + $0x22] sm:$0xff]
    %v6186 = vld [vmem:[#allocation5 + $0x2a] sm:$0xff]
    %v6187 = vld [vmem:[#allocation5 + $0x32] sm:$0xff]
    %v6188 = vld [vmem:[#allocation5 + $0x3a] sm:$0xff]
    %v6189 = vld [vmem:[#allocation5 + $0x42] sm:$0xff]
    %v6190 = vld [vmem:[#allocation5 + $0x4a] sm:$0xff]
    %v6191 = vld [vmem:[#allocation5 + $0x52] sm:$0xff]
    %v6192 = vld [vmem:[#allocation5 + $0x5a] sm:$0xff]
    %v6193 = vld [vmem:[#allocation5 + $0x62] sm:$0xff]
    %v6194 = vld [vmem:[#allocation5 + $0x6a] sm:$0xff]
    %v6195 = vld [vmem:[#allocation5 + $0x72] sm:$0xff]
    %v6196 = vld [vmem:[#allocation5 + $0x7a] sm:$0xff]
    %v6197 = vld [vmem:[#allocation5 + $0x82] sm:$0xff]
    %v6198 = vld [vmem:[#allocation5 + $0x8a] sm:$0xff]
    %v6199 = vld [vmem:[#allocation5 + $0x92] sm:$0xff]
    %v6200 = vld [vmem:[#allocation5 + $0x9a] sm:$0xff]
    %v6201 = vld [vmem:[#allocation5 + $0xa2] sm:$0xff]
    %v6202 = vld [vmem:[#allocation5 + $0xaa] sm:$0xff]
    %v6203 = vld [vmem:[#allocation5 + $0xb2] sm:$0xff]
    %v6204 = vld [vmem:[#allocation5 + $0xba] sm:$0xff]
    %v6205 = vld [vmem:[#allocation5 + $0xc2] sm:$0xff]
    %v6206 = vld [vmem:[#allocation5 + $0xca] sm:$0xff]
    %v6207 = vld [vmem:[#allocation5 + $0xd2] sm:$0xff]
    %v6208 = vld [vmem:[#allocation5 + $0xda] sm:$0xff]
    %v6209 = vld [vmem:[#allocation5 + $0xe2] sm:$0xff]
    %v6210 = vld [vmem:[#allocation5 + $0xea] sm:$0xff]
    %v6211 = vpack.c.bf16 %v6185, %v6184
    %v6212 = vpack.c.bf16 %v6187, %v6186
    %v6213 = vpack.c.bf16 %v6189, %v6188
    %v6214 = vpack.c.bf16 %v6191, %v6190
    %v6215 = vpack.c.bf16 %v6193, %v6192
    %v6216 = vpack.c.bf16 %v6195, %v6194
    %v6217 = vpack.c.bf16 %v6197, %v6196
    %v6218 = vpack.c.bf16 %v6199, %v6198
    %v6219 = vpack.c.bf16 %v6201, %v6200
    %v6220 = vpack.c.bf16 %v6203, %v6202
    %v6221 = vpack.c.bf16 %v6205, %v6204
    %v6222 = vpack.c.bf16 %v6207, %v6206
    %v6223 = vpack.c.bf16 %v6209, %v6208
    %v6224 = vpack.c.bf16 %v6210, %v6210
    %s6225 = scalar_lea.vmem %s3, 64
    %v6226 = vld [vmem:[%s6225] sm:$0xf]
    %v6227 = vld [vmem:[%s6225 + $0x4] sm:$0xf]
    %v6228 = vld [vmem:[%s6225 + $0x8] sm:$0xf]
    %v6229 = vld [vmem:[%s6225 + $0xc] sm:$0xf]
    %v6234 = vunpack.c.l.b16 %v6226
    %v6235 = vunpack.c.l.b16 %v6227
    %v6236 = vunpack.c.l.b16 %v6228
    %v6237 = vunpack.c.l.b16 %v6229
    %v6238 = vpack.c.b16 %v6235, %v6234
    %v6239 = vpack.c.b16 %v6237, %v6236
    %v6243 = vsel %vm655, %v6211, 0
    %v6246 = vsel %vm655, %v6212, 0
    %v6249 = vsel %vm655, %v6213, 0
    %v6252 = vsel %vm655, %v6214, 0
    %v6255 = vsel %vm655, %v6215, 0
    %v6258 = vsel %vm655, %v6216, 0
    %v6261 = vsel %vm655, %v6217, 0
    %v6264 = vsel %vm655, %v6218, 0
    %v6267 = vsel %vm655, %v6219, 0
    %v6270 = vsel %vm655, %v6220, 0
    %v6273 = vsel %vm655, %v6221, 0
    %v6276 = vsel %vm655, %v6222, 0
    %v6279 = vsel %vm655, %v6223, 0
    %v6282 = vsel %vm655, %v6224, 0
    %6284 = vmatprep.subr.bf16.mxu0 0
    %6285 = vmatpush1.bf16.msra.mxu0 %v6238
    %6286 = vmatprep.subr.bf16.mxu0 0
    %6287 = vmatpush1.bf16.msra.mxu0 %v6239
    %6288 = vmatprep.subr.bf16.mxu0 0
    %6289 = vmatpush1.bf16.msra.mxu0 0
    %6290 = vmatprep.subr.bf16.mxu0 0
    %6291 = vmatpush1.bf16.msra.mxu0 0
    %6292 = vmatprep.subr.bf16.mxu0 0
    %6293 = vmatpush1.bf16.msra.mxu0 0
    %6294 = vmatprep.subr.bf16.mxu0 0
    %6295 = vmatpush1.bf16.msra.mxu0 0
    %6296 = vmatprep.subr.bf16.mxu0 0
    %6297 = vmatpush1.bf16.msra.mxu0 0
    %6298 = vmatprep.subr.bf16.mxu0 0
    %6299 = vmatpush1.bf16.msra.mxu0 0
    %6300 = vmatprep.subr.bf16.mxu0 0
    %6301 = vmatpush1.bf16.msra.mxu0 0
    %6302 = vmatprep.subr.bf16.mxu0 0
    %6303 = vmatpush1.bf16.msra.mxu0 0
    %6304 = vmatprep.subr.bf16.mxu0 0
    %6305 = vmatpush1.bf16.msra.mxu0 0
    %6306 = vmatprep.subr.bf16.mxu0 0
    %6307 = vmatpush1.bf16.msra.mxu0 0
    %6308 = vmatprep.subr.bf16.mxu0 0
    %6309 = vmatpush1.bf16.msra.mxu0 0
    %6310 = vmatprep.subr.bf16.mxu0 0
    %6311 = vmatpush1.bf16.msra.mxu0 0
    %6312 = vmatprep.subr.bf16.mxu0 0
    %6313 = vmatpush1.bf16.msra.mxu0 0
    %6314 = vmatprep.subr.bf16.mxu0 0
    %6315 = vmatpush1.bf16.msra.mxu0 0
    %6316 = vmatprep.mubr.bf16.mxu0 0
    %6317 = vmatmul.mubr.bf16.gmra.mrb[0].mxu0 %v6243
    %v6318 = vpop.f32.mrb[0].mxu0
    %v6319 = vadd.f32 0.0, %v6318
    %v6320 = vpop.f32.mrb[0].mxu0
    %v6321 = vpop.f32.mrb[0].mxu0
    %v6322 = vadd.f32 0.0, %v6321
    %v6323 = vpop.f32.mrb[0].mxu0
    %6324 = vmatprep.mubr.bf16.mxu0 0
    %6325 = vmatmul.mubr.bf16.gmra.mrb[0].mxu0 %v6246
    %v6326 = vpop.f32.mrb[0].mxu0
    %v6327 = vadd.f32 0.0, %v6326
    %v6328 = vpop.f32.mrb[0].mxu0
    %v6329 = vpop.f32.mrb[0].mxu0
    %v6330 = vadd.f32 0.0, %v6329
    %v6331 = vpop.f32.mrb[0].mxu0
    %6332 = vmatprep.mubr.bf16.mxu0 0
    %6333 = vmatmul.mubr.bf16.gmra.mrb[0].mxu0 %v6249
    %v6334 = vpop.f32.mrb[0].mxu0
    %v6335 = vadd.f32 0.0, %v6334
    %v6336 = vpop.f32.mrb[0].mxu0
    %v6337 = vpop.f32.mrb[0].mxu0
    %v6338 = vadd.f32 0.0, %v6337
    %v6339 = vpop.f32.mrb[0].mxu0
    %6340 = vmatprep.mubr.bf16.mxu0 0
    %6341 = vmatmul.mubr.bf16.gmra.mrb[0].mxu0 %v6252
    %v6342 = vpop.f32.mrb[0].mxu0
    %v6343 = vadd.f32 0.0, %v6342
    %v6344 = vpop.f32.mrb[0].mxu0
    %v6345 = vpop.f32.mrb[0].mxu0
    %v6346 = vadd.f32 0.0, %v6345
    %v6347 = vpop.f32.mrb[0].mxu0
    %6348 = vmatprep.mubr.bf16.mxu0 0
    %6349 = vmatmul.mubr.bf16.gmra.mrb[0].mxu0 %v6255
    %v6350 = vpop.f32.mrb[0].mxu0
    %v6351 = vadd.f32 0.0, %v6350
    %v6352 = vpop.f32.mrb[0].mxu0
    %v6353 = vpop.f32.mrb[0].mxu0
    %v6354 = vadd.f32 0.0, %v6353
    %v6355 = vpop.f32.mrb[0].mxu0
    %6356 = vmatprep.mubr.bf16.mxu0 0
    %6357 = vmatmul.mubr.bf16.gmra.mrb[0].mxu0 %v6258
    %v6358 = vpop.f32.mrb[0].mxu0
    %v6359 = vadd.f32 0.0, %v6358
    %v6360 = vpop.f32.mrb[0].mxu0
    %v6361 = vpop.f32.mrb[0].mxu0
    %v6362 = vadd.f32 0.0, %v6361
    %v6363 = vpop.f32.mrb[0].mxu0
    %6364 = vmatprep.mubr.bf16.mxu0 0
    %6365 = vmatmul.mubr.bf16.gmra.mrb[0].mxu0 %v6261
    %v6366 = vpop.f32.mrb[0].mxu0
    %v6367 = vadd.f32 0.0, %v6366
    %v6368 = vpop.f32.mrb[0].mxu0
    %v6369 = vpop.f32.mrb[0].mxu0
    %v6370 = vadd.f32 0.0, %v6369
    %v6371 = vpop.f32.mrb[0].mxu0
    %6372 = vmatprep.mubr.bf16.mxu0 0
    %6373 = vmatmul.mubr.bf16.gmra.mrb[0].mxu0 %v6264
    %v6374 = vpop.f32.mrb[0].mxu0
    %v6375 = vadd.f32 0.0, %v6374
    %v6376 = vpop.f32.mrb[0].mxu0
    %v6377 = vpop.f32.mrb[0].mxu0
    %v6378 = vadd.f32 0.0, %v6377
    %v6379 = vpop.f32.mrb[0].mxu0
    %6380 = vmatprep.mubr.bf16.mxu0 0
    %6381 = vmatmul.mubr.bf16.gmra.mrb[0].mxu0 %v6267
    %v6382 = vpop.f32.mrb[0].mxu0
    %v6383 = vadd.f32 0.0, %v6382
    %v6384 = vpop.f32.mrb[0].mxu0
    %v6385 = vpop.f32.mrb[0].mxu0
    %v6386 = vadd.f32 0.0, %v6385
    %v6387 = vpop.f32.mrb[0].mxu0
    %6388 = vmatprep.mubr.bf16.mxu0 0
    %6389 = vmatmul.mubr.bf16.gmra.mrb[0].mxu0 %v6270
    %v6390 = vpop.f32.mrb[0].mxu0
    %v6391 = vadd.f32 0.0, %v6390
    %v6392 = vpop.f32.mrb[0].mxu0
    %v6393 = vpop.f32.mrb[0].mxu0
    %v6394 = vadd.f32 0.0, %v6393
    %v6395 = vpop.f32.mrb[0].mxu0
    %6396 = vmatprep.mubr.bf16.mxu0 0
    %6397 = vmatmul.mubr.bf16.gmra.mrb[0].mxu0 %v6273
    %v6398 = vpop.f32.mrb[0].mxu0
    %v6399 = vadd.f32 0.0, %v6398
    %v6400 = vpop.f32.mrb[0].mxu0
    %v6401 = vpop.f32.mrb[0].mxu0
    %v6402 = vadd.f32 0.0, %v6401
    %v6403 = vpop.f32.mrb[0].mxu0
    %6404 = vmatprep.mubr.bf16.mxu0 0
    %6405 = vmatmul.mubr.bf16.gmra.mrb[0].mxu0 %v6276
    %v6406 = vpop.f32.mrb[0].mxu0
    %v6407 = vadd.f32 0.0, %v6406
    %v6408 = vpop.f32.mrb[0].mxu0
    %v6409 = vpop.f32.mrb[0].mxu0
    %v6410 = vadd.f32 0.0, %v6409
    %v6411 = vpop.f32.mrb[0].mxu0
    %6412 = vmatprep.mubr.bf16.mxu0 0
    %6413 = vmatmul.mubr.bf16.gmra.mrb[0].mxu0 %v6279
    %v6414 = vpop.f32.mrb[0].mxu0
    %v6415 = vadd.f32 0.0, %v6414
    %v6416 = vpop.f32.mrb[0].mxu0
    %v6417 = vpop.f32.mrb[0].mxu0
    %v6418 = vadd.f32 0.0, %v6417
    %v6419 = vpop.f32.mrb[0].mxu0
    %6420 = vmatprep.mubr.bf16.mxu0 0
    %6421 = vmatmul.mubr.bf16.gmra.mrb[0].mxu0 %v6282
    %v6422 = vpop.f32.mrb[0].mxu0
    %v6423 = vadd.f32 0.0, %v6422
    %v6424 = vpop.f32.mrb[0].mxu0
    %v6425 = vpop.f32.mrb[0].mxu0
    %v6426 = vpop.f32.mrb[0].mxu0
    %6427 = vdwg.mxu0
    %v6428 = vadd.f32 %v6157, %v6319
    %v6429 = vadd.f32 %v6158, %v6322
    %v6430 = vadd.f32 %v6159, %v6327
    %v6431 = vadd.f32 %v6160, %v6330
    %v6432 = vadd.f32 %v6161, %v6335
    %v6433 = vadd.f32 %v6162, %v6338
    %v6434 = vadd.f32 %v6163, %v6343
    %v6435 = vadd.f32 %v6164, %v6346
    %v6436 = vadd.f32 %v6165, %v6351
    %v6437 = vadd.f32 %v6166, %v6354
    %v6438 = vadd.f32 %v6167, %v6359
    %v6439 = vadd.f32 %v6168, %v6362
    %v6440 = vadd.f32 %v6169, %v6367
    %v6441 = vadd.f32 %v6170, %v6370
    %v6442 = vadd.f32 %v6171, %v6375
    %v6443 = vadd.f32 %v6172, %v6378
    %v6444 = vadd.f32 %v6173, %v6383
    %v6445 = vadd.f32 %v6174, %v6386
    %v6446 = vadd.f32 %v6175, %v6391
    %v6447 = vadd.f32 %v6176, %v6394
    %v6448 = vadd.f32 %v6177, %v6399
    %v6449 = vadd.f32 %v6178, %v6402
    %v6450 = vadd.f32 %v6179, %v6407
    %v6451 = vadd.f32 %v6180, %v6410
    %v6452 = vadd.f32 %v6181, %v6415
    %v6453 = vadd.f32 %v6182, %v6418
    %v6454 = vadd.f32 %v6183, %v6423
    %v6455 = vld [vmem:[#allocation5 + $0x1c] sm:$0xff]
    %v6456 = vld [vmem:[#allocation5 + $0x24] sm:$0xff]
    %v6457 = vld [vmem:[#allocation5 + $0x2c] sm:$0xff]
    %v6458 = vld [vmem:[#allocation5 + $0x34] sm:$0xff]
    %v6459 = vld [vmem:[#allocation5 + $0x3c] sm:$0xff]
    %v6460 = vld [vmem:[#allocation5 + $0x44] sm:$0xff]
    %v6461 = vld [vmem:[#allocation5 + $0x4c] sm:$0xff]
    %v6462 = vld [vmem:[#allocation5 + $0x54] sm:$0xff]
    %v6463 = vld [vmem:[#allocation5 + $0x5c] sm:$0xff]
    %v6464 = vld [vmem:[#allocation5 + $0x64] sm:$0xff]
    %v6465 = vld [vmem:[#allocation5 + $0x6c] sm:$0xff]
    %v6466 = vld [vmem:[#allocation5 + $0x74] sm:$0xff]
    %v6467 = vld [vmem:[#allocation5 + $0x7c] sm:$0xff]
    %v6468 = vld [vmem:[#allocation5 + $0x84] sm:$0xff]
    %v6469 = vld [vmem:[#allocation5 + $0x8c] sm:$0xff]
    %v6470 = vld [vmem:[#allocation5 + $0x94] sm:$0xff]
    %v6471 = vld [vmem:[#allocation5 + $0x9c] sm:$0xff]
    %v6472 = vld [vmem:[#allocation5 + $0xa4] sm:$0xff]
    %v6473 = vld [vmem:[#allocation5 + $0xac] sm:$0xff]
    %v6474 = vld [vmem:[#allocation5 + $0xb4] sm:$0xff]
    %v6475 = vld [vmem:[#allocation5 + $0xbc] sm:$0xff]
    %v6476 = vld [vmem:[#allocation5 + $0xc4] sm:$0xff]
    %v6477 = vld [vmem:[#allocation5 + $0xcc] sm:$0xff]
    %v6478 = vld [vmem:[#allocation5 + $0xd4] sm:$0xff]
    %v6479 = vld [vmem:[#allocation5 + $0xdc] sm:$0xff]
    %v6480 = vld [vmem:[#allocation5 + $0xe4] sm:$0xff]
    %v6481 = vld [vmem:[#allocation5 + $0xec] sm:$0xff]
    %v6482 = vpack.c.bf16 %v6456, %v6455
    %v6483 = vpack.c.bf16 %v6458, %v6457
    %v6484 = vpack.c.bf16 %v6460, %v6459
    %v6485 = vpack.c.bf16 %v6462, %v6461
    %v6486 = vpack.c.bf16 %v6464, %v6463
    %v6487 = vpack.c.bf16 %v6466, %v6465
    %v6488 = vpack.c.bf16 %v6468, %v6467
    %v6489 = vpack.c.bf16 %v6470, %v6469
    %v6490 = vpack.c.bf16 %v6472, %v6471
    %v6491 = vpack.c.bf16 %v6474, %v6473
    %v6492 = vpack.c.bf16 %v6476, %v6475
    %v6493 = vpack.c.bf16 %v6478, %v6477
    %v6494 = vpack.c.bf16 %v6480, %v6479
    %v6495 = vpack.c.bf16 %v6481, %v6481
    %s6496 = scalar_lea.vmem %s3, 80
    %v6497 = vld [vmem:[%s6496] sm:$0xf]
    %v6498 = vld [vmem:[%s6496 + $0x4] sm:$0xf]
    %v6499 = vld [vmem:[%s6496 + $0x8] sm:$0xf]
    %v6500 = vld [vmem:[%s6496 + $0xc] sm:$0xf]
    %v6505 = vunpack.c.l.b16 %v6497
    %v6506 = vunpack.c.l.b16 %v6498
    %v6507 = vunpack.c.l.b16 %v6499
    %v6508 = vunpack.c.l.b16 %v6500
    %v6509 = vpack.c.b16 %v6506, %v6505
    %v6510 = vpack.c.b16 %v6508, %v6507
    %v6514 = vsel %vm655, %v6482, 0
    %v6517 = vsel %vm655, %v6483, 0
    %v6520 = vsel %vm655, %v6484, 0
    %v6523 = vsel %vm655, %v6485, 0
    %v6526 = vsel %vm655, %v6486, 0
    %v6529 = vsel %vm655, %v6487, 0
    %v6532 = vsel %vm655, %v6488, 0
    %v6535 = vsel %vm655, %v6489, 0
    %v6538 = vsel %vm655, %v6490, 0
    %v6541 = vsel %vm655, %v6491, 0
    %v6544 = vsel %vm655, %v6492, 0
    %v6547 = vsel %vm655, %v6493, 0
    %v6550 = vsel %vm655, %v6494, 0
    %v6553 = vsel %vm655, %v6495, 0
    %6555 = vmatprep.subr.bf16.mxu0 0
    %6556 = vmatpush1.bf16.msra.mxu0 %v6509
    %6557 = vmatprep.subr.bf16.mxu0 0
    %6558 = vmatpush1.bf16.msra.mxu0 %v6510
    %6559 = vmatprep.subr.bf16.mxu0 0
    %6560 = vmatpush1.bf16.msra.mxu0 0
    %6561 = vmatprep.subr.bf16.mxu0 0
    %6562 = vmatpush1.bf16.msra.mxu0 0
    %6563 = vmatprep.subr.bf16.mxu0 0
    %6564 = vmatpush1.bf16.msra.mxu0 0
    %6565 = vmatprep.subr.bf16.mxu0 0
    %6566 = vmatpush1.bf16.msra.mxu0 0
    %6567 = vmatprep.subr.bf16.mxu0 0
    %6568 = vmatpush1.bf16.msra.mxu0 0
    %6569 = vmatprep.subr.bf16.mxu0 0
    %6570 = vmatpush1.bf16.msra.mxu0 0
    %6571 = vmatprep.subr.bf16.mxu0 0
    %6572 = vmatpush1.bf16.msra.mxu0 0
    %6573 = vmatprep.subr.bf16.mxu0 0
    %6574 = vmatpush1.bf16.msra.mxu0 0
    %6575 = vmatprep.subr.bf16.mxu0 0
    %6576 = vmatpush1.bf16.msra.mxu0 0
    %6577 = vmatprep.subr.bf16.mxu0 0
    %6578 = vmatpush1.bf16.msra.mxu0 0
    %6579 = vmatprep.subr.bf16.mxu0 0
    %6580 = vmatpush1.bf16.msra.mxu0 0
    %6581 = vmatprep.subr.bf16.mxu0 0
    %6582 = vmatpush1.bf16.msra.mxu0 0
    %6583 = vmatprep.subr.bf16.mxu0 0
    %6584 = vmatpush1.bf16.msra.mxu0 0
    %6585 = vmatprep.subr.bf16.mxu0 0
    %6586 = vmatpush1.bf16.msra.mxu0 0
    %6587 = vmatprep.mubr.bf16.mxu0 0
    %6588 = vmatmul.mubr.bf16.gmra.mrb[0].mxu0 %v6514
    %v6589 = vpop.f32.mrb[0].mxu0
    %v6590 = vadd.f32 0.0, %v6589
    %v6591 = vpop.f32.mrb[0].mxu0
    %v6592 = vpop.f32.mrb[0].mxu0
    %v6593 = vadd.f32 0.0, %v6592
    %v6594 = vpop.f32.mrb[0].mxu0
    %6595 = vmatprep.mubr.bf16.mxu0 0
    %6596 = vmatmul.mubr.bf16.gmra.mrb[0].mxu0 %v6517
    %v6597 = vpop.f32.mrb[0].mxu0
    %v6598 = vadd.f32 0.0, %v6597
    %v6599 = vpop.f32.mrb[0].mxu0
    %v6600 = vpop.f32.mrb[0].mxu0
    %v6601 = vadd.f32 0.0, %v6600
    %v6602 = vpop.f32.mrb[0].mxu0
    %6603 = vmatprep.mubr.bf16.mxu0 0
    %6604 = vmatmul.mubr.bf16.gmra.mrb[0].mxu0 %v6520
    %v6605 = vpop.f32.mrb[0].mxu0
    %v6606 = vadd.f32 0.0, %v6605
    %v6607 = vpop.f32.mrb[0].mxu0
    %v6608 = vpop.f32.mrb[0].mxu0
    %v6609 = vadd.f32 0.0, %v6608
    %v6610 = vpop.f32.mrb[0].mxu0
    %6611 = vmatprep.mubr.bf16.mxu0 0
    %6612 = vmatmul.mubr.bf16.gmra.mrb[0].mxu0 %v6523
    %v6613 = vpop.f32.mrb[0].mxu0
    %v6614 = vadd.f32 0.0, %v6613
    %v6615 = vpop.f32.mrb[0].mxu0
    %v6616 = vpop.f32.mrb[0].mxu0
    %v6617 = vadd.f32 0.0, %v6616
    %v6618 = vpop.f32.mrb[0].mxu0
    %6619 = vmatprep.mubr.bf16.mxu0 0
    %6620 = vmatmul.mubr.bf16.gmra.mrb[0].mxu0 %v6526
    %v6621 = vpop.f32.mrb[0].mxu0
    %v6622 = vadd.f32 0.0, %v6621
    %v6623 = vpop.f32.mrb[0].mxu0
    %v6624 = vpop.f32.mrb[0].mxu0
    %v6625 = vadd.f32 0.0, %v6624
    %v6626 = vpop.f32.mrb[0].mxu0
    %6627 = vmatprep.mubr.bf16.mxu0 0
    %6628 = vmatmul.mubr.bf16.gmra.mrb[0].mxu0 %v6529
    %v6629 = vpop.f32.mrb[0].mxu0
    %v6630 = vadd.f32 0.0, %v6629
    %v6631 = vpop.f32.mrb[0].mxu0
    %v6632 = vpop.f32.mrb[0].mxu0
    %v6633 = vadd.f32 0.0, %v6632
    %v6634 = vpop.f32.mrb[0].mxu0
    %6635 = vmatprep.mubr.bf16.mxu0 0
    %6636 = vmatmul.mubr.bf16.gmra.mrb[0].mxu0 %v6532
    %v6637 = vpop.f32.mrb[0].mxu0
    %v6638 = vadd.f32 0.0, %v6637
    %v6639 = vpop.f32.mrb[0].mxu0
    %v6640 = vpop.f32.mrb[0].mxu0
    %v6641 = vadd.f32 0.0, %v6640
    %v6642 = vpop.f32.mrb[0].mxu0
    %6643 = vmatprep.mubr.bf16.mxu0 0
    %6644 = vmatmul.mubr.bf16.gmra.mrb[0].mxu0 %v6535
    %v6645 = vpop.f32.mrb[0].mxu0
    %v6646 = vadd.f32 0.0, %v6645
    %v6647 = vpop.f32.mrb[0].mxu0
    %v6648 = vpop.f32.mrb[0].mxu0
    %v6649 = vadd.f32 0.0, %v6648
    %v6650 = vpop.f32.mrb[0].mxu0
    %6651 = vmatprep.mubr.bf16.mxu0 0
    %6652 = vmatmul.mubr.bf16.gmra.mrb[0].mxu0 %v6538
    %v6653 = vpop.f32.mrb[0].mxu0
    %v6654 = vadd.f32 0.0, %v6653
    %v6655 = vpop.f32.mrb[0].mxu0
    %v6656 = vpop.f32.mrb[0].mxu0
    %v6657 = vadd.f32 0.0, %v6656
    %v6658 = vpop.f32.mrb[0].mxu0
    %6659 = vmatprep.mubr.bf16.mxu0 0
    %6660 = vmatmul.mubr.bf16.gmra.mrb[0].mxu0 %v6541
    %v6661 = vpop.f32.mrb[0].mxu0
    %v6662 = vadd.f32 0.0, %v6661
    %v6663 = vpop.f32.mrb[0].mxu0
    %v6664 = vpop.f32.mrb[0].mxu0
    %v6665 = vadd.f32 0.0, %v6664
    %v6666 = vpop.f32.mrb[0].mxu0
    %6667 = vmatprep.mubr.bf16.mxu0 0
    %6668 = vmatmul.mubr.bf16.gmra.mrb[0].mxu0 %v6544
    %v6669 = vpop.f32.mrb[0].mxu0
    %v6670 = vadd.f32 0.0, %v6669
    %v6671 = vpop.f32.mrb[0].mxu0
    %v6672 = vpop.f32.mrb[0].mxu0
    %v6673 = vadd.f32 0.0, %v6672
    %v6674 = vpop.f32.mrb[0].mxu0
    %6675 = vmatprep.mubr.bf16.mxu0 0
    %6676 = vmatmul.mubr.bf16.gmra.mrb[0].mxu0 %v6547
    %v6677 = vpop.f32.mrb[0].mxu0
    %v6678 = vadd.f32 0.0, %v6677
    %v6679 = vpop.f32.mrb[0].mxu0
    %v6680 = vpop.f32.mrb[0].mxu0
    %v6681 = vadd.f32 0.0, %v6680
    %v6682 = vpop.f32.mrb[0].mxu0
    %6683 = vmatprep.mubr.bf16.mxu0 0
    %6684 = vmatmul.mubr.bf16.gmra.mrb[0].mxu0 %v6550
    %v6685 = vpop.f32.mrb[0].mxu0
    %v6686 = vadd.f32 0.0, %v6685
    %v6687 = vpop.f32.mrb[0].mxu0
    %v6688 = vpop.f32.mrb[0].mxu0
    %v6689 = vadd.f32 0.0, %v6688
    %v6690 = vpop.f32.mrb[0].mxu0
    %6691 = vmatprep.mubr.bf16.mxu0 0
    %6692 = vmatmul.mubr.bf16.gmra.mrb[0].mxu0 %v6553
    %v6693 = vpop.f32.mrb[0].mxu0
    %v6694 = vadd.f32 0.0, %v6693
    %v6695 = vpop.f32.mrb[0].mxu0
    %v6696 = vpop.f32.mrb[0].mxu0
    %v6697 = vpop.f32.mrb[0].mxu0
    %6698 = vdwg.mxu0
    %v6699 = vadd.f32 %v6428, %v6590
    %v6700 = vadd.f32 %v6429, %v6593
    %v6701 = vadd.f32 %v6430, %v6598
    %v6702 = vadd.f32 %v6431, %v6601
    %v6703 = vadd.f32 %v6432, %v6606
    %v6704 = vadd.f32 %v6433, %v6609
    %v6705 = vadd.f32 %v6434, %v6614
    %v6706 = vadd.f32 %v6435, %v6617
    %v6707 = vadd.f32 %v6436, %v6622
    %v6708 = vadd.f32 %v6437, %v6625
    %v6709 = vadd.f32 %v6438, %v6630
    %v6710 = vadd.f32 %v6439, %v6633
    %v6711 = vadd.f32 %v6440, %v6638
    %v6712 = vadd.f32 %v6441, %v6641
    %v6713 = vadd.f32 %v6442, %v6646
    %v6714 = vadd.f32 %v6443, %v6649
    %v6715 = vadd.f32 %v6444, %v6654
    %v6716 = vadd.f32 %v6445, %v6657
    %v6717 = vadd.f32 %v6446, %v6662
    %v6718 = vadd.f32 %v6447, %v6665
    %v6719 = vadd.f32 %v6448, %v6670
    %v6720 = vadd.f32 %v6449, %v6673
    %v6721 = vadd.f32 %v6450, %v6678
    %v6722 = vadd.f32 %v6451, %v6681
    %v6723 = vadd.f32 %v6452, %v6686
    %v6724 = vadd.f32 %v6453, %v6689
    %v6725 = vadd.f32 %v6454, %v6694
    %v6726 = vld [vmem:[#allocation5 + $0x30] sm:$0xff]
    %v6727 = vld [vmem:[#allocation5 + $0x38] sm:$0xff]
    %v6728 = vld [vmem:[#allocation5 + $0x40] sm:$0xff]
    %v6729 = vld [vmem:[#allocation5 + $0x48] sm:$0xff]
    %v6730 = vld [vmem:[#allocation5 + $0x50] sm:$0xff]
    %v6731 = vld [vmem:[#allocation5 + $0x58] sm:$0xff]
    %v6732 = vld [vmem:[#allocation5 + $0x60] sm:$0xff]
    %v6733 = vld [vmem:[#allocation5 + $0x68] sm:$0xff]
    %v6734 = vld [vmem:[#allocation5 + $0x70] sm:$0xff]
    %v6735 = vld [vmem:[#allocation5 + $0x78] sm:$0xff]
    %v6736 = vld [vmem:[#allocation5 + $0x80] sm:$0xff]
    %v6737 = vld [vmem:[#allocation5 + $0x88] sm:$0xff]
    %v6738 = vld [vmem:[#allocation5 + $0x90] sm:$0xff]
    %v6739 = vld [vmem:[#allocation5 + $0x98] sm:$0xff]
    %v6740 = vld [vmem:[#allocation5 + $0xa0] sm:$0xff]
    %v6741 = vld [vmem:[#allocation5 + $0xa8] sm:$0xff]
    %v6742 = vld [vmem:[#allocation5 + $0xb0] sm:$0xff]
    %v6743 = vld [vmem:[#allocation5 + $0xb8] sm:$0xff]
    %v6744 = vld [vmem:[#allocation5 + $0xc0] sm:$0xff]
    %v6745 = vld [vmem:[#allocation5 + $0xc8] sm:$0xff]
    %v6746 = vld [vmem:[#allocation5 + $0xd0] sm:$0xff]
    %v6747 = vld [vmem:[#allocation5 + $0xd8] sm:$0xff]
    %v6748 = vld [vmem:[#allocation5 + $0xe0] sm:$0xff]
    %v6749 = vld [vmem:[#allocation5 + $0xe8] sm:$0xff]
    %v6750 = vld [vmem:[#allocation5 + $0xf0] sm:$0xff]
    %v6751 = vld [vmem:[#allocation5 + $0xf8] sm:$0xff]
    %v6752 = vld [vmem:[#allocation5 + $0x100] sm:$0xff]
    %v6753 = vpack.c.bf16 %v6727, %v6726
    %v6754 = vpack.c.bf16 %v6729, %v6728
    %v6755 = vpack.c.bf16 %v6731, %v6730
    %v6756 = vpack.c.bf16 %v6733, %v6732
    %v6757 = vpack.c.bf16 %v6735, %v6734
    %v6758 = vpack.c.bf16 %v6737, %v6736
    %v6759 = vpack.c.bf16 %v6739, %v6738
    %v6760 = vpack.c.bf16 %v6741, %v6740
    %v6761 = vpack.c.bf16 %v6743, %v6742
    %v6762 = vpack.c.bf16 %v6745, %v6744
    %v6763 = vpack.c.bf16 %v6747, %v6746
    %v6764 = vpack.c.bf16 %v6749, %v6748
    %v6765 = vpack.c.bf16 %v6751, %v6750
    %v6766 = vpack.c.bf16 %v6752, %v6752
    %s6767 = scalar_lea.vmem %s3, 96
    %v6768 = vld [vmem:[%s6767] sm:$0xf]
    %v6769 = vld [vmem:[%s6767 + $0x4] sm:$0xf]
    %v6770 = vld [vmem:[%s6767 + $0x8] sm:$0xf]
    %v6771 = vld [vmem:[%s6767 + $0xc] sm:$0xf]
    %v6776 = vunpack.c.l.b16 %v6768
    %v6777 = vunpack.c.l.b16 %v6769
    %v6778 = vunpack.c.l.b16 %v6770
    %v6779 = vunpack.c.l.b16 %v6771
    %v6780 = vpack.c.b16 %v6777, %v6776
    %v6781 = vpack.c.b16 %v6779, %v6778
    %v6785 = vsel %vm655, %v6753, 0
    %v6788 = vsel %vm655, %v6754, 0
    %v6791 = vsel %vm655, %v6755, 0
    %v6794 = vsel %vm655, %v6756, 0
    %v6797 = vsel %vm655, %v6757, 0
    %v6800 = vsel %vm655, %v6758, 0
    %v6803 = vsel %vm655, %v6759, 0
    %v6806 = vsel %vm655, %v6760, 0
    %v6809 = vsel %vm655, %v6761, 0
    %v6812 = vsel %vm655, %v6762, 0
    %v6815 = vsel %vm655, %v6763, 0
    %v6818 = vsel %vm655, %v6764, 0
    %v6821 = vsel %vm655, %v6765, 0
    %v6824 = vsel %vm655, %v6766, 0
    %6826 = vmatprep.subr.bf16.mxu0 0
    %6827 = vmatpush1.bf16.msra.mxu0 %v6780
    %6828 = vmatprep.subr.bf16.mxu0 0
    %6829 = vmatpush1.bf16.msra.mxu0 %v6781
    %6830 = vmatprep.subr.bf16.mxu0 0
    %6831 = vmatpush1.bf16.msra.mxu0 0
    %6832 = vmatprep.subr.bf16.mxu0 0
    %6833 = vmatpush1.bf16.msra.mxu0 0
    %6834 = vmatprep.subr.bf16.mxu0 0
    %6835 = vmatpush1.bf16.msra.mxu0 0
    %6836 = vmatprep.subr.bf16.mxu0 0
    %6837 = vmatpush1.bf16.msra.mxu0 0
    %6838 = vmatprep.subr.bf16.mxu0 0
    %6839 = vmatpush1.bf16.msra.mxu0 0
    %6840 = vmatprep.subr.bf16.mxu0 0
    %6841 = vmatpush1.bf16.msra.mxu0 0
    %6842 = vmatprep.subr.bf16.mxu0 0
    %6843 = vmatpush1.bf16.msra.mxu0 0
    %6844 = vmatprep.subr.bf16.mxu0 0
    %6845 = vmatpush1.bf16.msra.mxu0 0
    %6846 = vmatprep.subr.bf16.mxu0 0
    %6847 = vmatpush1.bf16.msra.mxu0 0
    %6848 = vmatprep.subr.bf16.mxu0 0
    %6849 = vmatpush1.bf16.msra.mxu0 0
    %6850 = vmatprep.subr.bf16.mxu0 0
    %6851 = vmatpush1.bf16.msra.mxu0 0
    %6852 = vmatprep.subr.bf16.mxu0 0
    %6853 = vmatpush1.bf16.msra.mxu0 0
    %6854 = vmatprep.subr.bf16.mxu0 0
    %6855 = vmatpush1.bf16.msra.mxu0 0
    %6856 = vmatprep.subr.bf16.mxu0 0
    %6857 = vmatpush1.bf16.msra.mxu0 0
    %6858 = vmatprep.mubr.bf16.mxu0 0
    %6859 = vmatmul.mubr.bf16.gmra.mrb[0].mxu0 %v6785
    %v6860 = vpop.f32.mrb[0].mxu0
    %v6861 = vadd.f32 0.0, %v6860
    %v6862 = vpop.f32.mrb[0].mxu0
    %v6863 = vpop.f32.mrb[0].mxu0
    %v6864 = vadd.f32 0.0, %v6863
    %v6865 = vpop.f32.mrb[0].mxu0
    %6866 = vmatprep.mubr.bf16.mxu0 0
    %6867 = vmatmul.mubr.bf16.gmra.mrb[0].mxu0 %v6788
    %v6868 = vpop.f32.mrb[0].mxu0
    %v6869 = vadd.f32 0.0, %v6868
    %v6870 = vpop.f32.mrb[0].mxu0
    %v6871 = vpop.f32.mrb[0].mxu0
    %v6872 = vadd.f32 0.0, %v6871
    %v6873 = vpop.f32.mrb[0].mxu0
    %6874 = vmatprep.mubr.bf16.mxu0 0
    %6875 = vmatmul.mubr.bf16.gmra.mrb[0].mxu0 %v6791
    %v6876 = vpop.f32.mrb[0].mxu0
    %v6877 = vadd.f32 0.0, %v6876
    %v6878 = vpop.f32.mrb[0].mxu0
    %v6879 = vpop.f32.mrb[0].mxu0
    %v6880 = vadd.f32 0.0, %v6879
    %v6881 = vpop.f32.mrb[0].mxu0
    %6882 = vmatprep.mubr.bf16.mxu0 0
    %6883 = vmatmul.mubr.bf16.gmra.mrb[0].mxu0 %v6794
    %v6884 = vpop.f32.mrb[0].mxu0
    %v6885 = vadd.f32 0.0, %v6884
    %v6886 = vpop.f32.mrb[0].mxu0
    %v6887 = vpop.f32.mrb[0].mxu0
    %v6888 = vadd.f32 0.0, %v6887
    %v6889 = vpop.f32.mrb[0].mxu0
    %6890 = vmatprep.mubr.bf16.mxu0 0
    %6891 = vmatmul.mubr.bf16.gmra.mrb[0].mxu0 %v6797
    %v6892 = vpop.f32.mrb[0].mxu0
    %v6893 = vadd.f32 0.0, %v6892
    %v6894 = vpop.f32.mrb[0].mxu0
    %v6895 = vpop.f32.mrb[0].mxu0
    %v6896 = vadd.f32 0.0, %v6895
    %v6897 = vpop.f32.mrb[0].mxu0
    %6898 = vmatprep.mubr.bf16.mxu0 0
    %6899 = vmatmul.mubr.bf16.gmra.mrb[0].mxu0 %v6800
    %v6900 = vpop.f32.mrb[0].mxu0
    %v6901 = vadd.f32 0.0, %v6900
    %v6902 = vpop.f32.mrb[0].mxu0
    %v6903 = vpop.f32.mrb[0].mxu0
    %v6904 = vadd.f32 0.0, %v6903
    %v6905 = vpop.f32.mrb[0].mxu0
    %6906 = vmatprep.mubr.bf16.mxu0 0
    %6907 = vmatmul.mubr.bf16.gmra.mrb[0].mxu0 %v6803
    %v6908 = vpop.f32.mrb[0].mxu0
    %v6909 = vadd.f32 0.0, %v6908
    %v6910 = vpop.f32.mrb[0].mxu0
    %v6911 = vpop.f32.mrb[0].mxu0
    %v6912 = vadd.f32 0.0, %v6911
    %v6913 = vpop.f32.mrb[0].mxu0
    %6914 = vmatprep.mubr.bf16.mxu0 0
    %6915 = vmatmul.mubr.bf16.gmra.mrb[0].mxu0 %v6806
    %v6916 = vpop.f32.mrb[0].mxu0
    %v6917 = vadd.f32 0.0, %v6916
    %v6918 = vpop.f32.mrb[0].mxu0
    %v6919 = vpop.f32.mrb[0].mxu0
    %v6920 = vadd.f32 0.0, %v6919
    %v6921 = vpop.f32.mrb[0].mxu0
    %6922 = vmatprep.mubr.bf16.mxu0 0
    %6923 = vmatmul.mubr.bf16.gmra.mrb[0].mxu0 %v6809
    %v6924 = vpop.f32.mrb[0].mxu0
    %v6925 = vadd.f32 0.0, %v6924
    %v6926 = vpop.f32.mrb[0].mxu0
    %v6927 = vpop.f32.mrb[0].mxu0
    %v6928 = vadd.f32 0.0, %v6927
    %v6929 = vpop.f32.mrb[0].mxu0
    %6930 = vmatprep.mubr.bf16.mxu0 0
    %6931 = vmatmul.mubr.bf16.gmra.mrb[0].mxu0 %v6812
    %v6932 = vpop.f32.mrb[0].mxu0
    %v6933 = vadd.f32 0.0, %v6932
    %v6934 = vpop.f32.mrb[0].mxu0
    %v6935 = vpop.f32.mrb[0].mxu0
    %v6936 = vadd.f32 0.0, %v6935
    %v6937 = vpop.f32.mrb[0].mxu0
    %6938 = vmatprep.mubr.bf16.mxu0 0
    %6939 = vmatmul.mubr.bf16.gmra.mrb[0].mxu0 %v6815
    %v6940 = vpop.f32.mrb[0].mxu0
    %v6941 = vadd.f32 0.0, %v6940
    %v6942 = vpop.f32.mrb[0].mxu0
    %v6943 = vpop.f32.mrb[0].mxu0
    %v6944 = vadd.f32 0.0, %v6943
    %v6945 = vpop.f32.mrb[0].mxu0
    %6946 = vmatprep.mubr.bf16.mxu0 0
    %6947 = vmatmul.mubr.bf16.gmra.mrb[0].mxu0 %v6818
    %v6948 = vpop.f32.mrb[0].mxu0
    %v6949 = vadd.f32 0.0, %v6948
    %v6950 = vpop.f32.mrb[0].mxu0
    %v6951 = vpop.f32.mrb[0].mxu0
    %v6952 = vadd.f32 0.0, %v6951
    %v6953 = vpop.f32.mrb[0].mxu0
    %6954 = vmatprep.mubr.bf16.mxu0 0
    %6955 = vmatmul.mubr.bf16.gmra.mrb[0].mxu0 %v6821
    %v6956 = vpop.f32.mrb[0].mxu0
    %v6957 = vadd.f32 0.0, %v6956
    %v6958 = vpop.f32.mrb[0].mxu0
    %v6959 = vpop.f32.mrb[0].mxu0
    %v6960 = vadd.f32 0.0, %v6959
    %v6961 = vpop.f32.mrb[0].mxu0
    %6962 = vmatprep.mubr.bf16.mxu0 0
    %6963 = vmatmul.mubr.bf16.gmra.mrb[0].mxu0 %v6824
    %v6964 = vpop.f32.mrb[0].mxu0
    %v6965 = vadd.f32 0.0, %v6964
    %v6966 = vpop.f32.mrb[0].mxu0
    %v6967 = vpop.f32.mrb[0].mxu0
    %v6968 = vpop.f32.mrb[0].mxu0
    %6969 = vdwg.mxu0
    %v6970 = vadd.f32 %v6699, %v6861
    %v6971 = vadd.f32 %v6700, %v6864
    %v6972 = vadd.f32 %v6701, %v6869
    %v6973 = vadd.f32 %v6702, %v6872
    %v6974 = vadd.f32 %v6703, %v6877
    %v6975 = vadd.f32 %v6704, %v6880
    %v6976 = vadd.f32 %v6705, %v6885
    %v6977 = vadd.f32 %v6706, %v6888
    %v6978 = vadd.f32 %v6707, %v6893
    %v6979 = vadd.f32 %v6708, %v6896
    %v6980 = vadd.f32 %v6709, %v6901
    %v6981 = vadd.f32 %v6710, %v6904
    %v6982 = vadd.f32 %v6711, %v6909
    %v6983 = vadd.f32 %v6712, %v6912
    %v6984 = vadd.f32 %v6713, %v6917
    %v6985 = vadd.f32 %v6714, %v6920
    %v6986 = vadd.f32 %v6715, %v6925
    %v6987 = vadd.f32 %v6716, %v6928
    %v6988 = vadd.f32 %v6717, %v6933
    %v6989 = vadd.f32 %v6718, %v6936
    %v6990 = vadd.f32 %v6719, %v6941
    %v6991 = vadd.f32 %v6720, %v6944
    %v6992 = vadd.f32 %v6721, %v6949
    %v6993 = vadd.f32 %v6722, %v6952
    %v6994 = vadd.f32 %v6723, %v6957
    %v6995 = vadd.f32 %v6724, %v6960
    %v6996 = vadd.f32 %v6725, %v6965
    %v6997 = vld [vmem:[#allocation5 + $0x32] sm:$0xff]
    %v6998 = vld [vmem:[#allocation5 + $0x3a] sm:$0xff]
    %v6999 = vld [vmem:[#allocation5 + $0x42] sm:$0xff]
    %v7000 = vld [vmem:[#allocation5 + $0x4a] sm:$0xff]
    %v7001 = vld [vmem:[#allocation5 + $0x52] sm:$0xff]
    %v7002 = vld [vmem:[#allocation5 + $0x5a] sm:$0xff]
    %v7003 = vld [vmem:[#allocation5 + $0x62] sm:$0xff]
    %v7004 = vld [vmem:[#allocation5 + $0x6a] sm:$0xff]
    %v7005 = vld [vmem:[#allocation5 + $0x72] sm:$0xff]
    %v7006 = vld [vmem:[#allocation5 + $0x7a] sm:$0xff]
    %v7007 = vld [vmem:[#allocation5 + $0x82] sm:$0xff]
    %v7008 = vld [vmem:[#allocation5 + $0x8a] sm:$0xff]
    %v7009 = vld [vmem:[#allocation5 + $0x92] sm:$0xff]
    %v7010 = vld [vmem:[#allocation5 + $0x9a] sm:$0xff]
    %v7011 = vld [vmem:[#allocation5 + $0xa2] sm:$0xff]
    %v7012 = vld [vmem:[#allocation5 + $0xaa] sm:$0xff]
    %v7013 = vld [vmem:[#allocation5 + $0xb2] sm:$0xff]
    %v7014 = vld [vmem:[#allocation5 + $0xba] sm:$0xff]
    %v7015 = vld [vmem:[#allocation5 + $0xc2] sm:$0xff]
    %v7016 = vld [vmem:[#allocation5 + $0xca] sm:$0xff]
    %v7017 = vld [vmem:[#allocation5 + $0xd2] sm:$0xff]
    %v7018 = vld [vmem:[#allocation5 + $0xda] sm:$0xff]
    %v7019 = vld [vmem:[#allocation5 + $0xe2] sm:$0xff]
    %v7020 = vld [vmem:[#allocation5 + $0xea] sm:$0xff]
    %v7021 = vld [vmem:[#allocation5 + $0xf2] sm:$0xff]
    %v7022 = vld [vmem:[#allocation5 + $0xfa] sm:$0xff]
    %v7023 = vld [vmem:[#allocation5 + $0x102] sm:$0xff]
    %v7024 = vpack.c.bf16 %v6998, %v6997
    %v7025 = vpack.c.bf16 %v7000, %v6999
    %v7026 = vpack.c.bf16 %v7002, %v7001
    %v7027 = vpack.c.bf16 %v7004, %v7003
    %v7028 = vpack.c.bf16 %v7006, %v7005
    %v7029 = vpack.c.bf16 %v7008, %v7007
    %v7030 = vpack.c.bf16 %v7010, %v7009
    %v7031 = vpack.c.bf16 %v7012, %v7011
    %v7032 = vpack.c.bf16 %v7014, %v7013
    %v7033 = vpack.c.bf16 %v7016, %v7015
    %v7034 = vpack.c.bf16 %v7018, %v7017
    %v7035 = vpack.c.bf16 %v7020, %v7019
    %v7036 = vpack.c.bf16 %v7022, %v7021
    %v7037 = vpack.c.bf16 %v7023, %v7023
    %s7038 = scalar_lea.vmem %s3, 112
    %v7039 = vld [vmem:[%s7038] sm:$0xf]
    %v7040 = vld [vmem:[%s7038 + $0x4] sm:$0xf]
    %v7041 = vld [vmem:[%s7038 + $0x8] sm:$0xf]
    %v7042 = vld [vmem:[%s7038 + $0xc] sm:$0xf]
    %v7047 = vunpack.c.l.b16 %v7039
    %v7048 = vunpack.c.l.b16 %v7040
    %v7049 = vunpack.c.l.b16 %v7041
    %v7050 = vunpack.c.l.b16 %v7042
    %v7051 = vpack.c.b16 %v7048, %v7047
    %v7052 = vpack.c.b16 %v7050, %v7049
    %v7056 = vsel %vm655, %v7024, 0
    %v7059 = vsel %vm655, %v7025, 0
    %v7062 = vsel %vm655, %v7026, 0
    %v7065 = vsel %vm655, %v7027, 0
    %v7068 = vsel %vm655, %v7028, 0
    %v7071 = vsel %vm655, %v7029, 0
    %v7074 = vsel %vm655, %v7030, 0
    %v7077 = vsel %vm655, %v7031, 0
    %v7080 = vsel %vm655, %v7032, 0
    %v7083 = vsel %vm655, %v7033, 0
    %v7086 = vsel %vm655, %v7034, 0
    %v7089 = vsel %vm655, %v7035, 0
    %v7092 = vsel %vm655, %v7036, 0
    %v7095 = vsel %vm655, %v7037, 0
    %7097 = vmatprep.subr.bf16.mxu0 0
    %7098 = vmatpush1.bf16.msra.mxu0 %v7051
    %7099 = vmatprep.subr.bf16.mxu0 0
    %7100 = vmatpush1.bf16.msra.mxu0 %v7052
    %7101 = vmatprep.subr.bf16.mxu0 0
    %7102 = vmatpush1.bf16.msra.mxu0 0
    %7103 = vmatprep.subr.bf16.mxu0 0
    %7104 = vmatpush1.bf16.msra.mxu0 0
    %7105 = vmatprep.subr.bf16.mxu0 0
    %7106 = vmatpush1.bf16.msra.mxu0 0
    %7107 = vmatprep.subr.bf16.mxu0 0
    %7108 = vmatpush1.bf16.msra.mxu0 0
    %7109 = vmatprep.subr.bf16.mxu0 0
    %7110 = vmatpush1.bf16.msra.mxu0 0
    %7111 = vmatprep.subr.bf16.mxu0 0
    %7112 = vmatpush1.bf16.msra.mxu0 0
    %7113 = vmatprep.subr.bf16.mxu0 0
    %7114 = vmatpush1.bf16.msra.mxu0 0
    %7115 = vmatprep.subr.bf16.mxu0 0
    %7116 = vmatpush1.bf16.msra.mxu0 0
    %7117 = vmatprep.subr.bf16.mxu0 0
    %7118 = vmatpush1.bf16.msra.mxu0 0
    %7119 = vmatprep.subr.bf16.mxu0 0
    %7120 = vmatpush1.bf16.msra.mxu0 0
    %7121 = vmatprep.subr.bf16.mxu0 0
    %7122 = vmatpush1.bf16.msra.mxu0 0
    %7123 = vmatprep.subr.bf16.mxu0 0
    %7124 = vmatpush1.bf16.msra.mxu0 0
    %7125 = vmatprep.subr.bf16.mxu0 0
    %7126 = vmatpush1.bf16.msra.mxu0 0
    %7127 = vmatprep.subr.bf16.mxu0 0
    %7128 = vmatpush1.bf16.msra.mxu0 0
    %7129 = vmatprep.mubr.bf16.mxu0 0
    %7130 = vmatmul.mubr.bf16.gmra.mrb[0].mxu0 %v7056
    %v7131 = vpop.f32.mrb[0].mxu0
    %v7132 = vadd.f32 0.0, %v7131
    %v7133 = vpop.f32.mrb[0].mxu0
    %v7134 = vpop.f32.mrb[0].mxu0
    %v7135 = vadd.f32 0.0, %v7134
    %v7136 = vpop.f32.mrb[0].mxu0
    %7137 = vmatprep.mubr.bf16.mxu0 0
    %7138 = vmatmul.mubr.bf16.gmra.mrb[0].mxu0 %v7059
    %v7139 = vpop.f32.mrb[0].mxu0
    %v7140 = vadd.f32 0.0, %v7139
    %v7141 = vpop.f32.mrb[0].mxu0
    %v7142 = vpop.f32.mrb[0].mxu0
    %v7143 = vadd.f32 0.0, %v7142
    %v7144 = vpop.f32.mrb[0].mxu0
    %7145 = vmatprep.mubr.bf16.mxu0 0
    %7146 = vmatmul.mubr.bf16.gmra.mrb[0].mxu0 %v7062
    %v7147 = vpop.f32.mrb[0].mxu0
    %v7148 = vadd.f32 0.0, %v7147
    %v7149 = vpop.f32.mrb[0].mxu0
    %v7150 = vpop.f32.mrb[0].mxu0
    %v7151 = vadd.f32 0.0, %v7150
    %v7152 = vpop.f32.mrb[0].mxu0
    %7153 = vmatprep.mubr.bf16.mxu0 0
    %7154 = vmatmul.mubr.bf16.gmra.mrb[0].mxu0 %v7065
    %v7155 = vpop.f32.mrb[0].mxu0
    %v7156 = vadd.f32 0.0, %v7155
    %v7157 = vpop.f32.mrb[0].mxu0
    %v7158 = vpop.f32.mrb[0].mxu0
    %v7159 = vadd.f32 0.0, %v7158
    %v7160 = vpop.f32.mrb[0].mxu0
    %7161 = vmatprep.mubr.bf16.mxu0 0
    %7162 = vmatmul.mubr.bf16.gmra.mrb[0].mxu0 %v7068
    %v7163 = vpop.f32.mrb[0].mxu0
    %v7164 = vadd.f32 0.0, %v7163
    %v7165 = vpop.f32.mrb[0].mxu0
    %v7166 = vpop.f32.mrb[0].mxu0
    %v7167 = vadd.f32 0.0, %v7166
    %v7168 = vpop.f32.mrb[0].mxu0
    %7169 = vmatprep.mubr.bf16.mxu0 0
    %7170 = vmatmul.mubr.bf16.gmra.mrb[0].mxu0 %v7071
    %v7171 = vpop.f32.mrb[0].mxu0
    %v7172 = vadd.f32 0.0, %v7171
    %v7173 = vpop.f32.mrb[0].mxu0
    %v7174 = vpop.f32.mrb[0].mxu0
    %v7175 = vadd.f32 0.0, %v7174
    %v7176 = vpop.f32.mrb[0].mxu0
    %7177 = vmatprep.mubr.bf16.mxu0 0
    %7178 = vmatmul.mubr.bf16.gmra.mrb[0].mxu0 %v7074
    %v7179 = vpop.f32.mrb[0].mxu0
    %v7180 = vadd.f32 0.0, %v7179
    %v7181 = vpop.f32.mrb[0].mxu0
    %v7182 = vpop.f32.mrb[0].mxu0
    %v7183 = vadd.f32 0.0, %v7182
    %v7184 = vpop.f32.mrb[0].mxu0
    %7185 = vmatprep.mubr.bf16.mxu0 0
    %7186 = vmatmul.mubr.bf16.gmra.mrb[0].mxu0 %v7077
    %v7187 = vpop.f32.mrb[0].mxu0
    %v7188 = vadd.f32 0.0, %v7187
    %v7189 = vpop.f32.mrb[0].mxu0
    %v7190 = vpop.f32.mrb[0].mxu0
    %v7191 = vadd.f32 0.0, %v7190
    %v7192 = vpop.f32.mrb[0].mxu0
    %7193 = vmatprep.mubr.bf16.mxu0 0
    %7194 = vmatmul.mubr.bf16.gmra.mrb[0].mxu0 %v7080
    %v7195 = vpop.f32.mrb[0].mxu0
    %v7196 = vadd.f32 0.0, %v7195
    %v7197 = vpop.f32.mrb[0].mxu0
    %v7198 = vpop.f32.mrb[0].mxu0
    %v7199 = vadd.f32 0.0, %v7198
    %v7200 = vpop.f32.mrb[0].mxu0
    %7201 = vmatprep.mubr.bf16.mxu0 0
    %7202 = vmatmul.mubr.bf16.gmra.mrb[0].mxu0 %v7083
    %v7203 = vpop.f32.mrb[0].mxu0
    %v7204 = vadd.f32 0.0, %v7203
    %v7205 = vpop.f32.mrb[0].mxu0
    %v7206 = vpop.f32.mrb[0].mxu0
    %v7207 = vadd.f32 0.0, %v7206
    %v7208 = vpop.f32.mrb[0].mxu0
    %7209 = vmatprep.mubr.bf16.mxu0 0
    %7210 = vmatmul.mubr.bf16.gmra.mrb[0].mxu0 %v7086
    %v7211 = vpop.f32.mrb[0].mxu0
    %v7212 = vadd.f32 0.0, %v7211
    %v7213 = vpop.f32.mrb[0].mxu0
    %v7214 = vpop.f32.mrb[0].mxu0
    %v7215 = vadd.f32 0.0, %v7214
    %v7216 = vpop.f32.mrb[0].mxu0
    %7217 = vmatprep.mubr.bf16.mxu0 0
    %7218 = vmatmul.mubr.bf16.gmra.mrb[0].mxu0 %v7089
    %v7219 = vpop.f32.mrb[0].mxu0
    %v7220 = vadd.f32 0.0, %v7219
    %v7221 = vpop.f32.mrb[0].mxu0
    %v7222 = vpop.f32.mrb[0].mxu0
    %v7223 = vadd.f32 0.0, %v7222
    %v7224 = vpop.f32.mrb[0].mxu0
    %7225 = vmatprep.mubr.bf16.mxu0 0
    %7226 = vmatmul.mubr.bf16.gmra.mrb[0].mxu0 %v7092
    %v7227 = vpop.f32.mrb[0].mxu0
    %v7228 = vadd.f32 0.0, %v7227
    %v7229 = vpop.f32.mrb[0].mxu0
    %v7230 = vpop.f32.mrb[0].mxu0
    %v7231 = vadd.f32 0.0, %v7230
    %v7232 = vpop.f32.mrb[0].mxu0
    %7233 = vmatprep.mubr.bf16.mxu0 0
    %7234 = vmatmul.mubr.bf16.gmra.mrb[0].mxu0 %v7095
    %v7235 = vpop.f32.mrb[0].mxu0
    %v7236 = vadd.f32 0.0, %v7235
    %v7237 = vpop.f32.mrb[0].mxu0
    %v7238 = vpop.f32.mrb[0].mxu0
    %v7239 = vpop.f32.mrb[0].mxu0
    %7240 = vdwg.mxu0
    %v7241 = vadd.f32 %v6970, %v7132
    %v7242 = vadd.f32 %v6971, %v7135
    %v7243 = vadd.f32 %v6972, %v7140
    %v7244 = vadd.f32 %v6973, %v7143
    %v7245 = vadd.f32 %v6974, %v7148
    %v7246 = vadd.f32 %v6975, %v7151
    %v7247 = vadd.f32 %v6976, %v7156
    %v7248 = vadd.f32 %v6977, %v7159
    %v7249 = vadd.f32 %v6978, %v7164
    %v7250 = vadd.f32 %v6979, %v7167
    %v7251 = vadd.f32 %v6980, %v7172
    %v7252 = vadd.f32 %v6981, %v7175
    %v7253 = vadd.f32 %v6982, %v7180
    %v7254 = vadd.f32 %v6983, %v7183
    %v7255 = vadd.f32 %v6984, %v7188
    %v7256 = vadd.f32 %v6985, %v7191
    %v7257 = vadd.f32 %v6986, %v7196
    %v7258 = vadd.f32 %v6987, %v7199
    %v7259 = vadd.f32 %v6988, %v7204
    %v7260 = vadd.f32 %v6989, %v7207
    %v7261 = vadd.f32 %v6990, %v7212
    %v7262 = vadd.f32 %v6991, %v7215
    %v7263 = vadd.f32 %v6992, %v7220
    %v7264 = vadd.f32 %v6993, %v7223
    %v7265 = vadd.f32 %v6994, %v7228
    %v7266 = vadd.f32 %v6995, %v7231
    %v7267 = vadd.f32 %v6996, %v7236
    %v7268 = vld [vmem:[#allocation5 + $0x34] sm:$0xff]
    %v7269 = vld [vmem:[#allocation5 + $0x3c] sm:$0xff]
    %v7270 = vld [vmem:[#allocation5 + $0x44] sm:$0xff]
    %v7271 = vld [vmem:[#allocation5 + $0x4c] sm:$0xff]
    %v7272 = vld [vmem:[#allocation5 + $0x54] sm:$0xff]
    %v7273 = vld [vmem:[#allocation5 + $0x5c] sm:$0xff]
    %v7274 = vld [vmem:[#allocation5 + $0x64] sm:$0xff]
    %v7275 = vld [vmem:[#allocation5 + $0x6c] sm:$0xff]
    %v7276 = vld [vmem:[#allocation5 + $0x74] sm:$0xff]
    %v7277 = vld [vmem:[#allocation5 + $0x7c] sm:$0xff]
    %v7278 = vld [vmem:[#allocation5 + $0x84] sm:$0xff]
    %v7279 = vld [vmem:[#allocation5 + $0x8c] sm:$0xff]
    %v7280 = vld [vmem:[#allocation5 + $0x94] sm:$0xff]
    %v7281 = vld [vmem:[#allocation5 + $0x9c] sm:$0xff]
    %v7282 = vld [vmem:[#allocation5 + $0xa4] sm:$0xff]
    %v7283 = vld [vmem:[#allocation5 + $0xac] sm:$0xff]
    %v7284 = vld [vmem:[#allocation5 + $0xb4] sm:$0xff]
    %v7285 = vld [vmem:[#allocation5 + $0xbc] sm:$0xff]
    %v7286 = vld [vmem:[#allocation5 + $0xc4] sm:$0xff]
    %v7287 = vld [vmem:[#allocation5 + $0xcc] sm:$0xff]
    %v7288 = vld [vmem:[#allocation5 + $0xd4] sm:$0xff]
    %v7289 = vld [vmem:[#allocation5 + $0xdc] sm:$0xff]
    %v7290 = vld [vmem:[#allocation5 + $0xe4] sm:$0xff]
    %v7291 = vld [vmem:[#allocation5 + $0xec] sm:$0xff]
    %v7292 = vld [vmem:[#allocation5 + $0xf4] sm:$0xff]
    %v7293 = vld [vmem:[#allocation5 + $0xfc] sm:$0xff]
    %v7294 = vld [vmem:[#allocation5 + $0x104] sm:$0xff]
    %v7295 = vpack.c.bf16 %v7269, %v7268
    %v7296 = vpack.c.bf16 %v7271, %v7270
    %v7297 = vpack.c.bf16 %v7273, %v7272
    %v7298 = vpack.c.bf16 %v7275, %v7274
    %v7299 = vpack.c.bf16 %v7277, %v7276
    %v7300 = vpack.c.bf16 %v7279, %v7278
    %v7301 = vpack.c.bf16 %v7281, %v7280
    %v7302 = vpack.c.bf16 %v7283, %v7282
    %v7303 = vpack.c.bf16 %v7285, %v7284
    %v7304 = vpack.c.bf16 %v7287, %v7286
    %v7305 = vpack.c.bf16 %v7289, %v7288
    %v7306 = vpack.c.bf16 %v7291, %v7290
    %v7307 = vpack.c.bf16 %v7293, %v7292
    %v7308 = vpack.c.bf16 %v7294, %v7294
    %s7309 = scalar_lea.vmem %s3, 128
    %v7310 = vld [vmem:[%s7309] sm:$0xf]
    %v7311 = vld [vmem:[%s7309 + $0x4] sm:$0xf]
    %v7312 = vld [vmem:[%s7309 + $0x8] sm:$0xf]
    %v7313 = vld [vmem:[%s7309 + $0xc] sm:$0xf]
    %v7318 = vunpack.c.l.b16 %v7310
    %v7319 = vunpack.c.l.b16 %v7311
    %v7320 = vunpack.c.l.b16 %v7312
    %v7321 = vunpack.c.l.b16 %v7313
    %v7322 = vpack.c.b16 %v7319, %v7318
    %v7323 = vpack.c.b16 %v7321, %v7320
    %v7327 = vsel %vm655, %v7295, 0
    %v7330 = vsel %vm655, %v7296, 0
    %v7333 = vsel %vm655, %v7297, 0
    %v7336 = vsel %vm655, %v7298, 0
    %v7339 = vsel %vm655, %v7299, 0
    %v7342 = vsel %vm655, %v7300, 0
    %v7345 = vsel %vm655, %v7301, 0
    %v7348 = vsel %vm655, %v7302, 0
    %v7351 = vsel %vm655, %v7303, 0
    %v7354 = vsel %vm655, %v7304, 0
    %v7357 = vsel %vm655, %v7305, 0
    %v7360 = vsel %vm655, %v7306, 0
    %v7363 = vsel %vm655, %v7307, 0
    %v7366 = vsel %vm655, %v7308, 0
    %7368 = vmatprep.subr.bf16.mxu0 0
    %7369 = vmatpush1.bf16.msra.mxu0 %v7322
    %7370 = vmatprep.subr.bf16.mxu0 0
    %7371 = vmatpush1.bf16.msra.mxu0 %v7323
    %7372 = vmatprep.subr.bf16.mxu0 0
    %7373 = vmatpush1.bf16.msra.mxu0 0
    %7374 = vmatprep.subr.bf16.mxu0 0
    %7375 = vmatpush1.bf16.msra.mxu0 0
    %7376 = vmatprep.subr.bf16.mxu0 0
    %7377 = vmatpush1.bf16.msra.mxu0 0
    %7378 = vmatprep.subr.bf16.mxu0 0
    %7379 = vmatpush1.bf16.msra.mxu0 0
    %7380 = vmatprep.subr.bf16.mxu0 0
    %7381 = vmatpush1.bf16.msra.mxu0 0
    %7382 = vmatprep.subr.bf16.mxu0 0
    %7383 = vmatpush1.bf16.msra.mxu0 0
    %7384 = vmatprep.subr.bf16.mxu0 0
    %7385 = vmatpush1.bf16.msra.mxu0 0
    %7386 = vmatprep.subr.bf16.mxu0 0
    %7387 = vmatpush1.bf16.msra.mxu0 0
    %7388 = vmatprep.subr.bf16.mxu0 0
    %7389 = vmatpush1.bf16.msra.mxu0 0
    %7390 = vmatprep.subr.bf16.mxu0 0
    %7391 = vmatpush1.bf16.msra.mxu0 0
    %7392 = vmatprep.subr.bf16.mxu0 0
    %7393 = vmatpush1.bf16.msra.mxu0 0
    %7394 = vmatprep.subr.bf16.mxu0 0
    %7395 = vmatpush1.bf16.msra.mxu0 0
    %7396 = vmatprep.subr.bf16.mxu0 0
    %7397 = vmatpush1.bf16.msra.mxu0 0
    %7398 = vmatprep.subr.bf16.mxu0 0
    %7399 = vmatpush1.bf16.msra.mxu0 0
    %7400 = vmatprep.mubr.bf16.mxu0 0
    %7401 = vmatmul.mubr.bf16.gmra.mrb[0].mxu0 %v7327
    %v7402 = vpop.f32.mrb[0].mxu0
    %v7403 = vadd.f32 0.0, %v7402
    %v7404 = vpop.f32.mrb[0].mxu0
    %v7405 = vpop.f32.mrb[0].mxu0
    %v7406 = vadd.f32 0.0, %v7405
    %v7407 = vpop.f32.mrb[0].mxu0
    %7408 = vmatprep.mubr.bf16.mxu0 0
    %7409 = vmatmul.mubr.bf16.gmra.mrb[0].mxu0 %v7330
    %v7410 = vpop.f32.mrb[0].mxu0
    %v7411 = vadd.f32 0.0, %v7410
    %v7412 = vpop.f32.mrb[0].mxu0
    %v7413 = vpop.f32.mrb[0].mxu0
    %v7414 = vadd.f32 0.0, %v7413
    %v7415 = vpop.f32.mrb[0].mxu0
    %7416 = vmatprep.mubr.bf16.mxu0 0
    %7417 = vmatmul.mubr.bf16.gmra.mrb[0].mxu0 %v7333
    %v7418 = vpop.f32.mrb[0].mxu0
    %v7419 = vadd.f32 0.0, %v7418
    %v7420 = vpop.f32.mrb[0].mxu0
    %v7421 = vpop.f32.mrb[0].mxu0
    %v7422 = vadd.f32 0.0, %v7421
    %v7423 = vpop.f32.mrb[0].mxu0
    %7424 = vmatprep.mubr.bf16.mxu0 0
    %7425 = vmatmul.mubr.bf16.gmra.mrb[0].mxu0 %v7336
    %v7426 = vpop.f32.mrb[0].mxu0
    %v7427 = vadd.f32 0.0, %v7426
    %v7428 = vpop.f32.mrb[0].mxu0
    %v7429 = vpop.f32.mrb[0].mxu0
    %v7430 = vadd.f32 0.0, %v7429
    %v7431 = vpop.f32.mrb[0].mxu0
    %7432 = vmatprep.mubr.bf16.mxu0 0
    %7433 = vmatmul.mubr.bf16.gmra.mrb[0].mxu0 %v7339
    %v7434 = vpop.f32.mrb[0].mxu0
    %v7435 = vadd.f32 0.0, %v7434
    %v7436 = vpop.f32.mrb[0].mxu0
    %v7437 = vpop.f32.mrb[0].mxu0
    %v7438 = vadd.f32 0.0, %v7437
    %v7439 = vpop.f32.mrb[0].mxu0
    %7440 = vmatprep.mubr.bf16.mxu0 0
    %7441 = vmatmul.mubr.bf16.gmra.mrb[0].mxu0 %v7342
    %v7442 = vpop.f32.mrb[0].mxu0
    %v7443 = vadd.f32 0.0, %v7442
    %v7444 = vpop.f32.mrb[0].mxu0
    %v7445 = vpop.f32.mrb[0].mxu0
    %v7446 = vadd.f32 0.0, %v7445
    %v7447 = vpop.f32.mrb[0].mxu0
    %7448 = vmatprep.mubr.bf16.mxu0 0
    %7449 = vmatmul.mubr.bf16.gmra.mrb[0].mxu0 %v7345
    %v7450 = vpop.f32.mrb[0].mxu0
    %v7451 = vadd.f32 0.0, %v7450
    %v7452 = vpop.f32.mrb[0].mxu0
    %v7453 = vpop.f32.mrb[0].mxu0
    %v7454 = vadd.f32 0.0, %v7453
    %v7455 = vpop.f32.mrb[0].mxu0
    %7456 = vmatprep.mubr.bf16.mxu0 0
    %7457 = vmatmul.mubr.bf16.gmra.mrb[0].mxu0 %v7348
    %v7458 = vpop.f32.mrb[0].mxu0
    %v7459 = vadd.f32 0.0, %v7458
    %v7460 = vpop.f32.mrb[0].mxu0
    %v7461 = vpop.f32.mrb[0].mxu0
    %v7462 = vadd.f32 0.0, %v7461
    %v7463 = vpop.f32.mrb[0].mxu0
    %7464 = vmatprep.mubr.bf16.mxu0 0
    %7465 = vmatmul.mubr.bf16.gmra.mrb[0].mxu0 %v7351
    %v7466 = vpop.f32.mrb[0].mxu0
    %v7467 = vadd.f32 0.0, %v7466
    %v7468 = vpop.f32.mrb[0].mxu0
    %v7469 = vpop.f32.mrb[0].mxu0
    %v7470 = vadd.f32 0.0, %v7469
    %v7471 = vpop.f32.mrb[0].mxu0
    %7472 = vmatprep.mubr.bf16.mxu0 0
    %7473 = vmatmul.mubr.bf16.gmra.mrb[0].mxu0 %v7354
    %v7474 = vpop.f32.mrb[0].mxu0
    %v7475 = vadd.f32 0.0, %v7474
    %v7476 = vpop.f32.mrb[0].mxu0
    %v7477 = vpop.f32.mrb[0].mxu0
    %v7478 = vadd.f32 0.0, %v7477
    %v7479 = vpop.f32.mrb[0].mxu0
    %7480 = vmatprep.mubr.bf16.mxu0 0
    %7481 = vmatmul.mubr.bf16.gmra.mrb[0].mxu0 %v7357
    %v7482 = vpop.f32.mrb[0].mxu0
    %v7483 = vadd.f32 0.0, %v7482
    %v7484 = vpop.f32.mrb[0].mxu0
    %v7485 = vpop.f32.mrb[0].mxu0
    %v7486 = vadd.f32 0.0, %v7485
    %v7487 = vpop.f32.mrb[0].mxu0
    %7488 = vmatprep.mubr.bf16.mxu0 0
    %7489 = vmatmul.mubr.bf16.gmra.mrb[0].mxu0 %v7360
    %v7490 = vpop.f32.mrb[0].mxu0
    %v7491 = vadd.f32 0.0, %v7490
    %v7492 = vpop.f32.mrb[0].mxu0
    %v7493 = vpop.f32.mrb[0].mxu0
    %v7494 = vadd.f32 0.0, %v7493
    %v7495 = vpop.f32.mrb[0].mxu0
    %7496 = vmatprep.mubr.bf16.mxu0 0
    %7497 = vmatmul.mubr.bf16.gmra.mrb[0].mxu0 %v7363
    %v7498 = vpop.f32.mrb[0].mxu0
    %v7499 = vadd.f32 0.0, %v7498
    %v7500 = vpop.f32.mrb[0].mxu0
    %v7501 = vpop.f32.mrb[0].mxu0
    %v7502 = vadd.f32 0.0, %v7501
    %v7503 = vpop.f32.mrb[0].mxu0
    %7504 = vmatprep.mubr.bf16.mxu0 0
    %7505 = vmatmul.mubr.bf16.gmra.mrb[0].mxu0 %v7366
    %v7506 = vpop.f32.mrb[0].mxu0
    %v7507 = vadd.f32 0.0, %v7506
    %v7508 = vpop.f32.mrb[0].mxu0
    %v7509 = vpop.f32.mrb[0].mxu0
    %v7510 = vpop.f32.mrb[0].mxu0
    %7511 = vdwg.mxu0
    %v7512 = vadd.f32 %v7241, %v7403
    %v7513 = vadd.f32 %v7242, %v7406
    %v7514 = vadd.f32 %v7243, %v7411
    %v7515 = vadd.f32 %v7244, %v7414
    %v7516 = vadd.f32 %v7245, %v7419
    %v7517 = vadd.f32 %v7246, %v7422
    %v7518 = vadd.f32 %v7247, %v7427
    %v7519 = vadd.f32 %v7248, %v7430
    %v7520 = vadd.f32 %v7249, %v7435
    %v7521 = vadd.f32 %v7250, %v7438
    %v7522 = vadd.f32 %v7251, %v7443
    %v7523 = vadd.f32 %v7252, %v7446
    %v7524 = vadd.f32 %v7253, %v7451
    %v7525 = vadd.f32 %v7254, %v7454
    %v7526 = vadd.f32 %v7255, %v7459
    %v7527 = vadd.f32 %v7256, %v7462
    %v7528 = vadd.f32 %v7257, %v7467
    %v7529 = vadd.f32 %v7258, %v7470
    %v7530 = vadd.f32 %v7259, %v7475
    %v7531 = vadd.f32 %v7260, %v7478
    %v7532 = vadd.f32 %v7261, %v7483
    %v7533 = vadd.f32 %v7262, %v7486
    %v7534 = vadd.f32 %v7263, %v7491
    %v7535 = vadd.f32 %v7264, %v7494
    %v7536 = vadd.f32 %v7265, %v7499
    %v7537 = vadd.f32 %v7266, %v7502
    %v7538 = vadd.f32 %v7267, %v7507
    %v7539 = vmax.f32 %v7512, 0.0
    %v7540 = vmax.f32 %v7513, 0.0
    %v7541 = vmax.f32 %v7514, 0.0
    %v7542 = vmax.f32 %v7515, 0.0
    %v7543 = vmax.f32 %v7516, 0.0
    %v7544 = vmax.f32 %v7517, 0.0
    %v7545 = vmax.f32 %v7518, 0.0
    %v7546 = vmax.f32 %v7519, 0.0
    %v7547 = vmax.f32 %v7520, 0.0
    %v7548 = vmax.f32 %v7521, 0.0
    %v7549 = vmax.f32 %v7522, 0.0
    %v7550 = vmax.f32 %v7523, 0.0
    %v7551 = vmax.f32 %v7524, 0.0
    %v7552 = vmax.f32 %v7525, 0.0
    %v7553 = vmax.f32 %v7526, 0.0
    %v7554 = vmax.f32 %v7527, 0.0
    %v7555 = vmax.f32 %v7528, 0.0
    %v7556 = vmax.f32 %v7529, 0.0
    %v7557 = vmax.f32 %v7530, 0.0
    %v7558 = vmax.f32 %v7531, 0.0
    %v7559 = vmax.f32 %v7532, 0.0
    %v7560 = vmax.f32 %v7533, 0.0
    %v7561 = vmax.f32 %v7534, 0.0
    %v7562 = vmax.f32 %v7535, 0.0
    %v7563 = vmax.f32 %v7536, 0.0
    %v7564 = vmax.f32 %v7537, 0.0
    %v7565 = vmax.f32 %v7538, 0.0
    %vm7566 = vcmask 523264
    %7567 = vst.msk [vmem:[#allocation6] sm:$0xff] %vm7566, %v7539
    %7568 = vst.msk [vmem:[#allocation6 + $0x8] sm:$0xff] %vm7566, %v7540
    %7569 = vst.msk [vmem:[#allocation6 + $0x10] sm:$0xff] %vm7566, %v7541
    %7570 = vst.msk [vmem:[#allocation6 + $0x18] sm:$0xff] %vm7566, %v7542
    %7571 = vst.msk [vmem:[#allocation6 + $0x20] sm:$0xff] %vm7566, %v7543
    %7572 = vst.msk [vmem:[#allocation6 + $0x28] sm:$0xff] %vm7566, %v7544
    %7573 = vst.msk [vmem:[#allocation6 + $0x30] sm:$0xff] %vm7566, %v7545
    %7574 = vst.msk [vmem:[#allocation6 + $0x38] sm:$0xff] %vm7566, %v7546
    %7575 = vst.msk [vmem:[#allocation6 + $0x40] sm:$0xff] %vm7566, %v7547
    %7576 = vst.msk [vmem:[#allocation6 + $0x48] sm:$0xff] %vm7566, %v7548
    %7577 = vst.msk [vmem:[#allocation6 + $0x50] sm:$0xff] %vm7566, %v7549
    %7578 = vst.msk [vmem:[#allocation6 + $0x58] sm:$0xff] %vm7566, %v7550
    %7579 = vst.msk [vmem:[#allocation6 + $0x60] sm:$0xff] %vm7566, %v7551
    %7580 = vst.msk [vmem:[#allocation6 + $0x68] sm:$0xff] %vm7566, %v7552
    %7581 = vst.msk [vmem:[#allocation6 + $0x70] sm:$0xff] %vm7566, %v7553
    %7582 = vst.msk [vmem:[#allocation6 + $0x78] sm:$0xff] %vm7566, %v7554
    %7583 = vst.msk [vmem:[#allocation6 + $0x80] sm:$0xff] %vm7566, %v7555
    %7584 = vst.msk [vmem:[#allocation6 + $0x88] sm:$0xff] %vm7566, %v7556
    %7585 = vst.msk [vmem:[#allocation6 + $0x90] sm:$0xff] %vm7566, %v7557
    %7586 = vst.msk [vmem:[#allocation6 + $0x98] sm:$0xff] %vm7566, %v7558
    %7587 = vst.msk [vmem:[#allocation6 + $0xa0] sm:$0xff] %vm7566, %v7559
    %7588 = vst.msk [vmem:[#allocation6 + $0xa8] sm:$0xff] %vm7566, %v7560
    %7589 = vst.msk [vmem:[#allocation6 + $0xb0] sm:$0xff] %vm7566, %v7561
    %7590 = vst.msk [vmem:[#allocation6 + $0xb8] sm:$0xff] %vm7566, %v7562
    %7591 = vst.msk [vmem:[#allocation6 + $0xc0] sm:$0xff] %vm7566, %v7563
    %7592 = vst.msk [vmem:[#allocation6 + $0xc8] sm:$0xff] %vm7566, %v7564
    %7593 = vst.msk [vmem:[#allocation6 + $0xd0] sm:$0xff] %vm7566, %v7565
    %v7594 = vld [vmem:[#allocation6] sm:$0xff]
    %v7595 = vld [vmem:[#allocation6 + $0x8] sm:$0xff]
    %v7596 = vld [vmem:[#allocation6 + $0x10] sm:$0xff]
    %v7597 = vld [vmem:[#allocation6 + $0x18] sm:$0xff]
    %v7598 = vld [vmem:[#allocation6 + $0x20] sm:$0xff]
    %v7599 = vld [vmem:[#allocation6 + $0x28] sm:$0xff]
    %v7600 = vld [vmem:[#allocation6 + $0x30] sm:$0xff]
    %v7601 = vld [vmem:[#allocation6 + $0x38] sm:$0xff]
    %v7602 = vld [vmem:[#allocation6 + $0x40] sm:$0xff]
    %v7603 = vld [vmem:[#allocation6 + $0x48] sm:$0xff]
    %v7604 = vld [vmem:[#allocation6 + $0x50] sm:$0xff]
    %v7605 = vld [vmem:[#allocation6 + $0x58] sm:$0xff]
    %v7606 = vld [vmem:[#allocation6 + $0x60] sm:$0xff]
    %v7607 = vld [vmem:[#allocation6 + $0x68] sm:$0xff]
    %v7608 = vld [vmem:[#allocation6 + $0x70] sm:$0xff]
    %v7609 = vld [vmem:[#allocation6 + $0x78] sm:$0xff]
    %v7610 = vld [vmem:[#allocation6 + $0x80] sm:$0xff]
    %v7611 = vld [vmem:[#allocation6 + $0x88] sm:$0xff]
    %v7612 = vld [vmem:[#allocation6 + $0x90] sm:$0xff]
    %v7613 = vld [vmem:[#allocation6 + $0x98] sm:$0xff]
    %v7614 = vld [vmem:[#allocation6 + $0xa0] sm:$0xff]
    %v7615 = vld [vmem:[#allocation6 + $0xa8] sm:$0xff]
    %v7616 = vld [vmem:[#allocation6 + $0xb0] sm:$0xff]
    %v7617 = vld [vmem:[#allocation6 + $0xb8] sm:$0xff]
    %v7618 = vld [vmem:[#allocation6 + $0xc0] sm:$0xff]
    %v7619 = vld [vmem:[#allocation6 + $0xc8] sm:$0xff]
    %v7620 = vld [vmem:[#allocation6 + $0x2] sm:$0xff]
    %v7621 = vld [vmem:[#allocation6 + $0xa] sm:$0xff]
    %v7622 = vld [vmem:[#allocation6 + $0x12] sm:$0xff]
    %v7623 = vld [vmem:[#allocation6 + $0x1a] sm:$0xff]
    %v7624 = vld [vmem:[#allocation6 + $0x22] sm:$0xff]
    %v7625 = vld [vmem:[#allocation6 + $0x2a] sm:$0xff]
    %v7626 = vld [vmem:[#allocation6 + $0x32] sm:$0xff]
    %v7627 = vld [vmem:[#allocation6 + $0x3a] sm:$0xff]
    %v7628 = vld [vmem:[#allocation6 + $0x42] sm:$0xff]
    %v7629 = vld [vmem:[#allocation6 + $0x4a] sm:$0xff]
    %v7630 = vld [vmem:[#allocation6 + $0x52] sm:$0xff]
    %v7631 = vld [vmem:[#allocation6 + $0x5a] sm:$0xff]
    %v7632 = vld [vmem:[#allocation6 + $0x62] sm:$0xff]
    %v7633 = vld [vmem:[#allocation6 + $0x6a] sm:$0xff]
    %v7634 = vld [vmem:[#allocation6 + $0x72] sm:$0xff]
    %v7635 = vld [vmem:[#allocation6 + $0x7a] sm:$0xff]
    %v7636 = vld [vmem:[#allocation6 + $0x82] sm:$0xff]
    %v7637 = vld [vmem:[#allocation6 + $0x8a] sm:$0xff]
    %v7638 = vld [vmem:[#allocation6 + $0x92] sm:$0xff]
    %v7639 = vld [vmem:[#allocation6 + $0x9a] sm:$0xff]
    %v7640 = vld [vmem:[#allocation6 + $0xa2] sm:$0xff]
    %v7641 = vld [vmem:[#allocation6 + $0xaa] sm:$0xff]
    %v7642 = vld [vmem:[#allocation6 + $0xb2] sm:$0xff]
    %v7643 = vld [vmem:[#allocation6 + $0xba] sm:$0xff]
    %v7644 = vld [vmem:[#allocation6 + $0xc2] sm:$0xff]
    %v7645 = vld [vmem:[#allocation6 + $0xca] sm:$0xff]
    %v7646 = vmax.f32 %v7594, %v7620
    %v7647 = vmax.f32 %v7595, %v7621
    %v7648 = vmax.f32 %v7596, %v7622
    %v7649 = vmax.f32 %v7597, %v7623
    %v7650 = vmax.f32 %v7598, %v7624
    %v7651 = vmax.f32 %v7599, %v7625
    %v7652 = vmax.f32 %v7600, %v7626
    %v7653 = vmax.f32 %v7601, %v7627
    %v7654 = vmax.f32 %v7602, %v7628
    %v7655 = vmax.f32 %v7603, %v7629
    %v7656 = vmax.f32 %v7604, %v7630
    %v7657 = vmax.f32 %v7605, %v7631
    %v7658 = vmax.f32 %v7606, %v7632
    %v7659 = vmax.f32 %v7607, %v7633
    %v7660 = vmax.f32 %v7608, %v7634
    %v7661 = vmax.f32 %v7609, %v7635
    %v7662 = vmax.f32 %v7610, %v7636
    %v7663 = vmax.f32 %v7611, %v7637
    %v7664 = vmax.f32 %v7612, %v7638
    %v7665 = vmax.f32 %v7613, %v7639
    %v7666 = vmax.f32 %v7614, %v7640
    %v7667 = vmax.f32 %v7615, %v7641
    %v7668 = vmax.f32 %v7616, %v7642
    %v7669 = vmax.f32 %v7617, %v7643
    %v7670 = vmax.f32 %v7618, %v7644
    %v7671 = vmax.f32 %v7619, %v7645
    %v7672 = vld [vmem:[#allocation6 + $0x4] sm:$0xff]
    %v7673 = vld [vmem:[#allocation6 + $0xc] sm:$0xff]
    %v7674 = vld [vmem:[#allocation6 + $0x14] sm:$0xff]
    %v7675 = vld [vmem:[#allocation6 + $0x1c] sm:$0xff]
    %v7676 = vld [vmem:[#allocation6 + $0x24] sm:$0xff]
    %v7677 = vld [vmem:[#allocation6 + $0x2c] sm:$0xff]
    %v7678 = vld [vmem:[#allocation6 + $0x34] sm:$0xff]
    %v7679 = vld [vmem:[#allocation6 + $0x3c] sm:$0xff]
    %v7680 = vld [vmem:[#allocation6 + $0x44] sm:$0xff]
    %v7681 = vld [vmem:[#allocation6 + $0x4c] sm:$0xff]
    %v7682 = vld [vmem:[#allocation6 + $0x54] sm:$0xff]
    %v7683 = vld [vmem:[#allocation6 + $0x5c] sm:$0xff]
    %v7684 = vld [vmem:[#allocation6 + $0x64] sm:$0xff]
    %v7685 = vld [vmem:[#allocation6 + $0x6c] sm:$0xff]
    %v7686 = vld [vmem:[#allocation6 + $0x74] sm:$0xff]
    %v7687 = vld [vmem:[#allocation6 + $0x7c] sm:$0xff]
    %v7688 = vld [vmem:[#allocation6 + $0x84] sm:$0xff]
    %v7689 = vld [vmem:[#allocation6 + $0x8c] sm:$0xff]
    %v7690 = vld [vmem:[#allocation6 + $0x94] sm:$0xff]
    %v7691 = vld [vmem:[#allocation6 + $0x9c] sm:$0xff]
    %v7692 = vld [vmem:[#allocation6 + $0xa4] sm:$0xff]
    %v7693 = vld [vmem:[#allocation6 + $0xac] sm:$0xff]
    %v7694 = vld [vmem:[#allocation6 + $0xb4] sm:$0xff]
    %v7695 = vld [vmem:[#allocation6 + $0xbc] sm:$0xff]
    %v7696 = vld [vmem:[#allocation6 + $0xc4] sm:$0xff]
    %v7697 = vld [vmem:[#allocation6 + $0xcc] sm:$0xff]
    %v7698 = vmax.f32 %v7646, %v7672
    %v7699 = vmax.f32 %v7647, %v7673
    %v7700 = vmax.f32 %v7648, %v7674
    %v7701 = vmax.f32 %v7649, %v7675
    %v7702 = vmax.f32 %v7650, %v7676
    %v7703 = vmax.f32 %v7651, %v7677
    %v7704 = vmax.f32 %v7652, %v7678
    %v7705 = vmax.f32 %v7653, %v7679
    %v7706 = vmax.f32 %v7654, %v7680
    %v7707 = vmax.f32 %v7655, %v7681
    %v7708 = vmax.f32 %v7656, %v7682
    %v7709 = vmax.f32 %v7657, %v7683
    %v7710 = vmax.f32 %v7658, %v7684
    %v7711 = vmax.f32 %v7659, %v7685
    %v7712 = vmax.f32 %v7660, %v7686
    %v7713 = vmax.f32 %v7661, %v7687
    %v7714 = vmax.f32 %v7662, %v7688
    %v7715 = vmax.f32 %v7663, %v7689
    %v7716 = vmax.f32 %v7664, %v7690
    %v7717 = vmax.f32 %v7665, %v7691
    %v7718 = vmax.f32 %v7666, %v7692
    %v7719 = vmax.f32 %v7667, %v7693
    %v7720 = vmax.f32 %v7668, %v7694
    %v7721 = vmax.f32 %v7669, %v7695
    %v7722 = vmax.f32 %v7670, %v7696
    %v7723 = vmax.f32 %v7671, %v7697
    %7724 = vst.msk [vmem:[#allocation7] sm:$0xff] %vm7566, %v7698
    %7725 = vst.msk [vmem:[#allocation7 + $0x8] sm:$0xff] %vm7566, %v7699
    %7726 = vst.msk [vmem:[#allocation7 + $0x10] sm:$0xff] %vm7566, %v7700
    %7727 = vst.msk [vmem:[#allocation7 + $0x18] sm:$0xff] %vm7566, %v7701
    %7728 = vst.msk [vmem:[#allocation7 + $0x20] sm:$0xff] %vm7566, %v7702
    %7729 = vst.msk [vmem:[#allocation7 + $0x28] sm:$0xff] %vm7566, %v7703
    %7730 = vst.msk [vmem:[#allocation7 + $0x30] sm:$0xff] %vm7566, %v7704
    %7731 = vst.msk [vmem:[#allocation7 + $0x38] sm:$0xff] %vm7566, %v7705
    %7732 = vst.msk [vmem:[#allocation7 + $0x40] sm:$0xff] %vm7566, %v7706
    %7733 = vst.msk [vmem:[#allocation7 + $0x48] sm:$0xff] %vm7566, %v7707
    %7734 = vst.msk [vmem:[#allocation7 + $0x50] sm:$0xff] %vm7566, %v7708
    %7735 = vst.msk [vmem:[#allocation7 + $0x58] sm:$0xff] %vm7566, %v7709
    %7736 = vst.msk [vmem:[#allocation7 + $0x60] sm:$0xff] %vm7566, %v7710
    %7737 = vst.msk [vmem:[#allocation7 + $0x68] sm:$0xff] %vm7566, %v7711
    %7738 = vst.msk [vmem:[#allocation7 + $0x70] sm:$0xff] %vm7566, %v7712
    %7739 = vst.msk [vmem:[#allocation7 + $0x78] sm:$0xff] %vm7566, %v7713
    %7740 = vst.msk [vmem:[#allocation7 + $0x80] sm:$0xff] %vm7566, %v7714
    %7741 = vst.msk [vmem:[#allocation7 + $0x88] sm:$0xff] %vm7566, %v7715
    %7742 = vst.msk [vmem:[#allocation7 + $0x90] sm:$0xff] %vm7566, %v7716
    %7743 = vst.msk [vmem:[#allocation7 + $0x98] sm:$0xff] %vm7566, %v7717
    %7744 = vst.msk [vmem:[#allocation7 + $0xa0] sm:$0xff] %vm7566, %v7718
    %7745 = vst.msk [vmem:[#allocation7 + $0xa8] sm:$0xff] %vm7566, %v7719
    %7746 = vst.msk [vmem:[#allocation7 + $0xb0] sm:$0xff] %vm7566, %v7720
    %7747 = vst.msk [vmem:[#allocation7 + $0xb8] sm:$0xff] %vm7566, %v7721
    %7748 = vst.msk [vmem:[#allocation7 + $0xc0] sm:$0xff] %vm7566, %v7722
    %7749 = vst.msk [vmem:[#allocation7 + $0xc8] sm:$0xff] %vm7566, %v7723
    %v7750 = vld [vmem:[#allocation7] sm:$0xff]
    %v7751 = vld [vmem:[#allocation7 + $0x8] sm:$0xff]
    %v7752 = vld [vmem:[#allocation7 + $0x10] sm:$0xff]
    %v7753 = vld [vmem:[#allocation7 + $0x18] sm:$0xff]
    %v7754 = vld [vmem:[#allocation7 + $0x20] sm:$0xff]
    %v7755 = vld [vmem:[#allocation7 + $0x28] sm:$0xff]
    %v7756 = vld [vmem:[#allocation7 + $0x30] sm:$0xff]
    %v7757 = vld [vmem:[#allocation7 + $0x38] sm:$0xff]
    %v7758 = vld [vmem:[#allocation7 + $0x40] sm:$0xff]
    %v7759 = vld [vmem:[#allocation7 + $0x48] sm:$0xff]
    %v7760 = vld [vmem:[#allocation7 + $0x50] sm:$0xff]
    %v7761 = vld [vmem:[#allocation7 + $0x58] sm:$0xff]
    %v7762 = vld [vmem:[#allocation7 + $0x60] sm:$0xff]
    %v7763 = vld [vmem:[#allocation7 + $0x68] sm:$0xff]
    %v7764 = vld [vmem:[#allocation7 + $0x70] sm:$0xff]
    %v7765 = vld [vmem:[#allocation7 + $0x78] sm:$0xff]
    %v7766 = vld [vmem:[#allocation7 + $0x80] sm:$0xff]
    %v7767 = vld [vmem:[#allocation7 + $0x88] sm:$0xff]
    %v7768 = vld [vmem:[#allocation7 + $0x90] sm:$0xff]
    %v7769 = vld [vmem:[#allocation7 + $0x98] sm:$0xff]
    %v7770 = vld [vmem:[#allocation7 + $0xa0] sm:$0xff]
    %v7771 = vld [vmem:[#allocation7 + $0xa8] sm:$0xff]
    %v7772 = vld [vmem:[#allocation7 + $0xb0] sm:$0xff]
    %v7773 = vmax.f32 %v7750, %v7753
    %v7774 = vmax.f32 %v7751, %v7754
    %v7775 = vmax.f32 %v7752, %v7755
    %v7776 = vmax.f32 %v7753, %v7756
    %v7777 = vmax.f32 %v7754, %v7757
    %v7778 = vmax.f32 %v7755, %v7758
    %v7779 = vmax.f32 %v7756, %v7759
    %v7780 = vmax.f32 %v7757, %v7760
    %v7781 = vmax.f32 %v7758, %v7761
    %v7782 = vmax.f32 %v7759, %v7762
    %v7783 = vmax.f32 %v7760, %v7763
    %v7784 = vmax.f32 %v7761, %v7764
    %v7785 = vmax.f32 %v7762, %v7765
    %v7786 = vmax.f32 %v7763, %v7766
    %v7787 = vmax.f32 %v7764, %v7767
    %v7788 = vmax.f32 %v7765, %v7768
    %v7789 = vmax.f32 %v7766, %v7769
    %v7790 = vmax.f32 %v7767, %v7770
    %v7791 = vmax.f32 %v7768, %v7771
    %v7792 = vmax.f32 %v7769, %v7772
    %v7793 = vld [vmem:[#allocation7 + $0xb8] sm:$0xff]
    %v7794 = vld [vmem:[#allocation7 + $0xc0] sm:$0xff]
    %v7795 = vld [vmem:[#allocation7 + $0xc8] sm:$0xff]
    %v7796 = vmax.f32 %v7773, %v7756
    %v7797 = vmax.f32 %v7774, %v7757
    %v7798 = vmax.f32 %v7775, %v7758
    %v7799 = vmax.f32 %v7776, %v7759
    %v7800 = vmax.f32 %v7777, %v7760
    %v7801 = vmax.f32 %v7778, %v7761
    %v7802 = vmax.f32 %v7779, %v7762
    %v7803 = vmax.f32 %v7780, %v7763
    %v7804 = vmax.f32 %v7781, %v7764
    %v7805 = vmax.f32 %v7782, %v7765
    %v7806 = vmax.f32 %v7783, %v7766
    %v7807 = vmax.f32 %v7784, %v7767
    %v7808 = vmax.f32 %v7785, %v7768
    %v7809 = vmax.f32 %v7786, %v7769
    %v7810 = vmax.f32 %v7787, %v7770
    %v7811 = vmax.f32 %v7788, %v7771
    %v7812 = vmax.f32 %v7789, %v7772
    %v7813 = vmax.f32 %v7790, %v7793
    %v7814 = vmax.f32 %v7791, %v7794
    %v7815 = vmax.f32 %v7792, %v7795
    %7816 = vst.msk [vmem:[#allocation8] sm:$0xff] %vm7566, %v7796
    %7817 = vst.msk [vmem:[#allocation8 + $0x8] sm:$0xff] %vm7566, %v7797
    %7818 = vst.msk [vmem:[#allocation8 + $0x10] sm:$0xff] %vm7566, %v7798
    %7819 = vst.msk [vmem:[#allocation8 + $0x18] sm:$0xff] %vm7566, %v7799
    %7820 = vst.msk [vmem:[#allocation8 + $0x20] sm:$0xff] %vm7566, %v7800
    %7821 = vst.msk [vmem:[#allocation8 + $0x28] sm:$0xff] %vm7566, %v7801
    %7822 = vst.msk [vmem:[#allocation8 + $0x30] sm:$0xff] %vm7566, %v7802
    %7823 = vst.msk [vmem:[#allocation8 + $0x38] sm:$0xff] %vm7566, %v7803
    %7824 = vst.msk [vmem:[#allocation8 + $0x40] sm:$0xff] %vm7566, %v7804
    %7825 = vst.msk [vmem:[#allocation8 + $0x48] sm:$0xff] %vm7566, %v7805
    %7826 = vst.msk [vmem:[#allocation8 + $0x50] sm:$0xff] %vm7566, %v7806
    %7827 = vst.msk [vmem:[#allocation8 + $0x58] sm:$0xff] %vm7566, %v7807
    %7828 = vst.msk [vmem:[#allocation8 + $0x60] sm:$0xff] %vm7566, %v7808
    %7829 = vst.msk [vmem:[#allocation8 + $0x68] sm:$0xff] %vm7566, %v7809
    %7830 = vst.msk [vmem:[#allocation8 + $0x70] sm:$0xff] %vm7566, %v7810
    %7831 = vst.msk [vmem:[#allocation8 + $0x78] sm:$0xff] %vm7566, %v7811
    %7832 = vst.msk [vmem:[#allocation8 + $0x80] sm:$0xff] %vm7566, %v7812
    %7833 = vst.msk [vmem:[#allocation8 + $0x88] sm:$0xff] %vm7566, %v7813
    %7834 = vst.msk [vmem:[#allocation8 + $0x90] sm:$0xff] %vm7566, %v7814
    %7835 = vst.msk [vmem:[#allocation8 + $0x98] sm:$0xff] %vm7566, %v7815
    %v7836 = vld [vmem:[%s7] sm:$0x1]
    %v7837 = vld [vmem:[#allocation8] sm:$0x3]
    %v7838 = vpack.c.bf16 %v7837, %v7837
    %v7839 = vld [vmem:[%s6] sm:$0xf]
    %v7840 = vld [vmem:[%s6 + $0x4] sm:$0xf]
    %v7841 = vld [vmem:[%s6 + $0x8] sm:$0xf]
    %v7842 = vld [vmem:[%s6 + $0xc] sm:$0xf]
    %v7843 = vld [vmem:[%s6 + $0x10] sm:$0xf]
    %v7844 = vld [vmem:[%s6 + $0x14] sm:$0xf]
    %v7845 = vld [vmem:[%s6 + $0x18] sm:$0xf]
    %v7846 = vld [vmem:[%s6 + $0x1c] sm:$0xf]
    %v7855 = vunpack.c.l.b16 %v7839
    %v7856 = vunpack.c.l.b16 %v7840
    %v7857 = vunpack.c.l.b16 %v7841
    %v7858 = vunpack.c.l.b16 %v7842
    %v7859 = vunpack.c.l.b16 %v7843
    %v7860 = vunpack.c.l.b16 %v7844
    %v7861 = vunpack.c.l.b16 %v7845
    %v7862 = vunpack.c.l.b16 %v7846
    %v7863 = vpack.c.b16 %v7856, %v7855
    %v7864 = vpack.c.b16 %v7858, %v7857
    %v7865 = vpack.c.b16 %v7860, %v7859
    %v7866 = vpack.c.b16 %v7862, %v7861
    %v7872 = vsel %vm7566, %v7838, 0
    %7874 = vmatprep.subr.bf16.mxu0 0
    %7875 = vmatpush1.bf16.msra.mxu0 %v7863
    %7876 = vmatprep.subr.bf16.mxu0 0
    %7877 = vmatpush1.bf16.msra.mxu0 %v7864
    %7878 = vmatprep.subr.bf16.mxu0 0
    %7879 = vmatpush1.bf16.msra.mxu0 %v7865
    %7880 = vmatprep.subr.bf16.mxu0 0
    %7881 = vmatpush1.bf16.msra.mxu0 %v7866
    %7882 = vmatprep.subr.bf16.mxu0 0
    %7883 = vmatpush1.bf16.msra.mxu0 0
    %7884 = vmatprep.subr.bf16.mxu0 0
    %7885 = vmatpush1.bf16.msra.mxu0 0
    %7886 = vmatprep.subr.bf16.mxu0 0
    %7887 = vmatpush1.bf16.msra.mxu0 0
    %7888 = vmatprep.subr.bf16.mxu0 0
    %7889 = vmatpush1.bf16.msra.mxu0 0
    %7890 = vmatprep.subr.bf16.mxu0 0
    %7891 = vmatpush1.bf16.msra.mxu0 0
    %7892 = vmatprep.subr.bf16.mxu0 0
    %7893 = vmatpush1.bf16.msra.mxu0 0
    %7894 = vmatprep.subr.bf16.mxu0 0
    %7895 = vmatpush1.bf16.msra.mxu0 0
    %7896 = vmatprep.subr.bf16.mxu0 0
    %7897 = vmatpush1.bf16.msra.mxu0 0
    %7898 = vmatprep.subr.bf16.mxu0 0
    %7899 = vmatpush1.bf16.msra.mxu0 0
    %7900 = vmatprep.subr.bf16.mxu0 0
    %7901 = vmatpush1.bf16.msra.mxu0 0
    %7902 = vmatprep.subr.bf16.mxu0 0
    %7903 = vmatpush1.bf16.msra.mxu0 0
    %7904 = vmatprep.subr.bf16.mxu0 0
    %7905 = vmatpush1.bf16.msra.mxu0 0
    %7906 = vmatprep.mubr.bf16.mxu0 0
    %7907 = vmatmul.mubr.bf16.gmra.mrb[0].mxu0 %v7872
    %v7908 = vpop.f32.mrb[0].mxu0
    %v7909 = vadd.f32 0.0, %v7908
    %v7910 = vpop.f32.mrb[0].mxu0
    %v7911 = vpop.f32.mrb[0].mxu0
    %v7912 = vpop.f32.mrb[0].mxu0
    %7913 = vdwg.mxu0
    %v7915 = vlaneseq
    %v7916 = vshrl.u32 %v7915, 7
    %v7917 = vsub.s32 0, %v7916
    %v7918 = vrot.slane %v7836, %v7917
    %v7920 = vadd.f32 %v7918, %v7909
    %v7921 = vld [vmem:[#allocation8 + $0x4] sm:$0x3]
    %v7922 = vpack.c.bf16 %v7921, %v7921
    %s7923 = scalar_lea.vmem %s6, 32
    %v7924 = vld [vmem:[%s7923] sm:$0xf]
    %v7925 = vld [vmem:[%s7923 + $0x4] sm:$0xf]
    %v7926 = vld [vmem:[%s7923 + $0x8] sm:$0xf]
    %v7927 = vld [vmem:[%s7923 + $0xc] sm:$0xf]
    %v7928 = vld [vmem:[%s7923 + $0x10] sm:$0xf]
    %v7929 = vld [vmem:[%s7923 + $0x14] sm:$0xf]
    %v7930 = vld [vmem:[%s7923 + $0x18] sm:$0xf]
    %v7931 = vld [vmem:[%s7923 + $0x1c] sm:$0xf]
    %v7940 = vunpack.c.l.b16 %v7924
    %v7941 = vunpack.c.l.b16 %v7925
    %v7942 = vunpack.c.l.b16 %v7926
    %v7943 = vunpack.c.l.b16 %v7927
    %v7944 = vunpack.c.l.b16 %v7928
    %v7945 = vunpack.c.l.b16 %v7929
    %v7946 = vunpack.c.l.b16 %v7930
    %v7947 = vunpack.c.l.b16 %v7931
    %v7948 = vpack.c.b16 %v7941, %v7940
    %v7949 = vpack.c.b16 %v7943, %v7942
    %v7950 = vpack.c.b16 %v7945, %v7944
    %v7951 = vpack.c.b16 %v7947, %v7946
    %v7957 = vsel %vm7566, %v7922, 0
    %7959 = vmatprep.subr.bf16.mxu0 0
    %7960 = vmatpush1.bf16.msra.mxu0 %v7948
    %7961 = vmatprep.subr.bf16.mxu0 0
    %7962 = vmatpush1.bf16.msra.mxu0 %v7949
    %7963 = vmatprep.subr.bf16.mxu0 0
    %7964 = vmatpush1.bf16.msra.mxu0 %v7950
    %7965 = vmatprep.subr.bf16.mxu0 0
    %7966 = vmatpush1.bf16.msra.mxu0 %v7951
    %7967 = vmatprep.subr.bf16.mxu0 0
    %7968 = vmatpush1.bf16.msra.mxu0 0
    %7969 = vmatprep.subr.bf16.mxu0 0
    %7970 = vmatpush1.bf16.msra.mxu0 0
    %7971 = vmatprep.subr.bf16.mxu0 0
    %7972 = vmatpush1.bf16.msra.mxu0 0
    %7973 = vmatprep.subr.bf16.mxu0 0
    %7974 = vmatpush1.bf16.msra.mxu0 0
    %7975 = vmatprep.subr.bf16.mxu0 0
    %7976 = vmatpush1.bf16.msra.mxu0 0
    %7977 = vmatprep.subr.bf16.mxu0 0
    %7978 = vmatpush1.bf16.msra.mxu0 0
    %7979 = vmatprep.subr.bf16.mxu0 0
    %7980 = vmatpush1.bf16.msra.mxu0 0
    %7981 = vmatprep.subr.bf16.mxu0 0
    %7982 = vmatpush1.bf16.msra.mxu0 0
    %7983 = vmatprep.subr.bf16.mxu0 0
    %7984 = vmatpush1.bf16.msra.mxu0 0
    %7985 = vmatprep.subr.bf16.mxu0 0
    %7986 = vmatpush1.bf16.msra.mxu0 0
    %7987 = vmatprep.subr.bf16.mxu0 0
    %7988 = vmatpush1.bf16.msra.mxu0 0
    %7989 = vmatprep.subr.bf16.mxu0 0
    %7990 = vmatpush1.bf16.msra.mxu0 0
    %7991 = vmatprep.mubr.bf16.mxu0 0
    %7992 = vmatmul.mubr.bf16.gmra.mrb[0].mxu0 %v7957
    %v7993 = vpop.f32.mrb[0].mxu0
    %v7994 = vadd.f32 0.0, %v7993
    %v7995 = vpop.f32.mrb[0].mxu0
    %v7996 = vpop.f32.mrb[0].mxu0
    %v7997 = vpop.f32.mrb[0].mxu0
    %7998 = vdwg.mxu0
    %v7999 = vadd.f32 %v7920, %v7994
    %v8000 = vld [vmem:[#allocation8 + $0x8] sm:$0x3]
    %v8001 = vpack.c.bf16 %v8000, %v8000
    %s8002 = scalar_lea.vmem %s6, 64
    %v8003 = vld [vmem:[%s8002] sm:$0xf]
    %v8004 = vld [vmem:[%s8002 + $0x4] sm:$0xf]
    %v8005 = vld [vmem:[%s8002 + $0x8] sm:$0xf]
    %v8006 = vld [vmem:[%s8002 + $0xc] sm:$0xf]
    %v8007 = vld [vmem:[%s8002 + $0x10] sm:$0xf]
    %v8008 = vld [vmem:[%s8002 + $0x14] sm:$0xf]
    %v8009 = vld [vmem:[%s8002 + $0x18] sm:$0xf]
    %v8010 = vld [vmem:[%s8002 + $0x1c] sm:$0xf]
    %v8019 = vunpack.c.l.b16 %v8003
    %v8020 = vunpack.c.l.b16 %v8004
    %v8021 = vunpack.c.l.b16 %v8005
    %v8022 = vunpack.c.l.b16 %v8006
    %v8023 = vunpack.c.l.b16 %v8007
    %v8024 = vunpack.c.l.b16 %v8008
    %v8025 = vunpack.c.l.b16 %v8009
    %v8026 = vunpack.c.l.b16 %v8010
    %v8027 = vpack.c.b16 %v8020, %v8019
    %v8028 = vpack.c.b16 %v8022, %v8021
    %v8029 = vpack.c.b16 %v8024, %v8023
    %v8030 = vpack.c.b16 %v8026, %v8025
    %v8036 = vsel %vm7566, %v8001, 0
    %8038 = vmatprep.subr.bf16.mxu0 0
    %8039 = vmatpush1.bf16.msra.mxu0 %v8027
    %8040 = vmatprep.subr.bf16.mxu0 0
    %8041 = vmatpush1.bf16.msra.mxu0 %v8028
    %8042 = vmatprep.subr.bf16.mxu0 0
    %8043 = vmatpush1.bf16.msra.mxu0 %v8029
    %8044 = vmatprep.subr.bf16.mxu0 0
    %8045 = vmatpush1.bf16.msra.mxu0 %v8030
    %8046 = vmatprep.subr.bf16.mxu0 0
    %8047 = vmatpush1.bf16.msra.mxu0 0
    %8048 = vmatprep.subr.bf16.mxu0 0
    %8049 = vmatpush1.bf16.msra.mxu0 0
    %8050 = vmatprep.subr.bf16.mxu0 0
    %8051 = vmatpush1.bf16.msra.mxu0 0
    %8052 = vmatprep.subr.bf16.mxu0 0
    %8053 = vmatpush1.bf16.msra.mxu0 0
    %8054 = vmatprep.subr.bf16.mxu0 0
    %8055 = vmatpush1.bf16.msra.mxu0 0
    %8056 = vmatprep.subr.bf16.mxu0 0
    %8057 = vmatpush1.bf16.msra.mxu0 0
    %8058 = vmatprep.subr.bf16.mxu0 0
    %8059 = vmatpush1.bf16.msra.mxu0 0
    %8060 = vmatprep.subr.bf16.mxu0 0
    %8061 = vmatpush1.bf16.msra.mxu0 0
    %8062 = vmatprep.subr.bf16.mxu0 0
    %8063 = vmatpush1.bf16.msra.mxu0 0
    %8064 = vmatprep.subr.bf16.mxu0 0
    %8065 = vmatpush1.bf16.msra.mxu0 0
    %8066 = vmatprep.subr.bf16.mxu0 0
    %8067 = vmatpush1.bf16.msra.mxu0 0
    %8068 = vmatprep.subr.bf16.mxu0 0
    %8069 = vmatpush1.bf16.msra.mxu0 0
    %8070 = vmatprep.mubr.bf16.mxu0 0
    %8071 = vmatmul.mubr.bf16.gmra.mrb[0].mxu0 %v8036
    %v8072 = vpop.f32.mrb[0].mxu0
    %v8073 = vadd.f32 0.0, %v8072
    %v8074 = vpop.f32.mrb[0].mxu0
    %v8075 = vpop.f32.mrb[0].mxu0
    %v8076 = vpop.f32.mrb[0].mxu0
    %8077 = vdwg.mxu0
    %v8078 = vadd.f32 %v7999, %v8073
    %v8079 = vld [vmem:[#allocation8 + $0xc] sm:$0x3]
    %v8080 = vpack.c.bf16 %v8079, %v8079
    %s8081 = scalar_lea.vmem %s6, 96
    %v8082 = vld [vmem:[%s8081] sm:$0xf]
    %v8083 = vld [vmem:[%s8081 + $0x4] sm:$0xf]
    %v8084 = vld [vmem:[%s8081 + $0x8] sm:$0xf]
    %v8085 = vld [vmem:[%s8081 + $0xc] sm:$0xf]
    %v8086 = vld [vmem:[%s8081 + $0x10] sm:$0xf]
    %v8087 = vld [vmem:[%s8081 + $0x14] sm:$0xf]
    %v8088 = vld [vmem:[%s8081 + $0x18] sm:$0xf]
    %v8089 = vld [vmem:[%s8081 + $0x1c] sm:$0xf]
    %v8098 = vunpack.c.l.b16 %v8082
    %v8099 = vunpack.c.l.b16 %v8083
    %v8100 = vunpack.c.l.b16 %v8084
    %v8101 = vunpack.c.l.b16 %v8085
    %v8102 = vunpack.c.l.b16 %v8086
    %v8103 = vunpack.c.l.b16 %v8087
    %v8104 = vunpack.c.l.b16 %v8088
    %v8105 = vunpack.c.l.b16 %v8089
    %v8106 = vpack.c.b16 %v8099, %v8098
    %v8107 = vpack.c.b16 %v8101, %v8100
    %v8108 = vpack.c.b16 %v8103, %v8102
    %v8109 = vpack.c.b16 %v8105, %v8104
    %v8115 = vsel %vm7566, %v8080, 0
    %8117 = vmatprep.subr.bf16.mxu0 0
    %8118 = vmatpush1.bf16.msra.mxu0 %v8106
    %8119 = vmatprep.subr.bf16.mxu0 0
    %8120 = vmatpush1.bf16.msra.mxu0 %v8107
    %8121 = vmatprep.subr.bf16.mxu0 0
    %8122 = vmatpush1.bf16.msra.mxu0 %v8108
    %8123 = vmatprep.subr.bf16.mxu0 0
    %8124 = vmatpush1.bf16.msra.mxu0 %v8109
    %8125 = vmatprep.subr.bf16.mxu0 0
    %8126 = vmatpush1.bf16.msra.mxu0 0
    %8127 = vmatprep.subr.bf16.mxu0 0
    %8128 = vmatpush1.bf16.msra.mxu0 0
    %8129 = vmatprep.subr.bf16.mxu0 0
    %8130 = vmatpush1.bf16.msra.mxu0 0
    %8131 = vmatprep.subr.bf16.mxu0 0
    %8132 = vmatpush1.bf16.msra.mxu0 0
    %8133 = vmatprep.subr.bf16.mxu0 0
    %8134 = vmatpush1.bf16.msra.mxu0 0
    %8135 = vmatprep.subr.bf16.mxu0 0
    %8136 = vmatpush1.bf16.msra.mxu0 0
    %8137 = vmatprep.subr.bf16.mxu0 0
    %8138 = vmatpush1.bf16.msra.mxu0 0
    %8139 = vmatprep.subr.bf16.mxu0 0
    %8140 = vmatpush1.bf16.msra.mxu0 0
    %8141 = vmatprep.subr.bf16.mxu0 0
    %8142 = vmatpush1.bf16.msra.mxu0 0
    %8143 = vmatprep.subr.bf16.mxu0 0
    %8144 = vmatpush1.bf16.msra.mxu0 0
    %8145 = vmatprep.subr.bf16.mxu0 0
    %8146 = vmatpush1.bf16.msra.mxu0 0
    %8147 = vmatprep.subr.bf16.mxu0 0
    %8148 = vmatpush1.bf16.msra.mxu0 0
    %8149 = vmatprep.mubr.bf16.mxu0 0
    %8150 = vmatmul.mubr.bf16.gmra.mrb[0].mxu0 %v8115
    %v8151 = vpop.f32.mrb[0].mxu0
    %v8152 = vadd.f32 0.0, %v8151
    %v8153 = vpop.f32.mrb[0].mxu0
    %v8154 = vpop.f32.mrb[0].mxu0
    %v8155 = vpop.f32.mrb[0].mxu0
    %8156 = vdwg.mxu0
    %v8157 = vadd.f32 %v8078, %v8152
    %v8158 = vld [vmem:[#allocation8 + $0x30] sm:$0x3]
    %v8159 = vpack.c.bf16 %v8158, %v8158
    %s8160 = scalar_lea.vmem %s6, 128
    %v8161 = vld [vmem:[%s8160] sm:$0xf]
    %v8162 = vld [vmem:[%s8160 + $0x4] sm:$0xf]
    %v8163 = vld [vmem:[%s8160 + $0x8] sm:$0xf]
    %v8164 = vld [vmem:[%s8160 + $0xc] sm:$0xf]
    %v8165 = vld [vmem:[%s8160 + $0x10] sm:$0xf]
    %v8166 = vld [vmem:[%s8160 + $0x14] sm:$0xf]
    %v8167 = vld [vmem:[%s8160 + $0x18] sm:$0xf]
    %v8168 = vld [vmem:[%s8160 + $0x1c] sm:$0xf]
    %v8177 = vunpack.c.l.b16 %v8161
    %v8178 = vunpack.c.l.b16 %v8162
    %v8179 = vunpack.c.l.b16 %v8163
    %v8180 = vunpack.c.l.b16 %v8164
    %v8181 = vunpack.c.l.b16 %v8165
    %v8182 = vunpack.c.l.b16 %v8166
    %v8183 = vunpack.c.l.b16 %v8167
    %v8184 = vunpack.c.l.b16 %v8168
    %v8185 = vpack.c.b16 %v8178, %v8177
    %v8186 = vpack.c.b16 %v8180, %v8179
    %v8187 = vpack.c.b16 %v8182, %v8181
    %v8188 = vpack.c.b16 %v8184, %v8183
    %v8194 = vsel %vm7566, %v8159, 0
    %8196 = vmatprep.subr.bf16.mxu0 0
    %8197 = vmatpush1.bf16.msra.mxu0 %v8185
    %8198 = vmatprep.subr.bf16.mxu0 0
    %8199 = vmatpush1.bf16.msra.mxu0 %v8186
    %8200 = vmatprep.subr.bf16.mxu0 0
    %8201 = vmatpush1.bf16.msra.mxu0 %v8187
    %8202 = vmatprep.subr.bf16.mxu0 0
    %8203 = vmatpush1.bf16.msra.mxu0 %v8188
    %8204 = vmatprep.subr.bf16.mxu0 0
    %8205 = vmatpush1.bf16.msra.mxu0 0
    %8206 = vmatprep.subr.bf16.mxu0 0
    %8207 = vmatpush1.bf16.msra.mxu0 0
    %8208 = vmatprep.subr.bf16.mxu0 0
    %8209 = vmatpush1.bf16.msra.mxu0 0
    %8210 = vmatprep.subr.bf16.mxu0 0
    %8211 = vmatpush1.bf16.msra.mxu0 0
    %8212 = vmatprep.subr.bf16.mxu0 0
    %8213 = vmatpush1.bf16.msra.mxu0 0
    %8214 = vmatprep.subr.bf16.mxu0 0
    %8215 = vmatpush1.bf16.msra.mxu0 0
    %8216 = vmatprep.subr.bf16.mxu0 0
    %8217 = vmatpush1.bf16.msra.mxu0 0
    %8218 = vmatprep.subr.bf16.mxu0 0
    %8219 = vmatpush1.bf16.msra.mxu0 0
    %8220 = vmatprep.subr.bf16.mxu0 0
    %8221 = vmatpush1.bf16.msra.mxu0 0
    %8222 = vmatprep.subr.bf16.mxu0 0
    %8223 = vmatpush1.bf16.msra.mxu0 0
    %8224 = vmatprep.subr.bf16.mxu0 0
    %8225 = vmatpush1.bf16.msra.mxu0 0
    %8226 = vmatprep.subr.bf16.mxu0 0
    %8227 = vmatpush1.bf16.msra.mxu0 0
    %8228 = vmatprep.mubr.bf16.mxu0 0
    %8229 = vmatmul.mubr.bf16.gmra.mrb[0].mxu0 %v8194
    %v8230 = vpop.f32.mrb[0].mxu0
    %v8231 = vadd.f32 0.0, %v8230
    %v8232 = vpop.f32.mrb[0].mxu0
    %v8233 = vpop.f32.mrb[0].mxu0
    %v8234 = vpop.f32.mrb[0].mxu0
    %8235 = vdwg.mxu0
    %v8236 = vadd.f32 %v8157, %v8231
    %v8237 = vld [vmem:[#allocation8 + $0x34] sm:$0x3]
    %v8238 = vpack.c.bf16 %v8237, %v8237
    %s8239 = scalar_lea.vmem %s6, 160
    %v8240 = vld [vmem:[%s8239] sm:$0xf]
    %v8241 = vld [vmem:[%s8239 + $0x4] sm:$0xf]
    %v8242 = vld [vmem:[%s8239 + $0x8] sm:$0xf]
    %v8243 = vld [vmem:[%s8239 + $0xc] sm:$0xf]
    %v8244 = vld [vmem:[%s8239 + $0x10] sm:$0xf]
    %v8245 = vld [vmem:[%s8239 + $0x14] sm:$0xf]
    %v8246 = vld [vmem:[%s8239 + $0x18] sm:$0xf]
    %v8247 = vld [vmem:[%s8239 + $0x1c] sm:$0xf]
    %v8256 = vunpack.c.l.b16 %v8240
    %v8257 = vunpack.c.l.b16 %v8241
    %v8258 = vunpack.c.l.b16 %v8242
    %v8259 = vunpack.c.l.b16 %v8243
    %v8260 = vunpack.c.l.b16 %v8244
    %v8261 = vunpack.c.l.b16 %v8245
    %v8262 = vunpack.c.l.b16 %v8246
    %v8263 = vunpack.c.l.b16 %v8247
    %v8264 = vpack.c.b16 %v8257, %v8256
    %v8265 = vpack.c.b16 %v8259, %v8258
    %v8266 = vpack.c.b16 %v8261, %v8260
    %v8267 = vpack.c.b16 %v8263, %v8262
    %v8273 = vsel %vm7566, %v8238, 0
    %8275 = vmatprep.subr.bf16.mxu0 0
    %8276 = vmatpush1.bf16.msra.mxu0 %v8264
    %8277 = vmatprep.subr.bf16.mxu0 0
    %8278 = vmatpush1.bf16.msra.mxu0 %v8265
    %8279 = vmatprep.subr.bf16.mxu0 0
    %8280 = vmatpush1.bf16.msra.mxu0 %v8266
    %8281 = vmatprep.subr.bf16.mxu0 0
    %8282 = vmatpush1.bf16.msra.mxu0 %v8267
    %8283 = vmatprep.subr.bf16.mxu0 0
    %8284 = vmatpush1.bf16.msra.mxu0 0
    %8285 = vmatprep.subr.bf16.mxu0 0
    %8286 = vmatpush1.bf16.msra.mxu0 0
    %8287 = vmatprep.subr.bf16.mxu0 0
    %8288 = vmatpush1.bf16.msra.mxu0 0
    %8289 = vmatprep.subr.bf16.mxu0 0
    %8290 = vmatpush1.bf16.msra.mxu0 0
    %8291 = vmatprep.subr.bf16.mxu0 0
    %8292 = vmatpush1.bf16.msra.mxu0 0
    %8293 = vmatprep.subr.bf16.mxu0 0
    %8294 = vmatpush1.bf16.msra.mxu0 0
    %8295 = vmatprep.subr.bf16.mxu0 0
    %8296 = vmatpush1.bf16.msra.mxu0 0
    %8297 = vmatprep.subr.bf16.mxu0 0
    %8298 = vmatpush1.bf16.msra.mxu0 0
    %8299 = vmatprep.subr.bf16.mxu0 0
    %8300 = vmatpush1.bf16.msra.mxu0 0
    %8301 = vmatprep.subr.bf16.mxu0 0
    %8302 = vmatpush1.bf16.msra.mxu0 0
    %8303 = vmatprep.subr.bf16.mxu0 0
    %8304 = vmatpush1.bf16.msra.mxu0 0
    %8305 = vmatprep.subr.bf16.mxu0 0
    %8306 = vmatpush1.bf16.msra.mxu0 0
    %8307 = vmatprep.mubr.bf16.mxu0 0
    %8308 = vmatmul.mubr.bf16.gmra.mrb[0].mxu0 %v8273
    %v8309 = vpop.f32.mrb[0].mxu0
    %v8310 = vadd.f32 0.0, %v8309
    %v8311 = vpop.f32.mrb[0].mxu0
    %v8312 = vpop.f32.mrb[0].mxu0
    %v8313 = vpop.f32.mrb[0].mxu0
    %8314 = vdwg.mxu0
    %v8315 = vadd.f32 %v8236, %v8310
    %v8316 = vld [vmem:[#allocation8 + $0x38] sm:$0x3]
    %v8317 = vpack.c.bf16 %v8316, %v8316
    %s8318 = scalar_lea.vmem %s6, 192
    %v8319 = vld [vmem:[%s8318] sm:$0xf]
    %v8320 = vld [vmem:[%s8318 + $0x4] sm:$0xf]
    %v8321 = vld [vmem:[%s8318 + $0x8] sm:$0xf]
    %v8322 = vld [vmem:[%s8318 + $0xc] sm:$0xf]
    %v8323 = vld [vmem:[%s8318 + $0x10] sm:$0xf]
    %v8324 = vld [vmem:[%s8318 + $0x14] sm:$0xf]
    %v8325 = vld [vmem:[%s8318 + $0x18] sm:$0xf]
    %v8326 = vld [vmem:[%s8318 + $0x1c] sm:$0xf]
    %v8335 = vunpack.c.l.b16 %v8319
    %v8336 = vunpack.c.l.b16 %v8320
    %v8337 = vunpack.c.l.b16 %v8321
    %v8338 = vunpack.c.l.b16 %v8322
    %v8339 = vunpack.c.l.b16 %v8323
    %v8340 = vunpack.c.l.b16 %v8324
    %v8341 = vunpack.c.l.b16 %v8325
    %v8342 = vunpack.c.l.b16 %v8326
    %v8343 = vpack.c.b16 %v8336, %v8335
    %v8344 = vpack.c.b16 %v8338, %v8337
    %v8345 = vpack.c.b16 %v8340, %v8339
    %v8346 = vpack.c.b16 %v8342, %v8341
    %v8352 = vsel %vm7566, %v8317, 0
    %8354 = vmatprep.subr.bf16.mxu0 0
    %8355 = vmatpush1.bf16.msra.mxu0 %v8343
    %8356 = vmatprep.subr.bf16.mxu0 0
    %8357 = vmatpush1.bf16.msra.mxu0 %v8344
    %8358 = vmatprep.subr.bf16.mxu0 0
    %8359 = vmatpush1.bf16.msra.mxu0 %v8345
    %8360 = vmatprep.subr.bf16.mxu0 0
    %8361 = vmatpush1.bf16.msra.mxu0 %v8346
    %8362 = vmatprep.subr.bf16.mxu0 0
    %8363 = vmatpush1.bf16.msra.mxu0 0
    %8364 = vmatprep.subr.bf16.mxu0 0
    %8365 = vmatpush1.bf16.msra.mxu0 0
    %8366 = vmatprep.subr.bf16.mxu0 0
    %8367 = vmatpush1.bf16.msra.mxu0 0
    %8368 = vmatprep.subr.bf16.mxu0 0
    %8369 = vmatpush1.bf16.msra.mxu0 0
    %8370 = vmatprep.subr.bf16.mxu0 0
    %8371 = vmatpush1.bf16.msra.mxu0 0
    %8372 = vmatprep.subr.bf16.mxu0 0
    %8373 = vmatpush1.bf16.msra.mxu0 0
    %8374 = vmatprep.subr.bf16.mxu0 0
    %8375 = vmatpush1.bf16.msra.mxu0 0
    %8376 = vmatprep.subr.bf16.mxu0 0
    %8377 = vmatpush1.bf16.msra.mxu0 0
    %8378 = vmatprep.subr.bf16.mxu0 0
    %8379 = vmatpush1.bf16.msra.mxu0 0
    %8380 = vmatprep.subr.bf16.mxu0 0
    %8381 = vmatpush1.bf16.msra.mxu0 0
    %8382 = vmatprep.subr.bf16.mxu0 0
    %8383 = vmatpush1.bf16.msra.mxu0 0
    %8384 = vmatprep.subr.bf16.mxu0 0
    %8385 = vmatpush1.bf16.msra.mxu0 0
    %8386 = vmatprep.mubr.bf16.mxu0 0
    %8387 = vmatmul.mubr.bf16.gmra.mrb[0].mxu0 %v8352
    %v8388 = vpop.f32.mrb[0].mxu0
    %v8389 = vadd.f32 0.0, %v8388
    %v8390 = vpop.f32.mrb[0].mxu0
    %v8391 = vpop.f32.mrb[0].mxu0
    %v8392 = vpop.f32.mrb[0].mxu0
    %8393 = vdwg.mxu0
    %v8394 = vadd.f32 %v8315, %v8389
    %v8395 = vld [vmem:[#allocation8 + $0x3c] sm:$0x3]
    %v8396 = vpack.c.bf16 %v8395, %v8395
    %s8397 = scalar_lea.vmem %s6, 224
    %v8398 = vld [vmem:[%s8397] sm:$0xf]
    %v8399 = vld [vmem:[%s8397 + $0x4] sm:$0xf]
    %v8400 = vld [vmem:[%s8397 + $0x8] sm:$0xf]
    %v8401 = vld [vmem:[%s8397 + $0xc] sm:$0xf]
    %v8402 = vld [vmem:[%s8397 + $0x10] sm:$0xf]
    %v8403 = vld [vmem:[%s8397 + $0x14] sm:$0xf]
    %v8404 = vld [vmem:[%s8397 + $0x18] sm:$0xf]
    %v8405 = vld [vmem:[%s8397 + $0x1c] sm:$0xf]
    %v8414 = vunpack.c.l.b16 %v8398
    %v8415 = vunpack.c.l.b16 %v8399
    %v8416 = vunpack.c.l.b16 %v8400
    %v8417 = vunpack.c.l.b16 %v8401
    %v8418 = vunpack.c.l.b16 %v8402
    %v8419 = vunpack.c.l.b16 %v8403
    %v8420 = vunpack.c.l.b16 %v8404
    %v8421 = vunpack.c.l.b16 %v8405
    %v8422 = vpack.c.b16 %v8415, %v8414
    %v8423 = vpack.c.b16 %v8417, %v8416
    %v8424 = vpack.c.b16 %v8419, %v8418
    %v8425 = vpack.c.b16 %v8421, %v8420
    %v8431 = vsel %vm7566, %v8396, 0
    %8433 = vmatprep.subr.bf16.mxu0 0
    %8434 = vmatpush1.bf16.msra.mxu0 %v8422
    %8435 = vmatprep.subr.bf16.mxu0 0
    %8436 = vmatpush1.bf16.msra.mxu0 %v8423
    %8437 = vmatprep.subr.bf16.mxu0 0
    %8438 = vmatpush1.bf16.msra.mxu0 %v8424
    %8439 = vmatprep.subr.bf16.mxu0 0
    %8440 = vmatpush1.bf16.msra.mxu0 %v8425
    %8441 = vmatprep.subr.bf16.mxu0 0
    %8442 = vmatpush1.bf16.msra.mxu0 0
    %8443 = vmatprep.subr.bf16.mxu0 0
    %8444 = vmatpush1.bf16.msra.mxu0 0
    %8445 = vmatprep.subr.bf16.mxu0 0
    %8446 = vmatpush1.bf16.msra.mxu0 0
    %8447 = vmatprep.subr.bf16.mxu0 0
    %8448 = vmatpush1.bf16.msra.mxu0 0
    %8449 = vmatprep.subr.bf16.mxu0 0
    %8450 = vmatpush1.bf16.msra.mxu0 0
    %8451 = vmatprep.subr.bf16.mxu0 0
    %8452 = vmatpush1.bf16.msra.mxu0 0
    %8453 = vmatprep.subr.bf16.mxu0 0
    %8454 = vmatpush1.bf16.msra.mxu0 0
    %8455 = vmatprep.subr.bf16.mxu0 0
    %8456 = vmatpush1.bf16.msra.mxu0 0
    %8457 = vmatprep.subr.bf16.mxu0 0
    %8458 = vmatpush1.bf16.msra.mxu0 0
    %8459 = vmatprep.subr.bf16.mxu0 0
    %8460 = vmatpush1.bf16.msra.mxu0 0
    %8461 = vmatprep.subr.bf16.mxu0 0
    %8462 = vmatpush1.bf16.msra.mxu0 0
    %8463 = vmatprep.subr.bf16.mxu0 0
    %8464 = vmatpush1.bf16.msra.mxu0 0
    %8465 = vmatprep.mubr.bf16.mxu0 0
    %8466 = vmatmul.mubr.bf16.gmra.mrb[0].mxu0 %v8431
    %v8467 = vpop.f32.mrb[0].mxu0
    %v8468 = vadd.f32 0.0, %v8467
    %v8469 = vpop.f32.mrb[0].mxu0
    %v8470 = vpop.f32.mrb[0].mxu0
    %v8471 = vpop.f32.mrb[0].mxu0
    %8472 = vdwg.mxu0
    %v8473 = vadd.f32 %v8394, %v8468
    %v8474 = vld [vmem:[#allocation8 + $0x60] sm:$0x3]
    %v8475 = vpack.c.bf16 %v8474, %v8474
    %s8476 = scalar_lea.vmem %s6, 256
    %v8477 = vld [vmem:[%s8476] sm:$0xf]
    %v8478 = vld [vmem:[%s8476 + $0x4] sm:$0xf]
    %v8479 = vld [vmem:[%s8476 + $0x8] sm:$0xf]
    %v8480 = vld [vmem:[%s8476 + $0xc] sm:$0xf]
    %v8481 = vld [vmem:[%s8476 + $0x10] sm:$0xf]
    %v8482 = vld [vmem:[%s8476 + $0x14] sm:$0xf]
    %v8483 = vld [vmem:[%s8476 + $0x18] sm:$0xf]
    %v8484 = vld [vmem:[%s8476 + $0x1c] sm:$0xf]
    %v8493 = vunpack.c.l.b16 %v8477
    %v8494 = vunpack.c.l.b16 %v8478
    %v8495 = vunpack.c.l.b16 %v8479
    %v8496 = vunpack.c.l.b16 %v8480
    %v8497 = vunpack.c.l.b16 %v8481
    %v8498 = vunpack.c.l.b16 %v8482
    %v8499 = vunpack.c.l.b16 %v8483
    %v8500 = vunpack.c.l.b16 %v8484
    %v8501 = vpack.c.b16 %v8494, %v8493
    %v8502 = vpack.c.b16 %v8496, %v8495
    %v8503 = vpack.c.b16 %v8498, %v8497
    %v8504 = vpack.c.b16 %v8500, %v8499
    %v8510 = vsel %vm7566, %v8475, 0
    %8512 = vmatprep.subr.bf16.mxu0 0
    %8513 = vmatpush1.bf16.msra.mxu0 %v8501
    %8514 = vmatprep.subr.bf16.mxu0 0
    %8515 = vmatpush1.bf16.msra.mxu0 %v8502
    %8516 = vmatprep.subr.bf16.mxu0 0
    %8517 = vmatpush1.bf16.msra.mxu0 %v8503
    %8518 = vmatprep.subr.bf16.mxu0 0
    %8519 = vmatpush1.bf16.msra.mxu0 %v8504
    %8520 = vmatprep.subr.bf16.mxu0 0
    %8521 = vmatpush1.bf16.msra.mxu0 0
    %8522 = vmatprep.subr.bf16.mxu0 0
    %8523 = vmatpush1.bf16.msra.mxu0 0
    %8524 = vmatprep.subr.bf16.mxu0 0
    %8525 = vmatpush1.bf16.msra.mxu0 0
    %8526 = vmatprep.subr.bf16.mxu0 0
    %8527 = vmatpush1.bf16.msra.mxu0 0
    %8528 = vmatprep.subr.bf16.mxu0 0
    %8529 = vmatpush1.bf16.msra.mxu0 0
    %8530 = vmatprep.subr.bf16.mxu0 0
    %8531 = vmatpush1.bf16.msra.mxu0 0
    %8532 = vmatprep.subr.bf16.mxu0 0
    %8533 = vmatpush1.bf16.msra.mxu0 0
    %8534 = vmatprep.subr.bf16.mxu0 0
    %8535 = vmatpush1.bf16.msra.mxu0 0
    %8536 = vmatprep.subr.bf16.mxu0 0
    %8537 = vmatpush1.bf16.msra.mxu0 0
    %8538 = vmatprep.subr.bf16.mxu0 0
    %8539 = vmatpush1.bf16.msra.mxu0 0
    %8540 = vmatprep.subr.bf16.mxu0 0
    %8541 = vmatpush1.bf16.msra.mxu0 0
    %8542 = vmatprep.subr.bf16.mxu0 0
    %8543 = vmatpush1.bf16.msra.mxu0 0
    %8544 = vmatprep.mubr.bf16.mxu0 0
    %8545 = vmatmul.mubr.bf16.gmra.mrb[0].mxu0 %v8510
    %v8546 = vpop.f32.mrb[0].mxu0
    %v8547 = vadd.f32 0.0, %v8546
    %v8548 = vpop.f32.mrb[0].mxu0
    %v8549 = vpop.f32.mrb[0].mxu0
    %v8550 = vpop.f32.mrb[0].mxu0
    %8551 = vdwg.mxu0
    %v8552 = vadd.f32 %v8473, %v8547
    %v8553 = vld [vmem:[#allocation8 + $0x64] sm:$0x3]
    %v8554 = vpack.c.bf16 %v8553, %v8553
    %s8555 = scalar_lea.vmem %s6, 288
    %v8556 = vld [vmem:[%s8555] sm:$0xf]
    %v8557 = vld [vmem:[%s8555 + $0x4] sm:$0xf]
    %v8558 = vld [vmem:[%s8555 + $0x8] sm:$0xf]
    %v8559 = vld [vmem:[%s8555 + $0xc] sm:$0xf]
    %v8560 = vld [vmem:[%s8555 + $0x10] sm:$0xf]
    %v8561 = vld [vmem:[%s8555 + $0x14] sm:$0xf]
    %v8562 = vld [vmem:[%s8555 + $0x18] sm:$0xf]
    %v8563 = vld [vmem:[%s8555 + $0x1c] sm:$0xf]
    %v8572 = vunpack.c.l.b16 %v8556
    %v8573 = vunpack.c.l.b16 %v8557
    %v8574 = vunpack.c.l.b16 %v8558
    %v8575 = vunpack.c.l.b16 %v8559
    %v8576 = vunpack.c.l.b16 %v8560
    %v8577 = vunpack.c.l.b16 %v8561
    %v8578 = vunpack.c.l.b16 %v8562
    %v8579 = vunpack.c.l.b16 %v8563
    %v8580 = vpack.c.b16 %v8573, %v8572
    %v8581 = vpack.c.b16 %v8575, %v8574
    %v8582 = vpack.c.b16 %v8577, %v8576
    %v8583 = vpack.c.b16 %v8579, %v8578
    %v8589 = vsel %vm7566, %v8554, 0
    %8591 = vmatprep.subr.bf16.mxu0 0
    %8592 = vmatpush1.bf16.msra.mxu0 %v8580
    %8593 = vmatprep.subr.bf16.mxu0 0
    %8594 = vmatpush1.bf16.msra.mxu0 %v8581
    %8595 = vmatprep.subr.bf16.mxu0 0
    %8596 = vmatpush1.bf16.msra.mxu0 %v8582
    %8597 = vmatprep.subr.bf16.mxu0 0
    %8598 = vmatpush1.bf16.msra.mxu0 %v8583
    %8599 = vmatprep.subr.bf16.mxu0 0
    %8600 = vmatpush1.bf16.msra.mxu0 0
    %8601 = vmatprep.subr.bf16.mxu0 0
    %8602 = vmatpush1.bf16.msra.mxu0 0
    %8603 = vmatprep.subr.bf16.mxu0 0
    %8604 = vmatpush1.bf16.msra.mxu0 0
    %8605 = vmatprep.subr.bf16.mxu0 0
    %8606 = vmatpush1.bf16.msra.mxu0 0
    %8607 = vmatprep.subr.bf16.mxu0 0
    %8608 = vmatpush1.bf16.msra.mxu0 0
    %8609 = vmatprep.subr.bf16.mxu0 0
    %8610 = vmatpush1.bf16.msra.mxu0 0
    %8611 = vmatprep.subr.bf16.mxu0 0
    %8612 = vmatpush1.bf16.msra.mxu0 0
    %8613 = vmatprep.subr.bf16.mxu0 0
    %8614 = vmatpush1.bf16.msra.mxu0 0
    %8615 = vmatprep.subr.bf16.mxu0 0
    %8616 = vmatpush1.bf16.msra.mxu0 0
    %8617 = vmatprep.subr.bf16.mxu0 0
    %8618 = vmatpush1.bf16.msra.mxu0 0
    %8619 = vmatprep.subr.bf16.mxu0 0
    %8620 = vmatpush1.bf16.msra.mxu0 0
    %8621 = vmatprep.subr.bf16.mxu0 0
    %8622 = vmatpush1.bf16.msra.mxu0 0
    %8623 = vmatprep.mubr.bf16.mxu0 0
    %8624 = vmatmul.mubr.bf16.gmra.mrb[0].mxu0 %v8589
    %v8625 = vpop.f32.mrb[0].mxu0
    %v8626 = vadd.f32 0.0, %v8625
    %v8627 = vpop.f32.mrb[0].mxu0
    %v8628 = vpop.f32.mrb[0].mxu0
    %v8629 = vpop.f32.mrb[0].mxu0
    %8630 = vdwg.mxu0
    %v8631 = vadd.f32 %v8552, %v8626
    %v8632 = vld [vmem:[#allocation8 + $0x68] sm:$0x3]
    %v8633 = vpack.c.bf16 %v8632, %v8632
    %s8634 = scalar_lea.vmem %s6, 320
    %v8635 = vld [vmem:[%s8634] sm:$0xf]
    %v8636 = vld [vmem:[%s8634 + $0x4] sm:$0xf]
    %v8637 = vld [vmem:[%s8634 + $0x8] sm:$0xf]
    %v8638 = vld [vmem:[%s8634 + $0xc] sm:$0xf]
    %v8639 = vld [vmem:[%s8634 + $0x10] sm:$0xf]
    %v8640 = vld [vmem:[%s8634 + $0x14] sm:$0xf]
    %v8641 = vld [vmem:[%s8634 + $0x18] sm:$0xf]
    %v8642 = vld [vmem:[%s8634 + $0x1c] sm:$0xf]
    %v8651 = vunpack.c.l.b16 %v8635
    %v8652 = vunpack.c.l.b16 %v8636
    %v8653 = vunpack.c.l.b16 %v8637
    %v8654 = vunpack.c.l.b16 %v8638
    %v8655 = vunpack.c.l.b16 %v8639
    %v8656 = vunpack.c.l.b16 %v8640
    %v8657 = vunpack.c.l.b16 %v8641
    %v8658 = vunpack.c.l.b16 %v8642
    %v8659 = vpack.c.b16 %v8652, %v8651
    %v8660 = vpack.c.b16 %v8654, %v8653
    %v8661 = vpack.c.b16 %v8656, %v8655
    %v8662 = vpack.c.b16 %v8658, %v8657
    %v8668 = vsel %vm7566, %v8633, 0
    %8670 = vmatprep.subr.bf16.mxu0 0
    %8671 = vmatpush1.bf16.msra.mxu0 %v8659
    %8672 = vmatprep.subr.bf16.mxu0 0
    %8673 = vmatpush1.bf16.msra.mxu0 %v8660
    %8674 = vmatprep.subr.bf16.mxu0 0
    %8675 = vmatpush1.bf16.msra.mxu0 %v8661
    %8676 = vmatprep.subr.bf16.mxu0 0
    %8677 = vmatpush1.bf16.msra.mxu0 %v8662
    %8678 = vmatprep.subr.bf16.mxu0 0
    %8679 = vmatpush1.bf16.msra.mxu0 0
    %8680 = vmatprep.subr.bf16.mxu0 0
    %8681 = vmatpush1.bf16.msra.mxu0 0
    %8682 = vmatprep.subr.bf16.mxu0 0
    %8683 = vmatpush1.bf16.msra.mxu0 0
    %8684 = vmatprep.subr.bf16.mxu0 0
    %8685 = vmatpush1.bf16.msra.mxu0 0
    %8686 = vmatprep.subr.bf16.mxu0 0
    %8687 = vmatpush1.bf16.msra.mxu0 0
    %8688 = vmatprep.subr.bf16.mxu0 0
    %8689 = vmatpush1.bf16.msra.mxu0 0
    %8690 = vmatprep.subr.bf16.mxu0 0
    %8691 = vmatpush1.bf16.msra.mxu0 0
    %8692 = vmatprep.subr.bf16.mxu0 0
    %8693 = vmatpush1.bf16.msra.mxu0 0
    %8694 = vmatprep.subr.bf16.mxu0 0
    %8695 = vmatpush1.bf16.msra.mxu0 0
    %8696 = vmatprep.subr.bf16.mxu0 0
    %8697 = vmatpush1.bf16.msra.mxu0 0
    %8698 = vmatprep.subr.bf16.mxu0 0
    %8699 = vmatpush1.bf16.msra.mxu0 0
    %8700 = vmatprep.subr.bf16.mxu0 0
    %8701 = vmatpush1.bf16.msra.mxu0 0
    %8702 = vmatprep.mubr.bf16.mxu0 0
    %8703 = vmatmul.mubr.bf16.gmra.mrb[0].mxu0 %v8668
    %v8704 = vpop.f32.mrb[0].mxu0
    %v8705 = vadd.f32 0.0, %v8704
    %v8706 = vpop.f32.mrb[0].mxu0
    %v8707 = vpop.f32.mrb[0].mxu0
    %v8708 = vpop.f32.mrb[0].mxu0
    %8709 = vdwg.mxu0
    %v8710 = vadd.f32 %v8631, %v8705
    %v8711 = vld [vmem:[#allocation8 + $0x6c] sm:$0x3]
    %v8712 = vpack.c.bf16 %v8711, %v8711
    %s8713 = scalar_lea.vmem %s6, 352
    %v8714 = vld [vmem:[%s8713] sm:$0xf]
    %v8715 = vld [vmem:[%s8713 + $0x4] sm:$0xf]
    %v8716 = vld [vmem:[%s8713 + $0x8] sm:$0xf]
    %v8717 = vld [vmem:[%s8713 + $0xc] sm:$0xf]
    %v8718 = vld [vmem:[%s8713 + $0x10] sm:$0xf]
    %v8719 = vld [vmem:[%s8713 + $0x14] sm:$0xf]
    %v8720 = vld [vmem:[%s8713 + $0x18] sm:$0xf]
    %v8721 = vld [vmem:[%s8713 + $0x1c] sm:$0xf]
    %v8730 = vunpack.c.l.b16 %v8714
    %v8731 = vunpack.c.l.b16 %v8715
    %v8732 = vunpack.c.l.b16 %v8716
    %v8733 = vunpack.c.l.b16 %v8717
    %v8734 = vunpack.c.l.b16 %v8718
    %v8735 = vunpack.c.l.b16 %v8719
    %v8736 = vunpack.c.l.b16 %v8720
    %v8737 = vunpack.c.l.b16 %v8721
    %v8738 = vpack.c.b16 %v8731, %v8730
    %v8739 = vpack.c.b16 %v8733, %v8732
    %v8740 = vpack.c.b16 %v8735, %v8734
    %v8741 = vpack.c.b16 %v8737, %v8736
    %v8747 = vsel %vm7566, %v8712, 0
    %8749 = vmatprep.subr.bf16.mxu0 0
    %8750 = vmatpush1.bf16.msra.mxu0 %v8738
    %8751 = vmatprep.subr.bf16.mxu0 0
    %8752 = vmatpush1.bf16.msra.mxu0 %v8739
    %8753 = vmatprep.subr.bf16.mxu0 0
    %8754 = vmatpush1.bf16.msra.mxu0 %v8740
    %8755 = vmatprep.subr.bf16.mxu0 0
    %8756 = vmatpush1.bf16.msra.mxu0 %v8741
    %8757 = vmatprep.subr.bf16.mxu0 0
    %8758 = vmatpush1.bf16.msra.mxu0 0
    %8759 = vmatprep.subr.bf16.mxu0 0
    %8760 = vmatpush1.bf16.msra.mxu0 0
    %8761 = vmatprep.subr.bf16.mxu0 0
    %8762 = vmatpush1.bf16.msra.mxu0 0
    %8763 = vmatprep.subr.bf16.mxu0 0
    %8764 = vmatpush1.bf16.msra.mxu0 0
    %8765 = vmatprep.subr.bf16.mxu0 0
    %8766 = vmatpush1.bf16.msra.mxu0 0
    %8767 = vmatprep.subr.bf16.mxu0 0
    %8768 = vmatpush1.bf16.msra.mxu0 0
    %8769 = vmatprep.subr.bf16.mxu0 0
    %8770 = vmatpush1.bf16.msra.mxu0 0
    %8771 = vmatprep.subr.bf16.mxu0 0
    %8772 = vmatpush1.bf16.msra.mxu0 0
    %8773 = vmatprep.subr.bf16.mxu0 0
    %8774 = vmatpush1.bf16.msra.mxu0 0
    %8775 = vmatprep.subr.bf16.mxu0 0
    %8776 = vmatpush1.bf16.msra.mxu0 0
    %8777 = vmatprep.subr.bf16.mxu0 0
    %8778 = vmatpush1.bf16.msra.mxu0 0
    %8779 = vmatprep.subr.bf16.mxu0 0
    %8780 = vmatpush1.bf16.msra.mxu0 0
    %8781 = vmatprep.mubr.bf16.mxu0 0
    %8782 = vmatmul.mubr.bf16.gmra.mrb[0].mxu0 %v8747
    %v8783 = vpop.f32.mrb[0].mxu0
    %v8784 = vadd.f32 0.0, %v8783
    %v8785 = vpop.f32.mrb[0].mxu0
    %v8786 = vpop.f32.mrb[0].mxu0
    %v8787 = vpop.f32.mrb[0].mxu0
    %8788 = vdwg.mxu0
    %v8789 = vadd.f32 %v8710, %v8784
    %v8790 = vld [vmem:[#allocation8 + $0x90] sm:$0x3]
    %v8791 = vpack.c.bf16 %v8790, %v8790
    %s8792 = scalar_lea.vmem %s6, 384
    %v8793 = vld [vmem:[%s8792] sm:$0xf]
    %v8794 = vld [vmem:[%s8792 + $0x4] sm:$0xf]
    %v8795 = vld [vmem:[%s8792 + $0x8] sm:$0xf]
    %v8796 = vld [vmem:[%s8792 + $0xc] sm:$0xf]
    %v8797 = vld [vmem:[%s8792 + $0x10] sm:$0xf]
    %v8798 = vld [vmem:[%s8792 + $0x14] sm:$0xf]
    %v8799 = vld [vmem:[%s8792 + $0x18] sm:$0xf]
    %v8800 = vld [vmem:[%s8792 + $0x1c] sm:$0xf]
    %v8809 = vunpack.c.l.b16 %v8793
    %v8810 = vunpack.c.l.b16 %v8794
    %v8811 = vunpack.c.l.b16 %v8795
    %v8812 = vunpack.c.l.b16 %v8796
    %v8813 = vunpack.c.l.b16 %v8797
    %v8814 = vunpack.c.l.b16 %v8798
    %v8815 = vunpack.c.l.b16 %v8799
    %v8816 = vunpack.c.l.b16 %v8800
    %v8817 = vpack.c.b16 %v8810, %v8809
    %v8818 = vpack.c.b16 %v8812, %v8811
    %v8819 = vpack.c.b16 %v8814, %v8813
    %v8820 = vpack.c.b16 %v8816, %v8815
    %v8826 = vsel %vm7566, %v8791, 0
    %8828 = vmatprep.subr.bf16.mxu0 0
    %8829 = vmatpush1.bf16.msra.mxu0 %v8817
    %8830 = vmatprep.subr.bf16.mxu0 0
    %8831 = vmatpush1.bf16.msra.mxu0 %v8818
    %8832 = vmatprep.subr.bf16.mxu0 0
    %8833 = vmatpush1.bf16.msra.mxu0 %v8819
    %8834 = vmatprep.subr.bf16.mxu0 0
    %8835 = vmatpush1.bf16.msra.mxu0 %v8820
    %8836 = vmatprep.subr.bf16.mxu0 0
    %8837 = vmatpush1.bf16.msra.mxu0 0
    %8838 = vmatprep.subr.bf16.mxu0 0
    %8839 = vmatpush1.bf16.msra.mxu0 0
    %8840 = vmatprep.subr.bf16.mxu0 0
    %8841 = vmatpush1.bf16.msra.mxu0 0
    %8842 = vmatprep.subr.bf16.mxu0 0
    %8843 = vmatpush1.bf16.msra.mxu0 0
    %8844 = vmatprep.subr.bf16.mxu0 0
    %8845 = vmatpush1.bf16.msra.mxu0 0
    %8846 = vmatprep.subr.bf16.mxu0 0
    %8847 = vmatpush1.bf16.msra.mxu0 0
    %8848 = vmatprep.subr.bf16.mxu0 0
    %8849 = vmatpush1.bf16.msra.mxu0 0
    %8850 = vmatprep.subr.bf16.mxu0 0
    %8851 = vmatpush1.bf16.msra.mxu0 0
    %8852 = vmatprep.subr.bf16.mxu0 0
    %8853 = vmatpush1.bf16.msra.mxu0 0
    %8854 = vmatprep.subr.bf16.mxu0 0
    %8855 = vmatpush1.bf16.msra.mxu0 0
    %8856 = vmatprep.subr.bf16.mxu0 0
    %8857 = vmatpush1.bf16.msra.mxu0 0
    %8858 = vmatprep.subr.bf16.mxu0 0
    %8859 = vmatpush1.bf16.msra.mxu0 0
    %8860 = vmatprep.mubr.bf16.mxu0 0
    %8861 = vmatmul.mubr.bf16.gmra.mrb[0].mxu0 %v8826
    %v8862 = vpop.f32.mrb[0].mxu0
    %v8863 = vadd.f32 0.0, %v8862
    %v8864 = vpop.f32.mrb[0].mxu0
    %v8865 = vpop.f32.mrb[0].mxu0
    %v8866 = vpop.f32.mrb[0].mxu0
    %8867 = vdwg.mxu0
    %v8868 = vadd.f32 %v8789, %v8863
    %v8869 = vld [vmem:[#allocation8 + $0x94] sm:$0x3]
    %v8870 = vpack.c.bf16 %v8869, %v8869
    %s8871 = scalar_lea.vmem %s6, 416
    %v8872 = vld [vmem:[%s8871] sm:$0xf]
    %v8873 = vld [vmem:[%s8871 + $0x4] sm:$0xf]
    %v8874 = vld [vmem:[%s8871 + $0x8] sm:$0xf]
    %v8875 = vld [vmem:[%s8871 + $0xc] sm:$0xf]
    %v8876 = vld [vmem:[%s8871 + $0x10] sm:$0xf]
    %v8877 = vld [vmem:[%s8871 + $0x14] sm:$0xf]
    %v8878 = vld [vmem:[%s8871 + $0x18] sm:$0xf]
    %v8879 = vld [vmem:[%s8871 + $0x1c] sm:$0xf]
    %v8888 = vunpack.c.l.b16 %v8872
    %v8889 = vunpack.c.l.b16 %v8873
    %v8890 = vunpack.c.l.b16 %v8874
    %v8891 = vunpack.c.l.b16 %v8875
    %v8892 = vunpack.c.l.b16 %v8876
    %v8893 = vunpack.c.l.b16 %v8877
    %v8894 = vunpack.c.l.b16 %v8878
    %v8895 = vunpack.c.l.b16 %v8879
    %v8896 = vpack.c.b16 %v8889, %v8888
    %v8897 = vpack.c.b16 %v8891, %v8890
    %v8898 = vpack.c.b16 %v8893, %v8892
    %v8899 = vpack.c.b16 %v8895, %v8894
    %v8905 = vsel %vm7566, %v8870, 0
    %8907 = vmatprep.subr.bf16.mxu0 0
    %8908 = vmatpush1.bf16.msra.mxu0 %v8896
    %8909 = vmatprep.subr.bf16.mxu0 0
    %8910 = vmatpush1.bf16.msra.mxu0 %v8897
    %8911 = vmatprep.subr.bf16.mxu0 0
    %8912 = vmatpush1.bf16.msra.mxu0 %v8898
    %8913 = vmatprep.subr.bf16.mxu0 0
    %8914 = vmatpush1.bf16.msra.mxu0 %v8899
    %8915 = vmatprep.subr.bf16.mxu0 0
    %8916 = vmatpush1.bf16.msra.mxu0 0
    %8917 = vmatprep.subr.bf16.mxu0 0
    %8918 = vmatpush1.bf16.msra.mxu0 0
    %8919 = vmatprep.subr.bf16.mxu0 0
    %8920 = vmatpush1.bf16.msra.mxu0 0
    %8921 = vmatprep.subr.bf16.mxu0 0
    %8922 = vmatpush1.bf16.msra.mxu0 0
    %8923 = vmatprep.subr.bf16.mxu0 0
    %8924 = vmatpush1.bf16.msra.mxu0 0
    %8925 = vmatprep.subr.bf16.mxu0 0
    %8926 = vmatpush1.bf16.msra.mxu0 0
    %8927 = vmatprep.subr.bf16.mxu0 0
    %8928 = vmatpush1.bf16.msra.mxu0 0
    %8929 = vmatprep.subr.bf16.mxu0 0
    %8930 = vmatpush1.bf16.msra.mxu0 0
    %8931 = vmatprep.subr.bf16.mxu0 0
    %8932 = vmatpush1.bf16.msra.mxu0 0
    %8933 = vmatprep.subr.bf16.mxu0 0
    %8934 = vmatpush1.bf16.msra.mxu0 0
    %8935 = vmatprep.subr.bf16.mxu0 0
    %8936 = vmatpush1.bf16.msra.mxu0 0
    %8937 = vmatprep.subr.bf16.mxu0 0
    %8938 = vmatpush1.bf16.msra.mxu0 0
    %8939 = vmatprep.mubr.bf16.mxu0 0
    %8940 = vmatmul.mubr.bf16.gmra.mrb[0].mxu0 %v8905
    %v8941 = vpop.f32.mrb[0].mxu0
    %v8942 = vadd.f32 0.0, %v8941
    %v8943 = vpop.f32.mrb[0].mxu0
    %v8944 = vpop.f32.mrb[0].mxu0
    %v8945 = vpop.f32.mrb[0].mxu0
    %8946 = vdwg.mxu0
    %v8947 = vadd.f32 %v8868, %v8942
    %v8948 = vld [vmem:[#allocation8 + $0x98] sm:$0x3]
    %v8949 = vpack.c.bf16 %v8948, %v8948
    %s8950 = scalar_lea.vmem %s6, 448
    %v8951 = vld [vmem:[%s8950] sm:$0xf]
    %v8952 = vld [vmem:[%s8950 + $0x4] sm:$0xf]
    %v8953 = vld [vmem:[%s8950 + $0x8] sm:$0xf]
    %v8954 = vld [vmem:[%s8950 + $0xc] sm:$0xf]
    %v8955 = vld [vmem:[%s8950 + $0x10] sm:$0xf]
    %v8956 = vld [vmem:[%s8950 + $0x14] sm:$0xf]
    %v8957 = vld [vmem:[%s8950 + $0x18] sm:$0xf]
    %v8958 = vld [vmem:[%s8950 + $0x1c] sm:$0xf]
    %v8967 = vunpack.c.l.b16 %v8951
    %v8968 = vunpack.c.l.b16 %v8952
    %v8969 = vunpack.c.l.b16 %v8953
    %v8970 = vunpack.c.l.b16 %v8954
    %v8971 = vunpack.c.l.b16 %v8955
    %v8972 = vunpack.c.l.b16 %v8956
    %v8973 = vunpack.c.l.b16 %v8957
    %v8974 = vunpack.c.l.b16 %v8958
    %v8975 = vpack.c.b16 %v8968, %v8967
    %v8976 = vpack.c.b16 %v8970, %v8969
    %v8977 = vpack.c.b16 %v8972, %v8971
    %v8978 = vpack.c.b16 %v8974, %v8973
    %v8984 = vsel %vm7566, %v8949, 0
    %8986 = vmatprep.subr.bf16.mxu0 0
    %8987 = vmatpush1.bf16.msra.mxu0 %v8975
    %8988 = vmatprep.subr.bf16.mxu0 0
    %8989 = vmatpush1.bf16.msra.mxu0 %v8976
    %8990 = vmatprep.subr.bf16.mxu0 0
    %8991 = vmatpush1.bf16.msra.mxu0 %v8977
    %8992 = vmatprep.subr.bf16.mxu0 0
    %8993 = vmatpush1.bf16.msra.mxu0 %v8978
    %8994 = vmatprep.subr.bf16.mxu0 0
    %8995 = vmatpush1.bf16.msra.mxu0 0
    %8996 = vmatprep.subr.bf16.mxu0 0
    %8997 = vmatpush1.bf16.msra.mxu0 0
    %8998 = vmatprep.subr.bf16.mxu0 0
    %8999 = vmatpush1.bf16.msra.mxu0 0
    %9000 = vmatprep.subr.bf16.mxu0 0
    %9001 = vmatpush1.bf16.msra.mxu0 0
    %9002 = vmatprep.subr.bf16.mxu0 0
    %9003 = vmatpush1.bf16.msra.mxu0 0
    %9004 = vmatprep.subr.bf16.mxu0 0
    %9005 = vmatpush1.bf16.msra.mxu0 0
    %9006 = vmatprep.subr.bf16.mxu0 0
    %9007 = vmatpush1.bf16.msra.mxu0 0
    %9008 = vmatprep.subr.bf16.mxu0 0
    %9009 = vmatpush1.bf16.msra.mxu0 0
    %9010 = vmatprep.subr.bf16.mxu0 0
    %9011 = vmatpush1.bf16.msra.mxu0 0
    %9012 = vmatprep.subr.bf16.mxu0 0
    %9013 = vmatpush1.bf16.msra.mxu0 0
    %9014 = vmatprep.subr.bf16.mxu0 0
    %9015 = vmatpush1.bf16.msra.mxu0 0
    %9016 = vmatprep.subr.bf16.mxu0 0
    %9017 = vmatpush1.bf16.msra.mxu0 0
    %9018 = vmatprep.mubr.bf16.mxu0 0
    %9019 = vmatmul.mubr.bf16.gmra.mrb[0].mxu0 %v8984
    %v9020 = vpop.f32.mrb[0].mxu0
    %v9021 = vadd.f32 0.0, %v9020
    %v9022 = vpop.f32.mrb[0].mxu0
    %v9023 = vpop.f32.mrb[0].mxu0
    %v9024 = vpop.f32.mrb[0].mxu0
    %9025 = vdwg.mxu0
    %v9026 = vadd.f32 %v8947, %v9021
    %v9027 = vld [vmem:[#allocation8 + $0x9c] sm:$0x3]
    %v9028 = vpack.c.bf16 %v9027, %v9027
    %s9029 = scalar_lea.vmem %s6, 480
    %v9030 = vld [vmem:[%s9029] sm:$0xf]
    %v9031 = vld [vmem:[%s9029 + $0x4] sm:$0xf]
    %v9032 = vld [vmem:[%s9029 + $0x8] sm:$0xf]
    %v9033 = vld [vmem:[%s9029 + $0xc] sm:$0xf]
    %v9034 = vld [vmem:[%s9029 + $0x10] sm:$0xf]
    %v9035 = vld [vmem:[%s9029 + $0x14] sm:$0xf]
    %v9036 = vld [vmem:[%s9029 + $0x18] sm:$0xf]
    %v9037 = vld [vmem:[%s9029 + $0x1c] sm:$0xf]
    %v9046 = vunpack.c.l.b16 %v9030
    %v9047 = vunpack.c.l.b16 %v9031
    %v9048 = vunpack.c.l.b16 %v9032
    %v9049 = vunpack.c.l.b16 %v9033
    %v9050 = vunpack.c.l.b16 %v9034
    %v9051 = vunpack.c.l.b16 %v9035
    %v9052 = vunpack.c.l.b16 %v9036
    %v9053 = vunpack.c.l.b16 %v9037
    %v9054 = vpack.c.b16 %v9047, %v9046
    %v9055 = vpack.c.b16 %v9049, %v9048
    %v9056 = vpack.c.b16 %v9051, %v9050
    %v9057 = vpack.c.b16 %v9053, %v9052
    %v9063 = vsel %vm7566, %v9028, 0
    %9065 = vmatprep.subr.bf16.mxu0 0
    %9066 = vmatpush1.bf16.msra.mxu0 %v9054
    %9067 = vmatprep.subr.bf16.mxu0 0
    %9068 = vmatpush1.bf16.msra.mxu0 %v9055
    %9069 = vmatprep.subr.bf16.mxu0 0
    %9070 = vmatpush1.bf16.msra.mxu0 %v9056
    %9071 = vmatprep.subr.bf16.mxu0 0
    %9072 = vmatpush1.bf16.msra.mxu0 %v9057
    %9073 = vmatprep.subr.bf16.mxu0 0
    %9074 = vmatpush1.bf16.msra.mxu0 0
    %9075 = vmatprep.subr.bf16.mxu0 0
    %9076 = vmatpush1.bf16.msra.mxu0 0
    %9077 = vmatprep.subr.bf16.mxu0 0
    %9078 = vmatpush1.bf16.msra.mxu0 0
    %9079 = vmatprep.subr.bf16.mxu0 0
    %9080 = vmatpush1.bf16.msra.mxu0 0
    %9081 = vmatprep.subr.bf16.mxu0 0
    %9082 = vmatpush1.bf16.msra.mxu0 0
    %9083 = vmatprep.subr.bf16.mxu0 0
    %9084 = vmatpush1.bf16.msra.mxu0 0
    %9085 = vmatprep.subr.bf16.mxu0 0
    %9086 = vmatpush1.bf16.msra.mxu0 0
    %9087 = vmatprep.subr.bf16.mxu0 0
    %9088 = vmatpush1.bf16.msra.mxu0 0
    %9089 = vmatprep.subr.bf16.mxu0 0
    %9090 = vmatpush1.bf16.msra.mxu0 0
    %9091 = vmatprep.subr.bf16.mxu0 0
    %9092 = vmatpush1.bf16.msra.mxu0 0
    %9093 = vmatprep.subr.bf16.mxu0 0
    %9094 = vmatpush1.bf16.msra.mxu0 0
    %9095 = vmatprep.subr.bf16.mxu0 0
    %9096 = vmatpush1.bf16.msra.mxu0 0
    %9097 = vmatprep.mubr.bf16.mxu0 0
    %9098 = vmatmul.mubr.bf16.gmra.mrb[0].mxu0 %v9063
    %v9099 = vpop.f32.mrb[0].mxu0
    %v9100 = vadd.f32 0.0, %v9099
    %v9101 = vpop.f32.mrb[0].mxu0
    %v9102 = vpop.f32.mrb[0].mxu0
    %v9103 = vpop.f32.mrb[0].mxu0
    %9104 = vdwg.mxu0
    %v9105 = vadd.f32 %v9026, %v9100
    %v9106 = vmax.f32 %v9105, 0.0
    %v9107 = vpack.c.bf16 %v9106, %v9106
    %v9108 = vld [vmem:[%s8] sm:$0xf]
    %v9109 = vld [vmem:[%s8 + $0x4] sm:$0xf]
    %v9110 = vld [vmem:[%s8 + $0x8] sm:$0xf]
    %v9111 = vld [vmem:[%s8 + $0xc] sm:$0xf]
    %v9112 = vld [vmem:[%s9] sm:$0x1]
    %v9114 = vlaneseq
    %v9115 = vshrl.u32 %v9114, 7
    %v9116 = vsub.s32 0, %v9115
    %v9117 = vrot.slane %v9112, %v9116
    %v9123 = vunpack.c.l.b16 %v9108
    %v9124 = vunpack.c.l.b16 %v9109
    %v9125 = vunpack.c.l.b16 %v9110
    %v9126 = vunpack.c.l.b16 %v9111
    %v9127 = vpack.c.b16 %v9124, %v9123
    %v9128 = vpack.c.b16 %v9126, %v9125
    %v9132 = vsel %vm655, %v9107, 0
    %9134 = vmatprep.subr.bf16.mxu0 0
    %9135 = vmatpush1.bf16.msra.mxu0 %v9127
    %9136 = vmatprep.subr.bf16.mxu0 0
    %9137 = vmatpush1.bf16.msra.mxu0 %v9128
    %9138 = vmatprep.subr.bf16.mxu0 0
    %9139 = vmatpush1.bf16.msra.mxu0 0
    %9140 = vmatprep.subr.bf16.mxu0 0
    %9141 = vmatpush1.bf16.msra.mxu0 0
    %9142 = vmatprep.subr.bf16.mxu0 0
    %9143 = vmatpush1.bf16.msra.mxu0 0
    %9144 = vmatprep.subr.bf16.mxu0 0
    %9145 = vmatpush1.bf16.msra.mxu0 0
    %9146 = vmatprep.subr.bf16.mxu0 0
    %9147 = vmatpush1.bf16.msra.mxu0 0
    %9148 = vmatprep.subr.bf16.mxu0 0
    %9149 = vmatpush1.bf16.msra.mxu0 0
    %9150 = vmatprep.subr.bf16.mxu0 0
    %9151 = vmatpush1.bf16.msra.mxu0 0
    %9152 = vmatprep.subr.bf16.mxu0 0
    %9153 = vmatpush1.bf16.msra.mxu0 0
    %9154 = vmatprep.subr.bf16.mxu0 0
    %9155 = vmatpush1.bf16.msra.mxu0 0
    %9156 = vmatprep.subr.bf16.mxu0 0
    %9157 = vmatpush1.bf16.msra.mxu0 0
    %9158 = vmatprep.subr.bf16.mxu0 0
    %9159 = vmatpush1.bf16.msra.mxu0 0
    %9160 = vmatprep.subr.bf16.mxu0 0
    %9161 = vmatpush1.bf16.msra.mxu0 0
    %9162 = vmatprep.subr.bf16.mxu0 0
    %9163 = vmatpush1.bf16.msra.mxu0 0
    %9164 = vmatprep.subr.bf16.mxu0 0
    %9165 = vmatpush1.bf16.msra.mxu0 0
    %9166 = vmatprep.mubr.bf16.mxu0 0
    %9167 = vmatmul.mubr.bf16.gmra.mrb[0].mxu0 %v9132
    %v9168 = vpop.f32.mrb[0].mxu0
    %v9169 = vadd.f32 %v9117, %v9168
    %v9170 = vpop.f32.mrb[0].mxu0
    %v9171 = vpop.f32.mrb[0].mxu0
    %v9172 = vpop.f32.mrb[0].mxu0
    %9173 = vdwg.mxu0
    %vm9174 = vcmask 50176
    %9175 = vst.msk [vmem:[#allocation9] sm:$0x3] %vm9174, %v9169
    // Predicated region
    $region42: #{neural_net_forward.1} parent=1 // pred_check
      _
    $region43: #{neural_net_forward.1} parent=1 // pred_check_branch
      %9177 = sbr.rel (0) target = $region45
    $region44: #{neural_net_forward.1} parent=1 // pred_region
      %s9179 = ssub.s32 32, 32
      %9180 = vsyncadd [#allocation10], %s9179
      %s9182 = sshll.u32 [#allocation9], 4
      %s9183 = int_to_ptr.vmem [resolvable:$true] %s9182
      %9185 = dma.vmem_to_hbm [thread:$0]  %s9183, 32, %s10, [#allocation10]
    $region45: #{neural_net_forward.1} parent=1 // pred_fallthru
      _
    // Predicated region
    $region46: #{neural_net_forward.1} parent=1 // pred_check
      _
    $region47: #{neural_net_forward.1} parent=1 // pred_check_branch
      %9187 = sbr.rel (0) target = $region49
    $region48: #{neural_net_forward.1} parent=1 // pred_region
      %9188 = dma.done [#allocation10], 32
    $region49: #{neural_net_forward.1} parent=1 // pred_fallthru
      _
    %9189 = vsyncpa [#allocation10], 1

</llo_original>
